<compile_context>
chip_gen: v7x
topology: tpu7x:2x2x1
jax: 0.10.0
libtpu: 0.0.40
codegen_flags: <defaults>
</compile_context>

<pallas_src>
import jax
import jax.numpy as jnp
from jax import lax
from jax.experimental import pallas as pl
from jax.experimental.pallas import tpu as pltpu

P_DROP = 0.3

# Geometry fixed by the PyTorch module (fc1 expects 16*6*6 = 576 -> input is 3x32x32).
CIN, HIN, WIN = 3, 32, 32
C1, C2 = 6, 16
KK = 3
H1O, W1O = HIN - KK + 1, WIN - KK + 1      # 30, 30   conv1 output
H1P, W1P = H1O // 2, W1O // 2              # 15, 15   after pool1
H2O, W2O = H1P - KK + 1, W1P - KK + 1      # 13, 13   conv2 output
H2P, W2P = H2O // 2, W2O // 2              # 6, 6     after pool2
N_FC1, N_FC2, N_OUT = 120, 84, 10
FEAT_PAD = 8                               # sublane-aligned feature rows per (c, h)
N_FEAT = C2 * H2P * FEAT_PAD               # 768 (= 576 real features + zero padding)


def _even_anchor_selector(n_out, n_in):
    # S[j, w] = 1 iff w == 2*j  ->  (S @ M)[j] = M[2*j]   (even-anchor selection)
    r = jnp.arange(n_out)[:, None]
    c = jnp.arange(n_in)[None, :]
    return (c == 2 * r).astype(jnp.float32)


def _dropout_mask(key, n_cols, training):
    """(120, n_cols) mask, pre-scaled by 1/(1-p) (independent per image column)."""
    if not training:
        return jnp.ones((N_FC1, n_cols), jnp.float32)
    keep = jax.random.bernoulli(key, 1.0 - P_DROP, (N_FC1, n_cols))
    return keep.astype(jnp.float32) * (1.0 / (1.0 - P_DROP))


def _fwd_kernel(x_ref, w1_ref, b1_ref, w2_ref, b2_ref,
                wf1_ref, bf1_ref, wf2_ref, bf2_ref, wf3_ref, bf3_ref,
                sel1_ref, sel2_ref, mask_ref,
                o_ref, act1_ref, feat_ref):
    f32 = jnp.float32
    bpad = x_ref.shape[-1]                       # lane-resident batch block (128)

    def conv_relu_pool(in_ref, hin_rows, w_ref, b_ref, cin, cout, wo, n_hp, sel, store):
        """Valid 3x3 conv + bias + 2x2/stride-2 max-pool (floor) + ReLU.

        in_ref layout: (cin*hin_rows) leading x (width) sublane x (B) lane.
        Taps are sliced from the ref once per use; only 2 row accumulators live.
        """
        def per_channel(co, _):
            def per_row(hp, _):
                bias = b_ref[co]
                acc0 = jnp.full((wo, bpad), bias, f32)       # conv row 2*hp
                acc1 = jnp.full((wo, bpad), bias, f32)       # conv row 2*hp + 1
                for ci in range(cin):
                    for kh in range(KK):
                        r0 = ci * hin_rows + 2 * hp + kh
                        for kw in range(KK):
                            w = w_ref[((co * cin + ci) * KK + kh) * KK + kw]  # SMEM
                            acc0 = acc0 + w * in_ref[r0, kw:kw + wo, :]
                            acc1 = acc1 + w * in_ref[r0 + 1, kw:kw + wo, :]
                m = jnp.maximum(acc0, acc1)                  # max over the 2 rows
                m = jnp.maximum(m[:wo - 1, :], m[1:, :])     # 2x2 anchor max (wo-1, B)
                pooled = jnp.dot(sel, m, preferred_element_type=f32)  # even anchors
                store(co, hp, jnp.maximum(pooled, 0.0))      # ReLU commutes with max
                return 0
            lax.fori_loop(0, n_hp, per_row, 0)
            return 0
        lax.fori_loop(0, cout, per_channel, 0)

    def store_act1(co, hp, pooled):                          # pooled: (W1P, B)
        act1_ref[co * H1P + hp] = pooled

    def store_feat(co, hp, pooled):                          # pooled: (W2P, B)
        row = pl.multiple_of((co * H2P + hp) * FEAT_PAD, FEAT_PAD)
        feat_ref[pl.ds(row, W2P), :] = pooled

    # ---- stage 1: conv1 (3->6) + ReLU + 2x2 max-pool -> VMEM scratch ----
    conv_relu_pool(x_ref, HIN, w1_ref, b1_ref, CIN, C1, W1O, H1P,
                   sel1_ref[...], store_act1)

    # ---- stage 2: conv2 (6->16) + ReLU + 2x2 max-pool -> (768, B) feature scratch
    #      (rows 8-aligned per (c, h); the 2 pad rows per group stay zero). ----
    feat_ref[...] = jnp.zeros(feat_ref.shape, f32)
    conv_relu_pool(act1_ref, H1P, w2_ref, b2_ref, C1, C2, W2O, H2P,
                   sel2_ref[...], store_feat)

    # ---- fc1 -> ReLU -> dropout, fc2 -> ReLU, fc3: weight-stationary MXU matmuls ----
    feat = feat_ref[...]                                                    # (768, B)
    h1 = jnp.dot(wf1_ref[...], feat, preferred_element_type=f32) + bf1_ref[...]
    h1 = jnp.maximum(h1, 0.0) * mask_ref[...]        # dropout mask pre-scaled by 1/(1-p)
    h2 = jnp.dot(wf2_ref[...], h1, preferred_element_type=f32) + bf2_ref[...]
    h2 = jnp.maximum(h2, 0.0)
    o_ref[...] = (jnp.dot(wf3_ref[...], h2, preferred_element_type=f32)
                  + bf3_ref[...]).astype(o_ref.dtype)                       # (10, B)


def forward(params, x_nchw, *, training=True, drop_key=None, block_b=128):
    f32 = jnp.float32
    n = x_nchw.shape[0]
    assert x_nchw.shape[1:] == (CIN, HIN, WIN), x_nchw.shape
    n_pad = ((n + block_b - 1) // block_b) * block_b

    # Batch on the 128-wide lane axis: (N, C, H, W) -> (C*H, W, Npad).
    x = jnp.transpose(x_nchw.astype(f32), (1, 2, 3, 0)).reshape(CIN * HIN, WIN, n)
    if n_pad != n:
        x = jnp.pad(x, ((0, 0), (0, 0), (0, n_pad - n)))

    # Conv weights/biases as flat SMEM scalar tables (PyTorch (Cout,Cin,kH,kW) order).
    w1 = params['conv1_w'].reshape(-1).astype(f32)
    b1 = params['conv1_b'].astype(f32)
    w2 = params['conv2_w'].reshape(-1).astype(f32)
    b2 = params['conv2_b'].astype(f32)

    # fc1 weight scattered onto the 8-aligned feature rows used by the kernel scratch:
    # torch flatten index (c, h, w) of x.view(N, -1) lives at scratch row (c*6+h)*8 + w.
    wf1 = params['fc1_w'].astype(f32).reshape(N_FC1, C2 * H2P, W2P)
    wf1 = jnp.zeros((N_FC1, C2 * H2P, FEAT_PAD), f32).at[:, :, :W2P].set(wf1)
    wf1 = wf1.reshape(N_FC1, N_FEAT)                       # (120, 768)
    bf1 = params['fc1_b'].astype(f32).reshape(N_FC1, 1)
    wf2 = params['fc2_w'].astype(f32)                      # (84, 120)
    bf2 = params['fc2_b'].astype(f32).reshape(N_FC2, 1)
    wf3 = params['fc3_w'].astype(f32)                      # (10, 84)
    bf3 = params['fc3_b'].astype(f32).reshape(N_OUT, 1)

    # Pooling even-anchor selectors, hoisted out of the kernel.
    sel1 = _even_anchor_selector(W1P, W1O - 1)             # (15, 29)
    sel2 = _even_anchor_selector(W2P, W2O - 1)             # (6, 12)

    # TODO(synk): dropout randomness comes from jax.random here (same statistics as
    # nn.Dropout, different stream than torch); in-kernel pltpu.prng_* has no
    # interpret-mode lowering, so the mask is generated in the wrapper.
    if drop_key is None:
        drop_key = jax.random.PRNGKey(0)
    mask = _dropout_mask(drop_key, n_pad, training)

    vmem = pl.BlockSpec(memory_space=pltpu.MemorySpace.VMEM)
    smem = pl.BlockSpec(memory_space=pltpu.MemorySpace.SMEM)

    out = pl.pallas_call(
        _fwd_kernel,
        out_shape=jax.ShapeDtypeStruct((N_OUT, n_pad), f32),
        grid=(n_pad // block_b,),
        in_specs=[
            pl.BlockSpec((CIN * HIN, WIN, block_b), lambda i: (0, 0, i)),  # image block
            smem, smem, smem, smem,                                        # conv w/b
            vmem, vmem, vmem, vmem, vmem, vmem,                            # fc w/b
            vmem, vmem,                                                    # selectors
            pl.BlockSpec((N_FC1, block_b), lambda i: (0, i)),              # dropout mask
        ],
        out_specs=pl.BlockSpec((N_OUT, block_b), lambda i: (0, i)),        # lane-dense
        scratch_shapes=[
            pltpu.VMEM((C1 * H1P, W1P, block_b), f32),   # stage-1 pooled activations
            pltpu.VMEM((N_FEAT, block_b), f32),          # flattened features (padded)
        ],
        compiler_params=pltpu.CompilerParams(
            dimension_semantics=("parallel",)),
    )(x, w1, b1, w2, b2, wf1, bf1, wf2, bf2, wf3, bf3, sel1, sel2, mask)
    return out[:, :n].T                                    # (n, 10)


# ------------------------- pure-JAX reference for checking -------------------------
def _maxpool2x2(y):
    n, c, h, w = y.shape
    hp, wp = h // 2, w // 2
    return y[:, :, :2 * hp, :2 * wp].reshape(n, c, hp, 2, wp, 2).max(axis=(3, 5))


def _reference_forward(params, x_nchw, mask):
    f32 = jnp.float32
    hi = lax.Precision.HIGHEST
    dn = ('NCHW', 'OIHW', 'NCHW')
    x = x_nchw.astype(f32)
    y = lax.conv_general_dilated(x, params['conv1_w'].astype(f32), (1, 1), 'VALID',
                                 dimension_numbers=dn, precision=hi)
    y = _maxpool2x2(jnp.maximum(y + params['conv1_b'].astype(f32)[None, :, None, None], 0.))
    y = lax.conv_general_dilated(y, params['conv2_w'].astype(f32), (1, 1), 'VALID',
                                 dimension_numbers=dn, precision=hi)
    y = _maxpool2x2(jnp.maximum(y + params['conv2_b'].astype(f32)[None, :, None, None], 0.))
    flat = y.reshape(y.shape[0], -1)
    h1 = jnp.maximum(jnp.dot(flat, params['fc1_w'].astype(f32).T, precision=hi)
                     + params['fc1_b'].astype(f32), 0.0)
    h1 = h1 * mask[:, :flat.shape[0]].T
    h2 = jnp.maximum(jnp.dot(h1, params['fc2_w'].astype(f32).T, precision=hi)
                     + params['fc2_b'].astype(f32), 0.0)
    return (jnp.dot(h2, params['fc3_w'].astype(f32).T, precision=hi)
            + params['fc3_b'].astype(f32))


if __name__ == "__main__":
    key = jax.random.PRNGKey(0)
    ks = jax.random.split(key, 12)

    def rnd(k, shape, scale):
        return jax.random.normal(k, shape, jnp.float32) * scale

    params = {
        'conv1_w': rnd(ks[0], (C1, CIN, KK, KK), 0.2),
        'conv1_b': rnd(ks[1], (C1,), 0.1),
        'conv2_w': rnd(ks[2], (C2, C1, KK, KK), 0.2),
        'conv2_b': rnd(ks[3], (C2,), 0.1),
        'fc1_w': rnd(ks[4], (N_FC1, C2 * H2P * W2P), 0.1),
        'fc1_b': rnd(ks[5], (N_FC1,), 0.1),
        'fc2_w': rnd(ks[6], (N_FC2, N_FC1), 0.1),
        'fc2_b': rnd(ks[7], (N_FC2,), 0.1),
        'fc3_w': rnd(ks[8], (N_OUT, N_FC2), 0.1),
        'fc3_b': rnd(ks[9], (N_OUT,), 0.1),
    }

    n, block_b = 256, 128            # 2 grid steps -> both TensorCores busy on v7x
    x = jax.random.normal(ks[10], (n, CIN, HIN, WIN), jnp.float32)
    drop_key = ks[11]

    out = jax.block_until_ready(
        forward(params, x, training=True, drop_key=drop_key, block_b=block_b))
    assert out.shape == (n, N_OUT) and out.dtype == jnp.float32
    assert bool(jnp.all(jnp.isfinite(out)))

    # Compare against the pure-JAX reference using the identical dropout mask.
    n_pad = ((n + block_b - 1) // block_b) * block_b
    mask = _dropout_mask(drop_key, n_pad, True)
    ref = _reference_forward(params, x, mask)
    max_err = float(jnp.max(jnp.abs(out - ref)))
    tol = 3e-2 * (float(jnp.max(jnp.abs(ref))) + 1.0)
    assert max_err < tol, f"max |kernel - reference| = {max_err} (tol {tol})"
    print("KERNEL_OK")
</pallas_src>

<mosaic_0001>
module attributes {stable_mosaic.version = 11 : i64} {
  func.func @_fwd_kernel(%arg0: i32, %arg1: memref<96x32x128xf32, #tpu.memory_space<vmem>>, %arg2: memref<162xf32, #tpu.memory_space<smem>>, %arg3: memref<6xf32, #tpu.memory_space<smem>>, %arg4: memref<864xf32, #tpu.memory_space<smem>>, %arg5: memref<16xf32, #tpu.memory_space<smem>>, %arg6: memref<120x768xf32, #tpu.memory_space<vmem>>, %arg7: memref<120x1xf32, #tpu.memory_space<vmem>>, %arg8: memref<84x120xf32, #tpu.memory_space<vmem>>, %arg9: memref<84x1xf32, #tpu.memory_space<vmem>>, %arg10: memref<10x84xf32, #tpu.memory_space<vmem>>, %arg11: memref<10x1xf32, #tpu.memory_space<vmem>>, %arg12: memref<15x29xf32, #tpu.memory_space<vmem>>, %arg13: memref<6x12xf32, #tpu.memory_space<vmem>>, %arg14: memref<120x128xf32, #tpu.memory_space<vmem>>, %arg15: memref<10x128xf32, #tpu.memory_space<vmem>>, %arg16: memref<90x15x128xf32, #tpu.memory_space<vmem>>, %arg17: memref<768x128xf32, #tpu.memory_space<vmem>>) attributes {dimension_semantics = [#tpu.dimension_semantics<parallel>], iteration_bounds = array<i64: 2>, scalar_prefetch = 0 : i64, scratch_operands = 2 : i64, tpu.core_type = #tpu.core_type<tc>, window_params = [{transform_indices = @transform_0, window_bounds = array<i64: 96, 32, 128>}, {transform_indices = @transform_1, window_bounds = array<i64: 162>}, {transform_indices = @transform_2, window_bounds = array<i64: 6>}, {transform_indices = @transform_3, window_bounds = array<i64: 864>}, {transform_indices = @transform_4, window_bounds = array<i64: 16>}, {pipeline_mode = #tpu.pipeline_mode<synchronous>, transform_indices = @transform_5, window_bounds = array<i64: 120, 768>}, {pipeline_mode = #tpu.pipeline_mode<synchronous>, transform_indices = @transform_6, window_bounds = array<i64: 120, 1>}, {pipeline_mode = #tpu.pipeline_mode<synchronous>, transform_indices = @transform_7, window_bounds = array<i64: 84, 120>}, {pipeline_mode = #tpu.pipeline_mode<synchronous>, transform_indices = @transform_8, window_bounds = array<i64: 84, 1>}, {pipeline_mode = #tpu.pipeline_mode<synchronous>, transform_indices = @transform_9, window_bounds = array<i64: 10, 84>}, {pipeline_mode = #tpu.pipeline_mode<synchronous>, transform_indices = @transform_10, window_bounds = array<i64: 10, 1>}, {pipeline_mode = #tpu.pipeline_mode<synchronous>, transform_indices = @transform_11, window_bounds = array<i64: 15, 29>}, {pipeline_mode = #tpu.pipeline_mode<synchronous>, transform_indices = @transform_12, window_bounds = array<i64: 6, 12>}, {transform_indices = @transform_13, window_bounds = array<i64: 120, 128>}, {transform_indices = @transform_14, window_bounds = array<i64: 10, 128>}]} {
    %c0 = arith.constant 0 : index
    %c0_0 = arith.constant 0 : index
    %0 = vector.load %arg12[%c0, %c0_0] : memref<15x29xf32, #tpu.memory_space<vmem>>, vector<15x29xf32>
    %c0_i32 = arith.constant 0 : i32
    %c6_i32 = arith.constant 6 : i32
    %1 = arith.addi %c0_i32, %c6_i32 : i32
    %c1_i32 = arith.constant 1 : i32
    scf.for %arg18 = %c0_i32 to %1 step %c1_i32  : i32 {
      %c0_i32_32 = arith.constant 0 : i32
      %c15_i32 = arith.constant 15 : i32
      %29 = arith.addi %c0_i32_32, %c15_i32 : i32
      %c1_i32_33 = arith.constant 1 : i32
      scf.for %arg19 = %c0_i32_32 to %29 step %c1_i32_33  : i32 {
        %30 = arith.index_cast %arg18 : i32 to index
        %31 = memref.load %arg3[%30] : memref<6xf32, #tpu.memory_space<smem>>
        %32 = vector.broadcast %31 : f32 to vector<30x128xf32>
        %33 = vector.broadcast %31 : f32 to vector<30x128xf32>
        %c2_i32 = arith.constant 2 : i32
        %34 = arith.muli %c2_i32, %arg19 : i32
        %c0_i32_35 = arith.constant 0 : i32
        %35 = arith.addi %c0_i32_35, %34 : i32
        %c0_i32_36 = arith.constant 0 : i32
        %36 = arith.addi %35, %c0_i32_36 : i32
        %c3_i32 = arith.constant 3 : i32
        %37 = arith.muli %arg18, %c3_i32 : i32
        %c0_i32_37 = arith.constant 0 : i32
        %38 = arith.addi %37, %c0_i32_37 : i32
        %c3_i32_38 = arith.constant 3 : i32
        %39 = arith.muli %38, %c3_i32_38 : i32
        %c0_i32_39 = arith.constant 0 : i32
        %40 = arith.addi %39, %c0_i32_39 : i32
        %c3_i32_40 = arith.constant 3 : i32
        %41 = arith.muli %40, %c3_i32_40 : i32
        %c0_i32_41 = arith.constant 0 : i32
        %42 = arith.addi %41, %c0_i32_41 : i32
        %43 = arith.index_cast %42 : i32 to index
        %44 = memref.load %arg2[%43] : memref<162xf32, #tpu.memory_space<smem>>
        %45 = arith.index_cast %36 : i32 to index
        %c0_42 = arith.constant 0 : index
        %c0_43 = arith.constant 0 : index
        %46 = vector.load %arg1[%45, %c0_42, %c0_43] : memref<96x32x128xf32, #tpu.memory_space<vmem>>, vector<1x30x128xf32>
        %47 = vector.shape_cast %46 : vector<1x30x128xf32> to vector<30x128xf32>
        %48 = vector.broadcast %44 : f32 to vector<30x128xf32>
        %49 = arith.mulf %48, %47 : vector<30x128xf32>
        %50 = arith.addf %32, %49 : vector<30x128xf32>
        %c1_i32_44 = arith.constant 1 : i32
        %51 = arith.addi %36, %c1_i32_44 : i32
        %52 = arith.index_cast %51 : i32 to index
        %c0_45 = arith.constant 0 : index
        %c0_46 = arith.constant 0 : index
        %53 = vector.load %arg1[%52, %c0_45, %c0_46] : memref<96x32x128xf32, #tpu.memory_space<vmem>>, vector<1x30x128xf32>
        %54 = vector.shape_cast %53 : vector<1x30x128xf32> to vector<30x128xf32>
        %55 = vector.broadcast %44 : f32 to vector<30x128xf32>
        %56 = arith.mulf %55, %54 : vector<30x128xf32>
        %57 = arith.addf %33, %56 : vector<30x128xf32>
        %c3_i32_47 = arith.constant 3 : i32
        %58 = arith.muli %arg18, %c3_i32_47 : i32
        %c0_i32_48 = arith.constant 0 : i32
        %59 = arith.addi %58, %c0_i32_48 : i32
        %c3_i32_49 = arith.constant 3 : i32
        %60 = arith.muli %59, %c3_i32_49 : i32
        %c0_i32_50 = arith.constant 0 : i32
        %61 = arith.addi %60, %c0_i32_50 : i32
        %c3_i32_51 = arith.constant 3 : i32
        %62 = arith.muli %61, %c3_i32_51 : i32
        %c1_i32_52 = arith.constant 1 : i32
        %63 = arith.addi %62, %c1_i32_52 : i32
        %64 = arith.index_cast %63 : i32 to index
        %65 = memref.load %arg2[%64] : memref<162xf32, #tpu.memory_space<smem>>
        %66 = arith.index_cast %36 : i32 to index
        %c1 = arith.constant 1 : index
        %c0_53 = arith.constant 0 : index
        %67 = vector.load %arg1[%66, %c1, %c0_53] : memref<96x32x128xf32, #tpu.memory_space<vmem>>, vector<1x30x128xf32>
        %68 = vector.shape_cast %67 : vector<1x30x128xf32> to vector<30x128xf32>
        %69 = vector.broadcast %65 : f32 to vector<30x128xf32>
        %70 = arith.mulf %69, %68 : vector<30x128xf32>
        %71 = arith.addf %50, %70 : vector<30x128xf32>
        %c1_i32_54 = arith.constant 1 : i32
        %72 = arith.addi %36, %c1_i32_54 : i32
        %73 = arith.index_cast %72 : i32 to index
        %c1_55 = arith.constant 1 : index
        %c0_56 = arith.constant 0 : index
        %74 = vector.load %arg1[%73, %c1_55, %c0_56] : memref<96x32x128xf32, #tpu.memory_space<vmem>>, vector<1x30x128xf32>
        %75 = vector.shape_cast %74 : vector<1x30x128xf32> to vector<30x128xf32>
        %76 = vector.broadcast %65 : f32 to vector<30x128xf32>
        %77 = arith.mulf %76, %75 : vector<30x128xf32>
        %78 = arith.addf %57, %77 : vector<30x128xf32>
        %c3_i32_57 = arith.constant 3 : i32
        %79 = arith.muli %arg18, %c3_i32_57 : i32
        %c0_i32_58 = arith.constant 0 : i32
        %80 = arith.addi %79, %c0_i32_58 : i32
        %c3_i32_59 = arith.constant 3 : i32
        %81 = arith.muli %80, %c3_i32_59 : i32
        %c0_i32_60 = arith.constant 0 : i32
        %82 = arith.addi %81, %c0_i32_60 : i32
        %c3_i32_61 = arith.constant 3 : i32
        %83 = arith.muli %82, %c3_i32_61 : i32
        %c2_i32_62 = arith.constant 2 : i32
        %84 = arith.addi %83, %c2_i32_62 : i32
        %85 = arith.index_cast %84 : i32 to index
        %86 = memref.load %arg2[%85] : memref<162xf32, #tpu.memory_space<smem>>
        %87 = arith.index_cast %36 : i32 to index
        %c2 = arith.constant 2 : index
        %c0_63 = arith.constant 0 : index
        %88 = vector.load %arg1[%87, %c2, %c0_63] : memref<96x32x128xf32, #tpu.memory_space<vmem>>, vector<1x30x128xf32>
        %89 = vector.shape_cast %88 : vector<1x30x128xf32> to vector<30x128xf32>
        %90 = vector.broadcast %86 : f32 to vector<30x128xf32>
        %91 = arith.mulf %90, %89 : vector<30x128xf32>
        %92 = arith.addf %71, %91 : vector<30x128xf32>
        %c1_i32_64 = arith.constant 1 : i32
        %93 = arith.addi %36, %c1_i32_64 : i32
        %94 = arith.index_cast %93 : i32 to index
        %c2_65 = arith.constant 2 : index
        %c0_66 = arith.constant 0 : index
        %95 = vector.load %arg1[%94, %c2_65, %c0_66] : memref<96x32x128xf32, #tpu.memory_space<vmem>>, vector<1x30x128xf32>
        %96 = vector.shape_cast %95 : vector<1x30x128xf32> to vector<30x128xf32>
        %97 = vector.broadcast %86 : f32 to vector<30x128xf32>
        %98 = arith.mulf %97, %96 : vector<30x128xf32>
        %99 = arith.addf %78, %98 : vector<30x128xf32>
        %c2_i32_67 = arith.constant 2 : i32
        %100 = arith.muli %c2_i32_67, %arg19 : i32
        %c0_i32_68 = arith.constant 0 : i32
        %101 = arith.addi %c0_i32_68, %100 : i32
        %c1_i32_69 = arith.constant 1 : i32
        %102 = arith.addi %101, %c1_i32_69 : i32
        %c3_i32_70 = arith.constant 3 : i32
        %103 = arith.muli %arg18, %c3_i32_70 : i32
        %c0_i32_71 = arith.constant 0 : i32
        %104 = arith.addi %103, %c0_i32_71 : i32
        %c3_i32_72 = arith.constant 3 : i32
        %105 = arith.muli %104, %c3_i32_72 : i32
        %c1_i32_73 = arith.constant 1 : i32
        %106 = arith.addi %105, %c1_i32_73 : i32
        %c3_i32_74 = arith.constant 3 : i32
        %107 = arith.muli %106, %c3_i32_74 : i32
        %c0_i32_75 = arith.constant 0 : i32
        %108 = arith.addi %107, %c0_i32_75 : i32
        %109 = arith.index_cast %108 : i32 to index
        %110 = memref.load %arg2[%109] : memref<162xf32, #tpu.memory_space<smem>>
        %111 = arith.index_cast %102 : i32 to index
        %c0_76 = arith.constant 0 : index
        %c0_77 = arith.constant 0 : index
        %112 = vector.load %arg1[%111, %c0_76, %c0_77] : memref<96x32x128xf32, #tpu.memory_space<vmem>>, vector<1x30x128xf32>
        %113 = vector.shape_cast %112 : vector<1x30x128xf32> to vector<30x128xf32>
        %114 = vector.broadcast %110 : f32 to vector<30x128xf32>
        %115 = arith.mulf %114, %113 : vector<30x128xf32>
        %116 = arith.addf %92, %115 : vector<30x128xf32>
        %c1_i32_78 = arith.constant 1 : i32
        %117 = arith.addi %102, %c1_i32_78 : i32
        %118 = arith.index_cast %117 : i32 to index
        %c0_79 = arith.constant 0 : index
        %c0_80 = arith.constant 0 : index
        %119 = vector.load %arg1[%118, %c0_79, %c0_80] : memref<96x32x128xf32, #tpu.memory_space<vmem>>, vector<1x30x128xf32>
        %120 = vector.shape_cast %119 : vector<1x30x128xf32> to vector<30x128xf32>
        %121 = vector.broadcast %110 : f32 to vector<30x128xf32>
        %122 = arith.mulf %121, %120 : vector<30x128xf32>
        %123 = arith.addf %99, %122 : vector<30x128xf32>
        %c3_i32_81 = arith.constant 3 : i32
        %124 = arith.muli %arg18, %c3_i32_81 : i32
        %c0_i32_82 = arith.constant 0 : i32
        %125 = arith.addi %124, %c0_i32_82 : i32
        %c3_i32_83 = arith.constant 3 : i32
        %126 = arith.muli %125, %c3_i32_83 : i32
        %c1_i32_84 = arith.constant 1 : i32
        %127 = arith.addi %126, %c1_i32_84 : i32
        %c3_i32_85 = arith.constant 3 : i32
        %128 = arith.muli %127, %c3_i32_85 : i32
        %c1_i32_86 = arith.constant 1 : i32
        %129 = arith.addi %128, %c1_i32_86 : i32
        %130 = arith.index_cast %129 : i32 to index
        %131 = memref.load %arg2[%130] : memref<162xf32, #tpu.memory_space<smem>>
        %132 = arith.index_cast %102 : i32 to index
        %c1_87 = arith.constant 1 : index
        %c0_88 = arith.constant 0 : index
        %133 = vector.load %arg1[%132, %c1_87, %c0_88] : memref<96x32x128xf32, #tpu.memory_space<vmem>>, vector<1x30x128xf32>
        %134 = vector.shape_cast %133 : vector<1x30x128xf32> to vector<30x128xf32>
        %135 = vector.broadcast %131 : f32 to vector<30x128xf32>
        %136 = arith.mulf %135, %134 : vector<30x128xf32>
        %137 = arith.addf %116, %136 : vector<30x128xf32>
        %c1_i32_89 = arith.constant 1 : i32
        %138 = arith.addi %102, %c1_i32_89 : i32
        %139 = arith.index_cast %138 : i32 to index
        %c1_90 = arith.constant 1 : index
        %c0_91 = arith.constant 0 : index
        %140 = vector.load %arg1[%139, %c1_90, %c0_91] : memref<96x32x128xf32, #tpu.memory_space<vmem>>, vector<1x30x128xf32>
        %141 = vector.shape_cast %140 : vector<1x30x128xf32> to vector<30x128xf32>
        %142 = vector.broadcast %131 : f32 to vector<30x128xf32>
        %143 = arith.mulf %142, %141 : vector<30x128xf32>
        %144 = arith.addf %123, %143 : vector<30x128xf32>
        %c3_i32_92 = arith.constant 3 : i32
        %145 = arith.muli %arg18, %c3_i32_92 : i32
        %c0_i32_93 = arith.constant 0 : i32
        %146 = arith.addi %145, %c0_i32_93 : i32
        %c3_i32_94 = arith.constant 3 : i32
        %147 = arith.muli %146, %c3_i32_94 : i32
        %c1_i32_95 = arith.constant 1 : i32
        %148 = arith.addi %147, %c1_i32_95 : i32
        %c3_i32_96 = arith.constant 3 : i32
        %149 = arith.muli %148, %c3_i32_96 : i32
        %c2_i32_97 = arith.constant 2 : i32
        %150 = arith.addi %149, %c2_i32_97 : i32
        %151 = arith.index_cast %150 : i32 to index
        %152 = memref.load %arg2[%151] : memref<162xf32, #tpu.memory_space<smem>>
        %153 = arith.index_cast %102 : i32 to index
        %c2_98 = arith.constant 2 : index
        %c0_99 = arith.constant 0 : index
        %154 = vector.load %arg1[%153, %c2_98, %c0_99] : memref<96x32x128xf32, #tpu.memory_space<vmem>>, vector<1x30x128xf32>
        %155 = vector.shape_cast %154 : vector<1x30x128xf32> to vector<30x128xf32>
        %156 = vector.broadcast %152 : f32 to vector<30x128xf32>
        %157 = arith.mulf %156, %155 : vector<30x128xf32>
        %158 = arith.addf %137, %157 : vector<30x128xf32>
        %c1_i32_100 = arith.constant 1 : i32
        %159 = arith.addi %102, %c1_i32_100 : i32
        %160 = arith.index_cast %159 : i32 to index
        %c2_101 = arith.constant 2 : index
        %c0_102 = arith.constant 0 : index
        %161 = vector.load %arg1[%160, %c2_101, %c0_102] : memref<96x32x128xf32, #tpu.memory_space<vmem>>, vector<1x30x128xf32>
        %162 = vector.shape_cast %161 : vector<1x30x128xf32> to vector<30x128xf32>
        %163 = vector.broadcast %152 : f32 to vector<30x128xf32>
        %164 = arith.mulf %163, %162 : vector<30x128xf32>
        %165 = arith.addf %144, %164 : vector<30x128xf32>
        %c2_i32_103 = arith.constant 2 : i32
        %166 = arith.muli %c2_i32_103, %arg19 : i32
        %c0_i32_104 = arith.constant 0 : i32
        %167 = arith.addi %c0_i32_104, %166 : i32
        %c2_i32_105 = arith.constant 2 : i32
        %168 = arith.addi %167, %c2_i32_105 : i32
        %c3_i32_106 = arith.constant 3 : i32
        %169 = arith.muli %arg18, %c3_i32_106 : i32
        %c0_i32_107 = arith.constant 0 : i32
        %170 = arith.addi %169, %c0_i32_107 : i32
        %c3_i32_108 = arith.constant 3 : i32
        %171 = arith.muli %170, %c3_i32_108 : i32
        %c2_i32_109 = arith.constant 2 : i32
        %172 = arith.addi %171, %c2_i32_109 : i32
        %c3_i32_110 = arith.constant 3 : i32
        %173 = arith.muli %172, %c3_i32_110 : i32
        %c0_i32_111 = arith.constant 0 : i32
        %174 = arith.addi %173, %c0_i32_111 : i32
        %175 = arith.index_cast %174 : i32 to index
        %176 = memref.load %arg2[%175] : memref<162xf32, #tpu.memory_space<smem>>
        %177 = arith.index_cast %168 : i32 to index
        %c0_112 = arith.constant 0 : index
        %c0_113 = arith.constant 0 : index
        %178 = vector.load %arg1[%177, %c0_112, %c0_113] : memref<96x32x128xf32, #tpu.memory_space<vmem>>, vector<1x30x128xf32>
        %179 = vector.shape_cast %178 : vector<1x30x128xf32> to vector<30x128xf32>
        %180 = vector.broadcast %176 : f32 to vector<30x128xf32>
        %181 = arith.mulf %180, %179 : vector<30x128xf32>
        %182 = arith.addf %158, %181 : vector<30x128xf32>
        %c1_i32_114 = arith.constant 1 : i32
        %183 = arith.addi %168, %c1_i32_114 : i32
        %184 = arith.index_cast %183 : i32 to index
        %c0_115 = arith.constant 0 : index
        %c0_116 = arith.constant 0 : index
        %185 = vector.load %arg1[%184, %c0_115, %c0_116] : memref<96x32x128xf32, #tpu.memory_space<vmem>>, vector<1x30x128xf32>
        %186 = vector.shape_cast %185 : vector<1x30x128xf32> to vector<30x128xf32>
        %187 = vector.broadcast %176 : f32 to vector<30x128xf32>
        %188 = arith.mulf %187, %186 : vector<30x128xf32>
        %189 = arith.addf %165, %188 : vector<30x128xf32>
        %c3_i32_117 = arith.constant 3 : i32
        %190 = arith.muli %arg18, %c3_i32_117 : i32
        %c0_i32_118 = arith.constant 0 : i32
        %191 = arith.addi %190, %c0_i32_118 : i32
        %c3_i32_119 = arith.constant 3 : i32
        %192 = arith.muli %191, %c3_i32_119 : i32
        %c2_i32_120 = arith.constant 2 : i32
        %193 = arith.addi %192, %c2_i32_120 : i32
        %c3_i32_121 = arith.constant 3 : i32
        %194 = arith.muli %193, %c3_i32_121 : i32
        %c1_i32_122 = arith.constant 1 : i32
        %195 = arith.addi %194, %c1_i32_122 : i32
        %196 = arith.index_cast %195 : i32 to index
        %197 = memref.load %arg2[%196] : memref<162xf32, #tpu.memory_space<smem>>
        %198 = arith.index_cast %168 : i32 to index
        %c1_123 = arith.constant 1 : index
        %c0_124 = arith.constant 0 : index
        %199 = vector.load %arg1[%198, %c1_123, %c0_124] : memref<96x32x128xf32, #tpu.memory_space<vmem>>, vector<1x30x128xf32>
        %200 = vector.shape_cast %199 : vector<1x30x128xf32> to vector<30x128xf32>
        %201 = vector.broadcast %197 : f32 to vector<30x128xf32>
        %202 = arith.mulf %201, %200 : vector<30x128xf32>
        %203 = arith.addf %182, %202 : vector<30x128xf32>
        %c1_i32_125 = arith.constant 1 : i32
        %204 = arith.addi %168, %c1_i32_125 : i32
        %205 = arith.index_cast %204 : i32 to index
        %c1_126 = arith.constant 1 : index
        %c0_127 = arith.constant 0 : index
        %206 = vector.load %arg1[%205, %c1_126, %c0_127] : memref<96x32x128xf32, #tpu.memory_space<vmem>>, vector<1x30x128xf32>
        %207 = vector.shape_cast %206 : vector<1x30x128xf32> to vector<30x128xf32>
        %208 = vector.broadcast %197 : f32 to vector<30x128xf32>
        %209 = arith.mulf %208, %207 : vector<30x128xf32>
        %210 = arith.addf %189, %209 : vector<30x128xf32>
        %c3_i32_128 = arith.constant 3 : i32
        %211 = arith.muli %arg18, %c3_i32_128 : i32
        %c0_i32_129 = arith.constant 0 : i32
        %212 = arith.addi %211, %c0_i32_129 : i32
        %c3_i32_130 = arith.constant 3 : i32
        %213 = arith.muli %212, %c3_i32_130 : i32
        %c2_i32_131 = arith.constant 2 : i32
        %214 = arith.addi %213, %c2_i32_131 : i32
        %c3_i32_132 = arith.constant 3 : i32
        %215 = arith.muli %214, %c3_i32_132 : i32
        %c2_i32_133 = arith.constant 2 : i32
        %216 = arith.addi %215, %c2_i32_133 : i32
        %217 = arith.index_cast %216 : i32 to index
        %218 = memref.load %arg2[%217] : memref<162xf32, #tpu.memory_space<smem>>
        %219 = arith.index_cast %168 : i32 to index
        %c2_134 = arith.constant 2 : index
        %c0_135 = arith.constant 0 : index
        %220 = vector.load %arg1[%219, %c2_134, %c0_135] : memref<96x32x128xf32, #tpu.memory_space<vmem>>, vector<1x30x128xf32>
        %221 = vector.shape_cast %220 : vector<1x30x128xf32> to vector<30x128xf32>
        %222 = vector.broadcast %218 : f32 to vector<30x128xf32>
        %223 = arith.mulf %222, %221 : vector<30x128xf32>
        %224 = arith.addf %203, %223 : vector<30x128xf32>
        %c1_i32_136 = arith.constant 1 : i32
        %225 = arith.addi %168, %c1_i32_136 : i32
        %226 = arith.index_cast %225 : i32 to index
        %c2_137 = arith.constant 2 : index
        %c0_138 = arith.constant 0 : index
        %227 = vector.load %arg1[%226, %c2_137, %c0_138] : memref<96x32x128xf32, #tpu.memory_space<vmem>>, vector<1x30x128xf32>
        %228 = vector.shape_cast %227 : vector<1x30x128xf32> to vector<30x128xf32>
        %229 = vector.broadcast %218 : f32 to vector<30x128xf32>
        %230 = arith.mulf %229, %228 : vector<30x128xf32>
        %231 = arith.addf %210, %230 : vector<30x128xf32>
        %c2_i32_139 = arith.constant 2 : i32
        %232 = arith.muli %c2_i32_139, %arg19 : i32
        %c32_i32 = arith.constant 32 : i32
        %233 = arith.addi %c32_i32, %232 : i32
        %c0_i32_140 = arith.constant 0 : i32
        %234 = arith.addi %233, %c0_i32_140 : i32
        %c3_i32_141 = arith.constant 3 : i32
        %235 = arith.muli %arg18, %c3_i32_141 : i32
        %c1_i32_142 = arith.constant 1 : i32
        %236 = arith.addi %235, %c1_i32_142 : i32
        %c3_i32_143 = arith.constant 3 : i32
        %237 = arith.muli %236, %c3_i32_143 : i32
        %c0_i32_144 = arith.constant 0 : i32
        %238 = arith.addi %237, %c0_i32_144 : i32
        %c3_i32_145 = arith.constant 3 : i32
        %239 = arith.muli %238, %c3_i32_145 : i32
        %c0_i32_146 = arith.constant 0 : i32
        %240 = arith.addi %239, %c0_i32_146 : i32
        %241 = arith.index_cast %240 : i32 to index
        %242 = memref.load %arg2[%241] : memref<162xf32, #tpu.memory_space<smem>>
        %243 = arith.index_cast %234 : i32 to index
        %c0_147 = arith.constant 0 : index
        %c0_148 = arith.constant 0 : index
        %244 = vector.load %arg1[%243, %c0_147, %c0_148] : memref<96x32x128xf32, #tpu.memory_space<vmem>>, vector<1x30x128xf32>
        %245 = vector.shape_cast %244 : vector<1x30x128xf32> to vector<30x128xf32>
        %246 = vector.broadcast %242 : f32 to vector<30x128xf32>
        %247 = arith.mulf %246, %245 : vector<30x128xf32>
        %248 = arith.addf %224, %247 : vector<30x128xf32>
        %c1_i32_149 = arith.constant 1 : i32
        %249 = arith.addi %234, %c1_i32_149 : i32
        %250 = arith.index_cast %249 : i32 to index
        %c0_150 = arith.constant 0 : index
        %c0_151 = arith.constant 0 : index
        %251 = vector.load %arg1[%250, %c0_150, %c0_151] : memref<96x32x128xf32, #tpu.memory_space<vmem>>, vector<1x30x128xf32>
        %252 = vector.shape_cast %251 : vector<1x30x128xf32> to vector<30x128xf32>
        %253 = vector.broadcast %242 : f32 to vector<30x128xf32>
        %254 = arith.mulf %253, %252 : vector<30x128xf32>
        %255 = arith.addf %231, %254 : vector<30x128xf32>
        %c3_i32_152 = arith.constant 3 : i32
        %256 = arith.muli %arg18, %c3_i32_152 : i32
        %c1_i32_153 = arith.constant 1 : i32
        %257 = arith.addi %256, %c1_i32_153 : i32
        %c3_i32_154 = arith.constant 3 : i32
        %258 = arith.muli %257, %c3_i32_154 : i32
        %c0_i32_155 = arith.constant 0 : i32
        %259 = arith.addi %258, %c0_i32_155 : i32
        %c3_i32_156 = arith.constant 3 : i32
        %260 = arith.muli %259, %c3_i32_156 : i32
        %c1_i32_157 = arith.constant 1 : i32
        %261 = arith.addi %260, %c1_i32_157 : i32
        %262 = arith.index_cast %261 : i32 to index
        %263 = memref.load %arg2[%262] : memref<162xf32, #tpu.memory_space<smem>>
        %264 = arith.index_cast %234 : i32 to index
        %c1_158 = arith.constant 1 : index
        %c0_159 = arith.constant 0 : index
        %265 = vector.load %arg1[%264, %c1_158, %c0_159] : memref<96x32x128xf32, #tpu.memory_space<vmem>>, vector<1x30x128xf32>
        %266 = vector.shape_cast %265 : vector<1x30x128xf32> to vector<30x128xf32>
        %267 = vector.broadcast %263 : f32 to vector<30x128xf32>
        %268 = arith.mulf %267, %266 : vector<30x128xf32>
        %269 = arith.addf %248, %268 : vector<30x128xf32>
        %c1_i32_160 = arith.constant 1 : i32
        %270 = arith.addi %234, %c1_i32_160 : i32
        %271 = arith.index_cast %270 : i32 to index
        %c1_161 = arith.constant 1 : index
        %c0_162 = arith.constant 0 : index
        %272 = vector.load %arg1[%271, %c1_161, %c0_162] : memref<96x32x128xf32, #tpu.memory_space<vmem>>, vector<1x30x128xf32>
        %273 = vector.shape_cast %272 : vector<1x30x128xf32> to vector<30x128xf32>
        %274 = vector.broadcast %263 : f32 to vector<30x128xf32>
        %275 = arith.mulf %274, %273 : vector<30x128xf32>
        %276 = arith.addf %255, %275 : vector<30x128xf32>
        %c3_i32_163 = arith.constant 3 : i32
        %277 = arith.muli %arg18, %c3_i32_163 : i32
        %c1_i32_164 = arith.constant 1 : i32
        %278 = arith.addi %277, %c1_i32_164 : i32
        %c3_i32_165 = arith.constant 3 : i32
        %279 = arith.muli %278, %c3_i32_165 : i32
        %c0_i32_166 = arith.constant 0 : i32
        %280 = arith.addi %279, %c0_i32_166 : i32
        %c3_i32_167 = arith.constant 3 : i32
        %281 = arith.muli %280, %c3_i32_167 : i32
        %c2_i32_168 = arith.constant 2 : i32
        %282 = arith.addi %281, %c2_i32_168 : i32
        %283 = arith.index_cast %282 : i32 to index
        %284 = memref.load %arg2[%283] : memref<162xf32, #tpu.memory_space<smem>>
        %285 = arith.index_cast %234 : i32 to index
        %c2_169 = arith.constant 2 : index
        %c0_170 = arith.constant 0 : index
        %286 = vector.load %arg1[%285, %c2_169, %c0_170] : memref<96x32x128xf32, #tpu.memory_space<vmem>>, vector<1x30x128xf32>
        %287 = vector.shape_cast %286 : vector<1x30x128xf32> to vector<30x128xf32>
        %288 = vector.broadcast %284 : f32 to vector<30x128xf32>
        %289 = arith.mulf %288, %287 : vector<30x128xf32>
        %290 = arith.addf %269, %289 : vector<30x128xf32>
        %c1_i32_171 = arith.constant 1 : i32
        %291 = arith.addi %234, %c1_i32_171 : i32
        %292 = arith.index_cast %291 : i32 to index
        %c2_172 = arith.constant 2 : index
        %c0_173 = arith.constant 0 : index
        %293 = vector.load %arg1[%292, %c2_172, %c0_173] : memref<96x32x128xf32, #tpu.memory_space<vmem>>, vector<1x30x128xf32>
        %294 = vector.shape_cast %293 : vector<1x30x128xf32> to vector<30x128xf32>
        %295 = vector.broadcast %284 : f32 to vector<30x128xf32>
        %296 = arith.mulf %295, %294 : vector<30x128xf32>
        %297 = arith.addf %276, %296 : vector<30x128xf32>
        %c2_i32_174 = arith.constant 2 : i32
        %298 = arith.muli %c2_i32_174, %arg19 : i32
        %c32_i32_175 = arith.constant 32 : i32
        %299 = arith.addi %c32_i32_175, %298 : i32
        %c1_i32_176 = arith.constant 1 : i32
        %300 = arith.addi %299, %c1_i32_176 : i32
        %c3_i32_177 = arith.constant 3 : i32
        %301 = arith.muli %arg18, %c3_i32_177 : i32
        %c1_i32_178 = arith.constant 1 : i32
        %302 = arith.addi %301, %c1_i32_178 : i32
        %c3_i32_179 = arith.constant 3 : i32
        %303 = arith.muli %302, %c3_i32_179 : i32
        %c1_i32_180 = arith.constant 1 : i32
        %304 = arith.addi %303, %c1_i32_180 : i32
        %c3_i32_181 = arith.constant 3 : i32
        %305 = arith.muli %304, %c3_i32_181 : i32
        %c0_i32_182 = arith.constant 0 : i32
        %306 = arith.addi %305, %c0_i32_182 : i32
        %307 = arith.index_cast %306 : i32 to index
        %308 = memref.load %arg2[%307] : memref<162xf32, #tpu.memory_space<smem>>
        %309 = arith.index_cast %300 : i32 to index
        %c0_183 = arith.constant 0 : index
        %c0_184 = arith.constant 0 : index
        %310 = vector.load %arg1[%309, %c0_183, %c0_184] : memref<96x32x128xf32, #tpu.memory_space<vmem>>, vector<1x30x128xf32>
        %311 = vector.shape_cast %310 : vector<1x30x128xf32> to vector<30x128xf32>
        %312 = vector.broadcast %308 : f32 to vector<30x128xf32>
        %313 = arith.mulf %312, %311 : vector<30x128xf32>
        %314 = arith.addf %290, %313 : vector<30x128xf32>
        %c1_i32_185 = arith.constant 1 : i32
        %315 = arith.addi %300, %c1_i32_185 : i32
        %316 = arith.index_cast %315 : i32 to index
        %c0_186 = arith.constant 0 : index
        %c0_187 = arith.constant 0 : index
        %317 = vector.load %arg1[%316, %c0_186, %c0_187] : memref<96x32x128xf32, #tpu.memory_space<vmem>>, vector<1x30x128xf32>
        %318 = vector.shape_cast %317 : vector<1x30x128xf32> to vector<30x128xf32>
        %319 = vector.broadcast %308 : f32 to vector<30x128xf32>
        %320 = arith.mulf %319, %318 : vector<30x128xf32>
        %321 = arith.addf %297, %320 : vector<30x128xf32>
        %c3_i32_188 = arith.constant 3 : i32
        %322 = arith.muli %arg18, %c3_i32_188 : i32
        %c1_i32_189 = arith.constant 1 : i32
        %323 = arith.addi %322, %c1_i32_189 : i32
        %c3_i32_190 = arith.constant 3 : i32
        %324 = arith.muli %323, %c3_i32_190 : i32
        %c1_i32_191 = arith.constant 1 : i32
        %325 = arith.addi %324, %c1_i32_191 : i32
        %c3_i32_192 = arith.constant 3 : i32
        %326 = arith.muli %325, %c3_i32_192 : i32
        %c1_i32_193 = arith.constant 1 : i32
        %327 = arith.addi %326, %c1_i32_193 : i32
        %328 = arith.index_cast %327 : i32 to index
        %329 = memref.load %arg2[%328] : memref<162xf32, #tpu.memory_space<smem>>
        %330 = arith.index_cast %300 : i32 to index
        %c1_194 = arith.constant 1 : index
        %c0_195 = arith.constant 0 : index
        %331 = vector.load %arg1[%330, %c1_194, %c0_195] : memref<96x32x128xf32, #tpu.memory_space<vmem>>, vector<1x30x128xf32>
        %332 = vector.shape_cast %331 : vector<1x30x128xf32> to vector<30x128xf32>
        %333 = vector.broadcast %329 : f32 to vector<30x128xf32>
        %334 = arith.mulf %333, %332 : vector<30x128xf32>
        %335 = arith.addf %314, %334 : vector<30x128xf32>
        %c1_i32_196 = arith.constant 1 : i32
        %336 = arith.addi %300, %c1_i32_196 : i32
        %337 = arith.index_cast %336 : i32 to index
        %c1_197 = arith.constant 1 : index
        %c0_198 = arith.constant 0 : index
        %338 = vector.load %arg1[%337, %c1_197, %c0_198] : memref<96x32x128xf32, #tpu.memory_space<vmem>>, vector<1x30x128xf32>
        %339 = vector.shape_cast %338 : vector<1x30x128xf32> to vector<30x128xf32>
        %340 = vector.broadcast %329 : f32 to vector<30x128xf32>
        %341 = arith.mulf %340, %339 : vector<30x128xf32>
        %342 = arith.addf %321, %341 : vector<30x128xf32>
        %c3_i32_199 = arith.constant 3 : i32
        %343 = arith.muli %arg18, %c3_i32_199 : i32
        %c1_i32_200 = arith.constant 1 : i32
        %344 = arith.addi %343, %c1_i32_200 : i32
        %c3_i32_201 = arith.constant 3 : i32
        %345 = arith.muli %344, %c3_i32_201 : i32
        %c1_i32_202 = arith.constant 1 : i32
        %346 = arith.addi %345, %c1_i32_202 : i32
        %c3_i32_203 = arith.constant 3 : i32
        %347 = arith.muli %346, %c3_i32_203 : i32
        %c2_i32_204 = arith.constant 2 : i32
        %348 = arith.addi %347, %c2_i32_204 : i32
        %349 = arith.index_cast %348 : i32 to index
        %350 = memref.load %arg2[%349] : memref<162xf32, #tpu.memory_space<smem>>
        %351 = arith.index_cast %300 : i32 to index
        %c2_205 = arith.constant 2 : index
        %c0_206 = arith.constant 0 : index
        %352 = vector.load %arg1[%351, %c2_205, %c0_206] : memref<96x32x128xf32, #tpu.memory_space<vmem>>, vector<1x30x128xf32>
        %353 = vector.shape_cast %352 : vector<1x30x128xf32> to vector<30x128xf32>
        %354 = vector.broadcast %350 : f32 to vector<30x128xf32>
        %355 = arith.mulf %354, %353 : vector<30x128xf32>
        %356 = arith.addf %335, %355 : vector<30x128xf32>
        %c1_i32_207 = arith.constant 1 : i32
        %357 = arith.addi %300, %c1_i32_207 : i32
        %358 = arith.index_cast %357 : i32 to index
        %c2_208 = arith.constant 2 : index
        %c0_209 = arith.constant 0 : index
        %359 = vector.load %arg1[%358, %c2_208, %c0_209] : memref<96x32x128xf32, #tpu.memory_space<vmem>>, vector<1x30x128xf32>
        %360 = vector.shape_cast %359 : vector<1x30x128xf32> to vector<30x128xf32>
        %361 = vector.broadcast %350 : f32 to vector<30x128xf32>
        %362 = arith.mulf %361, %360 : vector<30x128xf32>
        %363 = arith.addf %342, %362 : vector<30x128xf32>
        %c2_i32_210 = arith.constant 2 : i32
        %364 = arith.muli %c2_i32_210, %arg19 : i32
        %c32_i32_211 = arith.constant 32 : i32
        %365 = arith.addi %c32_i32_211, %364 : i32
        %c2_i32_212 = arith.constant 2 : i32
        %366 = arith.addi %365, %c2_i32_212 : i32
        %c3_i32_213 = arith.constant 3 : i32
        %367 = arith.muli %arg18, %c3_i32_213 : i32
        %c1_i32_214 = arith.constant 1 : i32
        %368 = arith.addi %367, %c1_i32_214 : i32
        %c3_i32_215 = arith.constant 3 : i32
        %369 = arith.muli %368, %c3_i32_215 : i32
        %c2_i32_216 = arith.constant 2 : i32
        %370 = arith.addi %369, %c2_i32_216 : i32
        %c3_i32_217 = arith.constant 3 : i32
        %371 = arith.muli %370, %c3_i32_217 : i32
        %c0_i32_218 = arith.constant 0 : i32
        %372 = arith.addi %371, %c0_i32_218 : i32
        %373 = arith.index_cast %372 : i32 to index
        %374 = memref.load %arg2[%373] : memref<162xf32, #tpu.memory_space<smem>>
        %375 = arith.index_cast %366 : i32 to index
        %c0_219 = arith.constant 0 : index
        %c0_220 = arith.constant 0 : index
        %376 = vector.load %arg1[%375, %c0_219, %c0_220] : memref<96x32x128xf32, #tpu.memory_space<vmem>>, vector<1x30x128xf32>
        %377 = vector.shape_cast %376 : vector<1x30x128xf32> to vector<30x128xf32>
        %378 = vector.broadcast %374 : f32 to vector<30x128xf32>
        %379 = arith.mulf %378, %377 : vector<30x128xf32>
        %380 = arith.addf %356, %379 : vector<30x128xf32>
        %c1_i32_221 = arith.constant 1 : i32
        %381 = arith.addi %366, %c1_i32_221 : i32
        %382 = arith.index_cast %381 : i32 to index
        %c0_222 = arith.constant 0 : index
        %c0_223 = arith.constant 0 : index
        %383 = vector.load %arg1[%382, %c0_222, %c0_223] : memref<96x32x128xf32, #tpu.memory_space<vmem>>, vector<1x30x128xf32>
        %384 = vector.shape_cast %383 : vector<1x30x128xf32> to vector<30x128xf32>
        %385 = vector.broadcast %374 : f32 to vector<30x128xf32>
        %386 = arith.mulf %385, %384 : vector<30x128xf32>
        %387 = arith.addf %363, %386 : vector<30x128xf32>
        %c3_i32_224 = arith.constant 3 : i32
        %388 = arith.muli %arg18, %c3_i32_224 : i32
        %c1_i32_225 = arith.constant 1 : i32
        %389 = arith.addi %388, %c1_i32_225 : i32
        %c3_i32_226 = arith.constant 3 : i32
        %390 = arith.muli %389, %c3_i32_226 : i32
        %c2_i32_227 = arith.constant 2 : i32
        %391 = arith.addi %390, %c2_i32_227 : i32
        %c3_i32_228 = arith.constant 3 : i32
        %392 = arith.muli %391, %c3_i32_228 : i32
        %c1_i32_229 = arith.constant 1 : i32
        %393 = arith.addi %392, %c1_i32_229 : i32
        %394 = arith.index_cast %393 : i32 to index
        %395 = memref.load %arg2[%394] : memref<162xf32, #tpu.memory_space<smem>>
        %396 = arith.index_cast %366 : i32 to index
        %c1_230 = arith.constant 1 : index
        %c0_231 = arith.constant 0 : index
        %397 = vector.load %arg1[%396, %c1_230, %c0_231] : memref<96x32x128xf32, #tpu.memory_space<vmem>>, vector<1x30x128xf32>
        %398 = vector.shape_cast %397 : vector<1x30x128xf32> to vector<30x128xf32>
        %399 = vector.broadcast %395 : f32 to vector<30x128xf32>
        %400 = arith.mulf %399, %398 : vector<30x128xf32>
        %401 = arith.addf %380, %400 : vector<30x128xf32>
        %c1_i32_232 = arith.constant 1 : i32
        %402 = arith.addi %366, %c1_i32_232 : i32
        %403 = arith.index_cast %402 : i32 to index
        %c1_233 = arith.constant 1 : index
        %c0_234 = arith.constant 0 : index
        %404 = vector.load %arg1[%403, %c1_233, %c0_234] : memref<96x32x128xf32, #tpu.memory_space<vmem>>, vector<1x30x128xf32>
        %405 = vector.shape_cast %404 : vector<1x30x128xf32> to vector<30x128xf32>
        %406 = vector.broadcast %395 : f32 to vector<30x128xf32>
        %407 = arith.mulf %406, %405 : vector<30x128xf32>
        %408 = arith.addf %387, %407 : vector<30x128xf32>
        %c3_i32_235 = arith.constant 3 : i32
        %409 = arith.muli %arg18, %c3_i32_235 : i32
        %c1_i32_236 = arith.constant 1 : i32
        %410 = arith.addi %409, %c1_i32_236 : i32
        %c3_i32_237 = arith.constant 3 : i32
        %411 = arith.muli %410, %c3_i32_237 : i32
        %c2_i32_238 = arith.constant 2 : i32
        %412 = arith.addi %411, %c2_i32_238 : i32
        %c3_i32_239 = arith.constant 3 : i32
        %413 = arith.muli %412, %c3_i32_239 : i32
        %c2_i32_240 = arith.constant 2 : i32
        %414 = arith.addi %413, %c2_i32_240 : i32
        %415 = arith.index_cast %414 : i32 to index
        %416 = memref.load %arg2[%415] : memref<162xf32, #tpu.memory_space<smem>>
        %417 = arith.index_cast %366 : i32 to index
        %c2_241 = arith.constant 2 : index
        %c0_242 = arith.constant 0 : index
        %418 = vector.load %arg1[%417, %c2_241, %c0_242] : memref<96x32x128xf32, #tpu.memory_space<vmem>>, vector<1x30x128xf32>
        %419 = vector.shape_cast %418 : vector<1x30x128xf32> to vector<30x128xf32>
        %420 = vector.broadcast %416 : f32 to vector<30x128xf32>
        %421 = arith.mulf %420, %419 : vector<30x128xf32>
        %422 = arith.addf %401, %421 : vector<30x128xf32>
        %c1_i32_243 = arith.constant 1 : i32
        %423 = arith.addi %366, %c1_i32_243 : i32
        %424 = arith.index_cast %423 : i32 to index
        %c2_244 = arith.constant 2 : index
        %c0_245 = arith.constant 0 : index
        %425 = vector.load %arg1[%424, %c2_244, %c0_245] : memref<96x32x128xf32, #tpu.memory_space<vmem>>, vector<1x30x128xf32>
        %426 = vector.shape_cast %425 : vector<1x30x128xf32> to vector<30x128xf32>
        %427 = vector.broadcast %416 : f32 to vector<30x128xf32>
        %428 = arith.mulf %427, %426 : vector<30x128xf32>
        %429 = arith.addf %408, %428 : vector<30x128xf32>
        %c2_i32_246 = arith.constant 2 : i32
        %430 = arith.muli %c2_i32_246, %arg19 : i32
        %c64_i32 = arith.constant 64 : i32
        %431 = arith.addi %c64_i32, %430 : i32
        %c0_i32_247 = arith.constant 0 : i32
        %432 = arith.addi %431, %c0_i32_247 : i32
        %c3_i32_248 = arith.constant 3 : i32
        %433 = arith.muli %arg18, %c3_i32_248 : i32
        %c2_i32_249 = arith.constant 2 : i32
        %434 = arith.addi %433, %c2_i32_249 : i32
        %c3_i32_250 = arith.constant 3 : i32
        %435 = arith.muli %434, %c3_i32_250 : i32
        %c0_i32_251 = arith.constant 0 : i32
        %436 = arith.addi %435, %c0_i32_251 : i32
        %c3_i32_252 = arith.constant 3 : i32
        %437 = arith.muli %436, %c3_i32_252 : i32
        %c0_i32_253 = arith.constant 0 : i32
        %438 = arith.addi %437, %c0_i32_253 : i32
        %439 = arith.index_cast %438 : i32 to index
        %440 = memref.load %arg2[%439] : memref<162xf32, #tpu.memory_space<smem>>
        %441 = arith.index_cast %432 : i32 to index
        %c0_254 = arith.constant 0 : index
        %c0_255 = arith.constant 0 : index
        %442 = vector.load %arg1[%441, %c0_254, %c0_255] : memref<96x32x128xf32, #tpu.memory_space<vmem>>, vector<1x30x128xf32>
        %443 = vector.shape_cast %442 : vector<1x30x128xf32> to vector<30x128xf32>
        %444 = vector.broadcast %440 : f32 to vector<30x128xf32>
        %445 = arith.mulf %444, %443 : vector<30x128xf32>
        %446 = arith.addf %422, %445 : vector<30x128xf32>
        %c1_i32_256 = arith.constant 1 : i32
        %447 = arith.addi %432, %c1_i32_256 : i32
        %448 = arith.index_cast %447 : i32 to index
        %c0_257 = arith.constant 0 : index
        %c0_258 = arith.constant 0 : index
        %449 = vector.load %arg1[%448, %c0_257, %c0_258] : memref<96x32x128xf32, #tpu.memory_space<vmem>>, vector<1x30x128xf32>
        %450 = vector.shape_cast %449 : vector<1x30x128xf32> to vector<30x128xf32>
        %451 = vector.broadcast %440 : f32 to vector<30x128xf32>
        %452 = arith.mulf %451, %450 : vector<30x128xf32>
        %453 = arith.addf %429, %452 : vector<30x128xf32>
        %c3_i32_259 = arith.constant 3 : i32
        %454 = arith.muli %arg18, %c3_i32_259 : i32
        %c2_i32_260 = arith.constant 2 : i32
        %455 = arith.addi %454, %c2_i32_260 : i32
        %c3_i32_261 = arith.constant 3 : i32
        %456 = arith.muli %455, %c3_i32_261 : i32
        %c0_i32_262 = arith.constant 0 : i32
        %457 = arith.addi %456, %c0_i32_262 : i32
        %c3_i32_263 = arith.constant 3 : i32
        %458 = arith.muli %457, %c3_i32_263 : i32
        %c1_i32_264 = arith.constant 1 : i32
        %459 = arith.addi %458, %c1_i32_264 : i32
        %460 = arith.index_cast %459 : i32 to index
        %461 = memref.load %arg2[%460] : memref<162xf32, #tpu.memory_space<smem>>
        %462 = arith.index_cast %432 : i32 to index
        %c1_265 = arith.constant 1 : index
        %c0_266 = arith.constant 0 : index
        %463 = vector.load %arg1[%462, %c1_265, %c0_266] : memref<96x32x128xf32, #tpu.memory_space<vmem>>, vector<1x30x128xf32>
        %464 = vector.shape_cast %463 : vector<1x30x128xf32> to vector<30x128xf32>
        %465 = vector.broadcast %461 : f32 to vector<30x128xf32>
        %466 = arith.mulf %465, %464 : vector<30x128xf32>
        %467 = arith.addf %446, %466 : vector<30x128xf32>
        %c1_i32_267 = arith.constant 1 : i32
        %468 = arith.addi %432, %c1_i32_267 : i32
        %469 = arith.index_cast %468 : i32 to index
        %c1_268 = arith.constant 1 : index
        %c0_269 = arith.constant 0 : index
        %470 = vector.load %arg1[%469, %c1_268, %c0_269] : memref<96x32x128xf32, #tpu.memory_space<vmem>>, vector<1x30x128xf32>
        %471 = vector.shape_cast %470 : vector<1x30x128xf32> to vector<30x128xf32>
        %472 = vector.broadcast %461 : f32 to vector<30x128xf32>
        %473 = arith.mulf %472, %471 : vector<30x128xf32>
        %474 = arith.addf %453, %473 : vector<30x128xf32>
        %c3_i32_270 = arith.constant 3 : i32
        %475 = arith.muli %arg18, %c3_i32_270 : i32
        %c2_i32_271 = arith.constant 2 : i32
        %476 = arith.addi %475, %c2_i32_271 : i32
        %c3_i32_272 = arith.constant 3 : i32
        %477 = arith.muli %476, %c3_i32_272 : i32
        %c0_i32_273 = arith.constant 0 : i32
        %478 = arith.addi %477, %c0_i32_273 : i32
        %c3_i32_274 = arith.constant 3 : i32
        %479 = arith.muli %478, %c3_i32_274 : i32
        %c2_i32_275 = arith.constant 2 : i32
        %480 = arith.addi %479, %c2_i32_275 : i32
        %481 = arith.index_cast %480 : i32 to index
        %482 = memref.load %arg2[%481] : memref<162xf32, #tpu.memory_space<smem>>
        %483 = arith.index_cast %432 : i32 to index
        %c2_276 = arith.constant 2 : index
        %c0_277 = arith.constant 0 : index
        %484 = vector.load %arg1[%483, %c2_276, %c0_277] : memref<96x32x128xf32, #tpu.memory_space<vmem>>, vector<1x30x128xf32>
        %485 = vector.shape_cast %484 : vector<1x30x128xf32> to vector<30x128xf32>
        %486 = vector.broadcast %482 : f32 to vector<30x128xf32>
        %487 = arith.mulf %486, %485 : vector<30x128xf32>
        %488 = arith.addf %467, %487 : vector<30x128xf32>
        %c1_i32_278 = arith.constant 1 : i32
        %489 = arith.addi %432, %c1_i32_278 : i32
        %490 = arith.index_cast %489 : i32 to index
        %c2_279 = arith.constant 2 : index
        %c0_280 = arith.constant 0 : index
        %491 = vector.load %arg1[%490, %c2_279, %c0_280] : memref<96x32x128xf32, #tpu.memory_space<vmem>>, vector<1x30x128xf32>
        %492 = vector.shape_cast %491 : vector<1x30x128xf32> to vector<30x128xf32>
        %493 = vector.broadcast %482 : f32 to vector<30x128xf32>
        %494 = arith.mulf %493, %492 : vector<30x128xf32>
        %495 = arith.addf %474, %494 : vector<30x128xf32>
        %c2_i32_281 = arith.constant 2 : i32
        %496 = arith.muli %c2_i32_281, %arg19 : i32
        %c64_i32_282 = arith.constant 64 : i32
        %497 = arith.addi %c64_i32_282, %496 : i32
        %c1_i32_283 = arith.constant 1 : i32
        %498 = arith.addi %497, %c1_i32_283 : i32
        %c3_i32_284 = arith.constant 3 : i32
        %499 = arith.muli %arg18, %c3_i32_284 : i32
        %c2_i32_285 = arith.constant 2 : i32
        %500 = arith.addi %499, %c2_i32_285 : i32
        %c3_i32_286 = arith.constant 3 : i32
        %501 = arith.muli %500, %c3_i32_286 : i32
        %c1_i32_287 = arith.constant 1 : i32
        %502 = arith.addi %501, %c1_i32_287 : i32
        %c3_i32_288 = arith.constant 3 : i32
        %503 = arith.muli %502, %c3_i32_288 : i32
        %c0_i32_289 = arith.constant 0 : i32
        %504 = arith.addi %503, %c0_i32_289 : i32
        %505 = arith.index_cast %504 : i32 to index
        %506 = memref.load %arg2[%505] : memref<162xf32, #tpu.memory_space<smem>>
        %507 = arith.index_cast %498 : i32 to index
        %c0_290 = arith.constant 0 : index
        %c0_291 = arith.constant 0 : index
        %508 = vector.load %arg1[%507, %c0_290, %c0_291] : memref<96x32x128xf32, #tpu.memory_space<vmem>>, vector<1x30x128xf32>
        %509 = vector.shape_cast %508 : vector<1x30x128xf32> to vector<30x128xf32>
        %510 = vector.broadcast %506 : f32 to vector<30x128xf32>
        %511 = arith.mulf %510, %509 : vector<30x128xf32>
        %512 = arith.addf %488, %511 : vector<30x128xf32>
        %c1_i32_292 = arith.constant 1 : i32
        %513 = arith.addi %498, %c1_i32_292 : i32
        %514 = arith.index_cast %513 : i32 to index
        %c0_293 = arith.constant 0 : index
        %c0_294 = arith.constant 0 : index
        %515 = vector.load %arg1[%514, %c0_293, %c0_294] : memref<96x32x128xf32, #tpu.memory_space<vmem>>, vector<1x30x128xf32>
        %516 = vector.shape_cast %515 : vector<1x30x128xf32> to vector<30x128xf32>
        %517 = vector.broadcast %506 : f32 to vector<30x128xf32>
        %518 = arith.mulf %517, %516 : vector<30x128xf32>
        %519 = arith.addf %495, %518 : vector<30x128xf32>
        %c3_i32_295 = arith.constant 3 : i32
        %520 = arith.muli %arg18, %c3_i32_295 : i32
        %c2_i32_296 = arith.constant 2 : i32
        %521 = arith.addi %520, %c2_i32_296 : i32
        %c3_i32_297 = arith.constant 3 : i32
        %522 = arith.muli %521, %c3_i32_297 : i32
        %c1_i32_298 = arith.constant 1 : i32
        %523 = arith.addi %522, %c1_i32_298 : i32
        %c3_i32_299 = arith.constant 3 : i32
        %524 = arith.muli %523, %c3_i32_299 : i32
        %c1_i32_300 = arith.constant 1 : i32
        %525 = arith.addi %524, %c1_i32_300 : i32
        %526 = arith.index_cast %525 : i32 to index
        %527 = memref.load %arg2[%526] : memref<162xf32, #tpu.memory_space<smem>>
        %528 = arith.index_cast %498 : i32 to index
        %c1_301 = arith.constant 1 : index
        %c0_302 = arith.constant 0 : index
        %529 = vector.load %arg1[%528, %c1_301, %c0_302] : memref<96x32x128xf32, #tpu.memory_space<vmem>>, vector<1x30x128xf32>
        %530 = vector.shape_cast %529 : vector<1x30x128xf32> to vector<30x128xf32>
        %531 = vector.broadcast %527 : f32 to vector<30x128xf32>
        %532 = arith.mulf %531, %530 : vector<30x128xf32>
        %533 = arith.addf %512, %532 : vector<30x128xf32>
        %c1_i32_303 = arith.constant 1 : i32
        %534 = arith.addi %498, %c1_i32_303 : i32
        %535 = arith.index_cast %534 : i32 to index
        %c1_304 = arith.constant 1 : index
        %c0_305 = arith.constant 0 : index
        %536 = vector.load %arg1[%535, %c1_304, %c0_305] : memref<96x32x128xf32, #tpu.memory_space<vmem>>, vector<1x30x128xf32>
        %537 = vector.shape_cast %536 : vector<1x30x128xf32> to vector<30x128xf32>
        %538 = vector.broadcast %527 : f32 to vector<30x128xf32>
        %539 = arith.mulf %538, %537 : vector<30x128xf32>
        %540 = arith.addf %519, %539 : vector<30x128xf32>
        %c3_i32_306 = arith.constant 3 : i32
        %541 = arith.muli %arg18, %c3_i32_306 : i32
        %c2_i32_307 = arith.constant 2 : i32
        %542 = arith.addi %541, %c2_i32_307 : i32
        %c3_i32_308 = arith.constant 3 : i32
        %543 = arith.muli %542, %c3_i32_308 : i32
        %c1_i32_309 = arith.constant 1 : i32
        %544 = arith.addi %543, %c1_i32_309 : i32
        %c3_i32_310 = arith.constant 3 : i32
        %545 = arith.muli %544, %c3_i32_310 : i32
        %c2_i32_311 = arith.constant 2 : i32
        %546 = arith.addi %545, %c2_i32_311 : i32
        %547 = arith.index_cast %546 : i32 to index
        %548 = memref.load %arg2[%547] : memref<162xf32, #tpu.memory_space<smem>>
        %549 = arith.index_cast %498 : i32 to index
        %c2_312 = arith.constant 2 : index
        %c0_313 = arith.constant 0 : index
        %550 = vector.load %arg1[%549, %c2_312, %c0_313] : memref<96x32x128xf32, #tpu.memory_space<vmem>>, vector<1x30x128xf32>
        %551 = vector.shape_cast %550 : vector<1x30x128xf32> to vector<30x128xf32>
        %552 = vector.broadcast %548 : f32 to vector<30x128xf32>
        %553 = arith.mulf %552, %551 : vector<30x128xf32>
        %554 = arith.addf %533, %553 : vector<30x128xf32>
        %c1_i32_314 = arith.constant 1 : i32
        %555 = arith.addi %498, %c1_i32_314 : i32
        %556 = arith.index_cast %555 : i32 to index
        %c2_315 = arith.constant 2 : index
        %c0_316 = arith.constant 0 : index
        %557 = vector.load %arg1[%556, %c2_315, %c0_316] : memref<96x32x128xf32, #tpu.memory_space<vmem>>, vector<1x30x128xf32>
        %558 = vector.shape_cast %557 : vector<1x30x128xf32> to vector<30x128xf32>
        %559 = vector.broadcast %548 : f32 to vector<30x128xf32>
        %560 = arith.mulf %559, %558 : vector<30x128xf32>
        %561 = arith.addf %540, %560 : vector<30x128xf32>
        %c2_i32_317 = arith.constant 2 : i32
        %562 = arith.muli %c2_i32_317, %arg19 : i32
        %c64_i32_318 = arith.constant 64 : i32
        %563 = arith.addi %c64_i32_318, %562 : i32
        %c2_i32_319 = arith.constant 2 : i32
        %564 = arith.addi %563, %c2_i32_319 : i32
        %c3_i32_320 = arith.constant 3 : i32
        %565 = arith.muli %arg18, %c3_i32_320 : i32
        %c2_i32_321 = arith.constant 2 : i32
        %566 = arith.addi %565, %c2_i32_321 : i32
        %c3_i32_322 = arith.constant 3 : i32
        %567 = arith.muli %566, %c3_i32_322 : i32
        %c2_i32_323 = arith.constant 2 : i32
        %568 = arith.addi %567, %c2_i32_323 : i32
        %c3_i32_324 = arith.constant 3 : i32
        %569 = arith.muli %568, %c3_i32_324 : i32
        %c0_i32_325 = arith.constant 0 : i32
        %570 = arith.addi %569, %c0_i32_325 : i32
        %571 = arith.index_cast %570 : i32 to index
        %572 = memref.load %arg2[%571] : memref<162xf32, #tpu.memory_space<smem>>
        %573 = arith.index_cast %564 : i32 to index
        %c0_326 = arith.constant 0 : index
        %c0_327 = arith.constant 0 : index
        %574 = vector.load %arg1[%573, %c0_326, %c0_327] : memref<96x32x128xf32, #tpu.memory_space<vmem>>, vector<1x30x128xf32>
        %575 = vector.shape_cast %574 : vector<1x30x128xf32> to vector<30x128xf32>
        %576 = vector.broadcast %572 : f32 to vector<30x128xf32>
        %577 = arith.mulf %576, %575 : vector<30x128xf32>
        %578 = arith.addf %554, %577 : vector<30x128xf32>
        %c1_i32_328 = arith.constant 1 : i32
        %579 = arith.addi %564, %c1_i32_328 : i32
        %580 = arith.index_cast %579 : i32 to index
        %c0_329 = arith.constant 0 : index
        %c0_330 = arith.constant 0 : index
        %581 = vector.load %arg1[%580, %c0_329, %c0_330] : memref<96x32x128xf32, #tpu.memory_space<vmem>>, vector<1x30x128xf32>
        %582 = vector.shape_cast %581 : vector<1x30x128xf32> to vector<30x128xf32>
        %583 = vector.broadcast %572 : f32 to vector<30x128xf32>
        %584 = arith.mulf %583, %582 : vector<30x128xf32>
        %585 = arith.addf %561, %584 : vector<30x128xf32>
        %c3_i32_331 = arith.constant 3 : i32
        %586 = arith.muli %arg18, %c3_i32_331 : i32
        %c2_i32_332 = arith.constant 2 : i32
        %587 = arith.addi %586, %c2_i32_332 : i32
        %c3_i32_333 = arith.constant 3 : i32
        %588 = arith.muli %587, %c3_i32_333 : i32
        %c2_i32_334 = arith.constant 2 : i32
        %589 = arith.addi %588, %c2_i32_334 : i32
        %c3_i32_335 = arith.constant 3 : i32
        %590 = arith.muli %589, %c3_i32_335 : i32
        %c1_i32_336 = arith.constant 1 : i32
        %591 = arith.addi %590, %c1_i32_336 : i32
        %592 = arith.index_cast %591 : i32 to index
        %593 = memref.load %arg2[%592] : memref<162xf32, #tpu.memory_space<smem>>
        %594 = arith.index_cast %564 : i32 to index
        %c1_337 = arith.constant 1 : index
        %c0_338 = arith.constant 0 : index
        %595 = vector.load %arg1[%594, %c1_337, %c0_338] : memref<96x32x128xf32, #tpu.memory_space<vmem>>, vector<1x30x128xf32>
        %596 = vector.shape_cast %595 : vector<1x30x128xf32> to vector<30x128xf32>
        %597 = vector.broadcast %593 : f32 to vector<30x128xf32>
        %598 = arith.mulf %597, %596 : vector<30x128xf32>
        %599 = arith.addf %578, %598 : vector<30x128xf32>
        %c1_i32_339 = arith.constant 1 : i32
        %600 = arith.addi %564, %c1_i32_339 : i32
        %601 = arith.index_cast %600 : i32 to index
        %c1_340 = arith.constant 1 : index
        %c0_341 = arith.constant 0 : index
        %602 = vector.load %arg1[%601, %c1_340, %c0_341] : memref<96x32x128xf32, #tpu.memory_space<vmem>>, vector<1x30x128xf32>
        %603 = vector.shape_cast %602 : vector<1x30x128xf32> to vector<30x128xf32>
        %604 = vector.broadcast %593 : f32 to vector<30x128xf32>
        %605 = arith.mulf %604, %603 : vector<30x128xf32>
        %606 = arith.addf %585, %605 : vector<30x128xf32>
        %c3_i32_342 = arith.constant 3 : i32
        %607 = arith.muli %arg18, %c3_i32_342 : i32
        %c2_i32_343 = arith.constant 2 : i32
        %608 = arith.addi %607, %c2_i32_343 : i32
        %c3_i32_344 = arith.constant 3 : i32
        %609 = arith.muli %608, %c3_i32_344 : i32
        %c2_i32_345 = arith.constant 2 : i32
        %610 = arith.addi %609, %c2_i32_345 : i32
        %c3_i32_346 = arith.constant 3 : i32
        %611 = arith.muli %610, %c3_i32_346 : i32
        %c2_i32_347 = arith.constant 2 : i32
        %612 = arith.addi %611, %c2_i32_347 : i32
        %613 = arith.index_cast %612 : i32 to index
        %614 = memref.load %arg2[%613] : memref<162xf32, #tpu.memory_space<smem>>
        %615 = arith.index_cast %564 : i32 to index
        %c2_348 = arith.constant 2 : index
        %c0_349 = arith.constant 0 : index
        %616 = vector.load %arg1[%615, %c2_348, %c0_349] : memref<96x32x128xf32, #tpu.memory_space<vmem>>, vector<1x30x128xf32>
        %617 = vector.shape_cast %616 : vector<1x30x128xf32> to vector<30x128xf32>
        %618 = vector.broadcast %614 : f32 to vector<30x128xf32>
        %619 = arith.mulf %618, %617 : vector<30x128xf32>
        %620 = arith.addf %599, %619 : vector<30x128xf32>
        %c1_i32_350 = arith.constant 1 : i32
        %621 = arith.addi %564, %c1_i32_350 : i32
        %622 = arith.index_cast %621 : i32 to index
        %c2_351 = arith.constant 2 : index
        %c0_352 = arith.constant 0 : index
        %623 = vector.load %arg1[%622, %c2_351, %c0_352] : memref<96x32x128xf32, #tpu.memory_space<vmem>>, vector<1x30x128xf32>
        %624 = vector.shape_cast %623 : vector<1x30x128xf32> to vector<30x128xf32>
        %625 = vector.broadcast %614 : f32 to vector<30x128xf32>
        %626 = arith.mulf %625, %624 : vector<30x128xf32>
        %627 = arith.addf %606, %626 : vector<30x128xf32>
        %628 = arith.maximumf %620, %627 : vector<30x128xf32>
        %629 = vector.extract_strided_slice %628 {offsets = [0, 0], sizes = [29, 128], strides = [1, 1]} : vector<30x128xf32> to vector<29x128xf32>
        %630 = vector.extract_strided_slice %628 {offsets = [1, 0], sizes = [29, 128], strides = [1, 1]} : vector<30x128xf32> to vector<29x128xf32>
        %631 = arith.maximumf %629, %630 : vector<29x128xf32>
        %cst_353 = arith.constant dense<0.000000e+00> : vector<15x128xf32>
        %632 = tpu.matmul %0, %631, %cst_353 {dimension_numbers = #tpu.dot_dimension_numbers<[1], [0], [0], [1], [0, 0, 1, 1], [], []>} : vector<15x29xf32>, vector<29x128xf32>, vector<15x128xf32> -> vector<15x128xf32>
        %cst_354 = arith.constant 0.000000e+00 : f32
        %633 = vector.broadcast %cst_354 : f32 to vector<15x128xf32>
        %634 = arith.maximumf %632, %633 : vector<15x128xf32>
        %c15_i32_355 = arith.constant 15 : i32
        %635 = arith.muli %arg18, %c15_i32_355 : i32
        %636 = arith.addi %635, %arg19 : i32
        %637 = arith.index_cast %636 : i32 to index
        %c0_356 = arith.constant 0 : index
        %c0_357 = arith.constant 0 : index
        %638 = vector.load %arg16[%637, %c0_356, %c0_357] : memref<90x15x128xf32, #tpu.memory_space<vmem>>, vector<1x15x128xf32>
        %639 = vector.shape_cast %638 : vector<1x15x128xf32> to vector<15x128xf32>
        %640 = vector.shape_cast %634 : vector<15x128xf32> to vector<1x15x128xf32>
        tpu.vector_store %arg16[%637, %c0_356, %c0_357], %640 {strides = array<i32>} : memref<90x15x128xf32, #tpu.memory_space<vmem>>, vector<1x15x128xf32>,
      }
      %c15_i32_34 = arith.constant 15 : i32
    }
    %c6_i32_1 = arith.constant 6 : i32
    %cst = arith.constant 0.000000e+00 : f32
    %2 = vector.broadcast %cst : f32 to vector<768x128xf32>
    %c0_2 = arith.constant 0 : index
    %c0_3 = arith.constant 0 : index
    %3 = vector.load %arg17[%c0_2, %c0_3] : memref<768x128xf32, #tpu.memory_space<vmem>>, vector<768x128xf32>
    tpu.vector_store %arg17[%c0_2, %c0_3], %2 {strides = array<i32>} : memref<768x128xf32, #tpu.memory_space<vmem>>, vector<768x128xf32>,
    %c0_4 = arith.constant 0 : index
    %c0_5 = arith.constant 0 : index
    %4 = vector.load %arg13[%c0_4, %c0_5] : memref<6x12xf32, #tpu.memory_space<vmem>>, vector<6x12xf32>
    %c0_i32_6 = arith.constant 0 : i32
    %c16_i32 = arith.constant 16 : i32
    %5 = arith.addi %c0_i32_6, %c16_i32 : i32
    %c1_i32_7 = arith.constant 1 : i32
    scf.for %arg18 = %c0_i32_6 to %5 step %c1_i32_7  : i32 {
      %c0_i32_32 = arith.constant 0 : i32
      %c6_i32_33 = arith.constant 6 : i32
      %29 = arith.addi %c0_i32_32, %c6_i32_33 : i32
      %c1_i32_34 = arith.constant 1 : i32
      scf.for %arg19 = %c0_i32_32 to %29 step %c1_i32_34  : i32 {
        %30 = arith.index_cast %arg18 : i32 to index
        %31 = memref.load %arg5[%30] : memref<16xf32, #tpu.memory_space<smem>>
        %32 = vector.broadcast %31 : f32 to vector<13x128xf32>
        %33 = vector.broadcast %31 : f32 to vector<13x128xf32>
        %c2_i32 = arith.constant 2 : i32
        %34 = arith.muli %c2_i32, %arg19 : i32
        %c0_i32_36 = arith.constant 0 : i32
        %35 = arith.addi %c0_i32_36, %34 : i32
        %c0_i32_37 = arith.constant 0 : i32
        %36 = arith.addi %35, %c0_i32_37 : i32
        %c6_i32_38 = arith.constant 6 : i32
        %37 = arith.muli %arg18, %c6_i32_38 : i32
        %c0_i32_39 = arith.constant 0 : i32
        %38 = arith.addi %37, %c0_i32_39 : i32
        %c3_i32 = arith.constant 3 : i32
        %39 = arith.muli %38, %c3_i32 : i32
        %c0_i32_40 = arith.constant 0 : i32
        %40 = arith.addi %39, %c0_i32_40 : i32
        %c3_i32_41 = arith.constant 3 : i32
        %41 = arith.muli %40, %c3_i32_41 : i32
        %c0_i32_42 = arith.constant 0 : i32
        %42 = arith.addi %41, %c0_i32_42 : i32
        %43 = arith.index_cast %42 : i32 to index
        %44 = memref.load %arg4[%43] : memref<864xf32, #tpu.memory_space<smem>>
        %45 = arith.index_cast %36 : i32 to index
        %c0_43 = arith.constant 0 : index
        %c0_44 = arith.constant 0 : index
        %46 = vector.load %arg16[%45, %c0_43, %c0_44] : memref<90x15x128xf32, #tpu.memory_space<vmem>>, vector<1x13x128xf32>
        %47 = vector.shape_cast %46 : vector<1x13x128xf32> to vector<13x128xf32>
        %48 = vector.broadcast %44 : f32 to vector<13x128xf32>
        %49 = arith.mulf %48, %47 : vector<13x128xf32>
        %50 = arith.addf %32, %49 : vector<13x128xf32>
        %c1_i32_45 = arith.constant 1 : i32
        %51 = arith.addi %36, %c1_i32_45 : i32
        %52 = arith.index_cast %51 : i32 to index
        %c0_46 = arith.constant 0 : index
        %c0_47 = arith.constant 0 : index
        %53 = vector.load %arg16[%52, %c0_46, %c0_47] : memref<90x15x128xf32, #tpu.memory_space<vmem>>, vector<1x13x128xf32>
        %54 = vector.shape_cast %53 : vector<1x13x128xf32> to vector<13x128xf32>
        %55 = vector.broadcast %44 : f32 to vector<13x128xf32>
        %56 = arith.mulf %55, %54 : vector<13x128xf32>
        %57 = arith.addf %33, %56 : vector<13x128xf32>
        %c6_i32_48 = arith.constant 6 : i32
        %58 = arith.muli %arg18, %c6_i32_48 : i32
        %c0_i32_49 = arith.constant 0 : i32
        %59 = arith.addi %58, %c0_i32_49 : i32
        %c3_i32_50 = arith.constant 3 : i32
        %60 = arith.muli %59, %c3_i32_50 : i32
        %c0_i32_51 = arith.constant 0 : i32
        %61 = arith.addi %60, %c0_i32_51 : i32
        %c3_i32_52 = arith.constant 3 : i32
        %62 = arith.muli %61, %c3_i32_52 : i32
        %c1_i32_53 = arith.constant 1 : i32
        %63 = arith.addi %62, %c1_i32_53 : i32
        %64 = arith.index_cast %63 : i32 to index
        %65 = memref.load %arg4[%64] : memref<864xf32, #tpu.memory_space<smem>>
        %66 = arith.index_cast %36 : i32 to index
        %c1 = arith.constant 1 : index
        %c0_54 = arith.constant 0 : index
        %67 = vector.load %arg16[%66, %c1, %c0_54] : memref<90x15x128xf32, #tpu.memory_space<vmem>>, vector<1x13x128xf32>
        %68 = vector.shape_cast %67 : vector<1x13x128xf32> to vector<13x128xf32>
        %69 = vector.broadcast %65 : f32 to vector<13x128xf32>
        %70 = arith.mulf %69, %68 : vector<13x128xf32>
        %71 = arith.addf %50, %70 : vector<13x128xf32>
        %c1_i32_55 = arith.constant 1 : i32
        %72 = arith.addi %36, %c1_i32_55 : i32
        %73 = arith.index_cast %72 : i32 to index
        %c1_56 = arith.constant 1 : index
        %c0_57 = arith.constant 0 : index
        %74 = vector.load %arg16[%73, %c1_56, %c0_57] : memref<90x15x128xf32, #tpu.memory_space<vmem>>, vector<1x13x128xf32>
        %75 = vector.shape_cast %74 : vector<1x13x128xf32> to vector<13x128xf32>
        %76 = vector.broadcast %65 : f32 to vector<13x128xf32>
        %77 = arith.mulf %76, %75 : vector<13x128xf32>
        %78 = arith.addf %57, %77 : vector<13x128xf32>
        %c6_i32_58 = arith.constant 6 : i32
        %79 = arith.muli %arg18, %c6_i32_58 : i32
        %c0_i32_59 = arith.constant 0 : i32
        %80 = arith.addi %79, %c0_i32_59 : i32
        %c3_i32_60 = arith.constant 3 : i32
        %81 = arith.muli %80, %c3_i32_60 : i32
        %c0_i32_61 = arith.constant 0 : i32
        %82 = arith.addi %81, %c0_i32_61 : i32
        %c3_i32_62 = arith.constant 3 : i32
        %83 = arith.muli %82, %c3_i32_62 : i32
        %c2_i32_63 = arith.constant 2 : i32
        %84 = arith.addi %83, %c2_i32_63 : i32
        %85 = arith.index_cast %84 : i32 to index
        %86 = memref.load %arg4[%85] : memref<864xf32, #tpu.memory_space<smem>>
        %87 = arith.index_cast %36 : i32 to index
        %c2 = arith.constant 2 : index
        %c0_64 = arith.constant 0 : index
        %88 = vector.load %arg16[%87, %c2, %c0_64] : memref<90x15x128xf32, #tpu.memory_space<vmem>>, vector<1x13x128xf32>
        %89 = vector.shape_cast %88 : vector<1x13x128xf32> to vector<13x128xf32>
        %90 = vector.broadcast %86 : f32 to vector<13x128xf32>
        %91 = arith.mulf %90, %89 : vector<13x128xf32>
        %92 = arith.addf %71, %91 : vector<13x128xf32>
        %c1_i32_65 = arith.constant 1 : i32
        %93 = arith.addi %36, %c1_i32_65 : i32
        %94 = arith.index_cast %93 : i32 to index
        %c2_66 = arith.constant 2 : index
        %c0_67 = arith.constant 0 : index
        %95 = vector.load %arg16[%94, %c2_66, %c0_67] : memref<90x15x128xf32, #tpu.memory_space<vmem>>, vector<1x13x128xf32>
        %96 = vector.shape_cast %95 : vector<1x13x128xf32> to vector<13x128xf32>
        %97 = vector.broadcast %86 : f32 to vector<13x128xf32>
        %98 = arith.mulf %97, %96 : vector<13x128xf32>
        %99 = arith.addf %78, %98 : vector<13x128xf32>
        %c2_i32_68 = arith.constant 2 : i32
        %100 = arith.muli %c2_i32_68, %arg19 : i32
        %c0_i32_69 = arith.constant 0 : i32
        %101 = arith.addi %c0_i32_69, %100 : i32
        %c1_i32_70 = arith.constant 1 : i32
        %102 = arith.addi %101, %c1_i32_70 : i32
        %c6_i32_71 = arith.constant 6 : i32
        %103 = arith.muli %arg18, %c6_i32_71 : i32
        %c0_i32_72 = arith.constant 0 : i32
        %104 = arith.addi %103, %c0_i32_72 : i32
        %c3_i32_73 = arith.constant 3 : i32
        %105 = arith.muli %104, %c3_i32_73 : i32
        %c1_i32_74 = arith.constant 1 : i32
        %106 = arith.addi %105, %c1_i32_74 : i32
        %c3_i32_75 = arith.constant 3 : i32
        %107 = arith.muli %106, %c3_i32_75 : i32
        %c0_i32_76 = arith.constant 0 : i32
        %108 = arith.addi %107, %c0_i32_76 : i32
        %109 = arith.index_cast %108 : i32 to index
        %110 = memref.load %arg4[%109] : memref<864xf32, #tpu.memory_space<smem>>
        %111 = arith.index_cast %102 : i32 to index
        %c0_77 = arith.constant 0 : index
        %c0_78 = arith.constant 0 : index
        %112 = vector.load %arg16[%111, %c0_77, %c0_78] : memref<90x15x128xf32, #tpu.memory_space<vmem>>, vector<1x13x128xf32>
        %113 = vector.shape_cast %112 : vector<1x13x128xf32> to vector<13x128xf32>
        %114 = vector.broadcast %110 : f32 to vector<13x128xf32>
        %115 = arith.mulf %114, %113 : vector<13x128xf32>
        %116 = arith.addf %92, %115 : vector<13x128xf32>
        %c1_i32_79 = arith.constant 1 : i32
        %117 = arith.addi %102, %c1_i32_79 : i32
        %118 = arith.index_cast %117 : i32 to index
        %c0_80 = arith.constant 0 : index
        %c0_81 = arith.constant 0 : index
        %119 = vector.load %arg16[%118, %c0_80, %c0_81] : memref<90x15x128xf32, #tpu.memory_space<vmem>>, vector<1x13x128xf32>
        %120 = vector.shape_cast %119 : vector<1x13x128xf32> to vector<13x128xf32>
        %121 = vector.broadcast %110 : f32 to vector<13x128xf32>
        %122 = arith.mulf %121, %120 : vector<13x128xf32>
        %123 = arith.addf %99, %122 : vector<13x128xf32>
        %c6_i32_82 = arith.constant 6 : i32
        %124 = arith.muli %arg18, %c6_i32_82 : i32
        %c0_i32_83 = arith.constant 0 : i32
        %125 = arith.addi %124, %c0_i32_83 : i32
        %c3_i32_84 = arith.constant 3 : i32
        %126 = arith.muli %125, %c3_i32_84 : i32
        %c1_i32_85 = arith.constant 1 : i32
        %127 = arith.addi %126, %c1_i32_85 : i32
        %c3_i32_86 = arith.constant 3 : i32
        %128 = arith.muli %127, %c3_i32_86 : i32
        %c1_i32_87 = arith.constant 1 : i32
        %129 = arith.addi %128, %c1_i32_87 : i32
        %130 = arith.index_cast %129 : i32 to index
        %131 = memref.load %arg4[%130] : memref<864xf32, #tpu.memory_space<smem>>
        %132 = arith.index_cast %102 : i32 to index
        %c1_88 = arith.constant 1 : index
        %c0_89 = arith.constant 0 : index
        %133 = vector.load %arg16[%132, %c1_88, %c0_89] : memref<90x15x128xf32, #tpu.memory_space<vmem>>, vector<1x13x128xf32>
        %134 = vector.shape_cast %133 : vector<1x13x128xf32> to vector<13x128xf32>
        %135 = vector.broadcast %131 : f32 to vector<13x128xf32>
        %136 = arith.mulf %135, %134 : vector<13x128xf32>
        %137 = arith.addf %116, %136 : vector<13x128xf32>
        %c1_i32_90 = arith.constant 1 : i32
        %138 = arith.addi %102, %c1_i32_90 : i32
        %139 = arith.index_cast %138 : i32 to index
        %c1_91 = arith.constant 1 : index
        %c0_92 = arith.constant 0 : index
        %140 = vector.load %arg16[%139, %c1_91, %c0_92] : memref<90x15x128xf32, #tpu.memory_space<vmem>>, vector<1x13x128xf32>
        %141 = vector.shape_cast %140 : vector<1x13x128xf32> to vector<13x128xf32>
        %142 = vector.broadcast %131 : f32 to vector<13x128xf32>
        %143 = arith.mulf %142, %141 : vector<13x128xf32>
        %144 = arith.addf %123, %143 : vector<13x128xf32>
        %c6_i32_93 = arith.constant 6 : i32
        %145 = arith.muli %arg18, %c6_i32_93 : i32
        %c0_i32_94 = arith.constant 0 : i32
        %146 = arith.addi %145, %c0_i32_94 : i32
        %c3_i32_95 = arith.constant 3 : i32
        %147 = arith.muli %146, %c3_i32_95 : i32
        %c1_i32_96 = arith.constant 1 : i32
        %148 = arith.addi %147, %c1_i32_96 : i32
        %c3_i32_97 = arith.constant 3 : i32
        %149 = arith.muli %148, %c3_i32_97 : i32
        %c2_i32_98 = arith.constant 2 : i32
        %150 = arith.addi %149, %c2_i32_98 : i32
        %151 = arith.index_cast %150 : i32 to index
        %152 = memref.load %arg4[%151] : memref<864xf32, #tpu.memory_space<smem>>
        %153 = arith.index_cast %102 : i32 to index
        %c2_99 = arith.constant 2 : index
        %c0_100 = arith.constant 0 : index
        %154 = vector.load %arg16[%153, %c2_99, %c0_100] : memref<90x15x128xf32, #tpu.memory_space<vmem>>, vector<1x13x128xf32>
        %155 = vector.shape_cast %154 : vector<1x13x128xf32> to vector<13x128xf32>
        %156 = vector.broadcast %152 : f32 to vector<13x128xf32>
        %157 = arith.mulf %156, %155 : vector<13x128xf32>
        %158 = arith.addf %137, %157 : vector<13x128xf32>
        %c1_i32_101 = arith.constant 1 : i32
        %159 = arith.addi %102, %c1_i32_101 : i32
        %160 = arith.index_cast %159 : i32 to index
        %c2_102 = arith.constant 2 : index
        %c0_103 = arith.constant 0 : index
        %161 = vector.load %arg16[%160, %c2_102, %c0_103] : memref<90x15x128xf32, #tpu.memory_space<vmem>>, vector<1x13x128xf32>
        %162 = vector.shape_cast %161 : vector<1x13x128xf32> to vector<13x128xf32>
        %163 = vector.broadcast %152 : f32 to vector<13x128xf32>
        %164 = arith.mulf %163, %162 : vector<13x128xf32>
        %165 = arith.addf %144, %164 : vector<13x128xf32>
        %c2_i32_104 = arith.constant 2 : i32
        %166 = arith.muli %c2_i32_104, %arg19 : i32
        %c0_i32_105 = arith.constant 0 : i32
        %167 = arith.addi %c0_i32_105, %166 : i32
        %c2_i32_106 = arith.constant 2 : i32
        %168 = arith.addi %167, %c2_i32_106 : i32
        %c6_i32_107 = arith.constant 6 : i32
        %169 = arith.muli %arg18, %c6_i32_107 : i32
        %c0_i32_108 = arith.constant 0 : i32
        %170 = arith.addi %169, %c0_i32_108 : i32
        %c3_i32_109 = arith.constant 3 : i32
        %171 = arith.muli %170, %c3_i32_109 : i32
        %c2_i32_110 = arith.constant 2 : i32
        %172 = arith.addi %171, %c2_i32_110 : i32
        %c3_i32_111 = arith.constant 3 : i32
        %173 = arith.muli %172, %c3_i32_111 : i32
        %c0_i32_112 = arith.constant 0 : i32
        %174 = arith.addi %173, %c0_i32_112 : i32
        %175 = arith.index_cast %174 : i32 to index
        %176 = memref.load %arg4[%175] : memref<864xf32, #tpu.memory_space<smem>>
        %177 = arith.index_cast %168 : i32 to index
        %c0_113 = arith.constant 0 : index
        %c0_114 = arith.constant 0 : index
        %178 = vector.load %arg16[%177, %c0_113, %c0_114] : memref<90x15x128xf32, #tpu.memory_space<vmem>>, vector<1x13x128xf32>
        %179 = vector.shape_cast %178 : vector<1x13x128xf32> to vector<13x128xf32>
        %180 = vector.broadcast %176 : f32 to vector<13x128xf32>
        %181 = arith.mulf %180, %179 : vector<13x128xf32>
        %182 = arith.addf %158, %181 : vector<13x128xf32>
        %c1_i32_115 = arith.constant 1 : i32
        %183 = arith.addi %168, %c1_i32_115 : i32
        %184 = arith.index_cast %183 : i32 to index
        %c0_116 = arith.constant 0 : index
        %c0_117 = arith.constant 0 : index
        %185 = vector.load %arg16[%184, %c0_116, %c0_117] : memref<90x15x128xf32, #tpu.memory_space<vmem>>, vector<1x13x128xf32>
        %186 = vector.shape_cast %185 : vector<1x13x128xf32> to vector<13x128xf32>
        %187 = vector.broadcast %176 : f32 to vector<13x128xf32>
        %188 = arith.mulf %187, %186 : vector<13x128xf32>
        %189 = arith.addf %165, %188 : vector<13x128xf32>
        %c6_i32_118 = arith.constant 6 : i32
        %190 = arith.muli %arg18, %c6_i32_118 : i32
        %c0_i32_119 = arith.constant 0 : i32
        %191 = arith.addi %190, %c0_i32_119 : i32
        %c3_i32_120 = arith.constant 3 : i32
        %192 = arith.muli %191, %c3_i32_120 : i32
        %c2_i32_121 = arith.constant 2 : i32
        %193 = arith.addi %192, %c2_i32_121 : i32
        %c3_i32_122 = arith.constant 3 : i32
        %194 = arith.muli %193, %c3_i32_122 : i32
        %c1_i32_123 = arith.constant 1 : i32
        %195 = arith.addi %194, %c1_i32_123 : i32
        %196 = arith.index_cast %195 : i32 to index
        %197 = memref.load %arg4[%196] : memref<864xf32, #tpu.memory_space<smem>>
        %198 = arith.index_cast %168 : i32 to index
        %c1_124 = arith.constant 1 : index
        %c0_125 = arith.constant 0 : index
        %199 = vector.load %arg16[%198, %c1_124, %c0_125] : memref<90x15x128xf32, #tpu.memory_space<vmem>>, vector<1x13x128xf32>
        %200 = vector.shape_cast %199 : vector<1x13x128xf32> to vector<13x128xf32>
        %201 = vector.broadcast %197 : f32 to vector<13x128xf32>
        %202 = arith.mulf %201, %200 : vector<13x128xf32>
        %203 = arith.addf %182, %202 : vector<13x128xf32>
        %c1_i32_126 = arith.constant 1 : i32
        %204 = arith.addi %168, %c1_i32_126 : i32
        %205 = arith.index_cast %204 : i32 to index
        %c1_127 = arith.constant 1 : index
        %c0_128 = arith.constant 0 : index
        %206 = vector.load %arg16[%205, %c1_127, %c0_128] : memref<90x15x128xf32, #tpu.memory_space<vmem>>, vector<1x13x128xf32>
        %207 = vector.shape_cast %206 : vector<1x13x128xf32> to vector<13x128xf32>
        %208 = vector.broadcast %197 : f32 to vector<13x128xf32>
        %209 = arith.mulf %208, %207 : vector<13x128xf32>
        %210 = arith.addf %189, %209 : vector<13x128xf32>
        %c6_i32_129 = arith.constant 6 : i32
        %211 = arith.muli %arg18, %c6_i32_129 : i32
        %c0_i32_130 = arith.constant 0 : i32
        %212 = arith.addi %211, %c0_i32_130 : i32
        %c3_i32_131 = arith.constant 3 : i32
        %213 = arith.muli %212, %c3_i32_131 : i32
        %c2_i32_132 = arith.constant 2 : i32
        %214 = arith.addi %213, %c2_i32_132 : i32
        %c3_i32_133 = arith.constant 3 : i32
        %215 = arith.muli %214, %c3_i32_133 : i32
        %c2_i32_134 = arith.constant 2 : i32
        %216 = arith.addi %215, %c2_i32_134 : i32
        %217 = arith.index_cast %216 : i32 to index
        %218 = memref.load %arg4[%217] : memref<864xf32, #tpu.memory_space<smem>>
        %219 = arith.index_cast %168 : i32 to index
        %c2_135 = arith.constant 2 : index
        %c0_136 = arith.constant 0 : index
        %220 = vector.load %arg16[%219, %c2_135, %c0_136] : memref<90x15x128xf32, #tpu.memory_space<vmem>>, vector<1x13x128xf32>
        %221 = vector.shape_cast %220 : vector<1x13x128xf32> to vector<13x128xf32>
        %222 = vector.broadcast %218 : f32 to vector<13x128xf32>
        %223 = arith.mulf %222, %221 : vector<13x128xf32>
        %224 = arith.addf %203, %223 : vector<13x128xf32>
        %c1_i32_137 = arith.constant 1 : i32
        %225 = arith.addi %168, %c1_i32_137 : i32
        %226 = arith.index_cast %225 : i32 to index
        %c2_138 = arith.constant 2 : index
        %c0_139 = arith.constant 0 : index
        %227 = vector.load %arg16[%226, %c2_138, %c0_139] : memref<90x15x128xf32, #tpu.memory_space<vmem>>, vector<1x13x128xf32>
        %228 = vector.shape_cast %227 : vector<1x13x128xf32> to vector<13x128xf32>
        %229 = vector.broadcast %218 : f32 to vector<13x128xf32>
        %230 = arith.mulf %229, %228 : vector<13x128xf32>
        %231 = arith.addf %210, %230 : vector<13x128xf32>
        %c2_i32_140 = arith.constant 2 : i32
        %232 = arith.muli %c2_i32_140, %arg19 : i32
        %c15_i32 = arith.constant 15 : i32
        %233 = arith.addi %c15_i32, %232 : i32
        %c0_i32_141 = arith.constant 0 : i32
        %234 = arith.addi %233, %c0_i32_141 : i32
        %c6_i32_142 = arith.constant 6 : i32
        %235 = arith.muli %arg18, %c6_i32_142 : i32
        %c1_i32_143 = arith.constant 1 : i32
        %236 = arith.addi %235, %c1_i32_143 : i32
        %c3_i32_144 = arith.constant 3 : i32
        %237 = arith.muli %236, %c3_i32_144 : i32
        %c0_i32_145 = arith.constant 0 : i32
        %238 = arith.addi %237, %c0_i32_145 : i32
        %c3_i32_146 = arith.constant 3 : i32
        %239 = arith.muli %238, %c3_i32_146 : i32
        %c0_i32_147 = arith.constant 0 : i32
        %240 = arith.addi %239, %c0_i32_147 : i32
        %241 = arith.index_cast %240 : i32 to index
        %242 = memref.load %arg4[%241] : memref<864xf32, #tpu.memory_space<smem>>
        %243 = arith.index_cast %234 : i32 to index
        %c0_148 = arith.constant 0 : index
        %c0_149 = arith.constant 0 : index
        %244 = vector.load %arg16[%243, %c0_148, %c0_149] : memref<90x15x128xf32, #tpu.memory_space<vmem>>, vector<1x13x128xf32>
        %245 = vector.shape_cast %244 : vector<1x13x128xf32> to vector<13x128xf32>
        %246 = vector.broadcast %242 : f32 to vector<13x128xf32>
        %247 = arith.mulf %246, %245 : vector<13x128xf32>
        %248 = arith.addf %224, %247 : vector<13x128xf32>
        %c1_i32_150 = arith.constant 1 : i32
        %249 = arith.addi %234, %c1_i32_150 : i32
        %250 = arith.index_cast %249 : i32 to index
        %c0_151 = arith.constant 0 : index
        %c0_152 = arith.constant 0 : index
        %251 = vector.load %arg16[%250, %c0_151, %c0_152] : memref<90x15x128xf32, #tpu.memory_space<vmem>>, vector<1x13x128xf32>
        %252 = vector.shape_cast %251 : vector<1x13x128xf32> to vector<13x128xf32>
        %253 = vector.broadcast %242 : f32 to vector<13x128xf32>
        %254 = arith.mulf %253, %252 : vector<13x128xf32>
        %255 = arith.addf %231, %254 : vector<13x128xf32>
        %c6_i32_153 = arith.constant 6 : i32
        %256 = arith.muli %arg18, %c6_i32_153 : i32
        %c1_i32_154 = arith.constant 1 : i32
        %257 = arith.addi %256, %c1_i32_154 : i32
        %c3_i32_155 = arith.constant 3 : i32
        %258 = arith.muli %257, %c3_i32_155 : i32
        %c0_i32_156 = arith.constant 0 : i32
        %259 = arith.addi %258, %c0_i32_156 : i32
        %c3_i32_157 = arith.constant 3 : i32
        %260 = arith.muli %259, %c3_i32_157 : i32
        %c1_i32_158 = arith.constant 1 : i32
        %261 = arith.addi %260, %c1_i32_158 : i32
        %262 = arith.index_cast %261 : i32 to index
        %263 = memref.load %arg4[%262] : memref<864xf32, #tpu.memory_space<smem>>
        %264 = arith.index_cast %234 : i32 to index
        %c1_159 = arith.constant 1 : index
        %c0_160 = arith.constant 0 : index
        %265 = vector.load %arg16[%264, %c1_159, %c0_160] : memref<90x15x128xf32, #tpu.memory_space<vmem>>, vector<1x13x128xf32>
        %266 = vector.shape_cast %265 : vector<1x13x128xf32> to vector<13x128xf32>
        %267 = vector.broadcast %263 : f32 to vector<13x128xf32>
        %268 = arith.mulf %267, %266 : vector<13x128xf32>
        %269 = arith.addf %248, %268 : vector<13x128xf32>
        %c1_i32_161 = arith.constant 1 : i32
        %270 = arith.addi %234, %c1_i32_161 : i32
        %271 = arith.index_cast %270 : i32 to index
        %c1_162 = arith.constant 1 : index
        %c0_163 = arith.constant 0 : index
        %272 = vector.load %arg16[%271, %c1_162, %c0_163] : memref<90x15x128xf32, #tpu.memory_space<vmem>>, vector<1x13x128xf32>
        %273 = vector.shape_cast %272 : vector<1x13x128xf32> to vector<13x128xf32>
        %274 = vector.broadcast %263 : f32 to vector<13x128xf32>
        %275 = arith.mulf %274, %273 : vector<13x128xf32>
        %276 = arith.addf %255, %275 : vector<13x128xf32>
        %c6_i32_164 = arith.constant 6 : i32
        %277 = arith.muli %arg18, %c6_i32_164 : i32
        %c1_i32_165 = arith.constant 1 : i32
        %278 = arith.addi %277, %c1_i32_165 : i32
        %c3_i32_166 = arith.constant 3 : i32
        %279 = arith.muli %278, %c3_i32_166 : i32
        %c0_i32_167 = arith.constant 0 : i32
        %280 = arith.addi %279, %c0_i32_167 : i32
        %c3_i32_168 = arith.constant 3 : i32
        %281 = arith.muli %280, %c3_i32_168 : i32
        %c2_i32_169 = arith.constant 2 : i32
        %282 = arith.addi %281, %c2_i32_169 : i32
        %283 = arith.index_cast %282 : i32 to index
        %284 = memref.load %arg4[%283] : memref<864xf32, #tpu.memory_space<smem>>
        %285 = arith.index_cast %234 : i32 to index
        %c2_170 = arith.constant 2 : index
        %c0_171 = arith.constant 0 : index
        %286 = vector.load %arg16[%285, %c2_170, %c0_171] : memref<90x15x128xf32, #tpu.memory_space<vmem>>, vector<1x13x128xf32>
        %287 = vector.shape_cast %286 : vector<1x13x128xf32> to vector<13x128xf32>
        %288 = vector.broadcast %284 : f32 to vector<13x128xf32>
        %289 = arith.mulf %288, %287 : vector<13x128xf32>
        %290 = arith.addf %269, %289 : vector<13x128xf32>
        %c1_i32_172 = arith.constant 1 : i32
        %291 = arith.addi %234, %c1_i32_172 : i32
        %292 = arith.index_cast %291 : i32 to index
        %c2_173 = arith.constant 2 : index
        %c0_174 = arith.constant 0 : index
        %293 = vector.load %arg16[%292, %c2_173, %c0_174] : memref<90x15x128xf32, #tpu.memory_space<vmem>>, vector<1x13x128xf32>
        %294 = vector.shape_cast %293 : vector<1x13x128xf32> to vector<13x128xf32>
        %295 = vector.broadcast %284 : f32 to vector<13x128xf32>
        %296 = arith.mulf %295, %294 : vector<13x128xf32>
        %297 = arith.addf %276, %296 : vector<13x128xf32>
        %c2_i32_175 = arith.constant 2 : i32
        %298 = arith.muli %c2_i32_175, %arg19 : i32
        %c15_i32_176 = arith.constant 15 : i32
        %299 = arith.addi %c15_i32_176, %298 : i32
        %c1_i32_177 = arith.constant 1 : i32
        %300 = arith.addi %299, %c1_i32_177 : i32
        %c6_i32_178 = arith.constant 6 : i32
        %301 = arith.muli %arg18, %c6_i32_178 : i32
        %c1_i32_179 = arith.constant 1 : i32
        %302 = arith.addi %301, %c1_i32_179 : i32
        %c3_i32_180 = arith.constant 3 : i32
        %303 = arith.muli %302, %c3_i32_180 : i32
        %c1_i32_181 = arith.constant 1 : i32
        %304 = arith.addi %303, %c1_i32_181 : i32
        %c3_i32_182 = arith.constant 3 : i32
        %305 = arith.muli %304, %c3_i32_182 : i32
        %c0_i32_183 = arith.constant 0 : i32
        %306 = arith.addi %305, %c0_i32_183 : i32
        %307 = arith.index_cast %306 : i32 to index
        %308 = memref.load %arg4[%307] : memref<864xf32, #tpu.memory_space<smem>>
        %309 = arith.index_cast %300 : i32 to index
        %c0_184 = arith.constant 0 : index
        %c0_185 = arith.constant 0 : index
        %310 = vector.load %arg16[%309, %c0_184, %c0_185] : memref<90x15x128xf32, #tpu.memory_space<vmem>>, vector<1x13x128xf32>
        %311 = vector.shape_cast %310 : vector<1x13x128xf32> to vector<13x128xf32>
        %312 = vector.broadcast %308 : f32 to vector<13x128xf32>
        %313 = arith.mulf %312, %311 : vector<13x128xf32>
        %314 = arith.addf %290, %313 : vector<13x128xf32>
        %c1_i32_186 = arith.constant 1 : i32
        %315 = arith.addi %300, %c1_i32_186 : i32
        %316 = arith.index_cast %315 : i32 to index
        %c0_187 = arith.constant 0 : index
        %c0_188 = arith.constant 0 : index
        %317 = vector.load %arg16[%316, %c0_187, %c0_188] : memref<90x15x128xf32, #tpu.memory_space<vmem>>, vector<1x13x128xf32>
        %318 = vector.shape_cast %317 : vector<1x13x128xf32> to vector<13x128xf32>
        %319 = vector.broadcast %308 : f32 to vector<13x128xf32>
        %320 = arith.mulf %319, %318 : vector<13x128xf32>
        %321 = arith.addf %297, %320 : vector<13x128xf32>
        %c6_i32_189 = arith.constant 6 : i32
        %322 = arith.muli %arg18, %c6_i32_189 : i32
        %c1_i32_190 = arith.constant 1 : i32
        %323 = arith.addi %322, %c1_i32_190 : i32
        %c3_i32_191 = arith.constant 3 : i32
        %324 = arith.muli %323, %c3_i32_191 : i32
        %c1_i32_192 = arith.constant 1 : i32
        %325 = arith.addi %324, %c1_i32_192 : i32
        %c3_i32_193 = arith.constant 3 : i32
        %326 = arith.muli %325, %c3_i32_193 : i32
        %c1_i32_194 = arith.constant 1 : i32
        %327 = arith.addi %326, %c1_i32_194 : i32
        %328 = arith.index_cast %327 : i32 to index
        %329 = memref.load %arg4[%328] : memref<864xf32, #tpu.memory_space<smem>>
        %330 = arith.index_cast %300 : i32 to index
        %c1_195 = arith.constant 1 : index
        %c0_196 = arith.constant 0 : index
        %331 = vector.load %arg16[%330, %c1_195, %c0_196] : memref<90x15x128xf32, #tpu.memory_space<vmem>>, vector<1x13x128xf32>
        %332 = vector.shape_cast %331 : vector<1x13x128xf32> to vector<13x128xf32>
        %333 = vector.broadcast %329 : f32 to vector<13x128xf32>
        %334 = arith.mulf %333, %332 : vector<13x128xf32>
        %335 = arith.addf %314, %334 : vector<13x128xf32>
        %c1_i32_197 = arith.constant 1 : i32
        %336 = arith.addi %300, %c1_i32_197 : i32
        %337 = arith.index_cast %336 : i32 to index
        %c1_198 = arith.constant 1 : index
        %c0_199 = arith.constant 0 : index
        %338 = vector.load %arg16[%337, %c1_198, %c0_199] : memref<90x15x128xf32, #tpu.memory_space<vmem>>, vector<1x13x128xf32>
        %339 = vector.shape_cast %338 : vector<1x13x128xf32> to vector<13x128xf32>
        %340 = vector.broadcast %329 : f32 to vector<13x128xf32>
        %341 = arith.mulf %340, %339 : vector<13x128xf32>
        %342 = arith.addf %321, %341 : vector<13x128xf32>
        %c6_i32_200 = arith.constant 6 : i32
        %343 = arith.muli %arg18, %c6_i32_200 : i32
        %c1_i32_201 = arith.constant 1 : i32
        %344 = arith.addi %343, %c1_i32_201 : i32
        %c3_i32_202 = arith.constant 3 : i32
        %345 = arith.muli %344, %c3_i32_202 : i32
        %c1_i32_203 = arith.constant 1 : i32
        %346 = arith.addi %345, %c1_i32_203 : i32
        %c3_i32_204 = arith.constant 3 : i32
        %347 = arith.muli %346, %c3_i32_204 : i32
        %c2_i32_205 = arith.constant 2 : i32
        %348 = arith.addi %347, %c2_i32_205 : i32
        %349 = arith.index_cast %348 : i32 to index
        %350 = memref.load %arg4[%349] : memref<864xf32, #tpu.memory_space<smem>>
        %351 = arith.index_cast %300 : i32 to index
        %c2_206 = arith.constant 2 : index
        %c0_207 = arith.constant 0 : index
        %352 = vector.load %arg16[%351, %c2_206, %c0_207] : memref<90x15x128xf32, #tpu.memory_space<vmem>>, vector<1x13x128xf32>
        %353 = vector.shape_cast %352 : vector<1x13x128xf32> to vector<13x128xf32>
        %354 = vector.broadcast %350 : f32 to vector<13x128xf32>
        %355 = arith.mulf %354, %353 : vector<13x128xf32>
        %356 = arith.addf %335, %355 : vector<13x128xf32>
        %c1_i32_208 = arith.constant 1 : i32
        %357 = arith.addi %300, %c1_i32_208 : i32
        %358 = arith.index_cast %357 : i32 to index
        %c2_209 = arith.constant 2 : index
        %c0_210 = arith.constant 0 : index
        %359 = vector.load %arg16[%358, %c2_209, %c0_210] : memref<90x15x128xf32, #tpu.memory_space<vmem>>, vector<1x13x128xf32>
        %360 = vector.shape_cast %359 : vector<1x13x128xf32> to vector<13x128xf32>
        %361 = vector.broadcast %350 : f32 to vector<13x128xf32>
        %362 = arith.mulf %361, %360 : vector<13x128xf32>
        %363 = arith.addf %342, %362 : vector<13x128xf32>
        %c2_i32_211 = arith.constant 2 : i32
        %364 = arith.muli %c2_i32_211, %arg19 : i32
        %c15_i32_212 = arith.constant 15 : i32
        %365 = arith.addi %c15_i32_212, %364 : i32
        %c2_i32_213 = arith.constant 2 : i32
        %366 = arith.addi %365, %c2_i32_213 : i32
        %c6_i32_214 = arith.constant 6 : i32
        %367 = arith.muli %arg18, %c6_i32_214 : i32
        %c1_i32_215 = arith.constant 1 : i32
        %368 = arith.addi %367, %c1_i32_215 : i32
        %c3_i32_216 = arith.constant 3 : i32
        %369 = arith.muli %368, %c3_i32_216 : i32
        %c2_i32_217 = arith.constant 2 : i32
        %370 = arith.addi %369, %c2_i32_217 : i32
        %c3_i32_218 = arith.constant 3 : i32
        %371 = arith.muli %370, %c3_i32_218 : i32
        %c0_i32_219 = arith.constant 0 : i32
        %372 = arith.addi %371, %c0_i32_219 : i32
        %373 = arith.index_cast %372 : i32 to index
        %374 = memref.load %arg4[%373] : memref<864xf32, #tpu.memory_space<smem>>
        %375 = arith.index_cast %366 : i32 to index
        %c0_220 = arith.constant 0 : index
        %c0_221 = arith.constant 0 : index
        %376 = vector.load %arg16[%375, %c0_220, %c0_221] : memref<90x15x128xf32, #tpu.memory_space<vmem>>, vector<1x13x128xf32>
        %377 = vector.shape_cast %376 : vector<1x13x128xf32> to vector<13x128xf32>
        %378 = vector.broadcast %374 : f32 to vector<13x128xf32>
        %379 = arith.mulf %378, %377 : vector<13x128xf32>
        %380 = arith.addf %356, %379 : vector<13x128xf32>
        %c1_i32_222 = arith.constant 1 : i32
        %381 = arith.addi %366, %c1_i32_222 : i32
        %382 = arith.index_cast %381 : i32 to index
        %c0_223 = arith.constant 0 : index
        %c0_224 = arith.constant 0 : index
        %383 = vector.load %arg16[%382, %c0_223, %c0_224] : memref<90x15x128xf32, #tpu.memory_space<vmem>>, vector<1x13x128xf32>
        %384 = vector.shape_cast %383 : vector<1x13x128xf32> to vector<13x128xf32>
        %385 = vector.broadcast %374 : f32 to vector<13x128xf32>
        %386 = arith.mulf %385, %384 : vector<13x128xf32>
        %387 = arith.addf %363, %386 : vector<13x128xf32>
        %c6_i32_225 = arith.constant 6 : i32
        %388 = arith.muli %arg18, %c6_i32_225 : i32
        %c1_i32_226 = arith.constant 1 : i32
        %389 = arith.addi %388, %c1_i32_226 : i32
        %c3_i32_227 = arith.constant 3 : i32
        %390 = arith.muli %389, %c3_i32_227 : i32
        %c2_i32_228 = arith.constant 2 : i32
        %391 = arith.addi %390, %c2_i32_228 : i32
        %c3_i32_229 = arith.constant 3 : i32
        %392 = arith.muli %391, %c3_i32_229 : i32
        %c1_i32_230 = arith.constant 1 : i32
        %393 = arith.addi %392, %c1_i32_230 : i32
        %394 = arith.index_cast %393 : i32 to index
        %395 = memref.load %arg4[%394] : memref<864xf32, #tpu.memory_space<smem>>
        %396 = arith.index_cast %366 : i32 to index
        %c1_231 = arith.constant 1 : index
        %c0_232 = arith.constant 0 : index
        %397 = vector.load %arg16[%396, %c1_231, %c0_232] : memref<90x15x128xf32, #tpu.memory_space<vmem>>, vector<1x13x128xf32>
        %398 = vector.shape_cast %397 : vector<1x13x128xf32> to vector<13x128xf32>
        %399 = vector.broadcast %395 : f32 to vector<13x128xf32>
        %400 = arith.mulf %399, %398 : vector<13x128xf32>
        %401 = arith.addf %380, %400 : vector<13x128xf32>
        %c1_i32_233 = arith.constant 1 : i32
        %402 = arith.addi %366, %c1_i32_233 : i32
        %403 = arith.index_cast %402 : i32 to index
        %c1_234 = arith.constant 1 : index
        %c0_235 = arith.constant 0 : index
        %404 = vector.load %arg16[%403, %c1_234, %c0_235] : memref<90x15x128xf32, #tpu.memory_space<vmem>>, vector<1x13x128xf32>
        %405 = vector.shape_cast %404 : vector<1x13x128xf32> to vector<13x128xf32>
        %406 = vector.broadcast %395 : f32 to vector<13x128xf32>
        %407 = arith.mulf %406, %405 : vector<13x128xf32>
        %408 = arith.addf %387, %407 : vector<13x128xf32>
        %c6_i32_236 = arith.constant 6 : i32
        %409 = arith.muli %arg18, %c6_i32_236 : i32
        %c1_i32_237 = arith.constant 1 : i32
        %410 = arith.addi %409, %c1_i32_237 : i32
        %c3_i32_238 = arith.constant 3 : i32
        %411 = arith.muli %410, %c3_i32_238 : i32
        %c2_i32_239 = arith.constant 2 : i32
        %412 = arith.addi %411, %c2_i32_239 : i32
        %c3_i32_240 = arith.constant 3 : i32
        %413 = arith.muli %412, %c3_i32_240 : i32
        %c2_i32_241 = arith.constant 2 : i32
        %414 = arith.addi %413, %c2_i32_241 : i32
        %415 = arith.index_cast %414 : i32 to index
        %416 = memref.load %arg4[%415] : memref<864xf32, #tpu.memory_space<smem>>
        %417 = arith.index_cast %366 : i32 to index
        %c2_242 = arith.constant 2 : index
        %c0_243 = arith.constant 0 : index
        %418 = vector.load %arg16[%417, %c2_242, %c0_243] : memref<90x15x128xf32, #tpu.memory_space<vmem>>, vector<1x13x128xf32>
        %419 = vector.shape_cast %418 : vector<1x13x128xf32> to vector<13x128xf32>
        %420 = vector.broadcast %416 : f32 to vector<13x128xf32>
        %421 = arith.mulf %420, %419 : vector<13x128xf32>
        %422 = arith.addf %401, %421 : vector<13x128xf32>
        %c1_i32_244 = arith.constant 1 : i32
        %423 = arith.addi %366, %c1_i32_244 : i32
        %424 = arith.index_cast %423 : i32 to index
        %c2_245 = arith.constant 2 : index
        %c0_246 = arith.constant 0 : index
        %425 = vector.load %arg16[%424, %c2_245, %c0_246] : memref<90x15x128xf32, #tpu.memory_space<vmem>>, vector<1x13x128xf32>
        %426 = vector.shape_cast %425 : vector<1x13x128xf32> to vector<13x128xf32>
        %427 = vector.broadcast %416 : f32 to vector<13x128xf32>
        %428 = arith.mulf %427, %426 : vector<13x128xf32>
        %429 = arith.addf %408, %428 : vector<13x128xf32>
        %c2_i32_247 = arith.constant 2 : i32
        %430 = arith.muli %c2_i32_247, %arg19 : i32
        %c30_i32 = arith.constant 30 : i32
        %431 = arith.addi %c30_i32, %430 : i32
        %c0_i32_248 = arith.constant 0 : i32
        %432 = arith.addi %431, %c0_i32_248 : i32
        %c6_i32_249 = arith.constant 6 : i32
        %433 = arith.muli %arg18, %c6_i32_249 : i32
        %c2_i32_250 = arith.constant 2 : i32
        %434 = arith.addi %433, %c2_i32_250 : i32
        %c3_i32_251 = arith.constant 3 : i32
        %435 = arith.muli %434, %c3_i32_251 : i32
        %c0_i32_252 = arith.constant 0 : i32
        %436 = arith.addi %435, %c0_i32_252 : i32
        %c3_i32_253 = arith.constant 3 : i32
        %437 = arith.muli %436, %c3_i32_253 : i32
        %c0_i32_254 = arith.constant 0 : i32
        %438 = arith.addi %437, %c0_i32_254 : i32
        %439 = arith.index_cast %438 : i32 to index
        %440 = memref.load %arg4[%439] : memref<864xf32, #tpu.memory_space<smem>>
        %441 = arith.index_cast %432 : i32 to index
        %c0_255 = arith.constant 0 : index
        %c0_256 = arith.constant 0 : index
        %442 = vector.load %arg16[%441, %c0_255, %c0_256] : memref<90x15x128xf32, #tpu.memory_space<vmem>>, vector<1x13x128xf32>
        %443 = vector.shape_cast %442 : vector<1x13x128xf32> to vector<13x128xf32>
        %444 = vector.broadcast %440 : f32 to vector<13x128xf32>
        %445 = arith.mulf %444, %443 : vector<13x128xf32>
        %446 = arith.addf %422, %445 : vector<13x128xf32>
        %c1_i32_257 = arith.constant 1 : i32
        %447 = arith.addi %432, %c1_i32_257 : i32
        %448 = arith.index_cast %447 : i32 to index
        %c0_258 = arith.constant 0 : index
        %c0_259 = arith.constant 0 : index
        %449 = vector.load %arg16[%448, %c0_258, %c0_259] : memref<90x15x128xf32, #tpu.memory_space<vmem>>, vector<1x13x128xf32>
        %450 = vector.shape_cast %449 : vector<1x13x128xf32> to vector<13x128xf32>
        %451 = vector.broadcast %440 : f32 to vector<13x128xf32>
        %452 = arith.mulf %451, %450 : vector<13x128xf32>
        %453 = arith.addf %429, %452 : vector<13x128xf32>
        %c6_i32_260 = arith.constant 6 : i32
        %454 = arith.muli %arg18, %c6_i32_260 : i32
        %c2_i32_261 = arith.constant 2 : i32
        %455 = arith.addi %454, %c2_i32_261 : i32
        %c3_i32_262 = arith.constant 3 : i32
        %456 = arith.muli %455, %c3_i32_262 : i32
        %c0_i32_263 = arith.constant 0 : i32
        %457 = arith.addi %456, %c0_i32_263 : i32
        %c3_i32_264 = arith.constant 3 : i32
        %458 = arith.muli %457, %c3_i32_264 : i32
        %c1_i32_265 = arith.constant 1 : i32
        %459 = arith.addi %458, %c1_i32_265 : i32
        %460 = arith.index_cast %459 : i32 to index
        %461 = memref.load %arg4[%460] : memref<864xf32, #tpu.memory_space<smem>>
        %462 = arith.index_cast %432 : i32 to index
        %c1_266 = arith.constant 1 : index
        %c0_267 = arith.constant 0 : index
        %463 = vector.load %arg16[%462, %c1_266, %c0_267] : memref<90x15x128xf32, #tpu.memory_space<vmem>>, vector<1x13x128xf32>
        %464 = vector.shape_cast %463 : vector<1x13x128xf32> to vector<13x128xf32>
        %465 = vector.broadcast %461 : f32 to vector<13x128xf32>
        %466 = arith.mulf %465, %464 : vector<13x128xf32>
        %467 = arith.addf %446, %466 : vector<13x128xf32>
        %c1_i32_268 = arith.constant 1 : i32
        %468 = arith.addi %432, %c1_i32_268 : i32
        %469 = arith.index_cast %468 : i32 to index
        %c1_269 = arith.constant 1 : index
        %c0_270 = arith.constant 0 : index
        %470 = vector.load %arg16[%469, %c1_269, %c0_270] : memref<90x15x128xf32, #tpu.memory_space<vmem>>, vector<1x13x128xf32>
        %471 = vector.shape_cast %470 : vector<1x13x128xf32> to vector<13x128xf32>
        %472 = vector.broadcast %461 : f32 to vector<13x128xf32>
        %473 = arith.mulf %472, %471 : vector<13x128xf32>
        %474 = arith.addf %453, %473 : vector<13x128xf32>
        %c6_i32_271 = arith.constant 6 : i32
        %475 = arith.muli %arg18, %c6_i32_271 : i32
        %c2_i32_272 = arith.constant 2 : i32
        %476 = arith.addi %475, %c2_i32_272 : i32
        %c3_i32_273 = arith.constant 3 : i32
        %477 = arith.muli %476, %c3_i32_273 : i32
        %c0_i32_274 = arith.constant 0 : i32
        %478 = arith.addi %477, %c0_i32_274 : i32
        %c3_i32_275 = arith.constant 3 : i32
        %479 = arith.muli %478, %c3_i32_275 : i32
        %c2_i32_276 = arith.constant 2 : i32
        %480 = arith.addi %479, %c2_i32_276 : i32
        %481 = arith.index_cast %480 : i32 to index
        %482 = memref.load %arg4[%481] : memref<864xf32, #tpu.memory_space<smem>>
        %483 = arith.index_cast %432 : i32 to index
        %c2_277 = arith.constant 2 : index
        %c0_278 = arith.constant 0 : index
        %484 = vector.load %arg16[%483, %c2_277, %c0_278] : memref<90x15x128xf32, #tpu.memory_space<vmem>>, vector<1x13x128xf32>
        %485 = vector.shape_cast %484 : vector<1x13x128xf32> to vector<13x128xf32>
        %486 = vector.broadcast %482 : f32 to vector<13x128xf32>
        %487 = arith.mulf %486, %485 : vector<13x128xf32>
        %488 = arith.addf %467, %487 : vector<13x128xf32>
        %c1_i32_279 = arith.constant 1 : i32
        %489 = arith.addi %432, %c1_i32_279 : i32
        %490 = arith.index_cast %489 : i32 to index
        %c2_280 = arith.constant 2 : index
        %c0_281 = arith.constant 0 : index
        %491 = vector.load %arg16[%490, %c2_280, %c0_281] : memref<90x15x128xf32, #tpu.memory_space<vmem>>, vector<1x13x128xf32>
        %492 = vector.shape_cast %491 : vector<1x13x128xf32> to vector<13x128xf32>
        %493 = vector.broadcast %482 : f32 to vector<13x128xf32>
        %494 = arith.mulf %493, %492 : vector<13x128xf32>
        %495 = arith.addf %474, %494 : vector<13x128xf32>
        %c2_i32_282 = arith.constant 2 : i32
        %496 = arith.muli %c2_i32_282, %arg19 : i32
        %c30_i32_283 = arith.constant 30 : i32
        %497 = arith.addi %c30_i32_283, %496 : i32
        %c1_i32_284 = arith.constant 1 : i32
        %498 = arith.addi %497, %c1_i32_284 : i32
        %c6_i32_285 = arith.constant 6 : i32
        %499 = arith.muli %arg18, %c6_i32_285 : i32
        %c2_i32_286 = arith.constant 2 : i32
        %500 = arith.addi %499, %c2_i32_286 : i32
        %c3_i32_287 = arith.constant 3 : i32
        %501 = arith.muli %500, %c3_i32_287 : i32
        %c1_i32_288 = arith.constant 1 : i32
        %502 = arith.addi %501, %c1_i32_288 : i32
        %c3_i32_289 = arith.constant 3 : i32
        %503 = arith.muli %502, %c3_i32_289 : i32
        %c0_i32_290 = arith.constant 0 : i32
        %504 = arith.addi %503, %c0_i32_290 : i32
        %505 = arith.index_cast %504 : i32 to index
        %506 = memref.load %arg4[%505] : memref<864xf32, #tpu.memory_space<smem>>
        %507 = arith.index_cast %498 : i32 to index
        %c0_291 = arith.constant 0 : index
        %c0_292 = arith.constant 0 : index
        %508 = vector.load %arg16[%507, %c0_291, %c0_292] : memref<90x15x128xf32, #tpu.memory_space<vmem>>, vector<1x13x128xf32>
        %509 = vector.shape_cast %508 : vector<1x13x128xf32> to vector<13x128xf32>
        %510 = vector.broadcast %506 : f32 to vector<13x128xf32>
        %511 = arith.mulf %510, %509 : vector<13x128xf32>
        %512 = arith.addf %488, %511 : vector<13x128xf32>
        %c1_i32_293 = arith.constant 1 : i32
        %513 = arith.addi %498, %c1_i32_293 : i32
        %514 = arith.index_cast %513 : i32 to index
        %c0_294 = arith.constant 0 : index
        %c0_295 = arith.constant 0 : index
        %515 = vector.load %arg16[%514, %c0_294, %c0_295] : memref<90x15x128xf32, #tpu.memory_space<vmem>>, vector<1x13x128xf32>
        %516 = vector.shape_cast %515 : vector<1x13x128xf32> to vector<13x128xf32>
        %517 = vector.broadcast %506 : f32 to vector<13x128xf32>
        %518 = arith.mulf %517, %516 : vector<13x128xf32>
        %519 = arith.addf %495, %518 : vector<13x128xf32>
        %c6_i32_296 = arith.constant 6 : i32
        %520 = arith.muli %arg18, %c6_i32_296 : i32
        %c2_i32_297 = arith.constant 2 : i32
        %521 = arith.addi %520, %c2_i32_297 : i32
        %c3_i32_298 = arith.constant 3 : i32
        %522 = arith.muli %521, %c3_i32_298 : i32
        %c1_i32_299 = arith.constant 1 : i32
        %523 = arith.addi %522, %c1_i32_299 : i32
        %c3_i32_300 = arith.constant 3 : i32
        %524 = arith.muli %523, %c3_i32_300 : i32
        %c1_i32_301 = arith.constant 1 : i32
        %525 = arith.addi %524, %c1_i32_301 : i32
        %526 = arith.index_cast %525 : i32 to index
        %527 = memref.load %arg4[%526] : memref<864xf32, #tpu.memory_space<smem>>
        %528 = arith.index_cast %498 : i32 to index
        %c1_302 = arith.constant 1 : index
        %c0_303 = arith.constant 0 : index
        %529 = vector.load %arg16[%528, %c1_302, %c0_303] : memref<90x15x128xf32, #tpu.memory_space<vmem>>, vector<1x13x128xf32>
        %530 = vector.shape_cast %529 : vector<1x13x128xf32> to vector<13x128xf32>
        %531 = vector.broadcast %527 : f32 to vector<13x128xf32>
        %532 = arith.mulf %531, %530 : vector<13x128xf32>
        %533 = arith.addf %512, %532 : vector<13x128xf32>
        %c1_i32_304 = arith.constant 1 : i32
        %534 = arith.addi %498, %c1_i32_304 : i32
        %535 = arith.index_cast %534 : i32 to index
        %c1_305 = arith.constant 1 : index
        %c0_306 = arith.constant 0 : index
        %536 = vector.load %arg16[%535, %c1_305, %c0_306] : memref<90x15x128xf32, #tpu.memory_space<vmem>>, vector<1x13x128xf32>
        %537 = vector.shape_cast %536 : vector<1x13x128xf32> to vector<13x128xf32>
        %538 = vector.broadcast %527 : f32 to vector<13x128xf32>
        %539 = arith.mulf %538, %537 : vector<13x128xf32>
        %540 = arith.addf %519, %539 : vector<13x128xf32>
        %c6_i32_307 = arith.constant 6 : i32
        %541 = arith.muli %arg18, %c6_i32_307 : i32
        %c2_i32_308 = arith.constant 2 : i32
        %542 = arith.addi %541, %c2_i32_308 : i32
        %c3_i32_309 = arith.constant 3 : i32
        %543 = arith.muli %542, %c3_i32_309 : i32
        %c1_i32_310 = arith.constant 1 : i32
        %544 = arith.addi %543, %c1_i32_310 : i32
        %c3_i32_311 = arith.constant 3 : i32
        %545 = arith.muli %544, %c3_i32_311 : i32
        %c2_i32_312 = arith.constant 2 : i32
        %546 = arith.addi %545, %c2_i32_312 : i32
        %547 = arith.index_cast %546 : i32 to index
        %548 = memref.load %arg4[%547] : memref<864xf32, #tpu.memory_space<smem>>
        %549 = arith.index_cast %498 : i32 to index
        %c2_313 = arith.constant 2 : index
        %c0_314 = arith.constant 0 : index
        %550 = vector.load %arg16[%549, %c2_313, %c0_314] : memref<90x15x128xf32, #tpu.memory_space<vmem>>, vector<1x13x128xf32>
        %551 = vector.shape_cast %550 : vector<1x13x128xf32> to vector<13x128xf32>
        %552 = vector.broadcast %548 : f32 to vector<13x128xf32>
        %553 = arith.mulf %552, %551 : vector<13x128xf32>
        %554 = arith.addf %533, %553 : vector<13x128xf32>
        %c1_i32_315 = arith.constant 1 : i32
        %555 = arith.addi %498, %c1_i32_315 : i32
        %556 = arith.index_cast %555 : i32 to index
        %c2_316 = arith.constant 2 : index
        %c0_317 = arith.constant 0 : index
        %557 = vector.load %arg16[%556, %c2_316, %c0_317] : memref<90x15x128xf32, #tpu.memory_space<vmem>>, vector<1x13x128xf32>
        %558 = vector.shape_cast %557 : vector<1x13x128xf32> to vector<13x128xf32>
        %559 = vector.broadcast %548 : f32 to vector<13x128xf32>
        %560 = arith.mulf %559, %558 : vector<13x128xf32>
        %561 = arith.addf %540, %560 : vector<13x128xf32>
        %c2_i32_318 = arith.constant 2 : i32
        %562 = arith.muli %c2_i32_318, %arg19 : i32
        %c30_i32_319 = arith.constant 30 : i32
        %563 = arith.addi %c30_i32_319, %562 : i32
        %c2_i32_320 = arith.constant 2 : i32
        %564 = arith.addi %563, %c2_i32_320 : i32
        %c6_i32_321 = arith.constant 6 : i32
        %565 = arith.muli %arg18, %c6_i32_321 : i32
        %c2_i32_322 = arith.constant 2 : i32
        %566 = arith.addi %565, %c2_i32_322 : i32
        %c3_i32_323 = arith.constant 3 : i32
        %567 = arith.muli %566, %c3_i32_323 : i32
        %c2_i32_324 = arith.constant 2 : i32
        %568 = arith.addi %567, %c2_i32_324 : i32
        %c3_i32_325 = arith.constant 3 : i32
        %569 = arith.muli %568, %c3_i32_325 : i32
        %c0_i32_326 = arith.constant 0 : i32
        %570 = arith.addi %569, %c0_i32_326 : i32
        %571 = arith.index_cast %570 : i32 to index
        %572 = memref.load %arg4[%571] : memref<864xf32, #tpu.memory_space<smem>>
        %573 = arith.index_cast %564 : i32 to index
        %c0_327 = arith.constant 0 : index
        %c0_328 = arith.constant 0 : index
        %574 = vector.load %arg16[%573, %c0_327, %c0_328] : memref<90x15x128xf32, #tpu.memory_space<vmem>>, vector<1x13x128xf32>
        %575 = vector.shape_cast %574 : vector<1x13x128xf32> to vector<13x128xf32>
        %576 = vector.broadcast %572 : f32 to vector<13x128xf32>
        %577 = arith.mulf %576, %575 : vector<13x128xf32>
        %578 = arith.addf %554, %577 : vector<13x128xf32>
        %c1_i32_329 = arith.constant 1 : i32
        %579 = arith.addi %564, %c1_i32_329 : i32
        %580 = arith.index_cast %579 : i32 to index
        %c0_330 = arith.constant 0 : index
        %c0_331 = arith.constant 0 : index
        %581 = vector.load %arg16[%580, %c0_330, %c0_331] : memref<90x15x128xf32, #tpu.memory_space<vmem>>, vector<1x13x128xf32>
        %582 = vector.shape_cast %581 : vector<1x13x128xf32> to vector<13x128xf32>
        %583 = vector.broadcast %572 : f32 to vector<13x128xf32>
        %584 = arith.mulf %583, %582 : vector<13x128xf32>
        %585 = arith.addf %561, %584 : vector<13x128xf32>
        %c6_i32_332 = arith.constant 6 : i32
        %586 = arith.muli %arg18, %c6_i32_332 : i32
        %c2_i32_333 = arith.constant 2 : i32
        %587 = arith.addi %586, %c2_i32_333 : i32
        %c3_i32_334 = arith.constant 3 : i32
        %588 = arith.muli %587, %c3_i32_334 : i32
        %c2_i32_335 = arith.constant 2 : i32
        %589 = arith.addi %588, %c2_i32_335 : i32
        %c3_i32_336 = arith.constant 3 : i32
        %590 = arith.muli %589, %c3_i32_336 : i32
        %c1_i32_337 = arith.constant 1 : i32
        %591 = arith.addi %590, %c1_i32_337 : i32
        %592 = arith.index_cast %591 : i32 to index
        %593 = memref.load %arg4[%592] : memref<864xf32, #tpu.memory_space<smem>>
        %594 = arith.index_cast %564 : i32 to index
        %c1_338 = arith.constant 1 : index
        %c0_339 = arith.constant 0 : index
        %595 = vector.load %arg16[%594, %c1_338, %c0_339] : memref<90x15x128xf32, #tpu.memory_space<vmem>>, vector<1x13x128xf32>
        %596 = vector.shape_cast %595 : vector<1x13x128xf32> to vector<13x128xf32>
        %597 = vector.broadcast %593 : f32 to vector<13x128xf32>
        %598 = arith.mulf %597, %596 : vector<13x128xf32>
        %599 = arith.addf %578, %598 : vector<13x128xf32>
        %c1_i32_340 = arith.constant 1 : i32
        %600 = arith.addi %564, %c1_i32_340 : i32
        %601 = arith.index_cast %600 : i32 to index
        %c1_341 = arith.constant 1 : index
        %c0_342 = arith.constant 0 : index
        %602 = vector.load %arg16[%601, %c1_341, %c0_342] : memref<90x15x128xf32, #tpu.memory_space<vmem>>, vector<1x13x128xf32>
        %603 = vector.shape_cast %602 : vector<1x13x128xf32> to vector<13x128xf32>
        %604 = vector.broadcast %593 : f32 to vector<13x128xf32>
        %605 = arith.mulf %604, %603 : vector<13x128xf32>
        %606 = arith.addf %585, %605 : vector<13x128xf32>
        %c6_i32_343 = arith.constant 6 : i32
        %607 = arith.muli %arg18, %c6_i32_343 : i32
        %c2_i32_344 = arith.constant 2 : i32
        %608 = arith.addi %607, %c2_i32_344 : i32
        %c3_i32_345 = arith.constant 3 : i32
        %609 = arith.muli %608, %c3_i32_345 : i32
        %c2_i32_346 = arith.constant 2 : i32
        %610 = arith.addi %609, %c2_i32_346 : i32
        %c3_i32_347 = arith.constant 3 : i32
        %611 = arith.muli %610, %c3_i32_347 : i32
        %c2_i32_348 = arith.constant 2 : i32
        %612 = arith.addi %611, %c2_i32_348 : i32
        %613 = arith.index_cast %612 : i32 to index
        %614 = memref.load %arg4[%613] : memref<864xf32, #tpu.memory_space<smem>>
        %615 = arith.index_cast %564 : i32 to index
        %c2_349 = arith.constant 2 : index
        %c0_350 = arith.constant 0 : index
        %616 = vector.load %arg16[%615, %c2_349, %c0_350] : memref<90x15x128xf32, #tpu.memory_space<vmem>>, vector<1x13x128xf32>
        %617 = vector.shape_cast %616 : vector<1x13x128xf32> to vector<13x128xf32>
        %618 = vector.broadcast %614 : f32 to vector<13x128xf32>
        %619 = arith.mulf %618, %617 : vector<13x128xf32>
        %620 = arith.addf %599, %619 : vector<13x128xf32>
        %c1_i32_351 = arith.constant 1 : i32
        %621 = arith.addi %564, %c1_i32_351 : i32
        %622 = arith.index_cast %621 : i32 to index
        %c2_352 = arith.constant 2 : index
        %c0_353 = arith.constant 0 : index
        %623 = vector.load %arg16[%622, %c2_352, %c0_353] : memref<90x15x128xf32, #tpu.memory_space<vmem>>, vector<1x13x128xf32>
        %624 = vector.shape_cast %623 : vector<1x13x128xf32> to vector<13x128xf32>
        %625 = vector.broadcast %614 : f32 to vector<13x128xf32>
        %626 = arith.mulf %625, %624 : vector<13x128xf32>
        %627 = arith.addf %606, %626 : vector<13x128xf32>
        %c2_i32_354 = arith.constant 2 : i32
        %628 = arith.muli %c2_i32_354, %arg19 : i32
        %c45_i32 = arith.constant 45 : i32
        %629 = arith.addi %c45_i32, %628 : i32
        %c0_i32_355 = arith.constant 0 : i32
        %630 = arith.addi %629, %c0_i32_355 : i32
        %c6_i32_356 = arith.constant 6 : i32
        %631 = arith.muli %arg18, %c6_i32_356 : i32
        %c3_i32_357 = arith.constant 3 : i32
        %632 = arith.addi %631, %c3_i32_357 : i32
        %c3_i32_358 = arith.constant 3 : i32
        %633 = arith.muli %632, %c3_i32_358 : i32
        %c0_i32_359 = arith.constant 0 : i32
        %634 = arith.addi %633, %c0_i32_359 : i32
        %c3_i32_360 = arith.constant 3 : i32
        %635 = arith.muli %634, %c3_i32_360 : i32
        %c0_i32_361 = arith.constant 0 : i32
        %636 = arith.addi %635, %c0_i32_361 : i32
        %637 = arith.index_cast %636 : i32 to index
        %638 = memref.load %arg4[%637] : memref<864xf32, #tpu.memory_space<smem>>
        %639 = arith.index_cast %630 : i32 to index
        %c0_362 = arith.constant 0 : index
        %c0_363 = arith.constant 0 : index
        %640 = vector.load %arg16[%639, %c0_362, %c0_363] : memref<90x15x128xf32, #tpu.memory_space<vmem>>, vector<1x13x128xf32>
        %641 = vector.shape_cast %640 : vector<1x13x128xf32> to vector<13x128xf32>
        %642 = vector.broadcast %638 : f32 to vector<13x128xf32>
        %643 = arith.mulf %642, %641 : vector<13x128xf32>
        %644 = arith.addf %620, %643 : vector<13x128xf32>
        %c1_i32_364 = arith.constant 1 : i32
        %645 = arith.addi %630, %c1_i32_364 : i32
        %646 = arith.index_cast %645 : i32 to index
        %c0_365 = arith.constant 0 : index
        %c0_366 = arith.constant 0 : index
        %647 = vector.load %arg16[%646, %c0_365, %c0_366] : memref<90x15x128xf32, #tpu.memory_space<vmem>>, vector<1x13x128xf32>
        %648 = vector.shape_cast %647 : vector<1x13x128xf32> to vector<13x128xf32>
        %649 = vector.broadcast %638 : f32 to vector<13x128xf32>
        %650 = arith.mulf %649, %648 : vector<13x128xf32>
        %651 = arith.addf %627, %650 : vector<13x128xf32>
        %c6_i32_367 = arith.constant 6 : i32
        %652 = arith.muli %arg18, %c6_i32_367 : i32
        %c3_i32_368 = arith.constant 3 : i32
        %653 = arith.addi %652, %c3_i32_368 : i32
        %c3_i32_369 = arith.constant 3 : i32
        %654 = arith.muli %653, %c3_i32_369 : i32
        %c0_i32_370 = arith.constant 0 : i32
        %655 = arith.addi %654, %c0_i32_370 : i32
        %c3_i32_371 = arith.constant 3 : i32
        %656 = arith.muli %655, %c3_i32_371 : i32
        %c1_i32_372 = arith.constant 1 : i32
        %657 = arith.addi %656, %c1_i32_372 : i32
        %658 = arith.index_cast %657 : i32 to index
        %659 = memref.load %arg4[%658] : memref<864xf32, #tpu.memory_space<smem>>
        %660 = arith.index_cast %630 : i32 to index
        %c1_373 = arith.constant 1 : index
        %c0_374 = arith.constant 0 : index
        %661 = vector.load %arg16[%660, %c1_373, %c0_374] : memref<90x15x128xf32, #tpu.memory_space<vmem>>, vector<1x13x128xf32>
        %662 = vector.shape_cast %661 : vector<1x13x128xf32> to vector<13x128xf32>
        %663 = vector.broadcast %659 : f32 to vector<13x128xf32>
        %664 = arith.mulf %663, %662 : vector<13x128xf32>
        %665 = arith.addf %644, %664 : vector<13x128xf32>
        %c1_i32_375 = arith.constant 1 : i32
        %666 = arith.addi %630, %c1_i32_375 : i32
        %667 = arith.index_cast %666 : i32 to index
        %c1_376 = arith.constant 1 : index
        %c0_377 = arith.constant 0 : index
        %668 = vector.load %arg16[%667, %c1_376, %c0_377] : memref<90x15x128xf32, #tpu.memory_space<vmem>>, vector<1x13x128xf32>
        %669 = vector.shape_cast %668 : vector<1x13x128xf32> to vector<13x128xf32>
        %670 = vector.broadcast %659 : f32 to vector<13x128xf32>
        %671 = arith.mulf %670, %669 : vector<13x128xf32>
        %672 = arith.addf %651, %671 : vector<13x128xf32>
        %c6_i32_378 = arith.constant 6 : i32
        %673 = arith.muli %arg18, %c6_i32_378 : i32
        %c3_i32_379 = arith.constant 3 : i32
        %674 = arith.addi %673, %c3_i32_379 : i32
        %c3_i32_380 = arith.constant 3 : i32
        %675 = arith.muli %674, %c3_i32_380 : i32
        %c0_i32_381 = arith.constant 0 : i32
        %676 = arith.addi %675, %c0_i32_381 : i32
        %c3_i32_382 = arith.constant 3 : i32
        %677 = arith.muli %676, %c3_i32_382 : i32
        %c2_i32_383 = arith.constant 2 : i32
        %678 = arith.addi %677, %c2_i32_383 : i32
        %679 = arith.index_cast %678 : i32 to index
        %680 = memref.load %arg4[%679] : memref<864xf32, #tpu.memory_space<smem>>
        %681 = arith.index_cast %630 : i32 to index
        %c2_384 = arith.constant 2 : index
        %c0_385 = arith.constant 0 : index
        %682 = vector.load %arg16[%681, %c2_384, %c0_385] : memref<90x15x128xf32, #tpu.memory_space<vmem>>, vector<1x13x128xf32>
        %683 = vector.shape_cast %682 : vector<1x13x128xf32> to vector<13x128xf32>
        %684 = vector.broadcast %680 : f32 to vector<13x128xf32>
        %685 = arith.mulf %684, %683 : vector<13x128xf32>
        %686 = arith.addf %665, %685 : vector<13x128xf32>
        %c1_i32_386 = arith.constant 1 : i32
        %687 = arith.addi %630, %c1_i32_386 : i32
        %688 = arith.index_cast %687 : i32 to index
        %c2_387 = arith.constant 2 : index
        %c0_388 = arith.constant 0 : index
        %689 = vector.load %arg16[%688, %c2_387, %c0_388] : memref<90x15x128xf32, #tpu.memory_space<vmem>>, vector<1x13x128xf32>
        %690 = vector.shape_cast %689 : vector<1x13x128xf32> to vector<13x128xf32>
        %691 = vector.broadcast %680 : f32 to vector<13x128xf32>
        %692 = arith.mulf %691, %690 : vector<13x128xf32>
        %693 = arith.addf %672, %692 : vector<13x128xf32>
        %c2_i32_389 = arith.constant 2 : i32
        %694 = arith.muli %c2_i32_389, %arg19 : i32
        %c45_i32_390 = arith.constant 45 : i32
        %695 = arith.addi %c45_i32_390, %694 : i32
        %c1_i32_391 = arith.constant 1 : i32
        %696 = arith.addi %695, %c1_i32_391 : i32
        %c6_i32_392 = arith.constant 6 : i32
        %697 = arith.muli %arg18, %c6_i32_392 : i32
        %c3_i32_393 = arith.constant 3 : i32
        %698 = arith.addi %697, %c3_i32_393 : i32
        %c3_i32_394 = arith.constant 3 : i32
        %699 = arith.muli %698, %c3_i32_394 : i32
        %c1_i32_395 = arith.constant 1 : i32
        %700 = arith.addi %699, %c1_i32_395 : i32
        %c3_i32_396 = arith.constant 3 : i32
        %701 = arith.muli %700, %c3_i32_396 : i32
        %c0_i32_397 = arith.constant 0 : i32
        %702 = arith.addi %701, %c0_i32_397 : i32
        %703 = arith.index_cast %702 : i32 to index
        %704 = memref.load %arg4[%703] : memref<864xf32, #tpu.memory_space<smem>>
        %705 = arith.index_cast %696 : i32 to index
        %c0_398 = arith.constant 0 : index
        %c0_399 = arith.constant 0 : index
        %706 = vector.load %arg16[%705, %c0_398, %c0_399] : memref<90x15x128xf32, #tpu.memory_space<vmem>>, vector<1x13x128xf32>
        %707 = vector.shape_cast %706 : vector<1x13x128xf32> to vector<13x128xf32>
        %708 = vector.broadcast %704 : f32 to vector<13x128xf32>
        %709 = arith.mulf %708, %707 : vector<13x128xf32>
        %710 = arith.addf %686, %709 : vector<13x128xf32>
        %c1_i32_400 = arith.constant 1 : i32
        %711 = arith.addi %696, %c1_i32_400 : i32
        %712 = arith.index_cast %711 : i32 to index
        %c0_401 = arith.constant 0 : index
        %c0_402 = arith.constant 0 : index
        %713 = vector.load %arg16[%712, %c0_401, %c0_402] : memref<90x15x128xf32, #tpu.memory_space<vmem>>, vector<1x13x128xf32>
        %714 = vector.shape_cast %713 : vector<1x13x128xf32> to vector<13x128xf32>
        %715 = vector.broadcast %704 : f32 to vector<13x128xf32>
        %716 = arith.mulf %715, %714 : vector<13x128xf32>
        %717 = arith.addf %693, %716 : vector<13x128xf32>
        %c6_i32_403 = arith.constant 6 : i32
        %718 = arith.muli %arg18, %c6_i32_403 : i32
        %c3_i32_404 = arith.constant 3 : i32
        %719 = arith.addi %718, %c3_i32_404 : i32
        %c3_i32_405 = arith.constant 3 : i32
        %720 = arith.muli %719, %c3_i32_405 : i32
        %c1_i32_406 = arith.constant 1 : i32
        %721 = arith.addi %720, %c1_i32_406 : i32
        %c3_i32_407 = arith.constant 3 : i32
        %722 = arith.muli %721, %c3_i32_407 : i32
        %c1_i32_408 = arith.constant 1 : i32
        %723 = arith.addi %722, %c1_i32_408 : i32
        %724 = arith.index_cast %723 : i32 to index
        %725 = memref.load %arg4[%724] : memref<864xf32, #tpu.memory_space<smem>>
        %726 = arith.index_cast %696 : i32 to index
        %c1_409 = arith.constant 1 : index
        %c0_410 = arith.constant 0 : index
        %727 = vector.load %arg16[%726, %c1_409, %c0_410] : memref<90x15x128xf32, #tpu.memory_space<vmem>>, vector<1x13x128xf32>
        %728 = vector.shape_cast %727 : vector<1x13x128xf32> to vector<13x128xf32>
        %729 = vector.broadcast %725 : f32 to vector<13x128xf32>
        %730 = arith.mulf %729, %728 : vector<13x128xf32>
        %731 = arith.addf %710, %730 : vector<13x128xf32>
        %c1_i32_411 = arith.constant 1 : i32
        %732 = arith.addi %696, %c1_i32_411 : i32
        %733 = arith.index_cast %732 : i32 to index
        %c1_412 = arith.constant 1 : index
        %c0_413 = arith.constant 0 : index
        %734 = vector.load %arg16[%733, %c1_412, %c0_413] : memref<90x15x128xf32, #tpu.memory_space<vmem>>, vector<1x13x128xf32>
        %735 = vector.shape_cast %734 : vector<1x13x128xf32> to vector<13x128xf32>
        %736 = vector.broadcast %725 : f32 to vector<13x128xf32>
        %737 = arith.mulf %736, %735 : vector<13x128xf32>
        %738 = arith.addf %717, %737 : vector<13x128xf32>
        %c6_i32_414 = arith.constant 6 : i32
        %739 = arith.muli %arg18, %c6_i32_414 : i32
        %c3_i32_415 = arith.constant 3 : i32
        %740 = arith.addi %739, %c3_i32_415 : i32
        %c3_i32_416 = arith.constant 3 : i32
        %741 = arith.muli %740, %c3_i32_416 : i32
        %c1_i32_417 = arith.constant 1 : i32
        %742 = arith.addi %741, %c1_i32_417 : i32
        %c3_i32_418 = arith.constant 3 : i32
        %743 = arith.muli %742, %c3_i32_418 : i32
        %c2_i32_419 = arith.constant 2 : i32
        %744 = arith.addi %743, %c2_i32_419 : i32
        %745 = arith.index_cast %744 : i32 to index
        %746 = memref.load %arg4[%745] : memref<864xf32, #tpu.memory_space<smem>>
        %747 = arith.index_cast %696 : i32 to index
        %c2_420 = arith.constant 2 : index
        %c0_421 = arith.constant 0 : index
        %748 = vector.load %arg16[%747, %c2_420, %c0_421] : memref<90x15x128xf32, #tpu.memory_space<vmem>>, vector<1x13x128xf32>
        %749 = vector.shape_cast %748 : vector<1x13x128xf32> to vector<13x128xf32>
        %750 = vector.broadcast %746 : f32 to vector<13x128xf32>
        %751 = arith.mulf %750, %749 : vector<13x128xf32>
        %752 = arith.addf %731, %751 : vector<13x128xf32>
        %c1_i32_422 = arith.constant 1 : i32
        %753 = arith.addi %696, %c1_i32_422 : i32
        %754 = arith.index_cast %753 : i32 to index
        %c2_423 = arith.constant 2 : index
        %c0_424 = arith.constant 0 : index
        %755 = vector.load %arg16[%754, %c2_423, %c0_424] : memref<90x15x128xf32, #tpu.memory_space<vmem>>, vector<1x13x128xf32>
        %756 = vector.shape_cast %755 : vector<1x13x128xf32> to vector<13x128xf32>
        %757 = vector.broadcast %746 : f32 to vector<13x128xf32>
        %758 = arith.mulf %757, %756 : vector<13x128xf32>
        %759 = arith.addf %738, %758 : vector<13x128xf32>
        %c2_i32_425 = arith.constant 2 : i32
        %760 = arith.muli %c2_i32_425, %arg19 : i32
        %c45_i32_426 = arith.constant 45 : i32
        %761 = arith.addi %c45_i32_426, %760 : i32
        %c2_i32_427 = arith.constant 2 : i32
        %762 = arith.addi %761, %c2_i32_427 : i32
        %c6_i32_428 = arith.constant 6 : i32
        %763 = arith.muli %arg18, %c6_i32_428 : i32
        %c3_i32_429 = arith.constant 3 : i32
        %764 = arith.addi %763, %c3_i32_429 : i32
        %c3_i32_430 = arith.constant 3 : i32
        %765 = arith.muli %764, %c3_i32_430 : i32
        %c2_i32_431 = arith.constant 2 : i32
        %766 = arith.addi %765, %c2_i32_431 : i32
        %c3_i32_432 = arith.constant 3 : i32
        %767 = arith.muli %766, %c3_i32_432 : i32
        %c0_i32_433 = arith.constant 0 : i32
        %768 = arith.addi %767, %c0_i32_433 : i32
        %769 = arith.index_cast %768 : i32 to index
        %770 = memref.load %arg4[%769] : memref<864xf32, #tpu.memory_space<smem>>
        %771 = arith.index_cast %762 : i32 to index
        %c0_434 = arith.constant 0 : index
        %c0_435 = arith.constant 0 : index
        %772 = vector.load %arg16[%771, %c0_434, %c0_435] : memref<90x15x128xf32, #tpu.memory_space<vmem>>, vector<1x13x128xf32>
        %773 = vector.shape_cast %772 : vector<1x13x128xf32> to vector<13x128xf32>
        %774 = vector.broadcast %770 : f32 to vector<13x128xf32>
        %775 = arith.mulf %774, %773 : vector<13x128xf32>
        %776 = arith.addf %752, %775 : vector<13x128xf32>
        %c1_i32_436 = arith.constant 1 : i32
        %777 = arith.addi %762, %c1_i32_436 : i32
        %778 = arith.index_cast %777 : i32 to index
        %c0_437 = arith.constant 0 : index
        %c0_438 = arith.constant 0 : index
        %779 = vector.load %arg16[%778, %c0_437, %c0_438] : memref<90x15x128xf32, #tpu.memory_space<vmem>>, vector<1x13x128xf32>
        %780 = vector.shape_cast %779 : vector<1x13x128xf32> to vector<13x128xf32>
        %781 = vector.broadcast %770 : f32 to vector<13x128xf32>
        %782 = arith.mulf %781, %780 : vector<13x128xf32>
        %783 = arith.addf %759, %782 : vector<13x128xf32>
        %c6_i32_439 = arith.constant 6 : i32
        %784 = arith.muli %arg18, %c6_i32_439 : i32
        %c3_i32_440 = arith.constant 3 : i32
        %785 = arith.addi %784, %c3_i32_440 : i32
        %c3_i32_441 = arith.constant 3 : i32
        %786 = arith.muli %785, %c3_i32_441 : i32
        %c2_i32_442 = arith.constant 2 : i32
        %787 = arith.addi %786, %c2_i32_442 : i32
        %c3_i32_443 = arith.constant 3 : i32
        %788 = arith.muli %787, %c3_i32_443 : i32
        %c1_i32_444 = arith.constant 1 : i32
        %789 = arith.addi %788, %c1_i32_444 : i32
        %790 = arith.index_cast %789 : i32 to index
        %791 = memref.load %arg4[%790] : memref<864xf32, #tpu.memory_space<smem>>
        %792 = arith.index_cast %762 : i32 to index
        %c1_445 = arith.constant 1 : index
        %c0_446 = arith.constant 0 : index
        %793 = vector.load %arg16[%792, %c1_445, %c0_446] : memref<90x15x128xf32, #tpu.memory_space<vmem>>, vector<1x13x128xf32>
        %794 = vector.shape_cast %793 : vector<1x13x128xf32> to vector<13x128xf32>
        %795 = vector.broadcast %791 : f32 to vector<13x128xf32>
        %796 = arith.mulf %795, %794 : vector<13x128xf32>
        %797 = arith.addf %776, %796 : vector<13x128xf32>
        %c1_i32_447 = arith.constant 1 : i32
        %798 = arith.addi %762, %c1_i32_447 : i32
        %799 = arith.index_cast %798 : i32 to index
        %c1_448 = arith.constant 1 : index
        %c0_449 = arith.constant 0 : index
        %800 = vector.load %arg16[%799, %c1_448, %c0_449] : memref<90x15x128xf32, #tpu.memory_space<vmem>>, vector<1x13x128xf32>
        %801 = vector.shape_cast %800 : vector<1x13x128xf32> to vector<13x128xf32>
        %802 = vector.broadcast %791 : f32 to vector<13x128xf32>
        %803 = arith.mulf %802, %801 : vector<13x128xf32>
        %804 = arith.addf %783, %803 : vector<13x128xf32>
        %c6_i32_450 = arith.constant 6 : i32
        %805 = arith.muli %arg18, %c6_i32_450 : i32
        %c3_i32_451 = arith.constant 3 : i32
        %806 = arith.addi %805, %c3_i32_451 : i32
        %c3_i32_452 = arith.constant 3 : i32
        %807 = arith.muli %806, %c3_i32_452 : i32
        %c2_i32_453 = arith.constant 2 : i32
        %808 = arith.addi %807, %c2_i32_453 : i32
        %c3_i32_454 = arith.constant 3 : i32
        %809 = arith.muli %808, %c3_i32_454 : i32
        %c2_i32_455 = arith.constant 2 : i32
        %810 = arith.addi %809, %c2_i32_455 : i32
        %811 = arith.index_cast %810 : i32 to index
        %812 = memref.load %arg4[%811] : memref<864xf32, #tpu.memory_space<smem>>
        %813 = arith.index_cast %762 : i32 to index
        %c2_456 = arith.constant 2 : index
        %c0_457 = arith.constant 0 : index
        %814 = vector.load %arg16[%813, %c2_456, %c0_457] : memref<90x15x128xf32, #tpu.memory_space<vmem>>, vector<1x13x128xf32>
        %815 = vector.shape_cast %814 : vector<1x13x128xf32> to vector<13x128xf32>
        %816 = vector.broadcast %812 : f32 to vector<13x128xf32>
        %817 = arith.mulf %816, %815 : vector<13x128xf32>
        %818 = arith.addf %797, %817 : vector<13x128xf32>
        %c1_i32_458 = arith.constant 1 : i32
        %819 = arith.addi %762, %c1_i32_458 : i32
        %820 = arith.index_cast %819 : i32 to index
        %c2_459 = arith.constant 2 : index
        %c0_460 = arith.constant 0 : index
        %821 = vector.load %arg16[%820, %c2_459, %c0_460] : memref<90x15x128xf32, #tpu.memory_space<vmem>>, vector<1x13x128xf32>
        %822 = vector.shape_cast %821 : vector<1x13x128xf32> to vector<13x128xf32>
        %823 = vector.broadcast %812 : f32 to vector<13x128xf32>
        %824 = arith.mulf %823, %822 : vector<13x128xf32>
        %825 = arith.addf %804, %824 : vector<13x128xf32>
        %c2_i32_461 = arith.constant 2 : i32
        %826 = arith.muli %c2_i32_461, %arg19 : i32
        %c60_i32 = arith.constant 60 : i32
        %827 = arith.addi %c60_i32, %826 : i32
        %c0_i32_462 = arith.constant 0 : i32
        %828 = arith.addi %827, %c0_i32_462 : i32
        %c6_i32_463 = arith.constant 6 : i32
        %829 = arith.muli %arg18, %c6_i32_463 : i32
        %c4_i32 = arith.constant 4 : i32
        %830 = arith.addi %829, %c4_i32 : i32
        %c3_i32_464 = arith.constant 3 : i32
        %831 = arith.muli %830, %c3_i32_464 : i32
        %c0_i32_465 = arith.constant 0 : i32
        %832 = arith.addi %831, %c0_i32_465 : i32
        %c3_i32_466 = arith.constant 3 : i32
        %833 = arith.muli %832, %c3_i32_466 : i32
        %c0_i32_467 = arith.constant 0 : i32
        %834 = arith.addi %833, %c0_i32_467 : i32
        %835 = arith.index_cast %834 : i32 to index
        %836 = memref.load %arg4[%835] : memref<864xf32, #tpu.memory_space<smem>>
        %837 = arith.index_cast %828 : i32 to index
        %c0_468 = arith.constant 0 : index
        %c0_469 = arith.constant 0 : index
        %838 = vector.load %arg16[%837, %c0_468, %c0_469] : memref<90x15x128xf32, #tpu.memory_space<vmem>>, vector<1x13x128xf32>
        %839 = vector.shape_cast %838 : vector<1x13x128xf32> to vector<13x128xf32>
        %840 = vector.broadcast %836 : f32 to vector<13x128xf32>
        %841 = arith.mulf %840, %839 : vector<13x128xf32>
        %842 = arith.addf %818, %841 : vector<13x128xf32>
        %c1_i32_470 = arith.constant 1 : i32
        %843 = arith.addi %828, %c1_i32_470 : i32
        %844 = arith.index_cast %843 : i32 to index
        %c0_471 = arith.constant 0 : index
        %c0_472 = arith.constant 0 : index
        %845 = vector.load %arg16[%844, %c0_471, %c0_472] : memref<90x15x128xf32, #tpu.memory_space<vmem>>, vector<1x13x128xf32>
        %846 = vector.shape_cast %845 : vector<1x13x128xf32> to vector<13x128xf32>
        %847 = vector.broadcast %836 : f32 to vector<13x128xf32>
        %848 = arith.mulf %847, %846 : vector<13x128xf32>
        %849 = arith.addf %825, %848 : vector<13x128xf32>
        %c6_i32_473 = arith.constant 6 : i32
        %850 = arith.muli %arg18, %c6_i32_473 : i32
        %c4_i32_474 = arith.constant 4 : i32
        %851 = arith.addi %850, %c4_i32_474 : i32
        %c3_i32_475 = arith.constant 3 : i32
        %852 = arith.muli %851, %c3_i32_475 : i32
        %c0_i32_476 = arith.constant 0 : i32
        %853 = arith.addi %852, %c0_i32_476 : i32
        %c3_i32_477 = arith.constant 3 : i32
        %854 = arith.muli %853, %c3_i32_477 : i32
        %c1_i32_478 = arith.constant 1 : i32
        %855 = arith.addi %854, %c1_i32_478 : i32
        %856 = arith.index_cast %855 : i32 to index
        %857 = memref.load %arg4[%856] : memref<864xf32, #tpu.memory_space<smem>>
        %858 = arith.index_cast %828 : i32 to index
        %c1_479 = arith.constant 1 : index
        %c0_480 = arith.constant 0 : index
        %859 = vector.load %arg16[%858, %c1_479, %c0_480] : memref<90x15x128xf32, #tpu.memory_space<vmem>>, vector<1x13x128xf32>
        %860 = vector.shape_cast %859 : vector<1x13x128xf32> to vector<13x128xf32>
        %861 = vector.broadcast %857 : f32 to vector<13x128xf32>
        %862 = arith.mulf %861, %860 : vector<13x128xf32>
        %863 = arith.addf %842, %862 : vector<13x128xf32>
        %c1_i32_481 = arith.constant 1 : i32
        %864 = arith.addi %828, %c1_i32_481 : i32
        %865 = arith.index_cast %864 : i32 to index
        %c1_482 = arith.constant 1 : index
        %c0_483 = arith.constant 0 : index
        %866 = vector.load %arg16[%865, %c1_482, %c0_483] : memref<90x15x128xf32, #tpu.memory_space<vmem>>, vector<1x13x128xf32>
        %867 = vector.shape_cast %866 : vector<1x13x128xf32> to vector<13x128xf32>
        %868 = vector.broadcast %857 : f32 to vector<13x128xf32>
        %869 = arith.mulf %868, %867 : vector<13x128xf32>
        %870 = arith.addf %849, %869 : vector<13x128xf32>
        %c6_i32_484 = arith.constant 6 : i32
        %871 = arith.muli %arg18, %c6_i32_484 : i32
        %c4_i32_485 = arith.constant 4 : i32
        %872 = arith.addi %871, %c4_i32_485 : i32
        %c3_i32_486 = arith.constant 3 : i32
        %873 = arith.muli %872, %c3_i32_486 : i32
        %c0_i32_487 = arith.constant 0 : i32
        %874 = arith.addi %873, %c0_i32_487 : i32
        %c3_i32_488 = arith.constant 3 : i32
        %875 = arith.muli %874, %c3_i32_488 : i32
        %c2_i32_489 = arith.constant 2 : i32
        %876 = arith.addi %875, %c2_i32_489 : i32
        %877 = arith.index_cast %876 : i32 to index
        %878 = memref.load %arg4[%877] : memref<864xf32, #tpu.memory_space<smem>>
        %879 = arith.index_cast %828 : i32 to index
        %c2_490 = arith.constant 2 : index
        %c0_491 = arith.constant 0 : index
        %880 = vector.load %arg16[%879, %c2_490, %c0_491] : memref<90x15x128xf32, #tpu.memory_space<vmem>>, vector<1x13x128xf32>
        %881 = vector.shape_cast %880 : vector<1x13x128xf32> to vector<13x128xf32>
        %882 = vector.broadcast %878 : f32 to vector<13x128xf32>
        %883 = arith.mulf %882, %881 : vector<13x128xf32>
        %884 = arith.addf %863, %883 : vector<13x128xf32>
        %c1_i32_492 = arith.constant 1 : i32
        %885 = arith.addi %828, %c1_i32_492 : i32
        %886 = arith.index_cast %885 : i32 to index
        %c2_493 = arith.constant 2 : index
        %c0_494 = arith.constant 0 : index
        %887 = vector.load %arg16[%886, %c2_493, %c0_494] : memref<90x15x128xf32, #tpu.memory_space<vmem>>, vector<1x13x128xf32>
        %888 = vector.shape_cast %887 : vector<1x13x128xf32> to vector<13x128xf32>
        %889 = vector.broadcast %878 : f32 to vector<13x128xf32>
        %890 = arith.mulf %889, %888 : vector<13x128xf32>
        %891 = arith.addf %870, %890 : vector<13x128xf32>
        %c2_i32_495 = arith.constant 2 : i32
        %892 = arith.muli %c2_i32_495, %arg19 : i32
        %c60_i32_496 = arith.constant 60 : i32
        %893 = arith.addi %c60_i32_496, %892 : i32
        %c1_i32_497 = arith.constant 1 : i32
        %894 = arith.addi %893, %c1_i32_497 : i32
        %c6_i32_498 = arith.constant 6 : i32
        %895 = arith.muli %arg18, %c6_i32_498 : i32
        %c4_i32_499 = arith.constant 4 : i32
        %896 = arith.addi %895, %c4_i32_499 : i32
        %c3_i32_500 = arith.constant 3 : i32
        %897 = arith.muli %896, %c3_i32_500 : i32
        %c1_i32_501 = arith.constant 1 : i32
        %898 = arith.addi %897, %c1_i32_501 : i32
        %c3_i32_502 = arith.constant 3 : i32
        %899 = arith.muli %898, %c3_i32_502 : i32
        %c0_i32_503 = arith.constant 0 : i32
        %900 = arith.addi %899, %c0_i32_503 : i32
        %901 = arith.index_cast %900 : i32 to index
        %902 = memref.load %arg4[%901] : memref<864xf32, #tpu.memory_space<smem>>
        %903 = arith.index_cast %894 : i32 to index
        %c0_504 = arith.constant 0 : index
        %c0_505 = arith.constant 0 : index
        %904 = vector.load %arg16[%903, %c0_504, %c0_505] : memref<90x15x128xf32, #tpu.memory_space<vmem>>, vector<1x13x128xf32>
        %905 = vector.shape_cast %904 : vector<1x13x128xf32> to vector<13x128xf32>
        %906 = vector.broadcast %902 : f32 to vector<13x128xf32>
        %907 = arith.mulf %906, %905 : vector<13x128xf32>
        %908 = arith.addf %884, %907 : vector<13x128xf32>
        %c1_i32_506 = arith.constant 1 : i32
        %909 = arith.addi %894, %c1_i32_506 : i32
        %910 = arith.index_cast %909 : i32 to index
        %c0_507 = arith.constant 0 : index
        %c0_508 = arith.constant 0 : index
        %911 = vector.load %arg16[%910, %c0_507, %c0_508] : memref<90x15x128xf32, #tpu.memory_space<vmem>>, vector<1x13x128xf32>
        %912 = vector.shape_cast %911 : vector<1x13x128xf32> to vector<13x128xf32>
        %913 = vector.broadcast %902 : f32 to vector<13x128xf32>
        %914 = arith.mulf %913, %912 : vector<13x128xf32>
        %915 = arith.addf %891, %914 : vector<13x128xf32>
        %c6_i32_509 = arith.constant 6 : i32
        %916 = arith.muli %arg18, %c6_i32_509 : i32
        %c4_i32_510 = arith.constant 4 : i32
        %917 = arith.addi %916, %c4_i32_510 : i32
        %c3_i32_511 = arith.constant 3 : i32
        %918 = arith.muli %917, %c3_i32_511 : i32
        %c1_i32_512 = arith.constant 1 : i32
        %919 = arith.addi %918, %c1_i32_512 : i32
        %c3_i32_513 = arith.constant 3 : i32
        %920 = arith.muli %919, %c3_i32_513 : i32
        %c1_i32_514 = arith.constant 1 : i32
        %921 = arith.addi %920, %c1_i32_514 : i32
        %922 = arith.index_cast %921 : i32 to index
        %923 = memref.load %arg4[%922] : memref<864xf32, #tpu.memory_space<smem>>
        %924 = arith.index_cast %894 : i32 to index
        %c1_515 = arith.constant 1 : index
        %c0_516 = arith.constant 0 : index
        %925 = vector.load %arg16[%924, %c1_515, %c0_516] : memref<90x15x128xf32, #tpu.memory_space<vmem>>, vector<1x13x128xf32>
        %926 = vector.shape_cast %925 : vector<1x13x128xf32> to vector<13x128xf32>
        %927 = vector.broadcast %923 : f32 to vector<13x128xf32>
        %928 = arith.mulf %927, %926 : vector<13x128xf32>
        %929 = arith.addf %908, %928 : vector<13x128xf32>
        %c1_i32_517 = arith.constant 1 : i32
        %930 = arith.addi %894, %c1_i32_517 : i32
        %931 = arith.index_cast %930 : i32 to index
        %c1_518 = arith.constant 1 : index
        %c0_519 = arith.constant 0 : index
        %932 = vector.load %arg16[%931, %c1_518, %c0_519] : memref<90x15x128xf32, #tpu.memory_space<vmem>>, vector<1x13x128xf32>
        %933 = vector.shape_cast %932 : vector<1x13x128xf32> to vector<13x128xf32>
        %934 = vector.broadcast %923 : f32 to vector<13x128xf32>
        %935 = arith.mulf %934, %933 : vector<13x128xf32>
        %936 = arith.addf %915, %935 : vector<13x128xf32>
        %c6_i32_520 = arith.constant 6 : i32
        %937 = arith.muli %arg18, %c6_i32_520 : i32
        %c4_i32_521 = arith.constant 4 : i32
        %938 = arith.addi %937, %c4_i32_521 : i32
        %c3_i32_522 = arith.constant 3 : i32
        %939 = arith.muli %938, %c3_i32_522 : i32
        %c1_i32_523 = arith.constant 1 : i32
        %940 = arith.addi %939, %c1_i32_523 : i32
        %c3_i32_524 = arith.constant 3 : i32
        %941 = arith.muli %940, %c3_i32_524 : i32
        %c2_i32_525 = arith.constant 2 : i32
        %942 = arith.addi %941, %c2_i32_525 : i32
        %943 = arith.index_cast %942 : i32 to index
        %944 = memref.load %arg4[%943] : memref<864xf32, #tpu.memory_space<smem>>
        %945 = arith.index_cast %894 : i32 to index
        %c2_526 = arith.constant 2 : index
        %c0_527 = arith.constant 0 : index
        %946 = vector.load %arg16[%945, %c2_526, %c0_527] : memref<90x15x128xf32, #tpu.memory_space<vmem>>, vector<1x13x128xf32>
        %947 = vector.shape_cast %946 : vector<1x13x128xf32> to vector<13x128xf32>
        %948 = vector.broadcast %944 : f32 to vector<13x128xf32>
        %949 = arith.mulf %948, %947 : vector<13x128xf32>
        %950 = arith.addf %929, %949 : vector<13x128xf32>
        %c1_i32_528 = arith.constant 1 : i32
        %951 = arith.addi %894, %c1_i32_528 : i32
        %952 = arith.index_cast %951 : i32 to index
        %c2_529 = arith.constant 2 : index
        %c0_530 = arith.constant 0 : index
        %953 = vector.load %arg16[%952, %c2_529, %c0_530] : memref<90x15x128xf32, #tpu.memory_space<vmem>>, vector<1x13x128xf32>
        %954 = vector.shape_cast %953 : vector<1x13x128xf32> to vector<13x128xf32>
        %955 = vector.broadcast %944 : f32 to vector<13x128xf32>
        %956 = arith.mulf %955, %954 : vector<13x128xf32>
        %957 = arith.addf %936, %956 : vector<13x128xf32>
        %c2_i32_531 = arith.constant 2 : i32
        %958 = arith.muli %c2_i32_531, %arg19 : i32
        %c60_i32_532 = arith.constant 60 : i32
        %959 = arith.addi %c60_i32_532, %958 : i32
        %c2_i32_533 = arith.constant 2 : i32
        %960 = arith.addi %959, %c2_i32_533 : i32
        %c6_i32_534 = arith.constant 6 : i32
        %961 = arith.muli %arg18, %c6_i32_534 : i32
        %c4_i32_535 = arith.constant 4 : i32
        %962 = arith.addi %961, %c4_i32_535 : i32
        %c3_i32_536 = arith.constant 3 : i32
        %963 = arith.muli %962, %c3_i32_536 : i32
        %c2_i32_537 = arith.constant 2 : i32
        %964 = arith.addi %963, %c2_i32_537 : i32
        %c3_i32_538 = arith.constant 3 : i32
        %965 = arith.muli %964, %c3_i32_538 : i32
        %c0_i32_539 = arith.constant 0 : i32
        %966 = arith.addi %965, %c0_i32_539 : i32
        %967 = arith.index_cast %966 : i32 to index
        %968 = memref.load %arg4[%967] : memref<864xf32, #tpu.memory_space<smem>>
        %969 = arith.index_cast %960 : i32 to index
        %c0_540 = arith.constant 0 : index
        %c0_541 = arith.constant 0 : index
        %970 = vector.load %arg16[%969, %c0_540, %c0_541] : memref<90x15x128xf32, #tpu.memory_space<vmem>>, vector<1x13x128xf32>
        %971 = vector.shape_cast %970 : vector<1x13x128xf32> to vector<13x128xf32>
        %972 = vector.broadcast %968 : f32 to vector<13x128xf32>
        %973 = arith.mulf %972, %971 : vector<13x128xf32>
        %974 = arith.addf %950, %973 : vector<13x128xf32>
        %c1_i32_542 = arith.constant 1 : i32
        %975 = arith.addi %960, %c1_i32_542 : i32
        %976 = arith.index_cast %975 : i32 to index
        %c0_543 = arith.constant 0 : index
        %c0_544 = arith.constant 0 : index
        %977 = vector.load %arg16[%976, %c0_543, %c0_544] : memref<90x15x128xf32, #tpu.memory_space<vmem>>, vector<1x13x128xf32>
        %978 = vector.shape_cast %977 : vector<1x13x128xf32> to vector<13x128xf32>
        %979 = vector.broadcast %968 : f32 to vector<13x128xf32>
        %980 = arith.mulf %979, %978 : vector<13x128xf32>
        %981 = arith.addf %957, %980 : vector<13x128xf32>
        %c6_i32_545 = arith.constant 6 : i32
        %982 = arith.muli %arg18, %c6_i32_545 : i32
        %c4_i32_546 = arith.constant 4 : i32
        %983 = arith.addi %982, %c4_i32_546 : i32
        %c3_i32_547 = arith.constant 3 : i32
        %984 = arith.muli %983, %c3_i32_547 : i32
        %c2_i32_548 = arith.constant 2 : i32
        %985 = arith.addi %984, %c2_i32_548 : i32
        %c3_i32_549 = arith.constant 3 : i32
        %986 = arith.muli %985, %c3_i32_549 : i32
        %c1_i32_550 = arith.constant 1 : i32
        %987 = arith.addi %986, %c1_i32_550 : i32
        %988 = arith.index_cast %987 : i32 to index
        %989 = memref.load %arg4[%988] : memref<864xf32, #tpu.memory_space<smem>>
        %990 = arith.index_cast %960 : i32 to index
        %c1_551 = arith.constant 1 : index
        %c0_552 = arith.constant 0 : index
        %991 = vector.load %arg16[%990, %c1_551, %c0_552] : memref<90x15x128xf32, #tpu.memory_space<vmem>>, vector<1x13x128xf32>
        %992 = vector.shape_cast %991 : vector<1x13x128xf32> to vector<13x128xf32>
        %993 = vector.broadcast %989 : f32 to vector<13x128xf32>
        %994 = arith.mulf %993, %992 : vector<13x128xf32>
        %995 = arith.addf %974, %994 : vector<13x128xf32>
        %c1_i32_553 = arith.constant 1 : i32
        %996 = arith.addi %960, %c1_i32_553 : i32
        %997 = arith.index_cast %996 : i32 to index
        %c1_554 = arith.constant 1 : index
        %c0_555 = arith.constant 0 : index
        %998 = vector.load %arg16[%997, %c1_554, %c0_555] : memref<90x15x128xf32, #tpu.memory_space<vmem>>, vector<1x13x128xf32>
        %999 = vector.shape_cast %998 : vector<1x13x128xf32> to vector<13x128xf32>
        %1000 = vector.broadcast %989 : f32 to vector<13x128xf32>
        %1001 = arith.mulf %1000, %999 : vector<13x128xf32>
        %1002 = arith.addf %981, %1001 : vector<13x128xf32>
        %c6_i32_556 = arith.constant 6 : i32
        %1003 = arith.muli %arg18, %c6_i32_556 : i32
        %c4_i32_557 = arith.constant 4 : i32
        %1004 = arith.addi %1003, %c4_i32_557 : i32
        %c3_i32_558 = arith.constant 3 : i32
        %1005 = arith.muli %1004, %c3_i32_558 : i32
        %c2_i32_559 = arith.constant 2 : i32
        %1006 = arith.addi %1005, %c2_i32_559 : i32
        %c3_i32_560 = arith.constant 3 : i32
        %1007 = arith.muli %1006, %c3_i32_560 : i32
        %c2_i32_561 = arith.constant 2 : i32
        %1008 = arith.addi %1007, %c2_i32_561 : i32
        %1009 = arith.index_cast %1008 : i32 to index
        %1010 = memref.load %arg4[%1009] : memref<864xf32, #tpu.memory_space<smem>>
        %1011 = arith.index_cast %960 : i32 to index
        %c2_562 = arith.constant 2 : index
        %c0_563 = arith.constant 0 : index
        %1012 = vector.load %arg16[%1011, %c2_562, %c0_563] : memref<90x15x128xf32, #tpu.memory_space<vmem>>, vector<1x13x128xf32>
        %1013 = vector.shape_cast %1012 : vector<1x13x128xf32> to vector<13x128xf32>
        %1014 = vector.broadcast %1010 : f32 to vector<13x128xf32>
        %1015 = arith.mulf %1014, %1013 : vector<13x128xf32>
        %1016 = arith.addf %995, %1015 : vector<13x128xf32>
        %c1_i32_564 = arith.constant 1 : i32
        %1017 = arith.addi %960, %c1_i32_564 : i32
        %1018 = arith.index_cast %1017 : i32 to index
        %c2_565 = arith.constant 2 : index
        %c0_566 = arith.constant 0 : index
        %1019 = vector.load %arg16[%1018, %c2_565, %c0_566] : memref<90x15x128xf32, #tpu.memory_space<vmem>>, vector<1x13x128xf32>
        %1020 = vector.shape_cast %1019 : vector<1x13x128xf32> to vector<13x128xf32>
        %1021 = vector.broadcast %1010 : f32 to vector<13x128xf32>
        %1022 = arith.mulf %1021, %1020 : vector<13x128xf32>
        %1023 = arith.addf %1002, %1022 : vector<13x128xf32>
        %c2_i32_567 = arith.constant 2 : i32
        %1024 = arith.muli %c2_i32_567, %arg19 : i32
        %c75_i32 = arith.constant 75 : i32
        %1025 = arith.addi %c75_i32, %1024 : i32
        %c0_i32_568 = arith.constant 0 : i32
        %1026 = arith.addi %1025, %c0_i32_568 : i32
        %c6_i32_569 = arith.constant 6 : i32
        %1027 = arith.muli %arg18, %c6_i32_569 : i32
        %c5_i32 = arith.constant 5 : i32
        %1028 = arith.addi %1027, %c5_i32 : i32
        %c3_i32_570 = arith.constant 3 : i32
        %1029 = arith.muli %1028, %c3_i32_570 : i32
        %c0_i32_571 = arith.constant 0 : i32
        %1030 = arith.addi %1029, %c0_i32_571 : i32
        %c3_i32_572 = arith.constant 3 : i32
        %1031 = arith.muli %1030, %c3_i32_572 : i32
        %c0_i32_573 = arith.constant 0 : i32
        %1032 = arith.addi %1031, %c0_i32_573 : i32
        %1033 = arith.index_cast %1032 : i32 to index
        %1034 = memref.load %arg4[%1033] : memref<864xf32, #tpu.memory_space<smem>>
        %1035 = arith.index_cast %1026 : i32 to index
        %c0_574 = arith.constant 0 : index
        %c0_575 = arith.constant 0 : index
        %1036 = vector.load %arg16[%1035, %c0_574, %c0_575] : memref<90x15x128xf32, #tpu.memory_space<vmem>>, vector<1x13x128xf32>
        %1037 = vector.shape_cast %1036 : vector<1x13x128xf32> to vector<13x128xf32>
        %1038 = vector.broadcast %1034 : f32 to vector<13x128xf32>
        %1039 = arith.mulf %1038, %1037 : vector<13x128xf32>
        %1040 = arith.addf %1016, %1039 : vector<13x128xf32>
        %c1_i32_576 = arith.constant 1 : i32
        %1041 = arith.addi %1026, %c1_i32_576 : i32
        %1042 = arith.index_cast %1041 : i32 to index
        %c0_577 = arith.constant 0 : index
        %c0_578 = arith.constant 0 : index
        %1043 = vector.load %arg16[%1042, %c0_577, %c0_578] : memref<90x15x128xf32, #tpu.memory_space<vmem>>, vector<1x13x128xf32>
        %1044 = vector.shape_cast %1043 : vector<1x13x128xf32> to vector<13x128xf32>
        %1045 = vector.broadcast %1034 : f32 to vector<13x128xf32>
        %1046 = arith.mulf %1045, %1044 : vector<13x128xf32>
        %1047 = arith.addf %1023, %1046 : vector<13x128xf32>
        %c6_i32_579 = arith.constant 6 : i32
        %1048 = arith.muli %arg18, %c6_i32_579 : i32
        %c5_i32_580 = arith.constant 5 : i32
        %1049 = arith.addi %1048, %c5_i32_580 : i32
        %c3_i32_581 = arith.constant 3 : i32
        %1050 = arith.muli %1049, %c3_i32_581 : i32
        %c0_i32_582 = arith.constant 0 : i32
        %1051 = arith.addi %1050, %c0_i32_582 : i32
        %c3_i32_583 = arith.constant 3 : i32
        %1052 = arith.muli %1051, %c3_i32_583 : i32
        %c1_i32_584 = arith.constant 1 : i32
        %1053 = arith.addi %1052, %c1_i32_584 : i32
        %1054 = arith.index_cast %1053 : i32 to index
        %1055 = memref.load %arg4[%1054] : memref<864xf32, #tpu.memory_space<smem>>
        %1056 = arith.index_cast %1026 : i32 to index
        %c1_585 = arith.constant 1 : index
        %c0_586 = arith.constant 0 : index
        %1057 = vector.load %arg16[%1056, %c1_585, %c0_586] : memref<90x15x128xf32, #tpu.memory_space<vmem>>, vector<1x13x128xf32>
        %1058 = vector.shape_cast %1057 : vector<1x13x128xf32> to vector<13x128xf32>
        %1059 = vector.broadcast %1055 : f32 to vector<13x128xf32>
        %1060 = arith.mulf %1059, %1058 : vector<13x128xf32>
        %1061 = arith.addf %1040, %1060 : vector<13x128xf32>
        %c1_i32_587 = arith.constant 1 : i32
        %1062 = arith.addi %1026, %c1_i32_587 : i32
        %1063 = arith.index_cast %1062 : i32 to index
        %c1_588 = arith.constant 1 : index
        %c0_589 = arith.constant 0 : index
        %1064 = vector.load %arg16[%1063, %c1_588, %c0_589] : memref<90x15x128xf32, #tpu.memory_space<vmem>>, vector<1x13x128xf32>
        %1065 = vector.shape_cast %1064 : vector<1x13x128xf32> to vector<13x128xf32>
        %1066 = vector.broadcast %1055 : f32 to vector<13x128xf32>
        %1067 = arith.mulf %1066, %1065 : vector<13x128xf32>
        %1068 = arith.addf %1047, %1067 : vector<13x128xf32>
        %c6_i32_590 = arith.constant 6 : i32
        %1069 = arith.muli %arg18, %c6_i32_590 : i32
        %c5_i32_591 = arith.constant 5 : i32
        %1070 = arith.addi %1069, %c5_i32_591 : i32
        %c3_i32_592 = arith.constant 3 : i32
        %1071 = arith.muli %1070, %c3_i32_592 : i32
        %c0_i32_593 = arith.constant 0 : i32
        %1072 = arith.addi %1071, %c0_i32_593 : i32
        %c3_i32_594 = arith.constant 3 : i32
        %1073 = arith.muli %1072, %c3_i32_594 : i32
        %c2_i32_595 = arith.constant 2 : i32
        %1074 = arith.addi %1073, %c2_i32_595 : i32
        %1075 = arith.index_cast %1074 : i32 to index
        %1076 = memref.load %arg4[%1075] : memref<864xf32, #tpu.memory_space<smem>>
        %1077 = arith.index_cast %1026 : i32 to index
        %c2_596 = arith.constant 2 : index
        %c0_597 = arith.constant 0 : index
        %1078 = vector.load %arg16[%1077, %c2_596, %c0_597] : memref<90x15x128xf32, #tpu.memory_space<vmem>>, vector<1x13x128xf32>
        %1079 = vector.shape_cast %1078 : vector<1x13x128xf32> to vector<13x128xf32>
        %1080 = vector.broadcast %1076 : f32 to vector<13x128xf32>
        %1081 = arith.mulf %1080, %1079 : vector<13x128xf32>
        %1082 = arith.addf %1061, %1081 : vector<13x128xf32>
        %c1_i32_598 = arith.constant 1 : i32
        %1083 = arith.addi %1026, %c1_i32_598 : i32
        %1084 = arith.index_cast %1083 : i32 to index
        %c2_599 = arith.constant 2 : index
        %c0_600 = arith.constant 0 : index
        %1085 = vector.load %arg16[%1084, %c2_599, %c0_600] : memref<90x15x128xf32, #tpu.memory_space<vmem>>, vector<1x13x128xf32>
        %1086 = vector.shape_cast %1085 : vector<1x13x128xf32> to vector<13x128xf32>
        %1087 = vector.broadcast %1076 : f32 to vector<13x128xf32>
        %1088 = arith.mulf %1087, %1086 : vector<13x128xf32>
        %1089 = arith.addf %1068, %1088 : vector<13x128xf32>
        %c2_i32_601 = arith.constant 2 : i32
        %1090 = arith.muli %c2_i32_601, %arg19 : i32
        %c75_i32_602 = arith.constant 75 : i32
        %1091 = arith.addi %c75_i32_602, %1090 : i32
        %c1_i32_603 = arith.constant 1 : i32
        %1092 = arith.addi %1091, %c1_i32_603 : i32
        %c6_i32_604 = arith.constant 6 : i32
        %1093 = arith.muli %arg18, %c6_i32_604 : i32
        %c5_i32_605 = arith.constant 5 : i32
        %1094 = arith.addi %1093, %c5_i32_605 : i32
        %c3_i32_606 = arith.constant 3 : i32
        %1095 = arith.muli %1094, %c3_i32_606 : i32
        %c1_i32_607 = arith.constant 1 : i32
        %1096 = arith.addi %1095, %c1_i32_607 : i32
        %c3_i32_608 = arith.constant 3 : i32
        %1097 = arith.muli %1096, %c3_i32_608 : i32
        %c0_i32_609 = arith.constant 0 : i32
        %1098 = arith.addi %1097, %c0_i32_609 : i32
        %1099 = arith.index_cast %1098 : i32 to index
        %1100 = memref.load %arg4[%1099] : memref<864xf32, #tpu.memory_space<smem>>
        %1101 = arith.index_cast %1092 : i32 to index
        %c0_610 = arith.constant 0 : index
        %c0_611 = arith.constant 0 : index
        %1102 = vector.load %arg16[%1101, %c0_610, %c0_611] : memref<90x15x128xf32, #tpu.memory_space<vmem>>, vector<1x13x128xf32>
        %1103 = vector.shape_cast %1102 : vector<1x13x128xf32> to vector<13x128xf32>
        %1104 = vector.broadcast %1100 : f32 to vector<13x128xf32>
        %1105 = arith.mulf %1104, %1103 : vector<13x128xf32>
        %1106 = arith.addf %1082, %1105 : vector<13x128xf32>
        %c1_i32_612 = arith.constant 1 : i32
        %1107 = arith.addi %1092, %c1_i32_612 : i32
        %1108 = arith.index_cast %1107 : i32 to index
        %c0_613 = arith.constant 0 : index
        %c0_614 = arith.constant 0 : index
        %1109 = vector.load %arg16[%1108, %c0_613, %c0_614] : memref<90x15x128xf32, #tpu.memory_space<vmem>>, vector<1x13x128xf32>
        %1110 = vector.shape_cast %1109 : vector<1x13x128xf32> to vector<13x128xf32>
        %1111 = vector.broadcast %1100 : f32 to vector<13x128xf32>
        %1112 = arith.mulf %1111, %1110 : vector<13x128xf32>
        %1113 = arith.addf %1089, %1112 : vector<13x128xf32>
        %c6_i32_615 = arith.constant 6 : i32
        %1114 = arith.muli %arg18, %c6_i32_615 : i32
        %c5_i32_616 = arith.constant 5 : i32
        %1115 = arith.addi %1114, %c5_i32_616 : i32
        %c3_i32_617 = arith.constant 3 : i32
        %1116 = arith.muli %1115, %c3_i32_617 : i32
        %c1_i32_618 = arith.constant 1 : i32
        %1117 = arith.addi %1116, %c1_i32_618 : i32
        %c3_i32_619 = arith.constant 3 : i32
        %1118 = arith.muli %1117, %c3_i32_619 : i32
        %c1_i32_620 = arith.constant 1 : i32
        %1119 = arith.addi %1118, %c1_i32_620 : i32
        %1120 = arith.index_cast %1119 : i32 to index
        %1121 = memref.load %arg4[%1120] : memref<864xf32, #tpu.memory_space<smem>>
        %1122 = arith.index_cast %1092 : i32 to index
        %c1_621 = arith.constant 1 : index
        %c0_622 = arith.constant 0 : index
        %1123 = vector.load %arg16[%1122, %c1_621, %c0_622] : memref<90x15x128xf32, #tpu.memory_space<vmem>>, vector<1x13x128xf32>
        %1124 = vector.shape_cast %1123 : vector<1x13x128xf32> to vector<13x128xf32>
        %1125 = vector.broadcast %1121 : f32 to vector<13x128xf32>
        %1126 = arith.mulf %1125, %1124 : vector<13x128xf32>
        %1127 = arith.addf %1106, %1126 : vector<13x128xf32>
        %c1_i32_623 = arith.constant 1 : i32
        %1128 = arith.addi %1092, %c1_i32_623 : i32
        %1129 = arith.index_cast %1128 : i32 to index
        %c1_624 = arith.constant 1 : index
        %c0_625 = arith.constant 0 : index
        %1130 = vector.load %arg16[%1129, %c1_624, %c0_625] : memref<90x15x128xf32, #tpu.memory_space<vmem>>, vector<1x13x128xf32>
        %1131 = vector.shape_cast %1130 : vector<1x13x128xf32> to vector<13x128xf32>
        %1132 = vector.broadcast %1121 : f32 to vector<13x128xf32>
        %1133 = arith.mulf %1132, %1131 : vector<13x128xf32>
        %1134 = arith.addf %1113, %1133 : vector<13x128xf32>
        %c6_i32_626 = arith.constant 6 : i32
        %1135 = arith.muli %arg18, %c6_i32_626 : i32
        %c5_i32_627 = arith.constant 5 : i32
        %1136 = arith.addi %1135, %c5_i32_627 : i32
        %c3_i32_628 = arith.constant 3 : i32
        %1137 = arith.muli %1136, %c3_i32_628 : i32
        %c1_i32_629 = arith.constant 1 : i32
        %1138 = arith.addi %1137, %c1_i32_629 : i32
        %c3_i32_630 = arith.constant 3 : i32
        %1139 = arith.muli %1138, %c3_i32_630 : i32
        %c2_i32_631 = arith.constant 2 : i32
        %1140 = arith.addi %1139, %c2_i32_631 : i32
        %1141 = arith.index_cast %1140 : i32 to index
        %1142 = memref.load %arg4[%1141] : memref<864xf32, #tpu.memory_space<smem>>
        %1143 = arith.index_cast %1092 : i32 to index
        %c2_632 = arith.constant 2 : index
        %c0_633 = arith.constant 0 : index
        %1144 = vector.load %arg16[%1143, %c2_632, %c0_633] : memref<90x15x128xf32, #tpu.memory_space<vmem>>, vector<1x13x128xf32>
        %1145 = vector.shape_cast %1144 : vector<1x13x128xf32> to vector<13x128xf32>
        %1146 = vector.broadcast %1142 : f32 to vector<13x128xf32>
        %1147 = arith.mulf %1146, %1145 : vector<13x128xf32>
        %1148 = arith.addf %1127, %1147 : vector<13x128xf32>
        %c1_i32_634 = arith.constant 1 : i32
        %1149 = arith.addi %1092, %c1_i32_634 : i32
        %1150 = arith.index_cast %1149 : i32 to index
        %c2_635 = arith.constant 2 : index
        %c0_636 = arith.constant 0 : index
        %1151 = vector.load %arg16[%1150, %c2_635, %c0_636] : memref<90x15x128xf32, #tpu.memory_space<vmem>>, vector<1x13x128xf32>
        %1152 = vector.shape_cast %1151 : vector<1x13x128xf32> to vector<13x128xf32>
        %1153 = vector.broadcast %1142 : f32 to vector<13x128xf32>
        %1154 = arith.mulf %1153, %1152 : vector<13x128xf32>
        %1155 = arith.addf %1134, %1154 : vector<13x128xf32>
        %c2_i32_637 = arith.constant 2 : i32
        %1156 = arith.muli %c2_i32_637, %arg19 : i32
        %c75_i32_638 = arith.constant 75 : i32
        %1157 = arith.addi %c75_i32_638, %1156 : i32
        %c2_i32_639 = arith.constant 2 : i32
        %1158 = arith.addi %1157, %c2_i32_639 : i32
        %c6_i32_640 = arith.constant 6 : i32
        %1159 = arith.muli %arg18, %c6_i32_640 : i32
        %c5_i32_641 = arith.constant 5 : i32
        %1160 = arith.addi %1159, %c5_i32_641 : i32
        %c3_i32_642 = arith.constant 3 : i32
        %1161 = arith.muli %1160, %c3_i32_642 : i32
        %c2_i32_643 = arith.constant 2 : i32
        %1162 = arith.addi %1161, %c2_i32_643 : i32
        %c3_i32_644 = arith.constant 3 : i32
        %1163 = arith.muli %1162, %c3_i32_644 : i32
        %c0_i32_645 = arith.constant 0 : i32
        %1164 = arith.addi %1163, %c0_i32_645 : i32
        %1165 = arith.index_cast %1164 : i32 to index
        %1166 = memref.load %arg4[%1165] : memref<864xf32, #tpu.memory_space<smem>>
        %1167 = arith.index_cast %1158 : i32 to index
        %c0_646 = arith.constant 0 : index
        %c0_647 = arith.constant 0 : index
        %1168 = vector.load %arg16[%1167, %c0_646, %c0_647] : memref<90x15x128xf32, #tpu.memory_space<vmem>>, vector<1x13x128xf32>
        %1169 = vector.shape_cast %1168 : vector<1x13x128xf32> to vector<13x128xf32>
        %1170 = vector.broadcast %1166 : f32 to vector<13x128xf32>
        %1171 = arith.mulf %1170, %1169 : vector<13x128xf32>
        %1172 = arith.addf %1148, %1171 : vector<13x128xf32>
        %c1_i32_648 = arith.constant 1 : i32
        %1173 = arith.addi %1158, %c1_i32_648 : i32
        %1174 = arith.index_cast %1173 : i32 to index
        %c0_649 = arith.constant 0 : index
        %c0_650 = arith.constant 0 : index
        %1175 = vector.load %arg16[%1174, %c0_649, %c0_650] : memref<90x15x128xf32, #tpu.memory_space<vmem>>, vector<1x13x128xf32>
        %1176 = vector.shape_cast %1175 : vector<1x13x128xf32> to vector<13x128xf32>
        %1177 = vector.broadcast %1166 : f32 to vector<13x128xf32>
        %1178 = arith.mulf %1177, %1176 : vector<13x128xf32>
        %1179 = arith.addf %1155, %1178 : vector<13x128xf32>
        %c6_i32_651 = arith.constant 6 : i32
        %1180 = arith.muli %arg18, %c6_i32_651 : i32
        %c5_i32_652 = arith.constant 5 : i32
        %1181 = arith.addi %1180, %c5_i32_652 : i32
        %c3_i32_653 = arith.constant 3 : i32
        %1182 = arith.muli %1181, %c3_i32_653 : i32
        %c2_i32_654 = arith.constant 2 : i32
        %1183 = arith.addi %1182, %c2_i32_654 : i32
        %c3_i32_655 = arith.constant 3 : i32
        %1184 = arith.muli %1183, %c3_i32_655 : i32
        %c1_i32_656 = arith.constant 1 : i32
        %1185 = arith.addi %1184, %c1_i32_656 : i32
        %1186 = arith.index_cast %1185 : i32 to index
        %1187 = memref.load %arg4[%1186] : memref<864xf32, #tpu.memory_space<smem>>
        %1188 = arith.index_cast %1158 : i32 to index
        %c1_657 = arith.constant 1 : index
        %c0_658 = arith.constant 0 : index
        %1189 = vector.load %arg16[%1188, %c1_657, %c0_658] : memref<90x15x128xf32, #tpu.memory_space<vmem>>, vector<1x13x128xf32>
        %1190 = vector.shape_cast %1189 : vector<1x13x128xf32> to vector<13x128xf32>
        %1191 = vector.broadcast %1187 : f32 to vector<13x128xf32>
        %1192 = arith.mulf %1191, %1190 : vector<13x128xf32>
        %1193 = arith.addf %1172, %1192 : vector<13x128xf32>
        %c1_i32_659 = arith.constant 1 : i32
        %1194 = arith.addi %1158, %c1_i32_659 : i32
        %1195 = arith.index_cast %1194 : i32 to index
        %c1_660 = arith.constant 1 : index
        %c0_661 = arith.constant 0 : index
        %1196 = vector.load %arg16[%1195, %c1_660, %c0_661] : memref<90x15x128xf32, #tpu.memory_space<vmem>>, vector<1x13x128xf32>
        %1197 = vector.shape_cast %1196 : vector<1x13x128xf32> to vector<13x128xf32>
        %1198 = vector.broadcast %1187 : f32 to vector<13x128xf32>
        %1199 = arith.mulf %1198, %1197 : vector<13x128xf32>
        %1200 = arith.addf %1179, %1199 : vector<13x128xf32>
        %c6_i32_662 = arith.constant 6 : i32
        %1201 = arith.muli %arg18, %c6_i32_662 : i32
        %c5_i32_663 = arith.constant 5 : i32
        %1202 = arith.addi %1201, %c5_i32_663 : i32
        %c3_i32_664 = arith.constant 3 : i32
        %1203 = arith.muli %1202, %c3_i32_664 : i32
        %c2_i32_665 = arith.constant 2 : i32
        %1204 = arith.addi %1203, %c2_i32_665 : i32
        %c3_i32_666 = arith.constant 3 : i32
        %1205 = arith.muli %1204, %c3_i32_666 : i32
        %c2_i32_667 = arith.constant 2 : i32
        %1206 = arith.addi %1205, %c2_i32_667 : i32
        %1207 = arith.index_cast %1206 : i32 to index
        %1208 = memref.load %arg4[%1207] : memref<864xf32, #tpu.memory_space<smem>>
        %1209 = arith.index_cast %1158 : i32 to index
        %c2_668 = arith.constant 2 : index
        %c0_669 = arith.constant 0 : index
        %1210 = vector.load %arg16[%1209, %c2_668, %c0_669] : memref<90x15x128xf32, #tpu.memory_space<vmem>>, vector<1x13x128xf32>
        %1211 = vector.shape_cast %1210 : vector<1x13x128xf32> to vector<13x128xf32>
        %1212 = vector.broadcast %1208 : f32 to vector<13x128xf32>
        %1213 = arith.mulf %1212, %1211 : vector<13x128xf32>
        %1214 = arith.addf %1193, %1213 : vector<13x128xf32>
        %c1_i32_670 = arith.constant 1 : i32
        %1215 = arith.addi %1158, %c1_i32_670 : i32
        %1216 = arith.index_cast %1215 : i32 to index
        %c2_671 = arith.constant 2 : index
        %c0_672 = arith.constant 0 : index
        %1217 = vector.load %arg16[%1216, %c2_671, %c0_672] : memref<90x15x128xf32, #tpu.memory_space<vmem>>, vector<1x13x128xf32>
        %1218 = vector.shape_cast %1217 : vector<1x13x128xf32> to vector<13x128xf32>
        %1219 = vector.broadcast %1208 : f32 to vector<13x128xf32>
        %1220 = arith.mulf %1219, %1218 : vector<13x128xf32>
        %1221 = arith.addf %1200, %1220 : vector<13x128xf32>
        %1222 = arith.maximumf %1214, %1221 : vector<13x128xf32>
        %1223 = vector.extract_strided_slice %1222 {offsets = [0, 0], sizes = [12, 128], strides = [1, 1]} : vector<13x128xf32> to vector<12x128xf32>
        %1224 = vector.extract_strided_slice %1222 {offsets = [1, 0], sizes = [12, 128], strides = [1, 1]} : vector<13x128xf32> to vector<12x128xf32>
        %1225 = arith.maximumf %1223, %1224 : vector<12x128xf32>
        %cst_673 = arith.constant dense<0.000000e+00> : vector<6x128xf32>
        %1226 = tpu.matmul %4, %1225, %cst_673 {dimension_numbers = #tpu.dot_dimension_numbers<[1], [0], [0], [1], [0, 0, 1, 1], [], []>} : vector<6x12xf32>, vector<12x128xf32>, vector<6x128xf32> -> vector<6x128xf32>
        %cst_674 = arith.constant 0.000000e+00 : f32
        %1227 = vector.broadcast %cst_674 : f32 to vector<6x128xf32>
        %1228 = arith.maximumf %1226, %1227 : vector<6x128xf32>
        %c6_i32_675 = arith.constant 6 : i32
        %1229 = arith.muli %arg18, %c6_i32_675 : i32
        %1230 = arith.addi %1229, %arg19 : i32
        %c8_i32 = arith.constant 8 : i32
        %1231 = arith.muli %1230, %c8_i32 : i32
        %1232 = tpu.assume_multiple %1231, 8 : i32
        %1233 = arith.index_cast %1232 : i32 to index
        %c0_676 = arith.constant 0 : index
        %1234 = vector.load %arg17[%1233, %c0_676] : memref<768x128xf32, #tpu.memory_space<vmem>>, vector<6x128xf32>
        tpu.vector_store %arg17[%1233, %c0_676], %1228 {strides = array<i32>} : memref<768x128xf32, #tpu.memory_space<vmem>>, vector<6x128xf32>,
      }
      %c6_i32_35 = arith.constant 6 : i32
    }
    %c16_i32_8 = arith.constant 16 : i32
    %c0_9 = arith.constant 0 : index
    %c0_10 = arith.constant 0 : index
    %6 = vector.load %arg17[%c0_9, %c0_10] : memref<768x128xf32, #tpu.memory_space<vmem>>, vector<768x128xf32>
    %c0_11 = arith.constant 0 : index
    %c0_12 = arith.constant 0 : index
    %7 = vector.load %arg6[%c0_11, %c0_12] : memref<120x768xf32, #tpu.memory_space<vmem>>, vector<120x768xf32>
    %cst_13 = arith.constant dense<0.000000e+00> : vector<120x128xf32>
    %8 = tpu.matmul %7, %6, %cst_13 {dimension_numbers = #tpu.dot_dimension_numbers<[1], [0], [0], [1], [0, 0, 1, 1], [], []>} : vector<120x768xf32>, vector<768x128xf32>, vector<120x128xf32> -> vector<120x128xf32>
    %c0_14 = arith.constant 0 : index
    %c0_15 = arith.constant 0 : index
    %9 = vector.load %arg7[%c0_14, %c0_15] : memref<120x1xf32, #tpu.memory_space<vmem>>, vector<120x1xf32>
    %10 = vector.broadcast %9 : vector<120x1xf32> to vector<120x128xf32>
    %11 = arith.addf %8, %10 : vector<120x128xf32>
    %cst_16 = arith.constant 0.000000e+00 : f32
    %12 = vector.broadcast %cst_16 : f32 to vector<120x128xf32>
    %13 = arith.maximumf %11, %12 : vector<120x128xf32>
    %c0_17 = arith.constant 0 : index
    %c0_18 = arith.constant 0 : index
    %14 = vector.load %arg14[%c0_17, %c0_18] : memref<120x128xf32, #tpu.memory_space<vmem>>, vector<120x128xf32>
    %15 = arith.mulf %13, %14 : vector<120x128xf32>
    %c0_19 = arith.constant 0 : index
    %c0_20 = arith.constant 0 : index
    %16 = vector.load %arg8[%c0_19, %c0_20] : memref<84x120xf32, #tpu.memory_space<vmem>>, vector<84x120xf32>
    %cst_21 = arith.constant dense<0.000000e+00> : vector<84x128xf32>
    %17 = tpu.matmul %16, %15, %cst_21 {dimension_numbers = #tpu.dot_dimension_numbers<[1], [0], [0], [1], [0, 0, 1, 1], [], []>} : vector<84x120xf32>, vector<120x128xf32>, vector<84x128xf32> -> vector<84x128xf32>
    %c0_22 = arith.constant 0 : index
    %c0_23 = arith.constant 0 : index
    %18 = vector.load %arg9[%c0_22, %c0_23] : memref<84x1xf32, #tpu.memory_space<vmem>>, vector<84x1xf32>
    %19 = vector.broadcast %18 : vector<84x1xf32> to vector<84x128xf32>
    %20 = arith.addf %17, %19 : vector<84x128xf32>
    %cst_24 = arith.constant 0.000000e+00 : f32
    %21 = vector.broadcast %cst_24 : f32 to vector<84x128xf32>
    %22 = arith.maximumf %20, %21 : vector<84x128xf32>
    %c0_25 = arith.constant 0 : index
    %c0_26 = arith.constant 0 : index
    %23 = vector.load %arg10[%c0_25, %c0_26] : memref<10x84xf32, #tpu.memory_space<vmem>>, vector<10x84xf32>
    %cst_27 = arith.constant dense<0.000000e+00> : vector<10x128xf32>
    %24 = tpu.matmul %23, %22, %cst_27 {dimension_numbers = #tpu.dot_dimension_numbers<[1], [0], [0], [1], [0, 0, 1, 1], [], []>} : vector<10x84xf32>, vector<84x128xf32>, vector<10x128xf32> -> vector<10x128xf32>
    %c0_28 = arith.constant 0 : index
    %c0_29 = arith.constant 0 : index
    %25 = vector.load %arg11[%c0_28, %c0_29] : memref<10x1xf32, #tpu.memory_space<vmem>>, vector<10x1xf32>
    %26 = vector.broadcast %25 : vector<10x1xf32> to vector<10x128xf32>
    %27 = arith.addf %24, %26 : vector<10x128xf32>
    %c0_30 = arith.constant 0 : index
    %c0_31 = arith.constant 0 : index
    %28 = vector.load %arg15[%c0_30, %c0_31] : memref<10x128xf32, #tpu.memory_space<vmem>>, vector<10x128xf32>
    tpu.vector_store %arg15[%c0_30, %c0_31], %27 {strides = array<i32>} : memref<10x128xf32, #tpu.memory_space<vmem>>, vector<10x128xf32>,
    return
  }
  func.func @transform_0(%arg0: i32) -> (i32, i32, i32) {
    %c0_i32 = arith.constant 0 : i32
    %c0_i32_0 = arith.constant 0 : i32
    %c0_i32_1 = arith.constant 0 : i32
    return %c0_i32, %c0_i32_0, %arg0 : i32, i32, i32
  }
  func.func @transform_1(%arg0: i32) -> i32 {
    %c0_i32 = arith.constant 0 : i32
    %c0_i32_0 = arith.constant 0 : i32
    return %c0_i32 : i32
  }
  func.func @transform_2(%arg0: i32) -> i32 {
    %c0_i32 = arith.constant 0 : i32
    %c0_i32_0 = arith.constant 0 : i32
    return %c0_i32 : i32
  }
  func.func @transform_3(%arg0: i32) -> i32 {
    %c0_i32 = arith.constant 0 : i32
    %c0_i32_0 = arith.constant 0 : i32
    return %c0_i32 : i32
  }
  func.func @transform_4(%arg0: i32) -> i32 {
    %c0_i32 = arith.constant 0 : i32
    %c0_i32_0 = arith.constant 0 : i32
    return %c0_i32 : i32
  }
  func.func @transform_5(%arg0: i32) -> (i32, i32) {
    %c0_i32 = arith.constant 0 : i32
    %c0_i32_0 = arith.constant 0 : i32
    %c0_i32_1 = arith.constant 0 : i32
    return %c0_i32, %c0_i32_0 : i32, i32
  }
  func.func @transform_6(%arg0: i32) -> (i32, i32) {
    %c0_i32 = arith.constant 0 : i32
    %c0_i32_0 = arith.constant 0 : i32
    %c0_i32_1 = arith.constant 0 : i32
    return %c0_i32, %c0_i32_0 : i32, i32
  }
  func.func @transform_7(%arg0: i32) -> (i32, i32) {
    %c0_i32 = arith.constant 0 : i32
    %c0_i32_0 = arith.constant 0 : i32
    %c0_i32_1 = arith.constant 0 : i32
    return %c0_i32, %c0_i32_0 : i32, i32
  }
  func.func @transform_8(%arg0: i32) -> (i32, i32) {
    %c0_i32 = arith.constant 0 : i32
    %c0_i32_0 = arith.constant 0 : i32
    %c0_i32_1 = arith.constant 0 : i32
    return %c0_i32, %c0_i32_0 : i32, i32
  }
  func.func @transform_9(%arg0: i32) -> (i32, i32) {
    %c0_i32 = arith.constant 0 : i32
    %c0_i32_0 = arith.constant 0 : i32
    %c0_i32_1 = arith.constant 0 : i32
    return %c0_i32, %c0_i32_0 : i32, i32
  }
  func.func @transform_10(%arg0: i32) -> (i32, i32) {
    %c0_i32 = arith.constant 0 : i32
    %c0_i32_0 = arith.constant 0 : i32
    %c0_i32_1 = arith.constant 0 : i32
    return %c0_i32, %c0_i32_0 : i32, i32
  }
  func.func @transform_11(%arg0: i32) -> (i32, i32) {
    %c0_i32 = arith.constant 0 : i32
    %c0_i32_0 = arith.constant 0 : i32
    %c0_i32_1 = arith.constant 0 : i32
    return %c0_i32, %c0_i32_0 : i32, i32
  }
  func.func @transform_12(%arg0: i32) -> (i32, i32) {
    %c0_i32 = arith.constant 0 : i32
    %c0_i32_0 = arith.constant 0 : i32
    %c0_i32_1 = arith.constant 0 : i32
    return %c0_i32, %c0_i32_0 : i32, i32
  }
  func.func @transform_13(%arg0: i32) -> (i32, i32) {
    %c0_i32 = arith.constant 0 : i32
    %c0_i32_0 = arith.constant 0 : i32
    return %c0_i32, %arg0 : i32, i32
  }
  func.func @transform_14(%arg0: i32) -> (i32, i32) {
    %c0_i32 = arith.constant 0 : i32
    %c0_i32_0 = arith.constant 0 : i32
    return %c0_i32, %arg0 : i32, i32
  }
}

</mosaic_0001>

<llo_original>
// kernel: tpu_custom_call.1
$region0: #{tpu_custom_call.1}
  #allocation0 [shape = 'u32[]', space=smem, size = 0x4, offset = 0x4, fixed_abs, tag = 'smem constant byte address 0x4 - core index']
  #allocation1 [shape = 'u32[144,128]{1,0:T(1,128)}', space=vmem, size = 0x12000, scoped, tag = 'internal scratch']
  #allocation2 [shape = 'f32[90,15,128]{2,1,0:T(8,128)}', space=vmem, size = 0xb4000, scoped, tag = 'scratch operand']
  #allocation3 [shape = 'f32[768,128]{1,0:T(8,128)}', space=vmem, size = 0x60000, scoped, tag = 'scratch operand']
  %s0 = inlined_call_operand.hbm [shape: f32[96,32,256], index: 0, kind: input, shape index: {}]
  %s1 = inlined_call_operand.hbm [shape: f32[162], index: 1, kind: input, shape index: {}]
  %s2 = inlined_call_operand.hbm [shape: f32[6], index: 2, kind: input, shape index: {}]
  %s3 = inlined_call_operand.hbm [shape: f32[864], index: 3, kind: input, shape index: {}]
  %s4 = inlined_call_operand.hbm [shape: f32[16], index: 4, kind: input, shape index: {}]
  %s5 = inlined_call_operand.hbm [shape: f32[120,768], index: 5, kind: input, shape index: {}]
  %s6 = inlined_call_operand.vmem [shape: f32[120,1], index: 6, kind: input, shape index: {}]
  %s7 = inlined_call_operand.hbm [shape: f32[84,120], index: 7, kind: input, shape index: {}]
  %s8 = inlined_call_operand.vmem [shape: f32[84,1], index: 8, kind: input, shape index: {}]
  %s9 = inlined_call_operand.hbm [shape: f32[10,84], index: 9, kind: input, shape index: {}]
  %s10 = inlined_call_operand.vmem [shape: f32[10,1], index: 10, kind: input, shape index: {}]
  %s11 = inlined_call_operand.hbm [shape: f32[15,29], index: 11, kind: input, shape index: {}]
  %s12 = inlined_call_operand.hbm [shape: f32[6,12], index: 12, kind: input, shape index: {}]
  %s13 = inlined_call_operand.hbm [shape: f32[120,256], index: 13, kind: input, shape index: {}]
  %s14 = inlined_call_operand.hbm [shape: f32[10,256], index: 14, kind: output, shape index: {}]
  %s15 = sld [smem:[#allocation0]]
  $region161: #{tpu_custom_call.1} parent=0
    _
  %s17 = ssub.s32 1, %s15
  %s18 = scalar_select 0, %s17, %s15
  $region1: #{tpu_custom_call.1} parent=0
    #allocation4 [shape = 'u8[3145728]{0}', space=vmem, size = 0x300000, scoped, tag = 'input window, operand 0']
    #allocation5 [shape = 's32[2]{0}', space=sflag, size = 0x8, scoped, tag = 'scoped memory for tpu_custom_call.1']
    #allocation6 [shape = 's32[2]{0}', space=sflag, size = 0x8, scoped, tag = 'scoped memory for tpu_custom_call.1']
    #allocation7 [shape = 's32[2]{0}', space=sflag, size = 0x8, scoped, tag = 'scoped memory for tpu_custom_call.1']
    #allocation8 [shape = 'u8[1024]{0}', space=smem, size = 0x400, scoped, tag = 'input window, operand 1, single buffered']
    #allocation9 [shape = 'u8[512]{0}', space=smem, size = 0x200, scoped, tag = 'input window, operand 2, single buffered']
    #allocation10 [shape = 's32[1]{0}', space=sflag, size = 0x4, scoped, tag = 'scoped memory for tpu_custom_call.1']
    #allocation11 [shape = 'u8[3584]{0}', space=smem, size = 0xe00, scoped, tag = 'input window, operand 3, single buffered']
    #allocation12 [shape = 'u8[512]{0}', space=smem, size = 0x200, scoped, tag = 'input window, operand 4, single buffered']
    #allocation13 [shape = 's32[1]{0}', space=sflag, size = 0x4, scoped, tag = 'scoped memory for tpu_custom_call.1']
    #allocation14 [shape = 'u8[368640]{0}', space=vmem, size = 0x5a000, scoped, tag = 'input window, operand 5, single buffered']
    #allocation15 [shape = 's32[1]{0}', space=sflag, size = 0x4, scoped, tag = 'scoped memory for tpu_custom_call.1']
    #allocation16 [shape = 'u8[45056]{0}', space=vmem, size = 0xb000, scoped, tag = 'input window, operand 7, single buffered']
    #allocation17 [shape = 'u8[8192]{0}', space=vmem, size = 0x2000, scoped, tag = 'input window, operand 9, single buffered']
    #allocation18 [shape = 's32[1]{0}', space=sflag, size = 0x4, scoped, tag = 'scoped memory for tpu_custom_call.1']
    #allocation19 [shape = 'u8[8192]{0}', space=vmem, size = 0x2000, scoped, tag = 'input window, operand 11, single buffered']
    #allocation20 [shape = 'u8[4096]{0}', space=vmem, size = 0x1000, scoped, tag = 'input window, operand 12, single buffered']
    #allocation21 [shape = 's32[1]{0}', space=sflag, size = 0x4, scoped, tag = 'scoped memory for tpu_custom_call.1']
    #allocation22 [shape = 'u8[122880]{0}', space=vmem, size = 0x1e000, scoped, tag = 'input window, operand 13']
    #allocation23 [shape = 'u8[16384]{0}', space=vmem, size = 0x4000, scoped, tag = 'output window, operand 0']
    %19 = vsyncpa [#allocation5], 0
    %s20 = scalar_lea.sflag [#allocation5], 1
    %21 = vsyncpa %s20, 0
    %22 = vsyncpa [#allocation7], 0
    %23 = vsyncpa [#allocation10], 0
    %24 = vsyncpa [#allocation13], 0
    %25 = vsyncpa [#allocation15], 0
    %26 = vsyncpa [#allocation18], 0
    %27 = vsyncpa [#allocation21], 0
    %28 = vsyncpa [#allocation6], 0
    %s29 = scalar_lea.sflag [#allocation6], 1
    %30 = vsyncpa %s29, 0
    loop: start=0, step=1, limit=4
    $region2: #{tpu_custom_call.1} parent=1 // loop_pre_header
      _
    $region3: #{tpu_custom_call.1} parent=1 // loop_header
      %s32 = sphi 0, %s36
      %p33 = scmp.ge.s32.totalorder %s32, 4
      %s42 = sphi 0, %s44
      %s45 = sphi 0, %s42
      %s46 = sphi 0, %s45
      %s62 = sphi 0, %s46
      %s66 = sphi 0, %s66
      %s68 = sphi 0, %s66
      %s69 = sphi 0, %s68
      %s83 = sphi 0, %s69
      %s87 = sphi 0, %s87
      %s89 = sphi 0, %s87
      %s90 = sphi 0, %s89
      %s104 = sphi 0, %s90
      %s108 = sphi 0, %s108
      %s110 = sphi 0, %s108
      %s111 = sphi 0, %s110
      %s125 = sphi 0, %s111
      %s129 = sphi 0, %s129
      %s131 = sphi 0, %s129
      %s132 = sphi 0, %s131
      %s146 = sphi 0, %s132
      %s150 = sphi 0, %s150
      %s152 = sphi 0, %s150
      %s153 = sphi 0, %s152
      %s167 = sphi 0, %s153
      %s171 = sphi 0, %s171
      %s173 = sphi 0, %s171
      %s174 = sphi 0, %s173
      %s188 = sphi 0, %s174
      %s192 = sphi 0, %s192
      %s194 = sphi 0, %s192
      %s195 = sphi 0, %s194
      %s209 = sphi 0, %s195
      %s213 = sphi 0, %s213
      %s215 = sphi 0, %s213
      %s216 = sphi 0, %s215
      %s230 = sphi 0, %s216
      %s234 = sphi 0, %s234
      %s236 = sphi 0, %s234
      %s237 = sphi 0, %s236
      %s251 = sphi 0, %s237
      %s255 = sphi 0, %s255
      %s257 = sphi 0, %s255
      %s258 = sphi 0, %s257
      %s272 = sphi 0, %s258
      %s276 = sphi 0, %s276
      %s278 = sphi 0, %s276
      %s279 = sphi 0, %s278
      %s293 = sphi 0, %s279
      %s297 = sphi 0, %s297
      %s299 = sphi 0, %s297
      %s300 = sphi 0, %s299
      %s314 = sphi 0, %s300
      %s320 = sphi 0, %s322
      %s323 = sphi 0, %s320
      %s324 = sphi 0, %s323
      %s340 = sphi 0, %s324
      %s346 = sphi 0, %s348
      %s349 = sphi 0, %s346
      %s350 = sphi 0, %s349
      %s366 = sphi 0, %s350
    $region4: #{tpu_custom_call.1} parent=1 // loop_header_branch
      %35 = sbr.rel (%p33) target = $region8
    $region5: #{tpu_custom_call.1} parent=1 // loop_body
      %s37 = ssub.s32 %s32, 1
      %s38 = ssub.s32 %s32, 2
      %s39 = sadd.s32 %s32, 1
      %s40 = ssub.s32 %s32, %s39
      %p41 = scmp.eq.s32.totalorder %s40, 0
      %s43 = sadd.s32 %s42, 1
      %s44 = scalar_select %p41, %s42, %s43
      %p47 = pneg %p41
      %p48 = scmp.eq.s32.totalorder %s32, 1
      %p49 = por %p47, %p48
      %p50 = scmp.ne.s32.totalorder %s42, %s45
      %p51 = scmp.eq.s32.totalorder %s32, 0
      %p52 = por %p50, %p51
      %p53 = scmp.ne.s32.totalorder %s42, %s45
      %p54 = scmp.eq.s32.totalorder %s37, 1
      %p55 = por %p53, %p54
      %p56 = scmp.ne.s32.totalorder %s45, %s46
      %p57 = scmp.eq.s32.totalorder %s37, 0
      %p58 = por %p56, %p57
      %p59 = scmp.ne.s32.totalorder %s45, %s46
      %p60 = scmp.eq.s32.totalorder %s38, 1
      %p61 = por %p59, %p60
      %p63 = scmp.ne.s32.totalorder %s46, %s62
      %p64 = scmp.eq.s32.totalorder %s38, 0
      %p65 = por %p63, %p64
      %s67 = sadd.s32 %s66, 1
      %p70 = scmp.eq.s32.totalorder %s32, 1
      %p71 = scmp.ne.s32.totalorder %s66, %s68
      %p72 = scmp.eq.s32.totalorder %s32, 0
      %p73 = por %p71, %p72
      %p74 = scmp.ne.s32.totalorder %s66, %s68
      %p75 = scmp.eq.s32.totalorder %s37, 1
      %p76 = por %p74, %p75
      %p77 = scmp.ne.s32.totalorder %s68, %s69
      %p78 = scmp.eq.s32.totalorder %s37, 0
      %p79 = por %p77, %p78
      %p80 = scmp.ne.s32.totalorder %s68, %s69
      %p81 = scmp.eq.s32.totalorder %s38, 1
      %p82 = por %p80, %p81
      %p84 = scmp.ne.s32.totalorder %s69, %s83
      %p85 = scmp.eq.s32.totalorder %s38, 0
      %p86 = por %p84, %p85
      %s88 = sadd.s32 %s87, 1
      %p91 = scmp.eq.s32.totalorder %s32, 1
      %p92 = scmp.ne.s32.totalorder %s87, %s89
      %p93 = scmp.eq.s32.totalorder %s32, 0
      %p94 = por %p92, %p93
      %p95 = scmp.ne.s32.totalorder %s87, %s89
      %p96 = scmp.eq.s32.totalorder %s37, 1
      %p97 = por %p95, %p96
      %p98 = scmp.ne.s32.totalorder %s89, %s90
      %p99 = scmp.eq.s32.totalorder %s37, 0
      %p100 = por %p98, %p99
      %p101 = scmp.ne.s32.totalorder %s89, %s90
      %p102 = scmp.eq.s32.totalorder %s38, 1
      %p103 = por %p101, %p102
      %p105 = scmp.ne.s32.totalorder %s90, %s104
      %p106 = scmp.eq.s32.totalorder %s38, 0
      %p107 = por %p105, %p106
      %s109 = sadd.s32 %s108, 1
      %p112 = scmp.eq.s32.totalorder %s32, 1
      %p113 = scmp.ne.s32.totalorder %s108, %s110
      %p114 = scmp.eq.s32.totalorder %s32, 0
      %p115 = por %p113, %p114
      %p116 = scmp.ne.s32.totalorder %s108, %s110
      %p117 = scmp.eq.s32.totalorder %s37, 1
      %p118 = por %p116, %p117
      %p119 = scmp.ne.s32.totalorder %s110, %s111
      %p120 = scmp.eq.s32.totalorder %s37, 0
      %p121 = por %p119, %p120
      %p122 = scmp.ne.s32.totalorder %s110, %s111
      %p123 = scmp.eq.s32.totalorder %s38, 1
      %p124 = por %p122, %p123
      %p126 = scmp.ne.s32.totalorder %s111, %s125
      %p127 = scmp.eq.s32.totalorder %s38, 0
      %p128 = por %p126, %p127
      %s130 = sadd.s32 %s129, 1
      %p133 = scmp.eq.s32.totalorder %s32, 1
      %p134 = scmp.ne.s32.totalorder %s129, %s131
      %p135 = scmp.eq.s32.totalorder %s32, 0
      %p136 = por %p134, %p135
      %p137 = scmp.ne.s32.totalorder %s129, %s131
      %p138 = scmp.eq.s32.totalorder %s37, 1
      %p139 = por %p137, %p138
      %p140 = scmp.ne.s32.totalorder %s131, %s132
      %p141 = scmp.eq.s32.totalorder %s37, 0
      %p142 = por %p140, %p141
      %p143 = scmp.ne.s32.totalorder %s131, %s132
      %p144 = scmp.eq.s32.totalorder %s38, 1
      %p145 = por %p143, %p144
      %p147 = scmp.ne.s32.totalorder %s132, %s146
      %p148 = scmp.eq.s32.totalorder %s38, 0
      %p149 = por %p147, %p148
      %s151 = sadd.s32 %s150, 1
      %p154 = scmp.eq.s32.totalorder %s32, 1
      %p155 = scmp.ne.s32.totalorder %s150, %s152
      %p156 = scmp.eq.s32.totalorder %s32, 0
      %p157 = por %p155, %p156
      %p158 = scmp.ne.s32.totalorder %s150, %s152
      %p159 = scmp.eq.s32.totalorder %s37, 1
      %p160 = por %p158, %p159
      %p161 = scmp.ne.s32.totalorder %s152, %s153
      %p162 = scmp.eq.s32.totalorder %s37, 0
      %p163 = por %p161, %p162
      %p164 = scmp.ne.s32.totalorder %s152, %s153
      %p165 = scmp.eq.s32.totalorder %s38, 1
      %p166 = por %p164, %p165
      %p168 = scmp.ne.s32.totalorder %s153, %s167
      %p169 = scmp.eq.s32.totalorder %s38, 0
      %p170 = por %p168, %p169
      %s172 = sadd.s32 %s171, 1
      %p175 = scmp.eq.s32.totalorder %s32, 1
      %p176 = scmp.ne.s32.totalorder %s171, %s173
      %p177 = scmp.eq.s32.totalorder %s32, 0
      %p178 = por %p176, %p177
      %p179 = scmp.ne.s32.totalorder %s171, %s173
      %p180 = scmp.eq.s32.totalorder %s37, 1
      %p181 = por %p179, %p180
      %p182 = scmp.ne.s32.totalorder %s173, %s174
      %p183 = scmp.eq.s32.totalorder %s37, 0
      %p184 = por %p182, %p183
      %p185 = scmp.ne.s32.totalorder %s173, %s174
      %p186 = scmp.eq.s32.totalorder %s38, 1
      %p187 = por %p185, %p186
      %p189 = scmp.ne.s32.totalorder %s174, %s188
      %p190 = scmp.eq.s32.totalorder %s38, 0
      %p191 = por %p189, %p190
      %s193 = sadd.s32 %s192, 1
      %p196 = scmp.eq.s32.totalorder %s32, 1
      %p197 = scmp.ne.s32.totalorder %s192, %s194
      %p198 = scmp.eq.s32.totalorder %s32, 0
      %p199 = por %p197, %p198
      %p200 = scmp.ne.s32.totalorder %s192, %s194
      %p201 = scmp.eq.s32.totalorder %s37, 1
      %p202 = por %p200, %p201
      %p203 = scmp.ne.s32.totalorder %s194, %s195
      %p204 = scmp.eq.s32.totalorder %s37, 0
      %p205 = por %p203, %p204
      %p206 = scmp.ne.s32.totalorder %s194, %s195
      %p207 = scmp.eq.s32.totalorder %s38, 1
      %p208 = por %p206, %p207
      %p210 = scmp.ne.s32.totalorder %s195, %s209
      %p211 = scmp.eq.s32.totalorder %s38, 0
      %p212 = por %p210, %p211
      %s214 = sadd.s32 %s213, 1
      %p217 = scmp.eq.s32.totalorder %s32, 1
      %p218 = scmp.ne.s32.totalorder %s213, %s215
      %p219 = scmp.eq.s32.totalorder %s32, 0
      %p220 = por %p218, %p219
      %p221 = scmp.ne.s32.totalorder %s213, %s215
      %p222 = scmp.eq.s32.totalorder %s37, 1
      %p223 = por %p221, %p222
      %p224 = scmp.ne.s32.totalorder %s215, %s216
      %p225 = scmp.eq.s32.totalorder %s37, 0
      %p226 = por %p224, %p225
      %p227 = scmp.ne.s32.totalorder %s215, %s216
      %p228 = scmp.eq.s32.totalorder %s38, 1
      %p229 = por %p227, %p228
      %p231 = scmp.ne.s32.totalorder %s216, %s230
      %p232 = scmp.eq.s32.totalorder %s38, 0
      %p233 = por %p231, %p232
      %s235 = sadd.s32 %s234, 1
      %p238 = scmp.eq.s32.totalorder %s32, 1
      %p239 = scmp.ne.s32.totalorder %s234, %s236
      %p240 = scmp.eq.s32.totalorder %s32, 0
      %p241 = por %p239, %p240
      %p242 = scmp.ne.s32.totalorder %s234, %s236
      %p243 = scmp.eq.s32.totalorder %s37, 1
      %p244 = por %p242, %p243
      %p245 = scmp.ne.s32.totalorder %s236, %s237
      %p246 = scmp.eq.s32.totalorder %s37, 0
      %p247 = por %p245, %p246
      %p248 = scmp.ne.s32.totalorder %s236, %s237
      %p249 = scmp.eq.s32.totalorder %s38, 1
      %p250 = por %p248, %p249
      %p252 = scmp.ne.s32.totalorder %s237, %s251
      %p253 = scmp.eq.s32.totalorder %s38, 0
      %p254 = por %p252, %p253
      %s256 = sadd.s32 %s255, 1
      %p259 = scmp.eq.s32.totalorder %s32, 1
      %p260 = scmp.ne.s32.totalorder %s255, %s257
      %p261 = scmp.eq.s32.totalorder %s32, 0
      %p262 = por %p260, %p261
      %p263 = scmp.ne.s32.totalorder %s255, %s257
      %p264 = scmp.eq.s32.totalorder %s37, 1
      %p265 = por %p263, %p264
      %p266 = scmp.ne.s32.totalorder %s257, %s258
      %p267 = scmp.eq.s32.totalorder %s37, 0
      %p268 = por %p266, %p267
      %p269 = scmp.ne.s32.totalorder %s257, %s258
      %p270 = scmp.eq.s32.totalorder %s38, 1
      %p271 = por %p269, %p270
      %p273 = scmp.ne.s32.totalorder %s258, %s272
      %p274 = scmp.eq.s32.totalorder %s38, 0
      %p275 = por %p273, %p274
      %s277 = sadd.s32 %s276, 1
      %p280 = scmp.eq.s32.totalorder %s32, 1
      %p281 = scmp.ne.s32.totalorder %s276, %s278
      %p282 = scmp.eq.s32.totalorder %s32, 0
      %p283 = por %p281, %p282
      %p284 = scmp.ne.s32.totalorder %s276, %s278
      %p285 = scmp.eq.s32.totalorder %s37, 1
      %p286 = por %p284, %p285
      %p287 = scmp.ne.s32.totalorder %s278, %s279
      %p288 = scmp.eq.s32.totalorder %s37, 0
      %p289 = por %p287, %p288
      %p290 = scmp.ne.s32.totalorder %s278, %s279
      %p291 = scmp.eq.s32.totalorder %s38, 1
      %p292 = por %p290, %p291
      %p294 = scmp.ne.s32.totalorder %s279, %s293
      %p295 = scmp.eq.s32.totalorder %s38, 0
      %p296 = por %p294, %p295
      %s298 = sadd.s32 %s297, 1
      %p301 = scmp.eq.s32.totalorder %s32, 1
      %p302 = scmp.ne.s32.totalorder %s297, %s299
      %p303 = scmp.eq.s32.totalorder %s32, 0
      %p304 = por %p302, %p303
      %p305 = scmp.ne.s32.totalorder %s297, %s299
      %p306 = scmp.eq.s32.totalorder %s37, 1
      %p307 = por %p305, %p306
      %p308 = scmp.ne.s32.totalorder %s299, %s300
      %p309 = scmp.eq.s32.totalorder %s37, 0
      %p310 = por %p308, %p309
      %p311 = scmp.ne.s32.totalorder %s299, %s300
      %p312 = scmp.eq.s32.totalorder %s38, 1
      %p313 = por %p311, %p312
      %p315 = scmp.ne.s32.totalorder %s300, %s314
      %p316 = scmp.eq.s32.totalorder %s38, 0
      %p317 = por %p315, %p316
      %s318 = ssub.s32 %s32, %s39
      %p319 = scmp.eq.s32.totalorder %s318, 0
      %s321 = sadd.s32 %s320, 1
      %s322 = scalar_select %p319, %s320, %s321
      %p325 = pneg %p319
      %p326 = scmp.eq.s32.totalorder %s32, 1
      %p327 = por %p325, %p326
      %p328 = scmp.ne.s32.totalorder %s320, %s323
      %p329 = scmp.eq.s32.totalorder %s32, 0
      %p330 = por %p328, %p329
      %p331 = scmp.ne.s32.totalorder %s320, %s323
      %p332 = scmp.eq.s32.totalorder %s37, 1
      %p333 = por %p331, %p332
      %p334 = scmp.ne.s32.totalorder %s323, %s324
      %p335 = scmp.eq.s32.totalorder %s37, 0
      %p336 = por %p334, %p335
      %p337 = scmp.ne.s32.totalorder %s323, %s324
      %p338 = scmp.eq.s32.totalorder %s38, 1
      %p339 = por %p337, %p338
      %p341 = scmp.ne.s32.totalorder %s324, %s340
      %p342 = scmp.eq.s32.totalorder %s38, 0
      %p343 = por %p341, %p342
      %s344 = ssub.s32 %s32, %s39
      %p345 = scmp.eq.s32.totalorder %s344, 0
      %s347 = sadd.s32 %s346, 1
      %s348 = scalar_select %p345, %s346, %s347
      %p351 = pneg %p345
      %p352 = scmp.eq.s32.totalorder %s32, 1
      %p353 = por %p351, %p352
      %p354 = scmp.ne.s32.totalorder %s346, %s349
      %p355 = scmp.eq.s32.totalorder %s32, 0
      %p356 = por %p354, %p355
      %p357 = scmp.ne.s32.totalorder %s346, %s349
      %p358 = scmp.eq.s32.totalorder %s37, 1
      %p359 = por %p357, %p358
      %p360 = scmp.ne.s32.totalorder %s349, %s350
      %p361 = scmp.eq.s32.totalorder %s37, 0
      %p362 = por %p360, %p361
      %p363 = scmp.ne.s32.totalorder %s349, %s350
      %p364 = scmp.eq.s32.totalorder %s38, 1
      %p365 = por %p363, %p364
      %p367 = scmp.ne.s32.totalorder %s350, %s366
      %p368 = scmp.eq.s32.totalorder %s38, 0
      %p369 = por %p367, %p368
      %p370 = scmp.le.s32.totalorder 1, %s32
      %p371 = scmp.lt.s32.totalorder %s32, 3
      %p372 = pnand %p370, %p371
      %p373 = pneg %p372
      // Predicated region
      $region9: #{tpu_custom_call.1} parent=5 // pred_check
        _
      $region10: #{tpu_custom_call.1} parent=5 // pred_check_branch
        %375 = sbr.rel (%p372) target = $region12
      $region11: #{tpu_custom_call.1} parent=5 // pred_region
        %s376 = ssub.s32 %s32, 1
        // Predicated region
        $region13: #{tpu_custom_call.1} parent=11 // pred_check
          %p377 = pneg %p79
        $region14: #{tpu_custom_call.1} parent=11 // pred_check_branch
          %379 = sbr.rel (%p377) target = $region16
        $region15: #{tpu_custom_call.1} parent=11 // pred_region
          %s381 = ssub.s32 32, 32
          %382 = vsyncadd [#allocation7], %s381
          %385 = dma.hbm_to_smem %s1, 32, [#allocation8], [#allocation7]
        $region16: #{tpu_custom_call.1} parent=11 // pred_fallthru
          _
        // Predicated region
        $region17: #{tpu_custom_call.1} parent=11 // pred_check
          %p386 = pneg %p100
        $region18: #{tpu_custom_call.1} parent=11 // pred_check_branch
          %388 = sbr.rel (%p386) target = $region20
        $region19: #{tpu_custom_call.1} parent=11 // pred_region
          %s390 = ssub.s32 16, 16
          %391 = vsyncadd [#allocation10], %s390
          %394 = dma.hbm_to_smem %s2, 16, [#allocation9], [#allocation10]
        $region20: #{tpu_custom_call.1} parent=11 // pred_fallthru
          _
        // Predicated region
        $region21: #{tpu_custom_call.1} parent=11 // pred_check
          %p395 = pneg %p121
        $region22: #{tpu_custom_call.1} parent=11 // pred_check_branch
          %397 = sbr.rel (%p395) target = $region24
        $region23: #{tpu_custom_call.1} parent=11 // pred_region
          %s399 = ssub.s32 112, 112
          %400 = vsyncadd [#allocation10], %s399
          %403 = dma.hbm_to_smem %s3, 112, [#allocation11], [#allocation10]
        $region24: #{tpu_custom_call.1} parent=11 // pred_fallthru
          _
        // Predicated region
        $region25: #{tpu_custom_call.1} parent=11 // pred_check
          %p404 = pneg %p142
        $region26: #{tpu_custom_call.1} parent=11 // pred_check_branch
          %406 = sbr.rel (%p404) target = $region28
        $region27: #{tpu_custom_call.1} parent=11 // pred_region
          %s408 = ssub.s32 16, 16
          %409 = vsyncadd [#allocation13], %s408
          %412 = dma.hbm_to_smem %s4, 16, [#allocation12], [#allocation13]
        $region28: #{tpu_custom_call.1} parent=11 // pred_fallthru
          _
        // Predicated region
        $region29: #{tpu_custom_call.1} parent=11 // pred_check
          %p413 = pneg %p163
        $region30: #{tpu_custom_call.1} parent=11 // pred_check_branch
          %415 = sbr.rel (%p413) target = $region32
        $region31: #{tpu_custom_call.1} parent=11 // pred_region
          %s417 = ssub.s32 11520, 11520
          %418 = vsyncadd [#allocation15], %s417
          %s419 = sshll.u32 [#allocation14], 4
          %s420 = int_to_ptr.vmem [resolvable:$true] %s419
          %425 = dma.hbm_to_vmem [thread:$0]  %s5, 11520, %s420, [#allocation15], 768, 768, 48
        $region32: #{tpu_custom_call.1} parent=11 // pred_fallthru
          _
        // Predicated region
        $region33: #{tpu_custom_call.1} parent=11 // pred_check
          %p426 = pneg %p184
        $region34: #{tpu_custom_call.1} parent=11 // pred_check_branch
          %428 = sbr.rel (%p426) target = $region36
        $region35: #{tpu_custom_call.1} parent=11 // pred_region
          _
        $region36: #{tpu_custom_call.1} parent=11 // pred_fallthru
          _
        // Predicated region
        $region37: #{tpu_custom_call.1} parent=11 // pred_check
          %p429 = pneg %p205
        $region38: #{tpu_custom_call.1} parent=11 // pred_check_branch
          %431 = sbr.rel (%p429) target = $region40
        $region39: #{tpu_custom_call.1} parent=11 // pred_region
          %s433 = ssub.s32 1408, 1408
          %434 = vsyncadd [#allocation15], %s433
          %s435 = sshll.u32 [#allocation16], 4
          %s436 = int_to_ptr.vmem [resolvable:$true] %s435
          %441 = dma.hbm_to_vmem [thread:$0]  %s7, 1408, %s436, [#allocation15], 128, 128, 8
        $region40: #{tpu_custom_call.1} parent=11 // pred_fallthru
          _
        // Predicated region
        $region41: #{tpu_custom_call.1} parent=11 // pred_check
          %p442 = pneg %p226
        $region42: #{tpu_custom_call.1} parent=11 // pred_check_branch
          %444 = sbr.rel (%p442) target = $region44
        $region43: #{tpu_custom_call.1} parent=11 // pred_region
          _
        $region44: #{tpu_custom_call.1} parent=11 // pred_fallthru
          _
        // Predicated region
        $region45: #{tpu_custom_call.1} parent=11 // pred_check
          %p445 = pneg %p247
        $region46: #{tpu_custom_call.1} parent=11 // pred_check_branch
          %447 = sbr.rel (%p445) target = $region48
        $region47: #{tpu_custom_call.1} parent=11 // pred_region
          %s449 = ssub.s32 256, 256
          %450 = vsyncadd [#allocation18], %s449
          %s451 = sshll.u32 [#allocation17], 4
          %s452 = int_to_ptr.vmem [resolvable:$true] %s451
          %457 = dma.hbm_to_vmem [thread:$0]  %s9, 256, %s452, [#allocation18], 128, 128, 8
        $region48: #{tpu_custom_call.1} parent=11 // pred_fallthru
          _
        // Predicated region
        $region49: #{tpu_custom_call.1} parent=11 // pred_check
          %p458 = pneg %p268
        $region50: #{tpu_custom_call.1} parent=11 // pred_check_branch
          %460 = sbr.rel (%p458) target = $region52
        $region51: #{tpu_custom_call.1} parent=11 // pred_region
          _
        $region52: #{tpu_custom_call.1} parent=11 // pred_fallthru
          _
        // Predicated region
        $region53: #{tpu_custom_call.1} parent=11 // pred_check
          %p461 = pneg %p289
        $region54: #{tpu_custom_call.1} parent=11 // pred_check_branch
          %463 = sbr.rel (%p461) target = $region56
        $region55: #{tpu_custom_call.1} parent=11 // pred_region
          %s465 = ssub.s32 256, 256
          %466 = vsyncadd [#allocation18], %s465
          %s467 = sshll.u32 [#allocation19], 4
          %s468 = int_to_ptr.vmem [resolvable:$true] %s467
          %473 = dma.hbm_to_vmem [thread:$0]  %s11, 256, %s468, [#allocation18], 128, 128, 8
        $region56: #{tpu_custom_call.1} parent=11 // pred_fallthru
          _
        // Predicated region
        $region57: #{tpu_custom_call.1} parent=11 // pred_check
          %p474 = pneg %p310
        $region58: #{tpu_custom_call.1} parent=11 // pred_check_branch
          %476 = sbr.rel (%p474) target = $region60
        $region59: #{tpu_custom_call.1} parent=11 // pred_region
          %s478 = ssub.s32 128, 128
          %479 = vsyncadd [#allocation21], %s478
          %s481 = sshll.u32 [#allocation20], 4
          %s482 = int_to_ptr.vmem [resolvable:$true] %s481
          %484 = dma.hbm_to_vmem [thread:$0]  %s12, 128, %s482, [#allocation21]
        $region60: #{tpu_custom_call.1} parent=11 // pred_fallthru
          _
      $region12: #{tpu_custom_call.1} parent=5 // pred_fallthru
        _
      %p485 = scmp.lt.s32.totalorder %s32, 2
      // Predicated region
      $region61: #{tpu_custom_call.1} parent=5 // pred_check
        %p486 = pneg %p485
      $region62: #{tpu_custom_call.1} parent=5 // pred_check_branch
        %488 = sbr.rel (%p486) target = $region64
      $region63: #{tpu_custom_call.1} parent=5 // pred_region
        // Predicated region
        $region65: #{tpu_custom_call.1} parent=63 // pred_check
          %p489 = pneg %p52
        $region66: #{tpu_custom_call.1} parent=63 // pred_check_branch
          %491 = sbr.rel (%p489) target = $region68
        $region67: #{tpu_custom_call.1} parent=63 // pred_region
          %s492 = sand.u32 %s32, 1
          %s493 = scalar_lea.sflag [#allocation5], %s492
          %s494 = sand.u32 %s42, 1
          %s495 = smul.addr %s494, 3072
          %s496 = scalar_lea.vmem [#allocation4], %s495
          %s498 = ssub.s32 49152, 49152
          %499 = vsyncadd %s493, %s498
          %s500 = smul.addr %s32, 128
          %s501 = scalar_lea.hbm %s0, %s500
          %s502 = sshll.u32 %s496, 4
          %s503 = int_to_ptr.vmem [resolvable:$true] %s502
          %508 = dma.hbm_to_vmem [thread:$0]  %s501, 49152, %s503, %s493, 256, 128, 8
        $region68: #{tpu_custom_call.1} parent=63 // pred_fallthru
          _
        // Predicated region
        $region69: #{tpu_custom_call.1} parent=63 // pred_check
          %p509 = pneg %p330
        $region70: #{tpu_custom_call.1} parent=63 // pred_check_branch
          %511 = sbr.rel (%p509) target = $region72
        $region71: #{tpu_custom_call.1} parent=63 // pred_region
          %s512 = sand.u32 %s32, 1
          %s513 = scalar_lea.sflag [#allocation5], %s512
          %s514 = sand.u32 %s320, 1
          %s515 = smul.addr %s514, 120
          %s516 = scalar_lea.vmem [#allocation22], %s515
          %s518 = ssub.s32 1920, 1920
          %519 = vsyncadd %s513, %s518
          %s520 = smul.addr %s32, 128
          %s521 = scalar_lea.hbm %s13, %s520
          %s522 = sshll.u32 %s516, 4
          %s523 = int_to_ptr.vmem [resolvable:$true] %s522
          %528 = dma.hbm_to_vmem [thread:$0]  %s521, 1920, %s523, %s513, 256, 128, 8
        $region72: #{tpu_custom_call.1} parent=63 // pred_fallthru
          _
      $region64: #{tpu_custom_call.1} parent=5 // pred_fallthru
        _
      %p529 = scmp.le.s32.totalorder 1, %s32
      %p530 = scmp.lt.s32.totalorder %s32, 3
      %p531 = pnand %p529, %p530
      %p532 = pneg %p531
      // Predicated region
      $region73: #{tpu_custom_call.1} parent=5 // pred_check
        _
      $region74: #{tpu_custom_call.1} parent=5 // pred_check_branch
        %534 = sbr.rel (%p531) target = $region76
      $region75: #{tpu_custom_call.1} parent=5 // pred_region
        %s535 = ssub.s32 %s32, 1
        %s536 = sand.u32 %s37, 1
        %s537 = scalar_lea.sflag [#allocation5], %s536
        %s538 = sand.u32 %s45, 1
        %s539 = smul.addr %s538, 3072
        %s540 = scalar_lea.vmem [#allocation4], %s539
        // Predicated region
        $region77: #{tpu_custom_call.1} parent=75 // pred_check
          %p541 = pneg %p58
        $region78: #{tpu_custom_call.1} parent=75 // pred_check_branch
          %543 = sbr.rel (%p541) target = $region80
        $region79: #{tpu_custom_call.1} parent=75 // pred_region
          %544 = dma.done %s537, 49152
        $region80: #{tpu_custom_call.1} parent=75 // pred_fallthru
          _
        // Predicated region
        $region81: #{tpu_custom_call.1} parent=75 // pred_check
          %p545 = pneg %p79
        $region82: #{tpu_custom_call.1} parent=75 // pred_check_branch
          %547 = sbr.rel (%p545) target = $region84
        $region83: #{tpu_custom_call.1} parent=75 // pred_region
          %548 = dma.done [#allocation7], 32
        $region84: #{tpu_custom_call.1} parent=75 // pred_fallthru
          _
        // Predicated region
        $region85: #{tpu_custom_call.1} parent=75 // pred_check
          %p549 = pneg %p100
        $region86: #{tpu_custom_call.1} parent=75 // pred_check_branch
          %551 = sbr.rel (%p549) target = $region88
        $region87: #{tpu_custom_call.1} parent=75 // pred_region
          %552 = dma.done [#allocation10], 16
        $region88: #{tpu_custom_call.1} parent=75 // pred_fallthru
          _
        // Predicated region
        $region89: #{tpu_custom_call.1} parent=75 // pred_check
          %p553 = pneg %p121
        $region90: #{tpu_custom_call.1} parent=75 // pred_check_branch
          %555 = sbr.rel (%p553) target = $region92
        $region91: #{tpu_custom_call.1} parent=75 // pred_region
          %556 = dma.done [#allocation10], 112
        $region92: #{tpu_custom_call.1} parent=75 // pred_fallthru
          _
        // Predicated region
        $region93: #{tpu_custom_call.1} parent=75 // pred_check
          %p557 = pneg %p142
        $region94: #{tpu_custom_call.1} parent=75 // pred_check_branch
          %559 = sbr.rel (%p557) target = $region96
        $region95: #{tpu_custom_call.1} parent=75 // pred_region
          %560 = dma.done [#allocation13], 16
        $region96: #{tpu_custom_call.1} parent=75 // pred_fallthru
          _
        // Predicated region
        $region97: #{tpu_custom_call.1} parent=75 // pred_check
          %p561 = pneg %p163
        $region98: #{tpu_custom_call.1} parent=75 // pred_check_branch
          %563 = sbr.rel (%p561) target = $region100
        $region99: #{tpu_custom_call.1} parent=75 // pred_region
          %564 = dma.done [#allocation15], 11520
        $region100: #{tpu_custom_call.1} parent=75 // pred_fallthru
          _
        // Predicated region
        $region101: #{tpu_custom_call.1} parent=75 // pred_check
          %p565 = pneg %p205
        $region102: #{tpu_custom_call.1} parent=75 // pred_check_branch
          %567 = sbr.rel (%p565) target = $region104
        $region103: #{tpu_custom_call.1} parent=75 // pred_region
          %568 = dma.done [#allocation15], 1408
        $region104: #{tpu_custom_call.1} parent=75 // pred_fallthru
          _
        // Predicated region
        $region105: #{tpu_custom_call.1} parent=75 // pred_check
          %p569 = pneg %p247
        $region106: #{tpu_custom_call.1} parent=75 // pred_check_branch
          %571 = sbr.rel (%p569) target = $region108
        $region107: #{tpu_custom_call.1} parent=75 // pred_region
          %572 = dma.done [#allocation18], 256
        $region108: #{tpu_custom_call.1} parent=75 // pred_fallthru
          _
        // Predicated region
        $region109: #{tpu_custom_call.1} parent=75 // pred_check
          %p573 = pneg %p289
        $region110: #{tpu_custom_call.1} parent=75 // pred_check_branch
          %575 = sbr.rel (%p573) target = $region112
        $region111: #{tpu_custom_call.1} parent=75 // pred_region
          %576 = dma.done [#allocation18], 256
        $region112: #{tpu_custom_call.1} parent=75 // pred_fallthru
          _
        // Predicated region
        $region113: #{tpu_custom_call.1} parent=75 // pred_check
          %p577 = pneg %p310
        $region114: #{tpu_custom_call.1} parent=75 // pred_check_branch
          %579 = sbr.rel (%p577) target = $region116
        $region115: #{tpu_custom_call.1} parent=75 // pred_region
          %580 = dma.done [#allocation21], 128
        $region116: #{tpu_custom_call.1} parent=75 // pred_fallthru
          _
        %s581 = sand.u32 %s37, 1
        %s582 = scalar_lea.sflag [#allocation5], %s581
        %s583 = sand.u32 %s323, 1
        %s584 = smul.addr %s583, 120
        %s585 = scalar_lea.vmem [#allocation22], %s584
        // Predicated region
        $region117: #{tpu_custom_call.1} parent=75 // pred_check
          %p586 = pneg %p336
        $region118: #{tpu_custom_call.1} parent=75 // pred_check_branch
          %588 = sbr.rel (%p586) target = $region120
        $region119: #{tpu_custom_call.1} parent=75 // pred_region
          %589 = dma.done %s582, 1920
        $region120: #{tpu_custom_call.1} parent=75 // pred_fallthru
          _
        %590 = sfence
        %s591 = sand.u32 %s37, 1
        %s592 = scalar_lea.sflag [#allocation5], %s591
        %s593 = sand.u32 %s45, 1
        %s594 = smul.addr %s593, 3072
        %s595 = scalar_lea.vmem [#allocation4], %s594
        %p596 = pneg %p58
        %p597 = pneg %p55
        %p598 = pneg %p79
        %p599 = pneg %p76
        %p600 = pneg %p100
        %p601 = pneg %p97
        %p602 = pneg %p121
        %p603 = pneg %p118
        %p604 = pneg %p142
        %p605 = pneg %p139
        %p606 = pneg %p163
        %p607 = pneg %p160
        %p608 = pneg %p184
        %p609 = pneg %p181
        %p610 = pneg %p205
        %p611 = pneg %p202
        %p612 = pneg %p226
        %p613 = pneg %p223
        %p614 = pneg %p247
        %p615 = pneg %p244
        %p616 = pneg %p268
        %p617 = pneg %p265
        %p618 = pneg %p289
        %p619 = pneg %p286
        %p620 = pneg %p310
        %p621 = pneg %p307
        %s622 = sand.u32 %s37, 1
        %s623 = scalar_lea.sflag [#allocation5], %s622
        %s624 = sand.u32 %s323, 1
        %s625 = smul.addr %s624, 120
        %s626 = scalar_lea.vmem [#allocation22], %s625
        %p627 = pneg %p336
        %p628 = pneg %p333
        %p629 = pneg %p362
        %p630 = pneg %p359
        %s631 = sand.u32 %s349, 1
        %s632 = scalar_lea.sflag [#allocation6], %s631
        %s633 = sand.u32 %s349, 1
        %s634 = smul.addr %s633, 16
        %s635 = scalar_lea.vmem [#allocation23], %s634
        %v636 = vld [vmem:[#allocation19] sm:$0xff]
        %v637 = vld [vmem:[#allocation19 + $0x8] sm:$0x7f]
        loop: start=0, step=1, limit=6
        $region121: #{tpu_custom_call.1} parent=75 // loop_pre_header
          _
        $region122: #{tpu_custom_call.1} parent=75 // loop_header
          %s639 = sphi 0, %s643
          %p640 = scmp.ge.s32.totalorder %s639, 6
        $region123: #{tpu_custom_call.1} parent=75 // loop_header_branch
          %642 = sbr.rel (%p640) target = $region127
        $region124: #{tpu_custom_call.1} parent=75 // loop_body
          loop: start=0, step=1, limit=15
          $region128: #{tpu_custom_call.1} parent=124 // loop_pre_header
            _
          $region129: #{tpu_custom_call.1} parent=124 // loop_header
            %s645 = sphi 0, %s649
            %p646 = scmp.ge.s32.totalorder %s645, 15
          $region130: #{tpu_custom_call.1} parent=124 // loop_header_branch
            %648 = sbr.rel (%p646) target = $region134
          $region131: #{tpu_custom_call.1} parent=124 // loop_body
            %s650 = sld [smem:[#allocation9 + %s639]]
            %v651 = vstv %s650
            %s652 = smul.u32 %s645, 2
            %s653 = smul.u32 %s639, 27
            %s654 = sld [smem:[#allocation8 + %s653]]
            %s655 = smul.u32 %s652, 32
            %s656 = scalar_lea.vmem %s540, %s655 [#allocation4]
            %v657 = vld [vmem:[%s656] sm:$0xff]
            %v658 = vld [vmem:[%s656 + $0x8] sm:$0xff]
            %v659 = vld [vmem:[%s656 + $0x10] sm:$0xff]
            %v660 = vld [vmem:[%s656 + $0x18] sm:$0x3f]
            %v661 = vstv %s654
            %v662 = vmul.f32 %v661, %v657
            %v663 = vmul.f32 %v661, %v658
            %v664 = vmul.f32 %v661, %v659
            %v665 = vmul.f32 %v661, %v660
            %v666 = vadd.f32 %v651, %v662
            %v667 = vadd.f32 %v651, %v663
            %v668 = vadd.f32 %v651, %v664
            %v669 = vadd.f32 %v651, %v665
            %s670 = sadd.s32 %s652, 1
            %s671 = smul.u32 %s670, 32
            %s672 = scalar_lea.vmem %s540, %s671 [#allocation4]
            %v673 = vld [vmem:[%s672] sm:$0xff]
            %v674 = vld [vmem:[%s672 + $0x8] sm:$0xff]
            %v675 = vld [vmem:[%s672 + $0x10] sm:$0xff]
            %v676 = vld [vmem:[%s672 + $0x18] sm:$0x3f]
            %v677 = vmul.f32 %v661, %v673
            %v678 = vmul.f32 %v661, %v674
            %v679 = vmul.f32 %v661, %v675
            %v680 = vmul.f32 %v661, %v676
            %v681 = vadd.f32 %v651, %v677
            %v682 = vadd.f32 %v651, %v678
            %v683 = vadd.f32 %v651, %v679
            %v684 = vadd.f32 %v651, %v680
            %s685 = sadd.s32 %s653, 1
            %s686 = sld [smem:[#allocation8 + %s685]]
            %v687 = vld [vmem:[%s656 + $0x1] sm:$0xff]
            %v688 = vld [vmem:[%s656 + $0x9] sm:$0xff]
            %v689 = vld [vmem:[%s656 + $0x11] sm:$0xff]
            %v690 = vld [vmem:[%s656 + $0x19] sm:$0x3f]
            %v691 = vstv %s686
            %v692 = vmul.f32 %v691, %v687
            %v693 = vmul.f32 %v691, %v688
            %v694 = vmul.f32 %v691, %v689
            %v695 = vmul.f32 %v691, %v690
            %v696 = vadd.f32 %v666, %v692
            %v697 = vadd.f32 %v667, %v693
            %v698 = vadd.f32 %v668, %v694
            %v699 = vadd.f32 %v669, %v695
            %v700 = vld [vmem:[%s672 + $0x1] sm:$0xff]
            %v701 = vld [vmem:[%s672 + $0x9] sm:$0xff]
            %v702 = vld [vmem:[%s672 + $0x11] sm:$0xff]
            %v703 = vld [vmem:[%s672 + $0x19] sm:$0x3f]
            %v704 = vmul.f32 %v691, %v700
            %v705 = vmul.f32 %v691, %v701
            %v706 = vmul.f32 %v691, %v702
            %v707 = vmul.f32 %v691, %v703
            %v708 = vadd.f32 %v681, %v704
            %v709 = vadd.f32 %v682, %v705
            %v710 = vadd.f32 %v683, %v706
            %v711 = vadd.f32 %v684, %v707
            %s712 = sadd.s32 %s653, 2
            %s713 = sld [smem:[#allocation8 + %s712]]
            %v714 = vld [vmem:[%s656 + $0x2] sm:$0xff]
            %v715 = vld [vmem:[%s656 + $0xa] sm:$0xff]
            %v716 = vld [vmem:[%s656 + $0x12] sm:$0xff]
            %v717 = vld [vmem:[%s656 + $0x1a] sm:$0x3f]
            %v718 = vstv %s713
            %v719 = vmul.f32 %v718, %v714
            %v720 = vmul.f32 %v718, %v715
            %v721 = vmul.f32 %v718, %v716
            %v722 = vmul.f32 %v718, %v717
            %v723 = vadd.f32 %v696, %v719
            %v724 = vadd.f32 %v697, %v720
            %v725 = vadd.f32 %v698, %v721
            %v726 = vadd.f32 %v699, %v722
            %v727 = vld [vmem:[%s672 + $0x2] sm:$0xff]
            %v728 = vld [vmem:[%s672 + $0xa] sm:$0xff]
            %v729 = vld [vmem:[%s672 + $0x12] sm:$0xff]
            %v730 = vld [vmem:[%s672 + $0x1a] sm:$0x3f]
            %v731 = vmul.f32 %v718, %v727
            %v732 = vmul.f32 %v718, %v728
            %v733 = vmul.f32 %v718, %v729
            %v734 = vmul.f32 %v718, %v730
            %v735 = vadd.f32 %v708, %v731
            %v736 = vadd.f32 %v709, %v732
            %v737 = vadd.f32 %v710, %v733
            %v738 = vadd.f32 %v711, %v734
            %s739 = smul.u32 %s639, 9
            %s740 = sadd.s32 %s739, 1
            %s741 = smul.u32 %s740, 3
            %s742 = sld [smem:[#allocation8 + %s741]]
            %v743 = vstv %s742
            %v744 = vmul.f32 %v743, %v673
            %v745 = vmul.f32 %v743, %v674
            %v746 = vmul.f32 %v743, %v675
            %v747 = vmul.f32 %v743, %v676
            %v748 = vadd.f32 %v723, %v744
            %v749 = vadd.f32 %v724, %v745
            %v750 = vadd.f32 %v725, %v746
            %v751 = vadd.f32 %v726, %v747
            %s752 = sadd.s32 %s652, 2
            %s753 = smul.u32 %s752, 32
            %s754 = scalar_lea.vmem %s540, %s753 [#allocation4]
            %v755 = vld [vmem:[%s754] sm:$0xff]
            %v756 = vld [vmem:[%s754 + $0x8] sm:$0xff]
            %v757 = vld [vmem:[%s754 + $0x10] sm:$0xff]
            %v758 = vld [vmem:[%s754 + $0x18] sm:$0x3f]
            %v759 = vmul.f32 %v743, %v755
            %v760 = vmul.f32 %v743, %v756
            %v761 = vmul.f32 %v743, %v757
            %v762 = vmul.f32 %v743, %v758
            %v763 = vadd.f32 %v735, %v759
            %v764 = vadd.f32 %v736, %v760
            %v765 = vadd.f32 %v737, %v761
            %v766 = vadd.f32 %v738, %v762
            %s767 = sadd.s32 %s741, 1
            %s768 = sld [smem:[#allocation8 + %s767]]
            %v769 = vstv %s768
            %v770 = vmul.f32 %v769, %v700
            %v771 = vmul.f32 %v769, %v701
            %v772 = vmul.f32 %v769, %v702
            %v773 = vmul.f32 %v769, %v703
            %v774 = vadd.f32 %v748, %v770
            %v775 = vadd.f32 %v749, %v771
            %v776 = vadd.f32 %v750, %v772
            %v777 = vadd.f32 %v751, %v773
            %v778 = vld [vmem:[%s754 + $0x1] sm:$0xff]
            %v779 = vld [vmem:[%s754 + $0x9] sm:$0xff]
            %v780 = vld [vmem:[%s754 + $0x11] sm:$0xff]
            %v781 = vld [vmem:[%s754 + $0x19] sm:$0x3f]
            %v782 = vmul.f32 %v769, %v778
            %v783 = vmul.f32 %v769, %v779
            %v784 = vmul.f32 %v769, %v780
            %v785 = vmul.f32 %v769, %v781
            %v786 = vadd.f32 %v763, %v782
            %v787 = vadd.f32 %v764, %v783
            %v788 = vadd.f32 %v765, %v784
            %v789 = vadd.f32 %v766, %v785
            %s790 = sadd.s32 %s741, 2
            %s791 = sld [smem:[#allocation8 + %s790]]
            %v792 = vstv %s791
            %v793 = vmul.f32 %v792, %v727
            %v794 = vmul.f32 %v792, %v728
            %v795 = vmul.f32 %v792, %v729
            %v796 = vmul.f32 %v792, %v730
            %v797 = vadd.f32 %v774, %v793
            %v798 = vadd.f32 %v775, %v794
            %v799 = vadd.f32 %v776, %v795
            %v800 = vadd.f32 %v777, %v796
            %v801 = vld [vmem:[%s754 + $0x2] sm:$0xff]
            %v802 = vld [vmem:[%s754 + $0xa] sm:$0xff]
            %v803 = vld [vmem:[%s754 + $0x12] sm:$0xff]
            %v804 = vld [vmem:[%s754 + $0x1a] sm:$0x3f]
            %v805 = vmul.f32 %v792, %v801
            %v806 = vmul.f32 %v792, %v802
            %v807 = vmul.f32 %v792, %v803
            %v808 = vmul.f32 %v792, %v804
            %v809 = vadd.f32 %v786, %v805
            %v810 = vadd.f32 %v787, %v806
            %v811 = vadd.f32 %v788, %v807
            %v812 = vadd.f32 %v789, %v808
            %s813 = sadd.s32 %s739, 2
            %s814 = smul.u32 %s813, 3
            %s815 = sld [smem:[#allocation8 + %s814]]
            %v816 = vstv %s815
            %v817 = vmul.f32 %v816, %v755
            %v818 = vmul.f32 %v816, %v756
            %v819 = vmul.f32 %v816, %v757
            %v820 = vmul.f32 %v816, %v758
            %v821 = vadd.f32 %v797, %v817
            %v822 = vadd.f32 %v798, %v818
            %v823 = vadd.f32 %v799, %v819
            %v824 = vadd.f32 %v800, %v820
            %s825 = sadd.s32 %s652, 3
            %s826 = smul.u32 %s825, 32
            %s827 = scalar_lea.vmem %s540, %s826 [#allocation4]
            %v828 = vld [vmem:[%s827] sm:$0xff]
            %v829 = vld [vmem:[%s827 + $0x8] sm:$0xff]
            %v830 = vld [vmem:[%s827 + $0x10] sm:$0xff]
            %v831 = vld [vmem:[%s827 + $0x18] sm:$0x3f]
            %v832 = vmul.f32 %v816, %v828
            %v833 = vmul.f32 %v816, %v829
            %v834 = vmul.f32 %v816, %v830
            %v835 = vmul.f32 %v816, %v831
            %v836 = vadd.f32 %v809, %v832
            %v837 = vadd.f32 %v810, %v833
            %v838 = vadd.f32 %v811, %v834
            %v839 = vadd.f32 %v812, %v835
            %s840 = sadd.s32 %s814, 1
            %s841 = sld [smem:[#allocation8 + %s840]]
            %v842 = vstv %s841
            %v843 = vmul.f32 %v842, %v778
            %v844 = vmul.f32 %v842, %v779
            %v845 = vmul.f32 %v842, %v780
            %v846 = vmul.f32 %v842, %v781
            %v847 = vadd.f32 %v821, %v843
            %v848 = vadd.f32 %v822, %v844
            %v849 = vadd.f32 %v823, %v845
            %v850 = vadd.f32 %v824, %v846
            %v851 = vld [vmem:[%s827 + $0x1] sm:$0xff]
            %v852 = vld [vmem:[%s827 + $0x9] sm:$0xff]
            %v853 = vld [vmem:[%s827 + $0x11] sm:$0xff]
            %v854 = vld [vmem:[%s827 + $0x19] sm:$0x3f]
            %v855 = vmul.f32 %v842, %v851
            %v856 = vmul.f32 %v842, %v852
            %v857 = vmul.f32 %v842, %v853
            %v858 = vmul.f32 %v842, %v854
            %v859 = vadd.f32 %v836, %v855
            %v860 = vadd.f32 %v837, %v856
            %v861 = vadd.f32 %v838, %v857
            %v862 = vadd.f32 %v839, %v858
            %s863 = sadd.s32 %s814, 2
            %s864 = sld [smem:[#allocation8 + %s863]]
            %v865 = vstv %s864
            %v866 = vmul.f32 %v865, %v801
            %v867 = vmul.f32 %v865, %v802
            %v868 = vmul.f32 %v865, %v803
            %v869 = vmul.f32 %v865, %v804
            %v870 = vadd.f32 %v847, %v866
            %v871 = vadd.f32 %v848, %v867
            %v872 = vadd.f32 %v849, %v868
            %v873 = vadd.f32 %v850, %v869
            %v874 = vld [vmem:[%s827 + $0x2] sm:$0xff]
            %v875 = vld [vmem:[%s827 + $0xa] sm:$0xff]
            %v876 = vld [vmem:[%s827 + $0x12] sm:$0xff]
            %v877 = vld [vmem:[%s827 + $0x1a] sm:$0x3f]
            %v878 = vmul.f32 %v865, %v874
            %v879 = vmul.f32 %v865, %v875
            %v880 = vmul.f32 %v865, %v876
            %v881 = vmul.f32 %v865, %v877
            %v882 = vadd.f32 %v859, %v878
            %v883 = vadd.f32 %v860, %v879
            %v884 = vadd.f32 %v861, %v880
            %v885 = vadd.f32 %v862, %v881
            %s886 = sadd.s32 %s652, 32
            %s887 = smul.u32 %s639, 3
            %s888 = sadd.s32 %s887, 1
            %s889 = smul.u32 %s888, 9
            %s890 = sld [smem:[#allocation8 + %s889]]
            %s891 = smul.u32 %s886, 32
            %s892 = scalar_lea.vmem %s540, %s891 [#allocation4]
            %v893 = vld [vmem:[%s892] sm:$0xff]
            %v894 = vld [vmem:[%s892 + $0x8] sm:$0xff]
            %v895 = vld [vmem:[%s892 + $0x10] sm:$0xff]
            %v896 = vld [vmem:[%s892 + $0x18] sm:$0x3f]
            %v897 = vstv %s890
            %v898 = vmul.f32 %v897, %v893
            %v899 = vmul.f32 %v897, %v894
            %v900 = vmul.f32 %v897, %v895
            %v901 = vmul.f32 %v897, %v896
            %v902 = vadd.f32 %v870, %v898
            %v903 = vadd.f32 %v871, %v899
            %v904 = vadd.f32 %v872, %v900
            %v905 = vadd.f32 %v873, %v901
            %s906 = sadd.s32 %s652, 33
            %s907 = smul.u32 %s906, 32
            %s908 = scalar_lea.vmem %s540, %s907 [#allocation4]
            %v909 = vld [vmem:[%s908] sm:$0xff]
            %v910 = vld [vmem:[%s908 + $0x8] sm:$0xff]
            %v911 = vld [vmem:[%s908 + $0x10] sm:$0xff]
            %v912 = vld [vmem:[%s908 + $0x18] sm:$0x3f]
            %v913 = vmul.f32 %v897, %v909
            %v914 = vmul.f32 %v897, %v910
            %v915 = vmul.f32 %v897, %v911
            %v916 = vmul.f32 %v897, %v912
            %v917 = vadd.f32 %v882, %v913
            %v918 = vadd.f32 %v883, %v914
            %v919 = vadd.f32 %v884, %v915
            %v920 = vadd.f32 %v885, %v916
            %s921 = sadd.s32 %s889, 1
            %s922 = sld [smem:[#allocation8 + %s921]]
            %v923 = vld [vmem:[%s892 + $0x1] sm:$0xff]
            %v924 = vld [vmem:[%s892 + $0x9] sm:$0xff]
            %v925 = vld [vmem:[%s892 + $0x11] sm:$0xff]
            %v926 = vld [vmem:[%s892 + $0x19] sm:$0x3f]
            %v927 = vstv %s922
            %v928 = vmul.f32 %v927, %v923
            %v929 = vmul.f32 %v927, %v924
            %v930 = vmul.f32 %v927, %v925
            %v931 = vmul.f32 %v927, %v926
            %v932 = vadd.f32 %v902, %v928
            %v933 = vadd.f32 %v903, %v929
            %v934 = vadd.f32 %v904, %v930
            %v935 = vadd.f32 %v905, %v931
            %v936 = vld [vmem:[%s908 + $0x1] sm:$0xff]
            %v937 = vld [vmem:[%s908 + $0x9] sm:$0xff]
            %v938 = vld [vmem:[%s908 + $0x11] sm:$0xff]
            %v939 = vld [vmem:[%s908 + $0x19] sm:$0x3f]
            %v940 = vmul.f32 %v927, %v936
            %v941 = vmul.f32 %v927, %v937
            %v942 = vmul.f32 %v927, %v938
            %v943 = vmul.f32 %v927, %v939
            %v944 = vadd.f32 %v917, %v940
            %v945 = vadd.f32 %v918, %v941
            %v946 = vadd.f32 %v919, %v942
            %v947 = vadd.f32 %v920, %v943
            %s948 = sadd.s32 %s889, 2
            %s949 = sld [smem:[#allocation8 + %s948]]
            %v950 = vld [vmem:[%s892 + $0x2] sm:$0xff]
            %v951 = vld [vmem:[%s892 + $0xa] sm:$0xff]
            %v952 = vld [vmem:[%s892 + $0x12] sm:$0xff]
            %v953 = vld [vmem:[%s892 + $0x1a] sm:$0x3f]
            %v954 = vstv %s949
            %v955 = vmul.f32 %v954, %v950
            %v956 = vmul.f32 %v954, %v951
            %v957 = vmul.f32 %v954, %v952
            %v958 = vmul.f32 %v954, %v953
            %v959 = vadd.f32 %v932, %v955
            %v960 = vadd.f32 %v933, %v956
            %v961 = vadd.f32 %v934, %v957
            %v962 = vadd.f32 %v935, %v958
            %v963 = vld [vmem:[%s908 + $0x2] sm:$0xff]
            %v964 = vld [vmem:[%s908 + $0xa] sm:$0xff]
            %v965 = vld [vmem:[%s908 + $0x12] sm:$0xff]
            %v966 = vld [vmem:[%s908 + $0x1a] sm:$0x3f]
            %v967 = vmul.f32 %v954, %v963
            %v968 = vmul.f32 %v954, %v964
            %v969 = vmul.f32 %v954, %v965
            %v970 = vmul.f32 %v954, %v966
            %v971 = vadd.f32 %v944, %v967
            %v972 = vadd.f32 %v945, %v968
            %v973 = vadd.f32 %v946, %v969
            %v974 = vadd.f32 %v947, %v970
            %s975 = smul.u32 %s888, 3
            %s976 = sadd.s32 %s975, 1
            %s977 = smul.u32 %s976, 3
            %s978 = sld [smem:[#allocation8 + %s977]]
            %v979 = vstv %s978
            %v980 = vmul.f32 %v979, %v909
            %v981 = vmul.f32 %v979, %v910
            %v982 = vmul.f32 %v979, %v911
            %v983 = vmul.f32 %v979, %v912
            %v984 = vadd.f32 %v959, %v980
            %v985 = vadd.f32 %v960, %v981
            %v986 = vadd.f32 %v961, %v982
            %v987 = vadd.f32 %v962, %v983
            %s988 = sadd.s32 %s652, 34
            %s989 = smul.u32 %s988, 32
            %s990 = scalar_lea.vmem %s540, %s989 [#allocation4]
            %v991 = vld [vmem:[%s990] sm:$0xff]
            %v992 = vld [vmem:[%s990 + $0x8] sm:$0xff]
            %v993 = vld [vmem:[%s990 + $0x10] sm:$0xff]
            %v994 = vld [vmem:[%s990 + $0x18] sm:$0x3f]
            %v995 = vmul.f32 %v979, %v991
            %v996 = vmul.f32 %v979, %v992
            %v997 = vmul.f32 %v979, %v993
            %v998 = vmul.f32 %v979, %v994
            %v999 = vadd.f32 %v971, %v995
            %v1000 = vadd.f32 %v972, %v996
            %v1001 = vadd.f32 %v973, %v997
            %v1002 = vadd.f32 %v974, %v998
            %s1003 = sadd.s32 %s977, 1
            %s1004 = sld [smem:[#allocation8 + %s1003]]
            %v1005 = vstv %s1004
            %v1006 = vmul.f32 %v1005, %v936
            %v1007 = vmul.f32 %v1005, %v937
            %v1008 = vmul.f32 %v1005, %v938
            %v1009 = vmul.f32 %v1005, %v939
            %v1010 = vadd.f32 %v984, %v1006
            %v1011 = vadd.f32 %v985, %v1007
            %v1012 = vadd.f32 %v986, %v1008
            %v1013 = vadd.f32 %v987, %v1009
            %v1014 = vld [vmem:[%s990 + $0x1] sm:$0xff]
            %v1015 = vld [vmem:[%s990 + $0x9] sm:$0xff]
            %v1016 = vld [vmem:[%s990 + $0x11] sm:$0xff]
            %v1017 = vld [vmem:[%s990 + $0x19] sm:$0x3f]
            %v1018 = vmul.f32 %v1005, %v1014
            %v1019 = vmul.f32 %v1005, %v1015
            %v1020 = vmul.f32 %v1005, %v1016
            %v1021 = vmul.f32 %v1005, %v1017
            %v1022 = vadd.f32 %v999, %v1018
            %v1023 = vadd.f32 %v1000, %v1019
            %v1024 = vadd.f32 %v1001, %v1020
            %v1025 = vadd.f32 %v1002, %v1021
            %s1026 = sadd.s32 %s977, 2
            %s1027 = sld [smem:[#allocation8 + %s1026]]
            %v1028 = vstv %s1027
            %v1029 = vmul.f32 %v1028, %v963
            %v1030 = vmul.f32 %v1028, %v964
            %v1031 = vmul.f32 %v1028, %v965
            %v1032 = vmul.f32 %v1028, %v966
            %v1033 = vadd.f32 %v1010, %v1029
            %v1034 = vadd.f32 %v1011, %v1030
            %v1035 = vadd.f32 %v1012, %v1031
            %v1036 = vadd.f32 %v1013, %v1032
            %v1037 = vld [vmem:[%s990 + $0x2] sm:$0xff]
            %v1038 = vld [vmem:[%s990 + $0xa] sm:$0xff]
            %v1039 = vld [vmem:[%s990 + $0x12] sm:$0xff]
            %v1040 = vld [vmem:[%s990 + $0x1a] sm:$0x3f]
            %v1041 = vmul.f32 %v1028, %v1037
            %v1042 = vmul.f32 %v1028, %v1038
            %v1043 = vmul.f32 %v1028, %v1039
            %v1044 = vmul.f32 %v1028, %v1040
            %v1045 = vadd.f32 %v1022, %v1041
            %v1046 = vadd.f32 %v1023, %v1042
            %v1047 = vadd.f32 %v1024, %v1043
            %v1048 = vadd.f32 %v1025, %v1044
            %s1049 = sadd.s32 %s975, 2
            %s1050 = smul.u32 %s1049, 3
            %s1051 = sld [smem:[#allocation8 + %s1050]]
            %v1052 = vstv %s1051
            %v1053 = vmul.f32 %v1052, %v991
            %v1054 = vmul.f32 %v1052, %v992
            %v1055 = vmul.f32 %v1052, %v993
            %v1056 = vmul.f32 %v1052, %v994
            %v1057 = vadd.f32 %v1033, %v1053
            %v1058 = vadd.f32 %v1034, %v1054
            %v1059 = vadd.f32 %v1035, %v1055
            %v1060 = vadd.f32 %v1036, %v1056
            %s1061 = sadd.s32 %s652, 35
            %s1062 = smul.u32 %s1061, 32
            %s1063 = scalar_lea.vmem %s540, %s1062 [#allocation4]
            %v1064 = vld [vmem:[%s1063] sm:$0xff]
            %v1065 = vld [vmem:[%s1063 + $0x8] sm:$0xff]
            %v1066 = vld [vmem:[%s1063 + $0x10] sm:$0xff]
            %v1067 = vld [vmem:[%s1063 + $0x18] sm:$0x3f]
            %v1068 = vmul.f32 %v1052, %v1064
            %v1069 = vmul.f32 %v1052, %v1065
            %v1070 = vmul.f32 %v1052, %v1066
            %v1071 = vmul.f32 %v1052, %v1067
            %v1072 = vadd.f32 %v1045, %v1068
            %v1073 = vadd.f32 %v1046, %v1069
            %v1074 = vadd.f32 %v1047, %v1070
            %v1075 = vadd.f32 %v1048, %v1071
            %s1076 = sadd.s32 %s1050, 1
            %s1077 = sld [smem:[#allocation8 + %s1076]]
            %v1078 = vstv %s1077
            %v1079 = vmul.f32 %v1078, %v1014
            %v1080 = vmul.f32 %v1078, %v1015
            %v1081 = vmul.f32 %v1078, %v1016
            %v1082 = vmul.f32 %v1078, %v1017
            %v1083 = vadd.f32 %v1057, %v1079
            %v1084 = vadd.f32 %v1058, %v1080
            %v1085 = vadd.f32 %v1059, %v1081
            %v1086 = vadd.f32 %v1060, %v1082
            %v1087 = vld [vmem:[%s1063 + $0x1] sm:$0xff]
            %v1088 = vld [vmem:[%s1063 + $0x9] sm:$0xff]
            %v1089 = vld [vmem:[%s1063 + $0x11] sm:$0xff]
            %v1090 = vld [vmem:[%s1063 + $0x19] sm:$0x3f]
            %v1091 = vmul.f32 %v1078, %v1087
            %v1092 = vmul.f32 %v1078, %v1088
            %v1093 = vmul.f32 %v1078, %v1089
            %v1094 = vmul.f32 %v1078, %v1090
            %v1095 = vadd.f32 %v1072, %v1091
            %v1096 = vadd.f32 %v1073, %v1092
            %v1097 = vadd.f32 %v1074, %v1093
            %v1098 = vadd.f32 %v1075, %v1094
            %s1099 = sadd.s32 %s1050, 2
            %s1100 = sld [smem:[#allocation8 + %s1099]]
            %v1101 = vstv %s1100
            %v1102 = vmul.f32 %v1101, %v1037
            %v1103 = vmul.f32 %v1101, %v1038
            %v1104 = vmul.f32 %v1101, %v1039
            %v1105 = vmul.f32 %v1101, %v1040
            %v1106 = vadd.f32 %v1083, %v1102
            %v1107 = vadd.f32 %v1084, %v1103
            %v1108 = vadd.f32 %v1085, %v1104
            %v1109 = vadd.f32 %v1086, %v1105
            %v1110 = vld [vmem:[%s1063 + $0x2] sm:$0xff]
            %v1111 = vld [vmem:[%s1063 + $0xa] sm:$0xff]
            %v1112 = vld [vmem:[%s1063 + $0x12] sm:$0xff]
            %v1113 = vld [vmem:[%s1063 + $0x1a] sm:$0x3f]
            %v1114 = vmul.f32 %v1101, %v1110
            %v1115 = vmul.f32 %v1101, %v1111
            %v1116 = vmul.f32 %v1101, %v1112
            %v1117 = vmul.f32 %v1101, %v1113
            %v1118 = vadd.f32 %v1095, %v1114
            %v1119 = vadd.f32 %v1096, %v1115
            %v1120 = vadd.f32 %v1097, %v1116
            %v1121 = vadd.f32 %v1098, %v1117
            %s1122 = sadd.s32 %s652, 64
            %s1123 = sadd.s32 %s887, 2
            %s1124 = smul.u32 %s1123, 9
            %s1125 = sld [smem:[#allocation8 + %s1124]]
            %s1126 = smul.u32 %s1122, 32
            %s1127 = scalar_lea.vmem %s540, %s1126 [#allocation4]
            %v1128 = vld [vmem:[%s1127] sm:$0xff]
            %v1129 = vld [vmem:[%s1127 + $0x8] sm:$0xff]
            %v1130 = vld [vmem:[%s1127 + $0x10] sm:$0xff]
            %v1131 = vld [vmem:[%s1127 + $0x18] sm:$0x3f]
            %v1132 = vstv %s1125
            %v1133 = vmul.f32 %v1132, %v1128
            %v1134 = vmul.f32 %v1132, %v1129
            %v1135 = vmul.f32 %v1132, %v1130
            %v1136 = vmul.f32 %v1132, %v1131
            %v1137 = vadd.f32 %v1106, %v1133
            %v1138 = vadd.f32 %v1107, %v1134
            %v1139 = vadd.f32 %v1108, %v1135
            %v1140 = vadd.f32 %v1109, %v1136
            %s1141 = sadd.s32 %s652, 65
            %s1142 = smul.u32 %s1141, 32
            %s1143 = scalar_lea.vmem %s540, %s1142 [#allocation4]
            %v1144 = vld [vmem:[%s1143] sm:$0xff]
            %v1145 = vld [vmem:[%s1143 + $0x8] sm:$0xff]
            %v1146 = vld [vmem:[%s1143 + $0x10] sm:$0xff]
            %v1147 = vld [vmem:[%s1143 + $0x18] sm:$0x3f]
            %v1148 = vmul.f32 %v1132, %v1144
            %v1149 = vmul.f32 %v1132, %v1145
            %v1150 = vmul.f32 %v1132, %v1146
            %v1151 = vmul.f32 %v1132, %v1147
            %v1152 = vadd.f32 %v1118, %v1148
            %v1153 = vadd.f32 %v1119, %v1149
            %v1154 = vadd.f32 %v1120, %v1150
            %v1155 = vadd.f32 %v1121, %v1151
            %s1156 = sadd.s32 %s1124, 1
            %s1157 = sld [smem:[#allocation8 + %s1156]]
            %v1158 = vld [vmem:[%s1127 + $0x1] sm:$0xff]
            %v1159 = vld [vmem:[%s1127 + $0x9] sm:$0xff]
            %v1160 = vld [vmem:[%s1127 + $0x11] sm:$0xff]
            %v1161 = vld [vmem:[%s1127 + $0x19] sm:$0x3f]
            %v1162 = vstv %s1157
            %v1163 = vmul.f32 %v1162, %v1158
            %v1164 = vmul.f32 %v1162, %v1159
            %v1165 = vmul.f32 %v1162, %v1160
            %v1166 = vmul.f32 %v1162, %v1161
            %v1167 = vadd.f32 %v1137, %v1163
            %v1168 = vadd.f32 %v1138, %v1164
            %v1169 = vadd.f32 %v1139, %v1165
            %v1170 = vadd.f32 %v1140, %v1166
            %v1171 = vld [vmem:[%s1143 + $0x1] sm:$0xff]
            %v1172 = vld [vmem:[%s1143 + $0x9] sm:$0xff]
            %v1173 = vld [vmem:[%s1143 + $0x11] sm:$0xff]
            %v1174 = vld [vmem:[%s1143 + $0x19] sm:$0x3f]
            %v1175 = vmul.f32 %v1162, %v1171
            %v1176 = vmul.f32 %v1162, %v1172
            %v1177 = vmul.f32 %v1162, %v1173
            %v1178 = vmul.f32 %v1162, %v1174
            %v1179 = vadd.f32 %v1152, %v1175
            %v1180 = vadd.f32 %v1153, %v1176
            %v1181 = vadd.f32 %v1154, %v1177
            %v1182 = vadd.f32 %v1155, %v1178
            %s1183 = sadd.s32 %s1124, 2
            %s1184 = sld [smem:[#allocation8 + %s1183]]
            %v1185 = vld [vmem:[%s1127 + $0x2] sm:$0xff]
            %v1186 = vld [vmem:[%s1127 + $0xa] sm:$0xff]
            %v1187 = vld [vmem:[%s1127 + $0x12] sm:$0xff]
            %v1188 = vld [vmem:[%s1127 + $0x1a] sm:$0x3f]
            %v1189 = vstv %s1184
            %v1190 = vmul.f32 %v1189, %v1185
            %v1191 = vmul.f32 %v1189, %v1186
            %v1192 = vmul.f32 %v1189, %v1187
            %v1193 = vmul.f32 %v1189, %v1188
            %v1194 = vadd.f32 %v1167, %v1190
            %v1195 = vadd.f32 %v1168, %v1191
            %v1196 = vadd.f32 %v1169, %v1192
            %v1197 = vadd.f32 %v1170, %v1193
            %v1198 = vld [vmem:[%s1143 + $0x2] sm:$0xff]
            %v1199 = vld [vmem:[%s1143 + $0xa] sm:$0xff]
            %v1200 = vld [vmem:[%s1143 + $0x12] sm:$0xff]
            %v1201 = vld [vmem:[%s1143 + $0x1a] sm:$0x3f]
            %v1202 = vmul.f32 %v1189, %v1198
            %v1203 = vmul.f32 %v1189, %v1199
            %v1204 = vmul.f32 %v1189, %v1200
            %v1205 = vmul.f32 %v1189, %v1201
            %v1206 = vadd.f32 %v1179, %v1202
            %v1207 = vadd.f32 %v1180, %v1203
            %v1208 = vadd.f32 %v1181, %v1204
            %v1209 = vadd.f32 %v1182, %v1205
            %s1210 = smul.u32 %s1123, 3
            %s1211 = sadd.s32 %s1210, 1
            %s1212 = smul.u32 %s1211, 3
            %s1213 = sld [smem:[#allocation8 + %s1212]]
            %v1214 = vstv %s1213
            %v1215 = vmul.f32 %v1214, %v1144
            %v1216 = vmul.f32 %v1214, %v1145
            %v1217 = vmul.f32 %v1214, %v1146
            %v1218 = vmul.f32 %v1214, %v1147
            %v1219 = vadd.f32 %v1194, %v1215
            %v1220 = vadd.f32 %v1195, %v1216
            %v1221 = vadd.f32 %v1196, %v1217
            %v1222 = vadd.f32 %v1197, %v1218
            %s1223 = sadd.s32 %s652, 66
            %s1224 = smul.u32 %s1223, 32
            %s1225 = scalar_lea.vmem %s540, %s1224 [#allocation4]
            %v1226 = vld [vmem:[%s1225] sm:$0xff]
            %v1227 = vld [vmem:[%s1225 + $0x8] sm:$0xff]
            %v1228 = vld [vmem:[%s1225 + $0x10] sm:$0xff]
            %v1229 = vld [vmem:[%s1225 + $0x18] sm:$0x3f]
            %v1230 = vmul.f32 %v1214, %v1226
            %v1231 = vmul.f32 %v1214, %v1227
            %v1232 = vmul.f32 %v1214, %v1228
            %v1233 = vmul.f32 %v1214, %v1229
            %v1234 = vadd.f32 %v1206, %v1230
            %v1235 = vadd.f32 %v1207, %v1231
            %v1236 = vadd.f32 %v1208, %v1232
            %v1237 = vadd.f32 %v1209, %v1233
            %s1238 = sadd.s32 %s1212, 1
            %s1239 = sld [smem:[#allocation8 + %s1238]]
            %v1240 = vstv %s1239
            %v1241 = vmul.f32 %v1240, %v1171
            %v1242 = vmul.f32 %v1240, %v1172
            %v1243 = vmul.f32 %v1240, %v1173
            %v1244 = vmul.f32 %v1240, %v1174
            %v1245 = vadd.f32 %v1219, %v1241
            %v1246 = vadd.f32 %v1220, %v1242
            %v1247 = vadd.f32 %v1221, %v1243
            %v1248 = vadd.f32 %v1222, %v1244
            %v1249 = vld [vmem:[%s1225 + $0x1] sm:$0xff]
            %v1250 = vld [vmem:[%s1225 + $0x9] sm:$0xff]
            %v1251 = vld [vmem:[%s1225 + $0x11] sm:$0xff]
            %v1252 = vld [vmem:[%s1225 + $0x19] sm:$0x3f]
            %v1253 = vmul.f32 %v1240, %v1249
            %v1254 = vmul.f32 %v1240, %v1250
            %v1255 = vmul.f32 %v1240, %v1251
            %v1256 = vmul.f32 %v1240, %v1252
            %v1257 = vadd.f32 %v1234, %v1253
            %v1258 = vadd.f32 %v1235, %v1254
            %v1259 = vadd.f32 %v1236, %v1255
            %v1260 = vadd.f32 %v1237, %v1256
            %s1261 = sadd.s32 %s1212, 2
            %s1262 = sld [smem:[#allocation8 + %s1261]]
            %v1263 = vstv %s1262
            %v1264 = vmul.f32 %v1263, %v1198
            %v1265 = vmul.f32 %v1263, %v1199
            %v1266 = vmul.f32 %v1263, %v1200
            %v1267 = vmul.f32 %v1263, %v1201
            %v1268 = vadd.f32 %v1245, %v1264
            %v1269 = vadd.f32 %v1246, %v1265
            %v1270 = vadd.f32 %v1247, %v1266
            %v1271 = vadd.f32 %v1248, %v1267
            %v1272 = vld [vmem:[%s1225 + $0x2] sm:$0xff]
            %v1273 = vld [vmem:[%s1225 + $0xa] sm:$0xff]
            %v1274 = vld [vmem:[%s1225 + $0x12] sm:$0xff]
            %v1275 = vld [vmem:[%s1225 + $0x1a] sm:$0x3f]
            %v1276 = vmul.f32 %v1263, %v1272
            %v1277 = vmul.f32 %v1263, %v1273
            %v1278 = vmul.f32 %v1263, %v1274
            %v1279 = vmul.f32 %v1263, %v1275
            %v1280 = vadd.f32 %v1257, %v1276
            %v1281 = vadd.f32 %v1258, %v1277
            %v1282 = vadd.f32 %v1259, %v1278
            %v1283 = vadd.f32 %v1260, %v1279
            %s1284 = sadd.s32 %s1210, 2
            %s1285 = smul.u32 %s1284, 3
            %s1286 = sld [smem:[#allocation8 + %s1285]]
            %v1287 = vstv %s1286
            %v1288 = vmul.f32 %v1287, %v1226
            %v1289 = vmul.f32 %v1287, %v1227
            %v1290 = vmul.f32 %v1287, %v1228
            %v1291 = vmul.f32 %v1287, %v1229
            %v1292 = vadd.f32 %v1268, %v1288
            %v1293 = vadd.f32 %v1269, %v1289
            %v1294 = vadd.f32 %v1270, %v1290
            %v1295 = vadd.f32 %v1271, %v1291
            %s1296 = sadd.s32 %s652, 67
            %s1297 = smul.u32 %s1296, 32
            %s1298 = scalar_lea.vmem %s540, %s1297 [#allocation4]
            %v1299 = vld [vmem:[%s1298] sm:$0xff]
            %v1300 = vld [vmem:[%s1298 + $0x8] sm:$0xff]
            %v1301 = vld [vmem:[%s1298 + $0x10] sm:$0xff]
            %v1302 = vld [vmem:[%s1298 + $0x18] sm:$0x3f]
            %v1303 = vmul.f32 %v1287, %v1299
            %v1304 = vmul.f32 %v1287, %v1300
            %v1305 = vmul.f32 %v1287, %v1301
            %v1306 = vmul.f32 %v1287, %v1302
            %v1307 = vadd.f32 %v1280, %v1303
            %v1308 = vadd.f32 %v1281, %v1304
            %v1309 = vadd.f32 %v1282, %v1305
            %v1310 = vadd.f32 %v1283, %v1306
            %s1311 = sadd.s32 %s1285, 1
            %s1312 = sld [smem:[#allocation8 + %s1311]]
            %v1313 = vstv %s1312
            %v1314 = vmul.f32 %v1313, %v1249
            %v1315 = vmul.f32 %v1313, %v1250
            %v1316 = vmul.f32 %v1313, %v1251
            %v1317 = vmul.f32 %v1313, %v1252
            %v1318 = vadd.f32 %v1292, %v1314
            %v1319 = vadd.f32 %v1293, %v1315
            %v1320 = vadd.f32 %v1294, %v1316
            %v1321 = vadd.f32 %v1295, %v1317
            %v1322 = vld [vmem:[%s1298 + $0x1] sm:$0xff]
            %v1323 = vld [vmem:[%s1298 + $0x9] sm:$0xff]
            %v1324 = vld [vmem:[%s1298 + $0x11] sm:$0xff]
            %v1325 = vld [vmem:[%s1298 + $0x19] sm:$0x3f]
            %v1326 = vmul.f32 %v1313, %v1322
            %v1327 = vmul.f32 %v1313, %v1323
            %v1328 = vmul.f32 %v1313, %v1324
            %v1329 = vmul.f32 %v1313, %v1325
            %v1330 = vadd.f32 %v1307, %v1326
            %v1331 = vadd.f32 %v1308, %v1327
            %v1332 = vadd.f32 %v1309, %v1328
            %v1333 = vadd.f32 %v1310, %v1329
            %s1334 = sadd.s32 %s1285, 2
            %s1335 = sld [smem:[#allocation8 + %s1334]]
            %v1336 = vstv %s1335
            %v1337 = vmul.f32 %v1336, %v1272
            %v1338 = vmul.f32 %v1336, %v1273
            %v1339 = vmul.f32 %v1336, %v1274
            %v1340 = vmul.f32 %v1336, %v1275
            %v1341 = vadd.f32 %v1318, %v1337
            %v1342 = vadd.f32 %v1319, %v1338
            %v1343 = vadd.f32 %v1320, %v1339
            %v1344 = vadd.f32 %v1321, %v1340
            %v1345 = vld [vmem:[%s1298 + $0x2] sm:$0xff]
            %v1346 = vld [vmem:[%s1298 + $0xa] sm:$0xff]
            %v1347 = vld [vmem:[%s1298 + $0x12] sm:$0xff]
            %v1348 = vld [vmem:[%s1298 + $0x1a] sm:$0x3f]
            %v1349 = vmul.f32 %v1336, %v1345
            %v1350 = vmul.f32 %v1336, %v1346
            %v1351 = vmul.f32 %v1336, %v1347
            %v1352 = vmul.f32 %v1336, %v1348
            %v1353 = vadd.f32 %v1330, %v1349
            %v1354 = vadd.f32 %v1331, %v1350
            %v1355 = vadd.f32 %v1332, %v1351
            %v1356 = vadd.f32 %v1333, %v1352
            %v1357 = vmax.f32 %v1341, %v1353
            %v1358 = vmax.f32 %v1342, %v1354
            %v1359 = vmax.f32 %v1343, %v1355
            %v1360 = vmax.f32 %v1344, %v1356
            %vm1365 = vcmask 1046528
            %v1366 = vrot.slane %v1357, 1
            %v1367 = vrot.slane %v1358, 1
            %v1368 = vsel %vm1365, %v1366, %v1367
            %v1369 = vrot.slane %v1359, 1
            %v1370 = vsel %vm1365, %v1367, %v1369
            %v1371 = vrot.slane %v1360, 1
            %v1372 = vsel %vm1365, %v1369, %v1371
            %v1377 = vmax.f32 %v1357, %v1368
            %v1378 = vmax.f32 %v1358, %v1370
            %v1379 = vmax.f32 %v1359, %v1372
            %v1380 = vmax.f32 %v1360, %v1371
            %vm1381 = vcmask 236544
            %v1383 = vsel %vm1381, %v636, 0
            %v1386 = vsel %vm1381, %v637, 0
            %vm1388 = vcmask 1044480
            %v1390 = vsel %vm1388, %v1380, 0
            %1392 = vmatprep.subr.mxu0 0.0
            %1393 = vmatpush1.msra.mxu0 %v1377
            %1394 = vmatprep.subr.mxu0 0.0
            %1395 = vmatpush1.msra.mxu0 %v1378
            %1396 = vmatprep.subr.mxu0 0.0
            %1397 = vmatpush1.msra.mxu0 %v1379
            %1398 = vmatprep.subr.mxu0 0.0
            %1399 = vmatpush1.msra.mxu0 %v1390
            %1400 = vmatprep.subr.mxu0 0.0
            %1401 = vmatpush1.msra.mxu0 0.0
            %1402 = vmatprep.subr.mxu0 0.0
            %1403 = vmatpush1.msra.mxu0 0.0
            %1404 = vmatprep.subr.mxu0 0.0
            %1405 = vmatpush1.msra.mxu0 0.0
            %1406 = vmatprep.subr.mxu0 0.0
            %1407 = vmatpush1.msra.mxu0 0.0
            %1408 = vmatprep.subr.mxu0 0.0
            %1409 = vmatpush1.msra.mxu0 0.0
            %1410 = vmatprep.subr.mxu0 0.0
            %1411 = vmatpush1.msra.mxu0 0.0
            %1412 = vmatprep.subr.mxu0 0.0
            %1413 = vmatpush1.msra.mxu0 0.0
            %1414 = vmatprep.subr.mxu0 0.0
            %1415 = vmatpush1.msra.mxu0 0.0
            %1416 = vmatprep.subr.mxu0 0.0
            %1417 = vmatpush1.msra.mxu0 0.0
            %1418 = vmatprep.subr.mxu0 0.0
            %1419 = vmatpush1.msra.mxu0 0.0
            %1420 = vmatprep.subr.mxu0 0.0
            %1421 = vmatpush1.msra.mxu0 0.0
            %1422 = vmatprep.subr.mxu0 0.0
            %1423 = vmatpush1.msra.mxu0 0.0
            %1424 = vmatprep.subr.mxu0 0.0
            %1425 = vmatpush1.msra.mxu0 0.0
            %1426 = vmatprep.subr.mxu0 0.0
            %1427 = vmatpush1.msra.mxu0 0.0
            %1428 = vmatprep.subr.mxu0 0.0
            %1429 = vmatpush1.msra.mxu0 0.0
            %1430 = vmatprep.subr.mxu0 0.0
            %1431 = vmatpush1.msra.mxu0 0.0
            %1432 = vmatprep.subr.mxu0 0.0
            %1433 = vmatpush1.msra.mxu0 0.0
            %1434 = vmatprep.subr.mxu0 0.0
            %1435 = vmatpush1.msra.mxu0 0.0
            %1436 = vmatprep.subr.mxu0 0.0
            %1437 = vmatpush1.msra.mxu0 0.0
            %1438 = vmatprep.subr.mxu0 0.0
            %1439 = vmatpush1.msra.mxu0 0.0
            %1440 = vmatprep.subr.mxu0 0.0
            %1441 = vmatpush1.msra.mxu0 0.0
            %1442 = vmatprep.subr.mxu0 0.0
            %1443 = vmatpush1.msra.mxu0 0.0
            %1444 = vmatprep.subr.mxu0 0.0
            %1445 = vmatpush1.msra.mxu0 0.0
            %1446 = vmatprep.subr.mxu0 0.0
            %1447 = vmatpush1.msra.mxu0 0.0
            %1448 = vmatprep.subr.mxu0 0.0
            %1449 = vmatpush1.msra.mxu0 0.0
            %1450 = vmatprep.subr.mxu0 0.0
            %1451 = vmatpush1.msra.mxu0 0.0
            %1452 = vmatprep.subr.mxu0 0.0
            %1453 = vmatpush1.msra.mxu0 0.0
            %1454 = vmatprep.subr.mxu0 0.0
            %1455 = vmatpush1.msra.mxu0 0.0
            %1456 = vmatprep.mubr.f32.mxu0 0.0
            %1457 = vmatmul.mubr.f32.gmra.mrb[0].mxu0 %v1383
            %v1458 = vpop.f32.mrb[0].mxu0
            %v1459 = vadd.f32 0.0, %v1458
            %v1460 = vpop.f32.mrb[0].mxu0
            %1461 = vmatprep.mubr.f32.mxu0 0.0
            %1462 = vmatmul.mubr.f32.gmra.mrb[0].mxu0 %v1386
            %v1463 = vpop.f32.mrb[0].mxu0
            %v1464 = vadd.f32 0.0, %v1463
            %v1465 = vpop.f32.mrb[0].mxu0
            %1466 = vdwg.mxu0
            %v1467 = vmax.f32 %v1459, 0.0
            %v1468 = vmax.f32 %v1464, 0.0
            %s1469 = smul.u32 %s639, 15
            %s1470 = sadd.s32 %s1469, %s645
            %s1471 = smul.u32 %s1470, 16
            %s1472 = scalar_lea.vmem [#allocation2], %s1471
            %1473 = vst [vmem:[%s1472] sm:$0xff] %v1467
            %1474 = vst [vmem:[%s1472 + $0x8] sm:$0x7f] %v1468
          $region132: #{tpu_custom_call.1} parent=124 // loop_footer
            %s649 = sadd.s32 1, %s645
          $region133: #{tpu_custom_call.1} parent=124 // loop_footer_branch
            %644 = sbr.rel target = $region129
          $region134: #{tpu_custom_call.1} parent=124 // loop_exit
            _
        $region125: #{tpu_custom_call.1} parent=75 // loop_footer
          %s643 = sadd.s32 1, %s639
        $region126: #{tpu_custom_call.1} parent=75 // loop_footer_branch
          %638 = sbr.rel target = $region122
        $region127: #{tpu_custom_call.1} parent=75 // loop_exit
          _
        %1475 = vst [vmem:[#allocation3] sm:$0xff] 0.0
        %1476 = vst [vmem:[#allocation3 + $0x8] sm:$0xff] 0.0
        %1477 = vst [vmem:[#allocation3 + $0x10] sm:$0xff] 0.0
        %1478 = vst [vmem:[#allocation3 + $0x18] sm:$0xff] 0.0
        %1479 = vst [vmem:[#allocation3 + $0x20] sm:$0xff] 0.0
        %1480 = vst [vmem:[#allocation3 + $0x28] sm:$0xff] 0.0
        %1481 = vst [vmem:[#allocation3 + $0x30] sm:$0xff] 0.0
        %1482 = vst [vmem:[#allocation3 + $0x38] sm:$0xff] 0.0
        %1483 = vst [vmem:[#allocation3 + $0x40] sm:$0xff] 0.0
        %1484 = vst [vmem:[#allocation3 + $0x48] sm:$0xff] 0.0
        %1485 = vst [vmem:[#allocation3 + $0x50] sm:$0xff] 0.0
        %1486 = vst [vmem:[#allocation3 + $0x58] sm:$0xff] 0.0
        %1487 = vst [vmem:[#allocation3 + $0x60] sm:$0xff] 0.0
        %1488 = vst [vmem:[#allocation3 + $0x68] sm:$0xff] 0.0
        %1489 = vst [vmem:[#allocation3 + $0x70] sm:$0xff] 0.0
        %1490 = vst [vmem:[#allocation3 + $0x78] sm:$0xff] 0.0
        %1491 = vst [vmem:[#allocation3 + $0x80] sm:$0xff] 0.0
        %1492 = vst [vmem:[#allocation3 + $0x88] sm:$0xff] 0.0
        %1493 = vst [vmem:[#allocation3 + $0x90] sm:$0xff] 0.0
        %1494 = vst [vmem:[#allocation3 + $0x98] sm:$0xff] 0.0
        %1495 = vst [vmem:[#allocation3 + $0xa0] sm:$0xff] 0.0
        %1496 = vst [vmem:[#allocation3 + $0xa8] sm:$0xff] 0.0
        %1497 = vst [vmem:[#allocation3 + $0xb0] sm:$0xff] 0.0
        %1498 = vst [vmem:[#allocation3 + $0xb8] sm:$0xff] 0.0
        %1499 = vst [vmem:[#allocation3 + $0xc0] sm:$0xff] 0.0
        %1500 = vst [vmem:[#allocation3 + $0xc8] sm:$0xff] 0.0
        %1501 = vst [vmem:[#allocation3 + $0xd0] sm:$0xff] 0.0
        %1502 = vst [vmem:[#allocation3 + $0xd8] sm:$0xff] 0.0
        %1503 = vst [vmem:[#allocation3 + $0xe0] sm:$0xff] 0.0
        %1504 = vst [vmem:[#allocation3 + $0xe8] sm:$0xff] 0.0
        %1505 = vst [vmem:[#allocation3 + $0xf0] sm:$0xff] 0.0
        %1506 = vst [vmem:[#allocation3 + $0xf8] sm:$0xff] 0.0
        %1507 = vst [vmem:[#allocation3 + $0x100] sm:$0xff] 0.0
        %1508 = vst [vmem:[#allocation3 + $0x108] sm:$0xff] 0.0
        %1509 = vst [vmem:[#allocation3 + $0x110] sm:$0xff] 0.0
        %1510 = vst [vmem:[#allocation3 + $0x118] sm:$0xff] 0.0
        %1511 = vst [vmem:[#allocation3 + $0x120] sm:$0xff] 0.0
        %1512 = vst [vmem:[#allocation3 + $0x128] sm:$0xff] 0.0
        %1513 = vst [vmem:[#allocation3 + $0x130] sm:$0xff] 0.0
        %1514 = vst [vmem:[#allocation3 + $0x138] sm:$0xff] 0.0
        %1515 = vst [vmem:[#allocation3 + $0x140] sm:$0xff] 0.0
        %1516 = vst [vmem:[#allocation3 + $0x148] sm:$0xff] 0.0
        %1517 = vst [vmem:[#allocation3 + $0x150] sm:$0xff] 0.0
        %1518 = vst [vmem:[#allocation3 + $0x158] sm:$0xff] 0.0
        %1519 = vst [vmem:[#allocation3 + $0x160] sm:$0xff] 0.0
        %1520 = vst [vmem:[#allocation3 + $0x168] sm:$0xff] 0.0
        %1521 = vst [vmem:[#allocation3 + $0x170] sm:$0xff] 0.0
        %1522 = vst [vmem:[#allocation3 + $0x178] sm:$0xff] 0.0
        %1523 = vst [vmem:[#allocation3 + $0x180] sm:$0xff] 0.0
        %1524 = vst [vmem:[#allocation3 + $0x188] sm:$0xff] 0.0
        %1525 = vst [vmem:[#allocation3 + $0x190] sm:$0xff] 0.0
        %1526 = vst [vmem:[#allocation3 + $0x198] sm:$0xff] 0.0
        %1527 = vst [vmem:[#allocation3 + $0x1a0] sm:$0xff] 0.0
        %1528 = vst [vmem:[#allocation3 + $0x1a8] sm:$0xff] 0.0
        %1529 = vst [vmem:[#allocation3 + $0x1b0] sm:$0xff] 0.0
        %1530 = vst [vmem:[#allocation3 + $0x1b8] sm:$0xff] 0.0
        %1531 = vst [vmem:[#allocation3 + $0x1c0] sm:$0xff] 0.0
        %1532 = vst [vmem:[#allocation3 + $0x1c8] sm:$0xff] 0.0
        %1533 = vst [vmem:[#allocation3 + $0x1d0] sm:$0xff] 0.0
        %1534 = vst [vmem:[#allocation3 + $0x1d8] sm:$0xff] 0.0
        %1535 = vst [vmem:[#allocation3 + $0x1e0] sm:$0xff] 0.0
        %1536 = vst [vmem:[#allocation3 + $0x1e8] sm:$0xff] 0.0
        %1537 = vst [vmem:[#allocation3 + $0x1f0] sm:$0xff] 0.0
        %1538 = vst [vmem:[#allocation3 + $0x1f8] sm:$0xff] 0.0
        %1539 = vst [vmem:[#allocation3 + $0x200] sm:$0xff] 0.0
        %1540 = vst [vmem:[#allocation3 + $0x208] sm:$0xff] 0.0
        %1541 = vst [vmem:[#allocation3 + $0x210] sm:$0xff] 0.0
        %1542 = vst [vmem:[#allocation3 + $0x218] sm:$0xff] 0.0
        %1543 = vst [vmem:[#allocation3 + $0x220] sm:$0xff] 0.0
        %1544 = vst [vmem:[#allocation3 + $0x228] sm:$0xff] 0.0
        %1545 = vst [vmem:[#allocation3 + $0x230] sm:$0xff] 0.0
        %1546 = vst [vmem:[#allocation3 + $0x238] sm:$0xff] 0.0
        %1547 = vst [vmem:[#allocation3 + $0x240] sm:$0xff] 0.0
        %1548 = vst [vmem:[#allocation3 + $0x248] sm:$0xff] 0.0
        %1549 = vst [vmem:[#allocation3 + $0x250] sm:$0xff] 0.0
        %1550 = vst [vmem:[#allocation3 + $0x258] sm:$0xff] 0.0
        %1551 = vst [vmem:[#allocation3 + $0x260] sm:$0xff] 0.0
        %1552 = vst [vmem:[#allocation3 + $0x268] sm:$0xff] 0.0
        %1553 = vst [vmem:[#allocation3 + $0x270] sm:$0xff] 0.0
        %1554 = vst [vmem:[#allocation3 + $0x278] sm:$0xff] 0.0
        %1555 = vst [vmem:[#allocation3 + $0x280] sm:$0xff] 0.0
        %1556 = vst [vmem:[#allocation3 + $0x288] sm:$0xff] 0.0
        %1557 = vst [vmem:[#allocation3 + $0x290] sm:$0xff] 0.0
        %1558 = vst [vmem:[#allocation3 + $0x298] sm:$0xff] 0.0
        %1559 = vst [vmem:[#allocation3 + $0x2a0] sm:$0xff] 0.0
        %1560 = vst [vmem:[#allocation3 + $0x2a8] sm:$0xff] 0.0
        %1561 = vst [vmem:[#allocation3 + $0x2b0] sm:$0xff] 0.0
        %1562 = vst [vmem:[#allocation3 + $0x2b8] sm:$0xff] 0.0
        %1563 = vst [vmem:[#allocation3 + $0x2c0] sm:$0xff] 0.0
        %1564 = vst [vmem:[#allocation3 + $0x2c8] sm:$0xff] 0.0
        %1565 = vst [vmem:[#allocation3 + $0x2d0] sm:$0xff] 0.0
        %1566 = vst [vmem:[#allocation3 + $0x2d8] sm:$0xff] 0.0
        %1567 = vst [vmem:[#allocation3 + $0x2e0] sm:$0xff] 0.0
        %1568 = vst [vmem:[#allocation3 + $0x2e8] sm:$0xff] 0.0
        %1569 = vst [vmem:[#allocation3 + $0x2f0] sm:$0xff] 0.0
        %1570 = vst [vmem:[#allocation3 + $0x2f8] sm:$0xff] 0.0
        %v1571 = vld [vmem:[#allocation20] sm:$0x3f]
        loop: start=0, step=1, limit=16
        $region135: #{tpu_custom_call.1} parent=75 // loop_pre_header
          _
        $region136: #{tpu_custom_call.1} parent=75 // loop_header
          %s1573 = sphi 0, %s1577
          %p1574 = scmp.ge.s32.totalorder %s1573, 16
        $region137: #{tpu_custom_call.1} parent=75 // loop_header_branch
          %1576 = sbr.rel (%p1574) target = $region141
        $region138: #{tpu_custom_call.1} parent=75 // loop_body
          loop: start=0, step=1, limit=6
          $region142: #{tpu_custom_call.1} parent=138 // loop_pre_header
            _
          $region143: #{tpu_custom_call.1} parent=138 // loop_header
            %s1579 = sphi 0, %s1583
            %p1580 = scmp.ge.s32.totalorder %s1579, 6
          $region144: #{tpu_custom_call.1} parent=138 // loop_header_branch
            %1582 = sbr.rel (%p1580) target = $region148
          $region145: #{tpu_custom_call.1} parent=138 // loop_body
            %s1584 = sld [smem:[#allocation12 + %s1573]]
            %v1585 = vstv %s1584
            %s1586 = smul.u32 %s1579, 2
            %s1587 = smul.u32 %s1573, 54
            %s1588 = sld [smem:[#allocation11 + %s1587]]
            %s1589 = smul.u32 %s1586, 16
            %s1590 = scalar_lea.vmem [#allocation2], %s1589
            %v1591 = vld [vmem:[%s1590] sm:$0xff]
            %v1592 = vld [vmem:[%s1590 + $0x8] sm:$0x1f]
            %v1593 = vstv %s1588
            %v1594 = vmul.f32 %v1593, %v1591
            %v1595 = vmul.f32 %v1593, %v1592
            %v1596 = vadd.f32 %v1585, %v1594
            %v1597 = vadd.f32 %v1585, %v1595
            %s1598 = sadd.s32 %s1586, 1
            %s1599 = smul.u32 %s1598, 16
            %s1600 = scalar_lea.vmem [#allocation2], %s1599
            %v1601 = vld [vmem:[%s1600] sm:$0xff]
            %v1602 = vld [vmem:[%s1600 + $0x8] sm:$0x1f]
            %v1603 = vmul.f32 %v1593, %v1601
            %v1604 = vmul.f32 %v1593, %v1602
            %v1605 = vadd.f32 %v1585, %v1603
            %v1606 = vadd.f32 %v1585, %v1604
            %s1607 = sadd.s32 %s1587, 1
            %s1608 = sld [smem:[#allocation11 + %s1607]]
            %v1609 = vld [vmem:[%s1590 + $0x1] sm:$0xff]
            %v1610 = vld [vmem:[%s1590 + $0x9] sm:$0x1f]
            %v1611 = vstv %s1608
            %v1612 = vmul.f32 %v1611, %v1609
            %v1613 = vmul.f32 %v1611, %v1610
            %v1614 = vadd.f32 %v1596, %v1612
            %v1615 = vadd.f32 %v1597, %v1613
            %v1616 = vld [vmem:[%s1600 + $0x1] sm:$0xff]
            %v1617 = vld [vmem:[%s1600 + $0x9] sm:$0x1f]
            %v1618 = vmul.f32 %v1611, %v1616
            %v1619 = vmul.f32 %v1611, %v1617
            %v1620 = vadd.f32 %v1605, %v1618
            %v1621 = vadd.f32 %v1606, %v1619
            %s1622 = sadd.s32 %s1587, 2
            %s1623 = sld [smem:[#allocation11 + %s1622]]
            %v1624 = vld [vmem:[%s1590 + $0x2] sm:$0xff]
            %v1625 = vld [vmem:[%s1590 + $0xa] sm:$0x1f]
            %v1626 = vstv %s1623
            %v1627 = vmul.f32 %v1626, %v1624
            %v1628 = vmul.f32 %v1626, %v1625
            %v1629 = vadd.f32 %v1614, %v1627
            %v1630 = vadd.f32 %v1615, %v1628
            %v1631 = vld [vmem:[%s1600 + $0x2] sm:$0xff]
            %v1632 = vld [vmem:[%s1600 + $0xa] sm:$0x1f]
            %v1633 = vmul.f32 %v1626, %v1631
            %v1634 = vmul.f32 %v1626, %v1632
            %v1635 = vadd.f32 %v1620, %v1633
            %v1636 = vadd.f32 %v1621, %v1634
            %s1637 = smul.u32 %s1573, 18
            %s1638 = sadd.s32 %s1637, 1
            %s1639 = smul.u32 %s1638, 3
            %s1640 = sld [smem:[#allocation11 + %s1639]]
            %v1641 = vstv %s1640
            %v1642 = vmul.f32 %v1641, %v1601
            %v1643 = vmul.f32 %v1641, %v1602
            %v1644 = vadd.f32 %v1629, %v1642
            %v1645 = vadd.f32 %v1630, %v1643
            %s1646 = sadd.s32 %s1586, 2
            %s1647 = smul.u32 %s1646, 16
            %s1648 = scalar_lea.vmem [#allocation2], %s1647
            %v1649 = vld [vmem:[%s1648] sm:$0xff]
            %v1650 = vld [vmem:[%s1648 + $0x8] sm:$0x1f]
            %v1651 = vmul.f32 %v1641, %v1649
            %v1652 = vmul.f32 %v1641, %v1650
            %v1653 = vadd.f32 %v1635, %v1651
            %v1654 = vadd.f32 %v1636, %v1652
            %s1655 = sadd.s32 %s1639, 1
            %s1656 = sld [smem:[#allocation11 + %s1655]]
            %v1657 = vstv %s1656
            %v1658 = vmul.f32 %v1657, %v1616
            %v1659 = vmul.f32 %v1657, %v1617
            %v1660 = vadd.f32 %v1644, %v1658
            %v1661 = vadd.f32 %v1645, %v1659
            %v1662 = vld [vmem:[%s1648 + $0x1] sm:$0xff]
            %v1663 = vld [vmem:[%s1648 + $0x9] sm:$0x1f]
            %v1664 = vmul.f32 %v1657, %v1662
            %v1665 = vmul.f32 %v1657, %v1663
            %v1666 = vadd.f32 %v1653, %v1664
            %v1667 = vadd.f32 %v1654, %v1665
            %s1668 = sadd.s32 %s1639, 2
            %s1669 = sld [smem:[#allocation11 + %s1668]]
            %v1670 = vstv %s1669
            %v1671 = vmul.f32 %v1670, %v1631
            %v1672 = vmul.f32 %v1670, %v1632
            %v1673 = vadd.f32 %v1660, %v1671
            %v1674 = vadd.f32 %v1661, %v1672
            %v1675 = vld [vmem:[%s1648 + $0x2] sm:$0xff]
            %v1676 = vld [vmem:[%s1648 + $0xa] sm:$0x1f]
            %v1677 = vmul.f32 %v1670, %v1675
            %v1678 = vmul.f32 %v1670, %v1676
            %v1679 = vadd.f32 %v1666, %v1677
            %v1680 = vadd.f32 %v1667, %v1678
            %s1681 = sadd.s32 %s1637, 2
            %s1682 = smul.u32 %s1681, 3
            %s1683 = sld [smem:[#allocation11 + %s1682]]
            %v1684 = vstv %s1683
            %v1685 = vmul.f32 %v1684, %v1649
            %v1686 = vmul.f32 %v1684, %v1650
            %v1687 = vadd.f32 %v1673, %v1685
            %v1688 = vadd.f32 %v1674, %v1686
            %s1689 = sadd.s32 %s1586, 3
            %s1690 = smul.u32 %s1689, 16
            %s1691 = scalar_lea.vmem [#allocation2], %s1690
            %v1692 = vld [vmem:[%s1691] sm:$0xff]
            %v1693 = vld [vmem:[%s1691 + $0x8] sm:$0x1f]
            %v1694 = vmul.f32 %v1684, %v1692
            %v1695 = vmul.f32 %v1684, %v1693
            %v1696 = vadd.f32 %v1679, %v1694
            %v1697 = vadd.f32 %v1680, %v1695
            %s1698 = sadd.s32 %s1682, 1
            %s1699 = sld [smem:[#allocation11 + %s1698]]
            %v1700 = vstv %s1699
            %v1701 = vmul.f32 %v1700, %v1662
            %v1702 = vmul.f32 %v1700, %v1663
            %v1703 = vadd.f32 %v1687, %v1701
            %v1704 = vadd.f32 %v1688, %v1702
            %v1705 = vld [vmem:[%s1691 + $0x1] sm:$0xff]
            %v1706 = vld [vmem:[%s1691 + $0x9] sm:$0x1f]
            %v1707 = vmul.f32 %v1700, %v1705
            %v1708 = vmul.f32 %v1700, %v1706
            %v1709 = vadd.f32 %v1696, %v1707
            %v1710 = vadd.f32 %v1697, %v1708
            %s1711 = sadd.s32 %s1682, 2
            %s1712 = sld [smem:[#allocation11 + %s1711]]
            %v1713 = vstv %s1712
            %v1714 = vmul.f32 %v1713, %v1675
            %v1715 = vmul.f32 %v1713, %v1676
            %v1716 = vadd.f32 %v1703, %v1714
            %v1717 = vadd.f32 %v1704, %v1715
            %v1718 = vld [vmem:[%s1691 + $0x2] sm:$0xff]
            %v1719 = vld [vmem:[%s1691 + $0xa] sm:$0x1f]
            %v1720 = vmul.f32 %v1713, %v1718
            %v1721 = vmul.f32 %v1713, %v1719
            %v1722 = vadd.f32 %v1709, %v1720
            %v1723 = vadd.f32 %v1710, %v1721
            %s1724 = sadd.s32 %s1586, 15
            %s1725 = smul.u32 %s1573, 6
            %s1726 = sadd.s32 %s1725, 1
            %s1727 = smul.u32 %s1726, 9
            %s1728 = sld [smem:[#allocation11 + %s1727]]
            %s1729 = smul.u32 %s1724, 16
            %s1730 = scalar_lea.vmem [#allocation2], %s1729
            %v1731 = vld [vmem:[%s1730] sm:$0xff]
            %v1732 = vld [vmem:[%s1730 + $0x8] sm:$0x1f]
            %v1733 = vstv %s1728
            %v1734 = vmul.f32 %v1733, %v1731
            %v1735 = vmul.f32 %v1733, %v1732
            %v1736 = vadd.f32 %v1716, %v1734
            %v1737 = vadd.f32 %v1717, %v1735
            %s1738 = sadd.s32 %s1586, 16
            %s1739 = smul.u32 %s1738, 16
            %s1740 = scalar_lea.vmem [#allocation2], %s1739
            %v1741 = vld [vmem:[%s1740] sm:$0xff]
            %v1742 = vld [vmem:[%s1740 + $0x8] sm:$0x1f]
            %v1743 = vmul.f32 %v1733, %v1741
            %v1744 = vmul.f32 %v1733, %v1742
            %v1745 = vadd.f32 %v1722, %v1743
            %v1746 = vadd.f32 %v1723, %v1744
            %s1747 = sadd.s32 %s1727, 1
            %s1748 = sld [smem:[#allocation11 + %s1747]]
            %v1749 = vld [vmem:[%s1730 + $0x1] sm:$0xff]
            %v1750 = vld [vmem:[%s1730 + $0x9] sm:$0x1f]
            %v1751 = vstv %s1748
            %v1752 = vmul.f32 %v1751, %v1749
            %v1753 = vmul.f32 %v1751, %v1750
            %v1754 = vadd.f32 %v1736, %v1752
            %v1755 = vadd.f32 %v1737, %v1753
            %v1756 = vld [vmem:[%s1740 + $0x1] sm:$0xff]
            %v1757 = vld [vmem:[%s1740 + $0x9] sm:$0x1f]
            %v1758 = vmul.f32 %v1751, %v1756
            %v1759 = vmul.f32 %v1751, %v1757
            %v1760 = vadd.f32 %v1745, %v1758
            %v1761 = vadd.f32 %v1746, %v1759
            %s1762 = sadd.s32 %s1727, 2
            %s1763 = sld [smem:[#allocation11 + %s1762]]
            %v1764 = vld [vmem:[%s1730 + $0x2] sm:$0xff]
            %v1765 = vld [vmem:[%s1730 + $0xa] sm:$0x1f]
            %v1766 = vstv %s1763
            %v1767 = vmul.f32 %v1766, %v1764
            %v1768 = vmul.f32 %v1766, %v1765
            %v1769 = vadd.f32 %v1754, %v1767
            %v1770 = vadd.f32 %v1755, %v1768
            %v1771 = vld [vmem:[%s1740 + $0x2] sm:$0xff]
            %v1772 = vld [vmem:[%s1740 + $0xa] sm:$0x1f]
            %v1773 = vmul.f32 %v1766, %v1771
            %v1774 = vmul.f32 %v1766, %v1772
            %v1775 = vadd.f32 %v1760, %v1773
            %v1776 = vadd.f32 %v1761, %v1774
            %s1777 = smul.u32 %s1726, 3
            %s1778 = sadd.s32 %s1777, 1
            %s1779 = smul.u32 %s1778, 3
            %s1780 = sld [smem:[#allocation11 + %s1779]]
            %v1781 = vstv %s1780
            %v1782 = vmul.f32 %v1781, %v1741
            %v1783 = vmul.f32 %v1781, %v1742
            %v1784 = vadd.f32 %v1769, %v1782
            %v1785 = vadd.f32 %v1770, %v1783
            %s1786 = sadd.s32 %s1586, 17
            %s1787 = smul.u32 %s1786, 16
            %s1788 = scalar_lea.vmem [#allocation2], %s1787
            %v1789 = vld [vmem:[%s1788] sm:$0xff]
            %v1790 = vld [vmem:[%s1788 + $0x8] sm:$0x1f]
            %v1791 = vmul.f32 %v1781, %v1789
            %v1792 = vmul.f32 %v1781, %v1790
            %v1793 = vadd.f32 %v1775, %v1791
            %v1794 = vadd.f32 %v1776, %v1792
            %s1795 = sadd.s32 %s1779, 1
            %s1796 = sld [smem:[#allocation11 + %s1795]]
            %v1797 = vstv %s1796
            %v1798 = vmul.f32 %v1797, %v1756
            %v1799 = vmul.f32 %v1797, %v1757
            %v1800 = vadd.f32 %v1784, %v1798
            %v1801 = vadd.f32 %v1785, %v1799
            %v1802 = vld [vmem:[%s1788 + $0x1] sm:$0xff]
            %v1803 = vld [vmem:[%s1788 + $0x9] sm:$0x1f]
            %v1804 = vmul.f32 %v1797, %v1802
            %v1805 = vmul.f32 %v1797, %v1803
            %v1806 = vadd.f32 %v1793, %v1804
            %v1807 = vadd.f32 %v1794, %v1805
            %s1808 = sadd.s32 %s1779, 2
            %s1809 = sld [smem:[#allocation11 + %s1808]]
            %v1810 = vstv %s1809
            %v1811 = vmul.f32 %v1810, %v1771
            %v1812 = vmul.f32 %v1810, %v1772
            %v1813 = vadd.f32 %v1800, %v1811
            %v1814 = vadd.f32 %v1801, %v1812
            %v1815 = vld [vmem:[%s1788 + $0x2] sm:$0xff]
            %v1816 = vld [vmem:[%s1788 + $0xa] sm:$0x1f]
            %v1817 = vmul.f32 %v1810, %v1815
            %v1818 = vmul.f32 %v1810, %v1816
            %v1819 = vadd.f32 %v1806, %v1817
            %v1820 = vadd.f32 %v1807, %v1818
            %s1821 = sadd.s32 %s1777, 2
            %s1822 = smul.u32 %s1821, 3
            %s1823 = sld [smem:[#allocation11 + %s1822]]
            %v1824 = vstv %s1823
            %v1825 = vmul.f32 %v1824, %v1789
            %v1826 = vmul.f32 %v1824, %v1790
            %v1827 = vadd.f32 %v1813, %v1825
            %v1828 = vadd.f32 %v1814, %v1826
            %s1829 = sadd.s32 %s1586, 18
            %s1830 = smul.u32 %s1829, 16
            %s1831 = scalar_lea.vmem [#allocation2], %s1830
            %v1832 = vld [vmem:[%s1831] sm:$0xff]
            %v1833 = vld [vmem:[%s1831 + $0x8] sm:$0x1f]
            %v1834 = vmul.f32 %v1824, %v1832
            %v1835 = vmul.f32 %v1824, %v1833
            %v1836 = vadd.f32 %v1819, %v1834
            %v1837 = vadd.f32 %v1820, %v1835
            %s1838 = sadd.s32 %s1822, 1
            %s1839 = sld [smem:[#allocation11 + %s1838]]
            %v1840 = vstv %s1839
            %v1841 = vmul.f32 %v1840, %v1802
            %v1842 = vmul.f32 %v1840, %v1803
            %v1843 = vadd.f32 %v1827, %v1841
            %v1844 = vadd.f32 %v1828, %v1842
            %v1845 = vld [vmem:[%s1831 + $0x1] sm:$0xff]
            %v1846 = vld [vmem:[%s1831 + $0x9] sm:$0x1f]
            %v1847 = vmul.f32 %v1840, %v1845
            %v1848 = vmul.f32 %v1840, %v1846
            %v1849 = vadd.f32 %v1836, %v1847
            %v1850 = vadd.f32 %v1837, %v1848
            %s1851 = sadd.s32 %s1822, 2
            %s1852 = sld [smem:[#allocation11 + %s1851]]
            %v1853 = vstv %s1852
            %v1854 = vmul.f32 %v1853, %v1815
            %v1855 = vmul.f32 %v1853, %v1816
            %v1856 = vadd.f32 %v1843, %v1854
            %v1857 = vadd.f32 %v1844, %v1855
            %v1858 = vld [vmem:[%s1831 + $0x2] sm:$0xff]
            %v1859 = vld [vmem:[%s1831 + $0xa] sm:$0x1f]
            %v1860 = vmul.f32 %v1853, %v1858
            %v1861 = vmul.f32 %v1853, %v1859
            %v1862 = vadd.f32 %v1849, %v1860
            %v1863 = vadd.f32 %v1850, %v1861
            %s1864 = sadd.s32 %s1586, 30
            %s1865 = sadd.s32 %s1725, 2
            %s1866 = smul.u32 %s1865, 9
            %s1867 = sld [smem:[#allocation11 + %s1866]]
            %s1868 = smul.u32 %s1864, 16
            %s1869 = scalar_lea.vmem [#allocation2], %s1868
            %v1870 = vld [vmem:[%s1869] sm:$0xff]
            %v1871 = vld [vmem:[%s1869 + $0x8] sm:$0x1f]
            %v1872 = vstv %s1867
            %v1873 = vmul.f32 %v1872, %v1870
            %v1874 = vmul.f32 %v1872, %v1871
            %v1875 = vadd.f32 %v1856, %v1873
            %v1876 = vadd.f32 %v1857, %v1874
            %s1877 = sadd.s32 %s1586, 31
            %s1878 = smul.u32 %s1877, 16
            %s1879 = scalar_lea.vmem [#allocation2], %s1878
            %v1880 = vld [vmem:[%s1879] sm:$0xff]
            %v1881 = vld [vmem:[%s1879 + $0x8] sm:$0x1f]
            %v1882 = vmul.f32 %v1872, %v1880
            %v1883 = vmul.f32 %v1872, %v1881
            %v1884 = vadd.f32 %v1862, %v1882
            %v1885 = vadd.f32 %v1863, %v1883
            %s1886 = sadd.s32 %s1866, 1
            %s1887 = sld [smem:[#allocation11 + %s1886]]
            %v1888 = vld [vmem:[%s1869 + $0x1] sm:$0xff]
            %v1889 = vld [vmem:[%s1869 + $0x9] sm:$0x1f]
            %v1890 = vstv %s1887
            %v1891 = vmul.f32 %v1890, %v1888
            %v1892 = vmul.f32 %v1890, %v1889
            %v1893 = vadd.f32 %v1875, %v1891
            %v1894 = vadd.f32 %v1876, %v1892
            %v1895 = vld [vmem:[%s1879 + $0x1] sm:$0xff]
            %v1896 = vld [vmem:[%s1879 + $0x9] sm:$0x1f]
            %v1897 = vmul.f32 %v1890, %v1895
            %v1898 = vmul.f32 %v1890, %v1896
            %v1899 = vadd.f32 %v1884, %v1897
            %v1900 = vadd.f32 %v1885, %v1898
            %s1901 = sadd.s32 %s1866, 2
            %s1902 = sld [smem:[#allocation11 + %s1901]]
            %v1903 = vld [vmem:[%s1869 + $0x2] sm:$0xff]
            %v1904 = vld [vmem:[%s1869 + $0xa] sm:$0x1f]
            %v1905 = vstv %s1902
            %v1906 = vmul.f32 %v1905, %v1903
            %v1907 = vmul.f32 %v1905, %v1904
            %v1908 = vadd.f32 %v1893, %v1906
            %v1909 = vadd.f32 %v1894, %v1907
            %v1910 = vld [vmem:[%s1879 + $0x2] sm:$0xff]
            %v1911 = vld [vmem:[%s1879 + $0xa] sm:$0x1f]
            %v1912 = vmul.f32 %v1905, %v1910
            %v1913 = vmul.f32 %v1905, %v1911
            %v1914 = vadd.f32 %v1899, %v1912
            %v1915 = vadd.f32 %v1900, %v1913
            %s1916 = smul.u32 %s1865, 3
            %s1917 = sadd.s32 %s1916, 1
            %s1918 = smul.u32 %s1917, 3
            %s1919 = sld [smem:[#allocation11 + %s1918]]
            %v1920 = vstv %s1919
            %v1921 = vmul.f32 %v1920, %v1880
            %v1922 = vmul.f32 %v1920, %v1881
            %v1923 = vadd.f32 %v1908, %v1921
            %v1924 = vadd.f32 %v1909, %v1922
            %s1925 = sadd.s32 %s1586, 32
            %s1926 = smul.u32 %s1925, 16
            %s1927 = scalar_lea.vmem [#allocation2], %s1926
            %v1928 = vld [vmem:[%s1927] sm:$0xff]
            %v1929 = vld [vmem:[%s1927 + $0x8] sm:$0x1f]
            %v1930 = vmul.f32 %v1920, %v1928
            %v1931 = vmul.f32 %v1920, %v1929
            %v1932 = vadd.f32 %v1914, %v1930
            %v1933 = vadd.f32 %v1915, %v1931
            %s1934 = sadd.s32 %s1918, 1
            %s1935 = sld [smem:[#allocation11 + %s1934]]
            %v1936 = vstv %s1935
            %v1937 = vmul.f32 %v1936, %v1895
            %v1938 = vmul.f32 %v1936, %v1896
            %v1939 = vadd.f32 %v1923, %v1937
            %v1940 = vadd.f32 %v1924, %v1938
            %v1941 = vld [vmem:[%s1927 + $0x1] sm:$0xff]
            %v1942 = vld [vmem:[%s1927 + $0x9] sm:$0x1f]
            %v1943 = vmul.f32 %v1936, %v1941
            %v1944 = vmul.f32 %v1936, %v1942
            %v1945 = vadd.f32 %v1932, %v1943
            %v1946 = vadd.f32 %v1933, %v1944
            %s1947 = sadd.s32 %s1918, 2
            %s1948 = sld [smem:[#allocation11 + %s1947]]
            %v1949 = vstv %s1948
            %v1950 = vmul.f32 %v1949, %v1910
            %v1951 = vmul.f32 %v1949, %v1911
            %v1952 = vadd.f32 %v1939, %v1950
            %v1953 = vadd.f32 %v1940, %v1951
            %v1954 = vld [vmem:[%s1927 + $0x2] sm:$0xff]
            %v1955 = vld [vmem:[%s1927 + $0xa] sm:$0x1f]
            %v1956 = vmul.f32 %v1949, %v1954
            %v1957 = vmul.f32 %v1949, %v1955
            %v1958 = vadd.f32 %v1945, %v1956
            %v1959 = vadd.f32 %v1946, %v1957
            %s1960 = sadd.s32 %s1916, 2
            %s1961 = smul.u32 %s1960, 3
            %s1962 = sld [smem:[#allocation11 + %s1961]]
            %v1963 = vstv %s1962
            %v1964 = vmul.f32 %v1963, %v1928
            %v1965 = vmul.f32 %v1963, %v1929
            %v1966 = vadd.f32 %v1952, %v1964
            %v1967 = vadd.f32 %v1953, %v1965
            %s1968 = sadd.s32 %s1586, 33
            %s1969 = smul.u32 %s1968, 16
            %s1970 = scalar_lea.vmem [#allocation2], %s1969
            %v1971 = vld [vmem:[%s1970] sm:$0xff]
            %v1972 = vld [vmem:[%s1970 + $0x8] sm:$0x1f]
            %v1973 = vmul.f32 %v1963, %v1971
            %v1974 = vmul.f32 %v1963, %v1972
            %v1975 = vadd.f32 %v1958, %v1973
            %v1976 = vadd.f32 %v1959, %v1974
            %s1977 = sadd.s32 %s1961, 1
            %s1978 = sld [smem:[#allocation11 + %s1977]]
            %v1979 = vstv %s1978
            %v1980 = vmul.f32 %v1979, %v1941
            %v1981 = vmul.f32 %v1979, %v1942
            %v1982 = vadd.f32 %v1966, %v1980
            %v1983 = vadd.f32 %v1967, %v1981
            %v1984 = vld [vmem:[%s1970 + $0x1] sm:$0xff]
            %v1985 = vld [vmem:[%s1970 + $0x9] sm:$0x1f]
            %v1986 = vmul.f32 %v1979, %v1984
            %v1987 = vmul.f32 %v1979, %v1985
            %v1988 = vadd.f32 %v1975, %v1986
            %v1989 = vadd.f32 %v1976, %v1987
            %s1990 = sadd.s32 %s1961, 2
            %s1991 = sld [smem:[#allocation11 + %s1990]]
            %v1992 = vstv %s1991
            %v1993 = vmul.f32 %v1992, %v1954
            %v1994 = vmul.f32 %v1992, %v1955
            %v1995 = vadd.f32 %v1982, %v1993
            %v1996 = vadd.f32 %v1983, %v1994
            %v1997 = vld [vmem:[%s1970 + $0x2] sm:$0xff]
            %v1998 = vld [vmem:[%s1970 + $0xa] sm:$0x1f]
            %v1999 = vmul.f32 %v1992, %v1997
            %v2000 = vmul.f32 %v1992, %v1998
            %v2001 = vadd.f32 %v1988, %v1999
            %v2002 = vadd.f32 %v1989, %v2000
            %s2003 = sadd.s32 %s1586, 45
            %s2004 = sadd.s32 %s1725, 3
            %s2005 = smul.u32 %s2004, 9
            %s2006 = sld [smem:[#allocation11 + %s2005]]
            %s2007 = smul.u32 %s2003, 16
            %s2008 = scalar_lea.vmem [#allocation2], %s2007
            %v2009 = vld [vmem:[%s2008] sm:$0xff]
            %v2010 = vld [vmem:[%s2008 + $0x8] sm:$0x1f]
            %v2011 = vstv %s2006
            %v2012 = vmul.f32 %v2011, %v2009
            %v2013 = vmul.f32 %v2011, %v2010
            %v2014 = vadd.f32 %v1995, %v2012
            %v2015 = vadd.f32 %v1996, %v2013
            %s2016 = sadd.s32 %s1586, 46
            %s2017 = smul.u32 %s2016, 16
            %s2018 = scalar_lea.vmem [#allocation2], %s2017
            %v2019 = vld [vmem:[%s2018] sm:$0xff]
            %v2020 = vld [vmem:[%s2018 + $0x8] sm:$0x1f]
            %v2021 = vmul.f32 %v2011, %v2019
            %v2022 = vmul.f32 %v2011, %v2020
            %v2023 = vadd.f32 %v2001, %v2021
            %v2024 = vadd.f32 %v2002, %v2022
            %s2025 = sadd.s32 %s2005, 1
            %s2026 = sld [smem:[#allocation11 + %s2025]]
            %v2027 = vld [vmem:[%s2008 + $0x1] sm:$0xff]
            %v2028 = vld [vmem:[%s2008 + $0x9] sm:$0x1f]
            %v2029 = vstv %s2026
            %v2030 = vmul.f32 %v2029, %v2027
            %v2031 = vmul.f32 %v2029, %v2028
            %v2032 = vadd.f32 %v2014, %v2030
            %v2033 = vadd.f32 %v2015, %v2031
            %v2034 = vld [vmem:[%s2018 + $0x1] sm:$0xff]
            %v2035 = vld [vmem:[%s2018 + $0x9] sm:$0x1f]
            %v2036 = vmul.f32 %v2029, %v2034
            %v2037 = vmul.f32 %v2029, %v2035
            %v2038 = vadd.f32 %v2023, %v2036
            %v2039 = vadd.f32 %v2024, %v2037
            %s2040 = sadd.s32 %s2005, 2
            %s2041 = sld [smem:[#allocation11 + %s2040]]
            %v2042 = vld [vmem:[%s2008 + $0x2] sm:$0xff]
            %v2043 = vld [vmem:[%s2008 + $0xa] sm:$0x1f]
            %v2044 = vstv %s2041
            %v2045 = vmul.f32 %v2044, %v2042
            %v2046 = vmul.f32 %v2044, %v2043
            %v2047 = vadd.f32 %v2032, %v2045
            %v2048 = vadd.f32 %v2033, %v2046
            %v2049 = vld [vmem:[%s2018 + $0x2] sm:$0xff]
            %v2050 = vld [vmem:[%s2018 + $0xa] sm:$0x1f]
            %v2051 = vmul.f32 %v2044, %v2049
            %v2052 = vmul.f32 %v2044, %v2050
            %v2053 = vadd.f32 %v2038, %v2051
            %v2054 = vadd.f32 %v2039, %v2052
            %s2055 = smul.u32 %s2004, 3
            %s2056 = sadd.s32 %s2055, 1
            %s2057 = smul.u32 %s2056, 3
            %s2058 = sld [smem:[#allocation11 + %s2057]]
            %v2059 = vstv %s2058
            %v2060 = vmul.f32 %v2059, %v2019
            %v2061 = vmul.f32 %v2059, %v2020
            %v2062 = vadd.f32 %v2047, %v2060
            %v2063 = vadd.f32 %v2048, %v2061
            %s2064 = sadd.s32 %s1586, 47
            %s2065 = smul.u32 %s2064, 16
            %s2066 = scalar_lea.vmem [#allocation2], %s2065
            %v2067 = vld [vmem:[%s2066] sm:$0xff]
            %v2068 = vld [vmem:[%s2066 + $0x8] sm:$0x1f]
            %v2069 = vmul.f32 %v2059, %v2067
            %v2070 = vmul.f32 %v2059, %v2068
            %v2071 = vadd.f32 %v2053, %v2069
            %v2072 = vadd.f32 %v2054, %v2070
            %s2073 = sadd.s32 %s2057, 1
            %s2074 = sld [smem:[#allocation11 + %s2073]]
            %v2075 = vstv %s2074
            %v2076 = vmul.f32 %v2075, %v2034
            %v2077 = vmul.f32 %v2075, %v2035
            %v2078 = vadd.f32 %v2062, %v2076
            %v2079 = vadd.f32 %v2063, %v2077
            %v2080 = vld [vmem:[%s2066 + $0x1] sm:$0xff]
            %v2081 = vld [vmem:[%s2066 + $0x9] sm:$0x1f]
            %v2082 = vmul.f32 %v2075, %v2080
            %v2083 = vmul.f32 %v2075, %v2081
            %v2084 = vadd.f32 %v2071, %v2082
            %v2085 = vadd.f32 %v2072, %v2083
            %s2086 = sadd.s32 %s2057, 2
            %s2087 = sld [smem:[#allocation11 + %s2086]]
            %v2088 = vstv %s2087
            %v2089 = vmul.f32 %v2088, %v2049
            %v2090 = vmul.f32 %v2088, %v2050
            %v2091 = vadd.f32 %v2078, %v2089
            %v2092 = vadd.f32 %v2079, %v2090
            %v2093 = vld [vmem:[%s2066 + $0x2] sm:$0xff]
            %v2094 = vld [vmem:[%s2066 + $0xa] sm:$0x1f]
            %v2095 = vmul.f32 %v2088, %v2093
            %v2096 = vmul.f32 %v2088, %v2094
            %v2097 = vadd.f32 %v2084, %v2095
            %v2098 = vadd.f32 %v2085, %v2096
            %s2099 = sadd.s32 %s2055, 2
            %s2100 = smul.u32 %s2099, 3
            %s2101 = sld [smem:[#allocation11 + %s2100]]
            %v2102 = vstv %s2101
            %v2103 = vmul.f32 %v2102, %v2067
            %v2104 = vmul.f32 %v2102, %v2068
            %v2105 = vadd.f32 %v2091, %v2103
            %v2106 = vadd.f32 %v2092, %v2104
            %s2107 = sadd.s32 %s1586, 48
            %s2108 = smul.u32 %s2107, 16
            %s2109 = scalar_lea.vmem [#allocation2], %s2108
            %v2110 = vld [vmem:[%s2109] sm:$0xff]
            %v2111 = vld [vmem:[%s2109 + $0x8] sm:$0x1f]
            %v2112 = vmul.f32 %v2102, %v2110
            %v2113 = vmul.f32 %v2102, %v2111
            %v2114 = vadd.f32 %v2097, %v2112
            %v2115 = vadd.f32 %v2098, %v2113
            %s2116 = sadd.s32 %s2100, 1
            %s2117 = sld [smem:[#allocation11 + %s2116]]
            %v2118 = vstv %s2117
            %v2119 = vmul.f32 %v2118, %v2080
            %v2120 = vmul.f32 %v2118, %v2081
            %v2121 = vadd.f32 %v2105, %v2119
            %v2122 = vadd.f32 %v2106, %v2120
            %v2123 = vld [vmem:[%s2109 + $0x1] sm:$0xff]
            %v2124 = vld [vmem:[%s2109 + $0x9] sm:$0x1f]
            %v2125 = vmul.f32 %v2118, %v2123
            %v2126 = vmul.f32 %v2118, %v2124
            %v2127 = vadd.f32 %v2114, %v2125
            %v2128 = vadd.f32 %v2115, %v2126
            %s2129 = sadd.s32 %s2100, 2
            %s2130 = sld [smem:[#allocation11 + %s2129]]
            %v2131 = vstv %s2130
            %v2132 = vmul.f32 %v2131, %v2093
            %v2133 = vmul.f32 %v2131, %v2094
            %v2134 = vadd.f32 %v2121, %v2132
            %v2135 = vadd.f32 %v2122, %v2133
            %v2136 = vld [vmem:[%s2109 + $0x2] sm:$0xff]
            %v2137 = vld [vmem:[%s2109 + $0xa] sm:$0x1f]
            %v2138 = vmul.f32 %v2131, %v2136
            %v2139 = vmul.f32 %v2131, %v2137
            %v2140 = vadd.f32 %v2127, %v2138
            %v2141 = vadd.f32 %v2128, %v2139
            %s2142 = sadd.s32 %s1586, 60
            %s2143 = sadd.s32 %s1725, 4
            %s2144 = smul.u32 %s2143, 9
            %s2145 = sld [smem:[#allocation11 + %s2144]]
            %s2146 = smul.u32 %s2142, 16
            %s2147 = scalar_lea.vmem [#allocation2], %s2146
            %v2148 = vld [vmem:[%s2147] sm:$0xff]
            %v2149 = vld [vmem:[%s2147 + $0x8] sm:$0x1f]
            %v2150 = vstv %s2145
            %v2151 = vmul.f32 %v2150, %v2148
            %v2152 = vmul.f32 %v2150, %v2149
            %v2153 = vadd.f32 %v2134, %v2151
            %v2154 = vadd.f32 %v2135, %v2152
            %s2155 = sadd.s32 %s1586, 61
            %s2156 = smul.u32 %s2155, 16
            %s2157 = scalar_lea.vmem [#allocation2], %s2156
            %v2158 = vld [vmem:[%s2157] sm:$0xff]
            %v2159 = vld [vmem:[%s2157 + $0x8] sm:$0x1f]
            %v2160 = vmul.f32 %v2150, %v2158
            %v2161 = vmul.f32 %v2150, %v2159
            %v2162 = vadd.f32 %v2140, %v2160
            %v2163 = vadd.f32 %v2141, %v2161
            %s2164 = sadd.s32 %s2144, 1
            %s2165 = sld [smem:[#allocation11 + %s2164]]
            %v2166 = vld [vmem:[%s2147 + $0x1] sm:$0xff]
            %v2167 = vld [vmem:[%s2147 + $0x9] sm:$0x1f]
            %v2168 = vstv %s2165
            %v2169 = vmul.f32 %v2168, %v2166
            %v2170 = vmul.f32 %v2168, %v2167
            %v2171 = vadd.f32 %v2153, %v2169
            %v2172 = vadd.f32 %v2154, %v2170
            %v2173 = vld [vmem:[%s2157 + $0x1] sm:$0xff]
            %v2174 = vld [vmem:[%s2157 + $0x9] sm:$0x1f]
            %v2175 = vmul.f32 %v2168, %v2173
            %v2176 = vmul.f32 %v2168, %v2174
            %v2177 = vadd.f32 %v2162, %v2175
            %v2178 = vadd.f32 %v2163, %v2176
            %s2179 = sadd.s32 %s2144, 2
            %s2180 = sld [smem:[#allocation11 + %s2179]]
            %v2181 = vld [vmem:[%s2147 + $0x2] sm:$0xff]
            %v2182 = vld [vmem:[%s2147 + $0xa] sm:$0x1f]
            %v2183 = vstv %s2180
            %v2184 = vmul.f32 %v2183, %v2181
            %v2185 = vmul.f32 %v2183, %v2182
            %v2186 = vadd.f32 %v2171, %v2184
            %v2187 = vadd.f32 %v2172, %v2185
            %v2188 = vld [vmem:[%s2157 + $0x2] sm:$0xff]
            %v2189 = vld [vmem:[%s2157 + $0xa] sm:$0x1f]
            %v2190 = vmul.f32 %v2183, %v2188
            %v2191 = vmul.f32 %v2183, %v2189
            %v2192 = vadd.f32 %v2177, %v2190
            %v2193 = vadd.f32 %v2178, %v2191
            %s2194 = smul.u32 %s2143, 3
            %s2195 = sadd.s32 %s2194, 1
            %s2196 = smul.u32 %s2195, 3
            %s2197 = sld [smem:[#allocation11 + %s2196]]
            %v2198 = vstv %s2197
            %v2199 = vmul.f32 %v2198, %v2158
            %v2200 = vmul.f32 %v2198, %v2159
            %v2201 = vadd.f32 %v2186, %v2199
            %v2202 = vadd.f32 %v2187, %v2200
            %s2203 = sadd.s32 %s1586, 62
            %s2204 = smul.u32 %s2203, 16
            %s2205 = scalar_lea.vmem [#allocation2], %s2204
            %v2206 = vld [vmem:[%s2205] sm:$0xff]
            %v2207 = vld [vmem:[%s2205 + $0x8] sm:$0x1f]
            %v2208 = vmul.f32 %v2198, %v2206
            %v2209 = vmul.f32 %v2198, %v2207
            %v2210 = vadd.f32 %v2192, %v2208
            %v2211 = vadd.f32 %v2193, %v2209
            %s2212 = sadd.s32 %s2196, 1
            %s2213 = sld [smem:[#allocation11 + %s2212]]
            %v2214 = vstv %s2213
            %v2215 = vmul.f32 %v2214, %v2173
            %v2216 = vmul.f32 %v2214, %v2174
            %v2217 = vadd.f32 %v2201, %v2215
            %v2218 = vadd.f32 %v2202, %v2216
            %v2219 = vld [vmem:[%s2205 + $0x1] sm:$0xff]
            %v2220 = vld [vmem:[%s2205 + $0x9] sm:$0x1f]
            %v2221 = vmul.f32 %v2214, %v2219
            %v2222 = vmul.f32 %v2214, %v2220
            %v2223 = vadd.f32 %v2210, %v2221
            %v2224 = vadd.f32 %v2211, %v2222
            %s2225 = sadd.s32 %s2196, 2
            %s2226 = sld [smem:[#allocation11 + %s2225]]
            %v2227 = vstv %s2226
            %v2228 = vmul.f32 %v2227, %v2188
            %v2229 = vmul.f32 %v2227, %v2189
            %v2230 = vadd.f32 %v2217, %v2228
            %v2231 = vadd.f32 %v2218, %v2229
            %v2232 = vld [vmem:[%s2205 + $0x2] sm:$0xff]
            %v2233 = vld [vmem:[%s2205 + $0xa] sm:$0x1f]
            %v2234 = vmul.f32 %v2227, %v2232
            %v2235 = vmul.f32 %v2227, %v2233
            %v2236 = vadd.f32 %v2223, %v2234
            %v2237 = vadd.f32 %v2224, %v2235
            %s2238 = sadd.s32 %s2194, 2
            %s2239 = smul.u32 %s2238, 3
            %s2240 = sld [smem:[#allocation11 + %s2239]]
            %v2241 = vstv %s2240
            %v2242 = vmul.f32 %v2241, %v2206
            %v2243 = vmul.f32 %v2241, %v2207
            %v2244 = vadd.f32 %v2230, %v2242
            %v2245 = vadd.f32 %v2231, %v2243
            %s2246 = sadd.s32 %s1586, 63
            %s2247 = smul.u32 %s2246, 16
            %s2248 = scalar_lea.vmem [#allocation2], %s2247
            %v2249 = vld [vmem:[%s2248] sm:$0xff]
            %v2250 = vld [vmem:[%s2248 + $0x8] sm:$0x1f]
            %v2251 = vmul.f32 %v2241, %v2249
            %v2252 = vmul.f32 %v2241, %v2250
            %v2253 = vadd.f32 %v2236, %v2251
            %v2254 = vadd.f32 %v2237, %v2252
            %s2255 = sadd.s32 %s2239, 1
            %s2256 = sld [smem:[#allocation11 + %s2255]]
            %v2257 = vstv %s2256
            %v2258 = vmul.f32 %v2257, %v2219
            %v2259 = vmul.f32 %v2257, %v2220
            %v2260 = vadd.f32 %v2244, %v2258
            %v2261 = vadd.f32 %v2245, %v2259
            %v2262 = vld [vmem:[%s2248 + $0x1] sm:$0xff]
            %v2263 = vld [vmem:[%s2248 + $0x9] sm:$0x1f]
            %v2264 = vmul.f32 %v2257, %v2262
            %v2265 = vmul.f32 %v2257, %v2263
            %v2266 = vadd.f32 %v2253, %v2264
            %v2267 = vadd.f32 %v2254, %v2265
            %s2268 = sadd.s32 %s2239, 2
            %s2269 = sld [smem:[#allocation11 + %s2268]]
            %v2270 = vstv %s2269
            %v2271 = vmul.f32 %v2270, %v2232
            %v2272 = vmul.f32 %v2270, %v2233
            %v2273 = vadd.f32 %v2260, %v2271
            %v2274 = vadd.f32 %v2261, %v2272
            %v2275 = vld [vmem:[%s2248 + $0x2] sm:$0xff]
            %v2276 = vld [vmem:[%s2248 + $0xa] sm:$0x1f]
            %v2277 = vmul.f32 %v2270, %v2275
            %v2278 = vmul.f32 %v2270, %v2276
            %v2279 = vadd.f32 %v2266, %v2277
            %v2280 = vadd.f32 %v2267, %v2278
            %s2281 = sadd.s32 %s1586, 75
            %s2282 = sadd.s32 %s1725, 5
            %s2283 = smul.u32 %s2282, 9
            %s2284 = sld [smem:[#allocation11 + %s2283]]
            %s2285 = smul.u32 %s2281, 16
            %s2286 = scalar_lea.vmem [#allocation2], %s2285
            %v2287 = vld [vmem:[%s2286] sm:$0xff]
            %v2288 = vld [vmem:[%s2286 + $0x8] sm:$0x1f]
            %v2289 = vstv %s2284
            %v2290 = vmul.f32 %v2289, %v2287
            %v2291 = vmul.f32 %v2289, %v2288
            %v2292 = vadd.f32 %v2273, %v2290
            %v2293 = vadd.f32 %v2274, %v2291
            %s2294 = sadd.s32 %s1586, 76
            %s2295 = smul.u32 %s2294, 16
            %s2296 = scalar_lea.vmem [#allocation2], %s2295
            %v2297 = vld [vmem:[%s2296] sm:$0xff]
            %v2298 = vld [vmem:[%s2296 + $0x8] sm:$0x1f]
            %v2299 = vmul.f32 %v2289, %v2297
            %v2300 = vmul.f32 %v2289, %v2298
            %v2301 = vadd.f32 %v2279, %v2299
            %v2302 = vadd.f32 %v2280, %v2300
            %s2303 = sadd.s32 %s2283, 1
            %s2304 = sld [smem:[#allocation11 + %s2303]]
            %v2305 = vld [vmem:[%s2286 + $0x1] sm:$0xff]
            %v2306 = vld [vmem:[%s2286 + $0x9] sm:$0x1f]
            %v2307 = vstv %s2304
            %v2308 = vmul.f32 %v2307, %v2305
            %v2309 = vmul.f32 %v2307, %v2306
            %v2310 = vadd.f32 %v2292, %v2308
            %v2311 = vadd.f32 %v2293, %v2309
            %v2312 = vld [vmem:[%s2296 + $0x1] sm:$0xff]
            %v2313 = vld [vmem:[%s2296 + $0x9] sm:$0x1f]
            %v2314 = vmul.f32 %v2307, %v2312
            %v2315 = vmul.f32 %v2307, %v2313
            %v2316 = vadd.f32 %v2301, %v2314
            %v2317 = vadd.f32 %v2302, %v2315
            %s2318 = sadd.s32 %s2283, 2
            %s2319 = sld [smem:[#allocation11 + %s2318]]
            %v2320 = vld [vmem:[%s2286 + $0x2] sm:$0xff]
            %v2321 = vld [vmem:[%s2286 + $0xa] sm:$0x1f]
            %v2322 = vstv %s2319
            %v2323 = vmul.f32 %v2322, %v2320
            %v2324 = vmul.f32 %v2322, %v2321
            %v2325 = vadd.f32 %v2310, %v2323
            %v2326 = vadd.f32 %v2311, %v2324
            %v2327 = vld [vmem:[%s2296 + $0x2] sm:$0xff]
            %v2328 = vld [vmem:[%s2296 + $0xa] sm:$0x1f]
            %v2329 = vmul.f32 %v2322, %v2327
            %v2330 = vmul.f32 %v2322, %v2328
            %v2331 = vadd.f32 %v2316, %v2329
            %v2332 = vadd.f32 %v2317, %v2330
            %s2333 = smul.u32 %s2282, 3
            %s2334 = sadd.s32 %s2333, 1
            %s2335 = smul.u32 %s2334, 3
            %s2336 = sld [smem:[#allocation11 + %s2335]]
            %v2337 = vstv %s2336
            %v2338 = vmul.f32 %v2337, %v2297
            %v2339 = vmul.f32 %v2337, %v2298
            %v2340 = vadd.f32 %v2325, %v2338
            %v2341 = vadd.f32 %v2326, %v2339
            %s2342 = sadd.s32 %s1586, 77
            %s2343 = smul.u32 %s2342, 16
            %s2344 = scalar_lea.vmem [#allocation2], %s2343
            %v2345 = vld [vmem:[%s2344] sm:$0xff]
            %v2346 = vld [vmem:[%s2344 + $0x8] sm:$0x1f]
            %v2347 = vmul.f32 %v2337, %v2345
            %v2348 = vmul.f32 %v2337, %v2346
            %v2349 = vadd.f32 %v2331, %v2347
            %v2350 = vadd.f32 %v2332, %v2348
            %s2351 = sadd.s32 %s2335, 1
            %s2352 = sld [smem:[#allocation11 + %s2351]]
            %v2353 = vstv %s2352
            %v2354 = vmul.f32 %v2353, %v2312
            %v2355 = vmul.f32 %v2353, %v2313
            %v2356 = vadd.f32 %v2340, %v2354
            %v2357 = vadd.f32 %v2341, %v2355
            %v2358 = vld [vmem:[%s2344 + $0x1] sm:$0xff]
            %v2359 = vld [vmem:[%s2344 + $0x9] sm:$0x1f]
            %v2360 = vmul.f32 %v2353, %v2358
            %v2361 = vmul.f32 %v2353, %v2359
            %v2362 = vadd.f32 %v2349, %v2360
            %v2363 = vadd.f32 %v2350, %v2361
            %s2364 = sadd.s32 %s2335, 2
            %s2365 = sld [smem:[#allocation11 + %s2364]]
            %v2366 = vstv %s2365
            %v2367 = vmul.f32 %v2366, %v2327
            %v2368 = vmul.f32 %v2366, %v2328
            %v2369 = vadd.f32 %v2356, %v2367
            %v2370 = vadd.f32 %v2357, %v2368
            %v2371 = vld [vmem:[%s2344 + $0x2] sm:$0xff]
            %v2372 = vld [vmem:[%s2344 + $0xa] sm:$0x1f]
            %v2373 = vmul.f32 %v2366, %v2371
            %v2374 = vmul.f32 %v2366, %v2372
            %v2375 = vadd.f32 %v2362, %v2373
            %v2376 = vadd.f32 %v2363, %v2374
            %s2377 = sadd.s32 %s2333, 2
            %s2378 = smul.u32 %s2377, 3
            %s2379 = sld [smem:[#allocation11 + %s2378]]
            %v2380 = vstv %s2379
            %v2381 = vmul.f32 %v2380, %v2345
            %v2382 = vmul.f32 %v2380, %v2346
            %v2383 = vadd.f32 %v2369, %v2381
            %v2384 = vadd.f32 %v2370, %v2382
            %s2385 = sadd.s32 %s1586, 78
            %s2386 = smul.u32 %s2385, 16
            %s2387 = scalar_lea.vmem [#allocation2], %s2386
            %v2388 = vld [vmem:[%s2387] sm:$0xff]
            %v2389 = vld [vmem:[%s2387 + $0x8] sm:$0x1f]
            %v2390 = vmul.f32 %v2380, %v2388
            %v2391 = vmul.f32 %v2380, %v2389
            %v2392 = vadd.f32 %v2375, %v2390
            %v2393 = vadd.f32 %v2376, %v2391
            %s2394 = sadd.s32 %s2378, 1
            %s2395 = sld [smem:[#allocation11 + %s2394]]
            %v2396 = vstv %s2395
            %v2397 = vmul.f32 %v2396, %v2358
            %v2398 = vmul.f32 %v2396, %v2359
            %v2399 = vadd.f32 %v2383, %v2397
            %v2400 = vadd.f32 %v2384, %v2398
            %v2401 = vld [vmem:[%s2387 + $0x1] sm:$0xff]
            %v2402 = vld [vmem:[%s2387 + $0x9] sm:$0x1f]
            %v2403 = vmul.f32 %v2396, %v2401
            %v2404 = vmul.f32 %v2396, %v2402
            %v2405 = vadd.f32 %v2392, %v2403
            %v2406 = vadd.f32 %v2393, %v2404
            %s2407 = sadd.s32 %s2378, 2
            %s2408 = sld [smem:[#allocation11 + %s2407]]
            %v2409 = vstv %s2408
            %v2410 = vmul.f32 %v2409, %v2371
            %v2411 = vmul.f32 %v2409, %v2372
            %v2412 = vadd.f32 %v2399, %v2410
            %v2413 = vadd.f32 %v2400, %v2411
            %v2414 = vld [vmem:[%s2387 + $0x2] sm:$0xff]
            %v2415 = vld [vmem:[%s2387 + $0xa] sm:$0x1f]
            %v2416 = vmul.f32 %v2409, %v2414
            %v2417 = vmul.f32 %v2409, %v2415
            %v2418 = vadd.f32 %v2405, %v2416
            %v2419 = vadd.f32 %v2406, %v2417
            %v2420 = vmax.f32 %v2412, %v2418
            %v2421 = vmax.f32 %v2413, %v2419
            %vm2424 = vcmask 1046528
            %v2425 = vrot.slane %v2420, 1
            %v2426 = vrot.slane %v2421, 1
            %v2427 = vsel %vm2424, %v2425, %v2426
            %v2430 = vmax.f32 %v2420, %v2427
            %v2431 = vmax.f32 %v2421, %v2426
            %vm2432 = vcmask 97280
            %v2434 = vsel %vm2432, %v1571, 0
            %vm2436 = vcmask 1043456
            %v2438 = vsel %vm2436, %v2431, 0
            %2440 = vmatprep.subr.mxu0 0.0
            %2441 = vmatpush1.msra.mxu0 %v2430
            %2442 = vmatprep.subr.mxu0 0.0
            %2443 = vmatpush1.msra.mxu0 %v2438
            %2444 = vmatprep.subr.mxu0 0.0
            %2445 = vmatpush1.msra.mxu0 0.0
            %2446 = vmatprep.subr.mxu0 0.0
            %2447 = vmatpush1.msra.mxu0 0.0
            %2448 = vmatprep.subr.mxu0 0.0
            %2449 = vmatpush1.msra.mxu0 0.0
            %2450 = vmatprep.subr.mxu0 0.0
            %2451 = vmatpush1.msra.mxu0 0.0
            %2452 = vmatprep.subr.mxu0 0.0
            %2453 = vmatpush1.msra.mxu0 0.0
            %2454 = vmatprep.subr.mxu0 0.0
            %2455 = vmatpush1.msra.mxu0 0.0
            %2456 = vmatprep.subr.mxu0 0.0
            %2457 = vmatpush1.msra.mxu0 0.0
            %2458 = vmatprep.subr.mxu0 0.0
            %2459 = vmatpush1.msra.mxu0 0.0
            %2460 = vmatprep.subr.mxu0 0.0
            %2461 = vmatpush1.msra.mxu0 0.0
            %2462 = vmatprep.subr.mxu0 0.0
            %2463 = vmatpush1.msra.mxu0 0.0
            %2464 = vmatprep.subr.mxu0 0.0
            %2465 = vmatpush1.msra.mxu0 0.0
            %2466 = vmatprep.subr.mxu0 0.0
            %2467 = vmatpush1.msra.mxu0 0.0
            %2468 = vmatprep.subr.mxu0 0.0
            %2469 = vmatpush1.msra.mxu0 0.0
            %2470 = vmatprep.subr.mxu0 0.0
            %2471 = vmatpush1.msra.mxu0 0.0
            %2472 = vmatprep.subr.mxu0 0.0
            %2473 = vmatpush1.msra.mxu0 0.0
            %2474 = vmatprep.subr.mxu0 0.0
            %2475 = vmatpush1.msra.mxu0 0.0
            %2476 = vmatprep.subr.mxu0 0.0
            %2477 = vmatpush1.msra.mxu0 0.0
            %2478 = vmatprep.subr.mxu0 0.0
            %2479 = vmatpush1.msra.mxu0 0.0
            %2480 = vmatprep.subr.mxu0 0.0
            %2481 = vmatpush1.msra.mxu0 0.0
            %2482 = vmatprep.subr.mxu0 0.0
            %2483 = vmatpush1.msra.mxu0 0.0
            %2484 = vmatprep.subr.mxu0 0.0
            %2485 = vmatpush1.msra.mxu0 0.0
            %2486 = vmatprep.subr.mxu0 0.0
            %2487 = vmatpush1.msra.mxu0 0.0
            %2488 = vmatprep.subr.mxu0 0.0
            %2489 = vmatpush1.msra.mxu0 0.0
            %2490 = vmatprep.subr.mxu0 0.0
            %2491 = vmatpush1.msra.mxu0 0.0
            %2492 = vmatprep.subr.mxu0 0.0
            %2493 = vmatpush1.msra.mxu0 0.0
            %2494 = vmatprep.subr.mxu0 0.0
            %2495 = vmatpush1.msra.mxu0 0.0
            %2496 = vmatprep.subr.mxu0 0.0
            %2497 = vmatpush1.msra.mxu0 0.0
            %2498 = vmatprep.subr.mxu0 0.0
            %2499 = vmatpush1.msra.mxu0 0.0
            %2500 = vmatprep.subr.mxu0 0.0
            %2501 = vmatpush1.msra.mxu0 0.0
            %2502 = vmatprep.subr.mxu0 0.0
            %2503 = vmatpush1.msra.mxu0 0.0
            %2504 = vmatprep.mubr.f32.mxu0 0.0
            %2505 = vmatmul.mubr.f32.gmra.mrb[0].mxu0 %v2434
            %v2506 = vpop.f32.mrb[0].mxu0
            %v2507 = vadd.f32 0.0, %v2506
            %v2508 = vpop.f32.mrb[0].mxu0
            %2509 = vdwg.mxu0
            %v2510 = vmax.f32 %v2507, 0.0
            %s2511 = sadd.s32 %s1725, %s1579
            %s2512 = smul.u32 %s2511, 8
            %s2513 = scalar_lea.vmem [#allocation3], %s2512
            %2514 = vst [vmem:[%s2513] sm:$0x3f] %v2510
          $region146: #{tpu_custom_call.1} parent=138 // loop_footer
            %s1583 = sadd.s32 1, %s1579
          $region147: #{tpu_custom_call.1} parent=138 // loop_footer_branch
            %1578 = sbr.rel target = $region143
          $region148: #{tpu_custom_call.1} parent=138 // loop_exit
            _
        $region139: #{tpu_custom_call.1} parent=75 // loop_footer
          %s1577 = sadd.s32 1, %s1573
        $region140: #{tpu_custom_call.1} parent=75 // loop_footer_branch
          %1572 = sbr.rel target = $region136
        $region141: #{tpu_custom_call.1} parent=75 // loop_exit
          _
        %v2515 = vld [vmem:[#allocation3] sm:$0xff]
        %v2516 = vld [vmem:[#allocation3 + $0x8] sm:$0xff]
        %v2517 = vld [vmem:[#allocation3 + $0x10] sm:$0xff]
        %v2518 = vld [vmem:[#allocation3 + $0x18] sm:$0xff]
        %v2519 = vld [vmem:[#allocation3 + $0x20] sm:$0xff]
        %v2520 = vld [vmem:[#allocation3 + $0x28] sm:$0xff]
        %v2521 = vld [vmem:[#allocation3 + $0x30] sm:$0xff]
        %v2522 = vld [vmem:[#allocation3 + $0x38] sm:$0xff]
        %v2523 = vld [vmem:[#allocation3 + $0x40] sm:$0xff]
        %v2524 = vld [vmem:[#allocation3 + $0x48] sm:$0xff]
        %v2525 = vld [vmem:[#allocation3 + $0x50] sm:$0xff]
        %v2526 = vld [vmem:[#allocation3 + $0x58] sm:$0xff]
        %v2527 = vld [vmem:[#allocation3 + $0x60] sm:$0xff]
        %v2528 = vld [vmem:[#allocation3 + $0x68] sm:$0xff]
        %v2529 = vld [vmem:[#allocation3 + $0x70] sm:$0xff]
        %v2530 = vld [vmem:[#allocation3 + $0x78] sm:$0xff]
        %v2531 = vld [vmem:[#allocation3 + $0x80] sm:$0xff]
        %v2532 = vld [vmem:[#allocation3 + $0x88] sm:$0xff]
        %v2533 = vld [vmem:[#allocation3 + $0x90] sm:$0xff]
        %v2534 = vld [vmem:[#allocation3 + $0x98] sm:$0xff]
        %v2535 = vld [vmem:[#allocation3 + $0xa0] sm:$0xff]
        %v2536 = vld [vmem:[#allocation3 + $0xa8] sm:$0xff]
        %v2537 = vld [vmem:[#allocation3 + $0xb0] sm:$0xff]
        %v2538 = vld [vmem:[#allocation3 + $0xb8] sm:$0xff]
        %v2539 = vld [vmem:[#allocation3 + $0xc0] sm:$0xff]
        %v2540 = vld [vmem:[#allocation3 + $0xc8] sm:$0xff]
        %v2541 = vld [vmem:[#allocation3 + $0xd0] sm:$0xff]
        %v2542 = vld [vmem:[#allocation3 + $0xd8] sm:$0xff]
        %v2543 = vld [vmem:[#allocation3 + $0xe0] sm:$0xff]
        %v2544 = vld [vmem:[#allocation3 + $0xe8] sm:$0xff]
        %v2545 = vld [vmem:[#allocation3 + $0xf0] sm:$0xff]
        %v2546 = vld [vmem:[#allocation3 + $0xf8] sm:$0xff]
        %v2547 = vld [vmem:[#allocation3 + $0x100] sm:$0xff]
        %v2548 = vld [vmem:[#allocation3 + $0x108] sm:$0xff]
        %v2549 = vld [vmem:[#allocation3 + $0x110] sm:$0xff]
        %v2550 = vld [vmem:[#allocation3 + $0x118] sm:$0xff]
        %v2551 = vld [vmem:[#allocation3 + $0x120] sm:$0xff]
        %v2552 = vld [vmem:[#allocation3 + $0x128] sm:$0xff]
        %v2553 = vld [vmem:[#allocation3 + $0x130] sm:$0xff]
        %v2554 = vld [vmem:[#allocation3 + $0x138] sm:$0xff]
        %v2555 = vld [vmem:[#allocation3 + $0x140] sm:$0xff]
        %v2556 = vld [vmem:[#allocation3 + $0x148] sm:$0xff]
        %v2557 = vld [vmem:[#allocation3 + $0x150] sm:$0xff]
        %v2558 = vld [vmem:[#allocation3 + $0x158] sm:$0xff]
        %v2559 = vld [vmem:[#allocation3 + $0x160] sm:$0xff]
        %v2560 = vld [vmem:[#allocation3 + $0x168] sm:$0xff]
        %v2561 = vld [vmem:[#allocation3 + $0x170] sm:$0xff]
        %v2562 = vld [vmem:[#allocation3 + $0x178] sm:$0xff]
        %v2563 = vld [vmem:[#allocation3 + $0x180] sm:$0xff]
        %v2564 = vld [vmem:[#allocation3 + $0x188] sm:$0xff]
        %v2565 = vld [vmem:[#allocation3 + $0x190] sm:$0xff]
        %v2566 = vld [vmem:[#allocation3 + $0x198] sm:$0xff]
        %v2567 = vld [vmem:[#allocation3 + $0x1a0] sm:$0xff]
        %v2568 = vld [vmem:[#allocation3 + $0x1a8] sm:$0xff]
        %v2569 = vld [vmem:[#allocation3 + $0x1b0] sm:$0xff]
        %v2570 = vld [vmem:[#allocation3 + $0x1b8] sm:$0xff]
        %v2571 = vld [vmem:[#allocation3 + $0x1c0] sm:$0xff]
        %v2572 = vld [vmem:[#allocation3 + $0x1c8] sm:$0xff]
        %v2573 = vld [vmem:[#allocation3 + $0x1d0] sm:$0xff]
        %v2574 = vld [vmem:[#allocation3 + $0x1d8] sm:$0xff]
        %v2575 = vld [vmem:[#allocation3 + $0x1e0] sm:$0xff]
        %v2576 = vld [vmem:[#allocation3 + $0x1e8] sm:$0xff]
        %v2577 = vld [vmem:[#allocation3 + $0x1f0] sm:$0xff]
        %v2578 = vld [vmem:[#allocation3 + $0x1f8] sm:$0xff]
        %v2579 = vld [vmem:[#allocation3 + $0x200] sm:$0xff]
        %v2580 = vld [vmem:[#allocation3 + $0x208] sm:$0xff]
        %v2581 = vld [vmem:[#allocation3 + $0x210] sm:$0xff]
        %v2582 = vld [vmem:[#allocation3 + $0x218] sm:$0xff]
        %v2583 = vld [vmem:[#allocation3 + $0x220] sm:$0xff]
        %v2584 = vld [vmem:[#allocation3 + $0x228] sm:$0xff]
        %v2585 = vld [vmem:[#allocation3 + $0x230] sm:$0xff]
        %v2586 = vld [vmem:[#allocation3 + $0x238] sm:$0xff]
        %v2587 = vld [vmem:[#allocation3 + $0x240] sm:$0xff]
        %v2588 = vld [vmem:[#allocation3 + $0x248] sm:$0xff]
        %v2589 = vld [vmem:[#allocation3 + $0x250] sm:$0xff]
        %v2590 = vld [vmem:[#allocation3 + $0x258] sm:$0xff]
        %v2591 = vld [vmem:[#allocation3 + $0x260] sm:$0xff]
        %v2592 = vld [vmem:[#allocation3 + $0x268] sm:$0xff]
        %v2593 = vld [vmem:[#allocation3 + $0x270] sm:$0xff]
        %v2594 = vld [vmem:[#allocation3 + $0x278] sm:$0xff]
        %v2595 = vld [vmem:[#allocation3 + $0x280] sm:$0xff]
        %v2596 = vld [vmem:[#allocation3 + $0x288] sm:$0xff]
        %v2597 = vld [vmem:[#allocation3 + $0x290] sm:$0xff]
        %v2598 = vld [vmem:[#allocation3 + $0x298] sm:$0xff]
        %v2599 = vld [vmem:[#allocation3 + $0x2a0] sm:$0xff]
        %v2600 = vld [vmem:[#allocation3 + $0x2a8] sm:$0xff]
        %v2601 = vld [vmem:[#allocation3 + $0x2b0] sm:$0xff]
        %v2602 = vld [vmem:[#allocation3 + $0x2b8] sm:$0xff]
        %v2603 = vld [vmem:[#allocation3 + $0x2c0] sm:$0xff]
        %v2604 = vld [vmem:[#allocation3 + $0x2c8] sm:$0xff]
        %v2605 = vld [vmem:[#allocation3 + $0x2d0] sm:$0xff]
        %v2606 = vld [vmem:[#allocation3 + $0x2d8] sm:$0xff]
        %v2607 = vld [vmem:[#allocation3 + $0x2e0] sm:$0xff]
        %v2608 = vld [vmem:[#allocation3 + $0x2e8] sm:$0xff]
        %v2609 = vld [vmem:[#allocation3 + $0x2f0] sm:$0xff]
        %v2610 = vld [vmem:[#allocation3 + $0x2f8] sm:$0xff]
        %v2611 = vld [vmem:[#allocation14] sm:$0xff]
        %v2612 = vld [vmem:[#allocation14 + $0x8] sm:$0xff]
        %v2613 = vld [vmem:[#allocation14 + $0x10] sm:$0xff]
        %v2614 = vld [vmem:[#allocation14 + $0x18] sm:$0xff]
        %v2615 = vld [vmem:[#allocation14 + $0x20] sm:$0xff]
        %v2616 = vld [vmem:[#allocation14 + $0x28] sm:$0xff]
        %v2617 = vld [vmem:[#allocation14 + $0x30] sm:$0xff]
        %v2618 = vld [vmem:[#allocation14 + $0x38] sm:$0xff]
        %v2619 = vld [vmem:[#allocation14 + $0x40] sm:$0xff]
        %v2620 = vld [vmem:[#allocation14 + $0x48] sm:$0xff]
        %v2621 = vld [vmem:[#allocation14 + $0x50] sm:$0xff]
        %v2622 = vld [vmem:[#allocation14 + $0x58] sm:$0xff]
        %v2623 = vld [vmem:[#allocation14 + $0x60] sm:$0xff]
        %v2624 = vld [vmem:[#allocation14 + $0x68] sm:$0xff]
        %v2625 = vld [vmem:[#allocation14 + $0x70] sm:$0xff]
        %v2626 = vld [vmem:[#allocation14 + $0x78] sm:$0xff]
        %v2627 = vld [vmem:[#allocation14 + $0x80] sm:$0xff]
        %v2628 = vld [vmem:[#allocation14 + $0x88] sm:$0xff]
        %v2629 = vld [vmem:[#allocation14 + $0x90] sm:$0xff]
        %v2630 = vld [vmem:[#allocation14 + $0x98] sm:$0xff]
        %v2631 = vld [vmem:[#allocation14 + $0xa0] sm:$0xff]
        %v2632 = vld [vmem:[#allocation14 + $0xa8] sm:$0xff]
        %v2633 = vld [vmem:[#allocation14 + $0xb0] sm:$0xff]
        %v2634 = vld [vmem:[#allocation14 + $0xb8] sm:$0xff]
        %v2635 = vld [vmem:[#allocation14 + $0xc0] sm:$0xff]
        %v2636 = vld [vmem:[#allocation14 + $0xc8] sm:$0xff]
        %v2637 = vld [vmem:[#allocation14 + $0xd0] sm:$0xff]
        %v2638 = vld [vmem:[#allocation14 + $0xd8] sm:$0xff]
        %v2639 = vld [vmem:[#allocation14 + $0xe0] sm:$0xff]
        %v2640 = vld [vmem:[#allocation14 + $0xe8] sm:$0xff]
        %v2641 = vld [vmem:[#allocation14 + $0xf0] sm:$0xff]
        %v2642 = vld [vmem:[#allocation14 + $0xf8] sm:$0xff]
        %v2643 = vld [vmem:[#allocation14 + $0x100] sm:$0xff]
        %v2644 = vld [vmem:[#allocation14 + $0x108] sm:$0xff]
        %v2645 = vld [vmem:[#allocation14 + $0x110] sm:$0xff]
        %v2646 = vld [vmem:[#allocation14 + $0x118] sm:$0xff]
        %v2647 = vld [vmem:[#allocation14 + $0x120] sm:$0xff]
        %v2648 = vld [vmem:[#allocation14 + $0x128] sm:$0xff]
        %v2649 = vld [vmem:[#allocation14 + $0x130] sm:$0xff]
        %v2650 = vld [vmem:[#allocation14 + $0x138] sm:$0xff]
        %v2651 = vld [vmem:[#allocation14 + $0x140] sm:$0xff]
        %v2652 = vld [vmem:[#allocation14 + $0x148] sm:$0xff]
        %v2653 = vld [vmem:[#allocation14 + $0x150] sm:$0xff]
        %v2654 = vld [vmem:[#allocation14 + $0x158] sm:$0xff]
        %v2655 = vld [vmem:[#allocation14 + $0x160] sm:$0xff]
        %v2656 = vld [vmem:[#allocation14 + $0x168] sm:$0xff]
        %v2657 = vld [vmem:[#allocation14 + $0x170] sm:$0xff]
        %v2658 = vld [vmem:[#allocation14 + $0x178] sm:$0xff]
        %v2659 = vld [vmem:[#allocation14 + $0x180] sm:$0xff]
        %v2660 = vld [vmem:[#allocation14 + $0x188] sm:$0xff]
        %v2661 = vld [vmem:[#allocation14 + $0x190] sm:$0xff]
        %v2662 = vld [vmem:[#allocation14 + $0x198] sm:$0xff]
        %v2663 = vld [vmem:[#allocation14 + $0x1a0] sm:$0xff]
        %v2664 = vld [vmem:[#allocation14 + $0x1a8] sm:$0xff]
        %v2665 = vld [vmem:[#allocation14 + $0x1b0] sm:$0xff]
        %v2666 = vld [vmem:[#allocation14 + $0x1b8] sm:$0xff]
        %v2667 = vld [vmem:[#allocation14 + $0x1c0] sm:$0xff]
        %v2668 = vld [vmem:[#allocation14 + $0x1c8] sm:$0xff]
        %v2669 = vld [vmem:[#allocation14 + $0x1d0] sm:$0xff]
        %v2670 = vld [vmem:[#allocation14 + $0x1d8] sm:$0xff]
        %v2671 = vld [vmem:[#allocation14 + $0x1e0] sm:$0xff]
        %v2672 = vld [vmem:[#allocation14 + $0x1e8] sm:$0xff]
        %v2673 = vld [vmem:[#allocation14 + $0x1f0] sm:$0xff]
        %v2674 = vld [vmem:[#allocation14 + $0x1f8] sm:$0xff]
        %v2675 = vld [vmem:[#allocation14 + $0x200] sm:$0xff]
        %v2676 = vld [vmem:[#allocation14 + $0x208] sm:$0xff]
        %v2677 = vld [vmem:[#allocation14 + $0x210] sm:$0xff]
        %v2678 = vld [vmem:[#allocation14 + $0x218] sm:$0xff]
        %v2679 = vld [vmem:[#allocation14 + $0x220] sm:$0xff]
        %v2680 = vld [vmem:[#allocation14 + $0x228] sm:$0xff]
        %v2681 = vld [vmem:[#allocation14 + $0x230] sm:$0xff]
        %v2682 = vld [vmem:[#allocation14 + $0x238] sm:$0xff]
        %v2683 = vld [vmem:[#allocation14 + $0x240] sm:$0xff]
        %v2684 = vld [vmem:[#allocation14 + $0x248] sm:$0xff]
        %v2685 = vld [vmem:[#allocation14 + $0x250] sm:$0xff]
        %v2686 = vld [vmem:[#allocation14 + $0x258] sm:$0xff]
        %v2687 = vld [vmem:[#allocation14 + $0x260] sm:$0xff]
        %v2688 = vld [vmem:[#allocation14 + $0x268] sm:$0xff]
        %v2689 = vld [vmem:[#allocation14 + $0x270] sm:$0xff]
        %v2690 = vld [vmem:[#allocation14 + $0x278] sm:$0xff]
        %v2691 = vld [vmem:[#allocation14 + $0x280] sm:$0xff]
        %v2692 = vld [vmem:[#allocation14 + $0x288] sm:$0xff]
        %v2693 = vld [vmem:[#allocation14 + $0x290] sm:$0xff]
        %v2694 = vld [vmem:[#allocation14 + $0x298] sm:$0xff]
        %v2695 = vld [vmem:[#allocation14 + $0x2a0] sm:$0xff]
        %v2696 = vld [vmem:[#allocation14 + $0x2a8] sm:$0xff]
        %v2697 = vld [vmem:[#allocation14 + $0x2b0] sm:$0xff]
        %v2698 = vld [vmem:[#allocation14 + $0x2b8] sm:$0xff]
        %v2699 = vld [vmem:[#allocation14 + $0x2c0] sm:$0xff]
        %v2700 = vld [vmem:[#allocation14 + $0x2c8] sm:$0xff]
        %v2701 = vld [vmem:[%s6] sm:$0xff]
        %v2702 = vld [vmem:[%s6 + $0x8] sm:$0xff]
        %v2703 = vld [vmem:[%s6 + $0x10] sm:$0xff]
        %v2704 = vld [vmem:[%s6 + $0x18] sm:$0xff]
        %v2705 = vld [vmem:[%s6 + $0x20] sm:$0xff]
        %v2706 = vld [vmem:[%s6 + $0x28] sm:$0xff]
        %v2707 = vld [vmem:[%s6 + $0x30] sm:$0xff]
        %v2708 = vld [vmem:[%s6 + $0x38] sm:$0xff]
        %v2709 = vld [vmem:[%s6 + $0x40] sm:$0xff]
        %v2710 = vld [vmem:[%s6 + $0x48] sm:$0xff]
        %v2711 = vld [vmem:[%s6 + $0x50] sm:$0xff]
        %v2712 = vld [vmem:[%s6 + $0x58] sm:$0xff]
        %v2713 = vld [vmem:[%s6 + $0x60] sm:$0xff]
        %v2714 = vld [vmem:[%s6 + $0x68] sm:$0xff]
        %v2715 = vld [vmem:[%s6 + $0x70] sm:$0xff]
        %2717 = vset.pattern.permute.xlu0 0
        %2718 = vperm.xlu0 %2717, %v2701
        %v2719 = vpop.permute.xlu0 %2718
        %2722 = vset.pattern.permute.xlu0 0
        %2723 = vperm.xlu0 %2722, %v2702
        %v2724 = vpop.permute.xlu0 %2723
        %2727 = vset.pattern.permute.xlu0 0
        %2728 = vperm.xlu0 %2727, %v2703
        %v2729 = vpop.permute.xlu0 %2728
        %2732 = vset.pattern.permute.xlu0 0
        %2733 = vperm.xlu0 %2732, %v2704
        %v2734 = vpop.permute.xlu0 %2733
        %2737 = vset.pattern.permute.xlu0 0
        %2738 = vperm.xlu0 %2737, %v2705
        %v2739 = vpop.permute.xlu0 %2738
        %2742 = vset.pattern.permute.xlu0 0
        %2743 = vperm.xlu0 %2742, %v2706
        %v2744 = vpop.permute.xlu0 %2743
        %2747 = vset.pattern.permute.xlu0 0
        %2748 = vperm.xlu0 %2747, %v2707
        %v2749 = vpop.permute.xlu0 %2748
        %2752 = vset.pattern.permute.xlu0 0
        %2753 = vperm.xlu0 %2752, %v2708
        %v2754 = vpop.permute.xlu0 %2753
        %2757 = vset.pattern.permute.xlu0 0
        %2758 = vperm.xlu0 %2757, %v2709
        %v2759 = vpop.permute.xlu0 %2758
        %2762 = vset.pattern.permute.xlu0 0
        %2763 = vperm.xlu0 %2762, %v2710
        %v2764 = vpop.permute.xlu0 %2763
        %2767 = vset.pattern.permute.xlu0 0
        %2768 = vperm.xlu0 %2767, %v2711
        %v2769 = vpop.permute.xlu0 %2768
        %2772 = vset.pattern.permute.xlu0 0
        %2773 = vperm.xlu0 %2772, %v2712
        %v2774 = vpop.permute.xlu0 %2773
        %2777 = vset.pattern.permute.xlu0 0
        %2778 = vperm.xlu0 %2777, %v2713
        %v2779 = vpop.permute.xlu0 %2778
        %2782 = vset.pattern.permute.xlu0 0
        %2783 = vperm.xlu0 %2782, %v2714
        %v2784 = vpop.permute.xlu0 %2783
        %2787 = vset.pattern.permute.xlu0 0
        %2788 = vperm.xlu0 %2787, %v2715
        %v2789 = vpop.permute.xlu0 %2788
        %2791 = vmatprep.subr.mxu0 0.0
        %2792 = vmatpush1.msra.mxu0 %v2515
        %2793 = vmatprep.subr.mxu0 0.0
        %2794 = vmatpush1.msra.mxu0 %v2516
        %2795 = vmatprep.subr.mxu0 0.0
        %2796 = vmatpush1.msra.mxu0 %v2517
        %2797 = vmatprep.subr.mxu0 0.0
        %2798 = vmatpush1.msra.mxu0 %v2518
        %2799 = vmatprep.subr.mxu0 0.0
        %2800 = vmatpush1.msra.mxu0 %v2519
        %2801 = vmatprep.subr.mxu0 0.0
        %2802 = vmatpush1.msra.mxu0 %v2520
        %2803 = vmatprep.subr.mxu0 0.0
        %2804 = vmatpush1.msra.mxu0 %v2521
        %2805 = vmatprep.subr.mxu0 0.0
        %2806 = vmatpush1.msra.mxu0 %v2522
        %2807 = vmatprep.subr.mxu0 0.0
        %2808 = vmatpush1.msra.mxu0 %v2523
        %2809 = vmatprep.subr.mxu0 0.0
        %2810 = vmatpush1.msra.mxu0 %v2524
        %2811 = vmatprep.subr.mxu0 0.0
        %2812 = vmatpush1.msra.mxu0 %v2525
        %2813 = vmatprep.subr.mxu0 0.0
        %2814 = vmatpush1.msra.mxu0 %v2526
        %2815 = vmatprep.subr.mxu0 0.0
        %2816 = vmatpush1.msra.mxu0 %v2527
        %2817 = vmatprep.subr.mxu0 0.0
        %2818 = vmatpush1.msra.mxu0 %v2528
        %2819 = vmatprep.subr.mxu0 0.0
        %2820 = vmatpush1.msra.mxu0 %v2529
        %2821 = vmatprep.subr.mxu0 0.0
        %2822 = vmatpush1.msra.mxu0 %v2530
        %2823 = vmatprep.subr.mxu0 0.0
        %2824 = vmatpush1.msra.mxu0 %v2531
        %2825 = vmatprep.subr.mxu0 0.0
        %2826 = vmatpush1.msra.mxu0 %v2532
        %2827 = vmatprep.subr.mxu0 0.0
        %2828 = vmatpush1.msra.mxu0 %v2533
        %2829 = vmatprep.subr.mxu0 0.0
        %2830 = vmatpush1.msra.mxu0 %v2534
        %2831 = vmatprep.subr.mxu0 0.0
        %2832 = vmatpush1.msra.mxu0 %v2535
        %2833 = vmatprep.subr.mxu0 0.0
        %2834 = vmatpush1.msra.mxu0 %v2536
        %2835 = vmatprep.subr.mxu0 0.0
        %2836 = vmatpush1.msra.mxu0 %v2537
        %2837 = vmatprep.subr.mxu0 0.0
        %2838 = vmatpush1.msra.mxu0 %v2538
        %2839 = vmatprep.subr.mxu0 0.0
        %2840 = vmatpush1.msra.mxu0 %v2539
        %2841 = vmatprep.subr.mxu0 0.0
        %2842 = vmatpush1.msra.mxu0 %v2540
        %2843 = vmatprep.subr.mxu0 0.0
        %2844 = vmatpush1.msra.mxu0 %v2541
        %2845 = vmatprep.subr.mxu0 0.0
        %2846 = vmatpush1.msra.mxu0 %v2542
        %2847 = vmatprep.subr.mxu0 0.0
        %2848 = vmatpush1.msra.mxu0 %v2543
        %2849 = vmatprep.subr.mxu0 0.0
        %2850 = vmatpush1.msra.mxu0 %v2544
        %2851 = vmatprep.subr.mxu0 0.0
        %2852 = vmatpush1.msra.mxu0 %v2545
        %2853 = vmatprep.subr.mxu0 0.0
        %2854 = vmatpush1.msra.mxu0 %v2546
        %2855 = vmatprep.mubr.f32.mxu0 %v2612
        %2856 = vmatmul.mubr.f32.gmra.mrb[0].mxu0 %v2611
        %v2857 = vpop.f32.mrb[0].mxu0
        %v2858 = vadd.f32 %v2719, %v2857
        %v2859 = vpop.f32.mrb[0].mxu0
        %2860 = vmatprep.mubr.f32.mxu0 %v2618
        %2861 = vmatmul.mubr.f32.gmra.mrb[0].mxu0 %v2617
        %v2862 = vpop.f32.mrb[0].mxu0
        %v2863 = vadd.f32 %v2724, %v2862
        %v2864 = vpop.f32.mrb[0].mxu0
        %2865 = vmatprep.mubr.f32.mxu0 %v2624
        %2866 = vmatmul.mubr.f32.gmra.mrb[0].mxu0 %v2623
        %v2867 = vpop.f32.mrb[0].mxu0
        %v2868 = vadd.f32 %v2729, %v2867
        %v2869 = vpop.f32.mrb[0].mxu0
        %2870 = vmatprep.mubr.f32.mxu0 %v2630
        %2871 = vmatmul.mubr.f32.gmra.mrb[0].mxu0 %v2629
        %v2872 = vpop.f32.mrb[0].mxu0
        %v2873 = vadd.f32 %v2734, %v2872
        %v2874 = vpop.f32.mrb[0].mxu0
        %2875 = vmatprep.mubr.f32.mxu0 %v2636
        %2876 = vmatmul.mubr.f32.gmra.mrb[0].mxu0 %v2635
        %v2877 = vpop.f32.mrb[0].mxu0
        %v2878 = vadd.f32 %v2739, %v2877
        %v2879 = vpop.f32.mrb[0].mxu0
        %2880 = vmatprep.mubr.f32.mxu0 %v2642
        %2881 = vmatmul.mubr.f32.gmra.mrb[0].mxu0 %v2641
        %v2882 = vpop.f32.mrb[0].mxu0
        %v2883 = vadd.f32 %v2744, %v2882
        %v2884 = vpop.f32.mrb[0].mxu0
        %2885 = vmatprep.mubr.f32.mxu0 %v2648
        %2886 = vmatmul.mubr.f32.gmra.mrb[0].mxu0 %v2647
        %v2887 = vpop.f32.mrb[0].mxu0
        %v2888 = vadd.f32 %v2749, %v2887
        %v2889 = vpop.f32.mrb[0].mxu0
        %2890 = vmatprep.mubr.f32.mxu0 %v2654
        %2891 = vmatmul.mubr.f32.gmra.mrb[0].mxu0 %v2653
        %v2892 = vpop.f32.mrb[0].mxu0
        %v2893 = vadd.f32 %v2754, %v2892
        %v2894 = vpop.f32.mrb[0].mxu0
        %2895 = vmatprep.mubr.f32.mxu0 %v2660
        %2896 = vmatmul.mubr.f32.gmra.mrb[0].mxu0 %v2659
        %v2897 = vpop.f32.mrb[0].mxu0
        %v2898 = vadd.f32 %v2759, %v2897
        %v2899 = vpop.f32.mrb[0].mxu0
        %2900 = vmatprep.mubr.f32.mxu0 %v2666
        %2901 = vmatmul.mubr.f32.gmra.mrb[0].mxu0 %v2665
        %v2902 = vpop.f32.mrb[0].mxu0
        %v2903 = vadd.f32 %v2764, %v2902
        %v2904 = vpop.f32.mrb[0].mxu0
        %2905 = vmatprep.mubr.f32.mxu0 %v2672
        %2906 = vmatmul.mubr.f32.gmra.mrb[0].mxu0 %v2671
        %v2907 = vpop.f32.mrb[0].mxu0
        %v2908 = vadd.f32 %v2769, %v2907
        %v2909 = vpop.f32.mrb[0].mxu0
        %2910 = vmatprep.mubr.f32.mxu0 %v2678
        %2911 = vmatmul.mubr.f32.gmra.mrb[0].mxu0 %v2677
        %v2912 = vpop.f32.mrb[0].mxu0
        %v2913 = vadd.f32 %v2774, %v2912
        %v2914 = vpop.f32.mrb[0].mxu0
        %2915 = vmatprep.mubr.f32.mxu0 %v2684
        %2916 = vmatmul.mubr.f32.gmra.mrb[0].mxu0 %v2683
        %v2917 = vpop.f32.mrb[0].mxu0
        %v2918 = vadd.f32 %v2779, %v2917
        %v2919 = vpop.f32.mrb[0].mxu0
        %2920 = vmatprep.mubr.f32.mxu0 %v2690
        %2921 = vmatmul.mubr.f32.gmra.mrb[0].mxu0 %v2689
        %v2922 = vpop.f32.mrb[0].mxu0
        %v2923 = vadd.f32 %v2784, %v2922
        %v2924 = vpop.f32.mrb[0].mxu0
        %2925 = vmatprep.mubr.f32.mxu0 %v2696
        %2926 = vmatmul.mubr.f32.gmra.mrb[0].mxu0 %v2695
        %v2927 = vpop.f32.mrb[0].mxu0
        %v2928 = vadd.f32 %v2789, %v2927
        %v2929 = vpop.f32.mrb[0].mxu0
        %2930 = vdwg.mxu0
        %2931 = vmatprep.subr.mxu0 0.0
        %2932 = vmatpush1.msra.mxu0 %v2547
        %2933 = vmatprep.subr.mxu0 0.0
        %2934 = vmatpush1.msra.mxu0 %v2548
        %2935 = vmatprep.subr.mxu0 0.0
        %2936 = vmatpush1.msra.mxu0 %v2549
        %2937 = vmatprep.subr.mxu0 0.0
        %2938 = vmatpush1.msra.mxu0 %v2550
        %2939 = vmatprep.subr.mxu0 0.0
        %2940 = vmatpush1.msra.mxu0 %v2551
        %2941 = vmatprep.subr.mxu0 0.0
        %2942 = vmatpush1.msra.mxu0 %v2552
        %2943 = vmatprep.subr.mxu0 0.0
        %2944 = vmatpush1.msra.mxu0 %v2553
        %2945 = vmatprep.subr.mxu0 0.0
        %2946 = vmatpush1.msra.mxu0 %v2554
        %2947 = vmatprep.subr.mxu0 0.0
        %2948 = vmatpush1.msra.mxu0 %v2555
        %2949 = vmatprep.subr.mxu0 0.0
        %2950 = vmatpush1.msra.mxu0 %v2556
        %2951 = vmatprep.subr.mxu0 0.0
        %2952 = vmatpush1.msra.mxu0 %v2557
        %2953 = vmatprep.subr.mxu0 0.0
        %2954 = vmatpush1.msra.mxu0 %v2558
        %2955 = vmatprep.subr.mxu0 0.0
        %2956 = vmatpush1.msra.mxu0 %v2559
        %2957 = vmatprep.subr.mxu0 0.0
        %2958 = vmatpush1.msra.mxu0 %v2560
        %2959 = vmatprep.subr.mxu0 0.0
        %2960 = vmatpush1.msra.mxu0 %v2561
        %2961 = vmatprep.subr.mxu0 0.0
        %2962 = vmatpush1.msra.mxu0 %v2562
        %2963 = vmatprep.subr.mxu0 0.0
        %2964 = vmatpush1.msra.mxu0 %v2563
        %2965 = vmatprep.subr.mxu0 0.0
        %2966 = vmatpush1.msra.mxu0 %v2564
        %2967 = vmatprep.subr.mxu0 0.0
        %2968 = vmatpush1.msra.mxu0 %v2565
        %2969 = vmatprep.subr.mxu0 0.0
        %2970 = vmatpush1.msra.mxu0 %v2566
        %2971 = vmatprep.subr.mxu0 0.0
        %2972 = vmatpush1.msra.mxu0 %v2567
        %2973 = vmatprep.subr.mxu0 0.0
        %2974 = vmatpush1.msra.mxu0 %v2568
        %2975 = vmatprep.subr.mxu0 0.0
        %2976 = vmatpush1.msra.mxu0 %v2569
        %2977 = vmatprep.subr.mxu0 0.0
        %2978 = vmatpush1.msra.mxu0 %v2570
        %2979 = vmatprep.subr.mxu0 0.0
        %2980 = vmatpush1.msra.mxu0 %v2571
        %2981 = vmatprep.subr.mxu0 0.0
        %2982 = vmatpush1.msra.mxu0 %v2572
        %2983 = vmatprep.subr.mxu0 0.0
        %2984 = vmatpush1.msra.mxu0 %v2573
        %2985 = vmatprep.subr.mxu0 0.0
        %2986 = vmatpush1.msra.mxu0 %v2574
        %2987 = vmatprep.subr.mxu0 0.0
        %2988 = vmatpush1.msra.mxu0 %v2575
        %2989 = vmatprep.subr.mxu0 0.0
        %2990 = vmatpush1.msra.mxu0 %v2576
        %2991 = vmatprep.subr.mxu0 0.0
        %2992 = vmatpush1.msra.mxu0 %v2577
        %2993 = vmatprep.subr.mxu0 0.0
        %2994 = vmatpush1.msra.mxu0 %v2578
        %2995 = vmatprep.mubr.f32.mxu0 %v2614
        %2996 = vmatmul.mubr.f32.gmra.mrb[0].mxu0 %v2613
        %v2997 = vpop.f32.mrb[0].mxu0
        %v2998 = vadd.f32 %v2858, %v2997
        %v2999 = vpop.f32.mrb[0].mxu0
        %3000 = vmatprep.mubr.f32.mxu0 %v2620
        %3001 = vmatmul.mubr.f32.gmra.mrb[0].mxu0 %v2619
        %v3002 = vpop.f32.mrb[0].mxu0
        %v3003 = vadd.f32 %v2863, %v3002
        %v3004 = vpop.f32.mrb[0].mxu0
        %3005 = vmatprep.mubr.f32.mxu0 %v2626
        %3006 = vmatmul.mubr.f32.gmra.mrb[0].mxu0 %v2625
        %v3007 = vpop.f32.mrb[0].mxu0
        %v3008 = vadd.f32 %v2868, %v3007
        %v3009 = vpop.f32.mrb[0].mxu0
        %3010 = vmatprep.mubr.f32.mxu0 %v2632
        %3011 = vmatmul.mubr.f32.gmra.mrb[0].mxu0 %v2631
        %v3012 = vpop.f32.mrb[0].mxu0
        %v3013 = vadd.f32 %v2873, %v3012
        %v3014 = vpop.f32.mrb[0].mxu0
        %3015 = vmatprep.mubr.f32.mxu0 %v2638
        %3016 = vmatmul.mubr.f32.gmra.mrb[0].mxu0 %v2637
        %v3017 = vpop.f32.mrb[0].mxu0
        %v3018 = vadd.f32 %v2878, %v3017
        %v3019 = vpop.f32.mrb[0].mxu0
        %3020 = vmatprep.mubr.f32.mxu0 %v2644
        %3021 = vmatmul.mubr.f32.gmra.mrb[0].mxu0 %v2643
        %v3022 = vpop.f32.mrb[0].mxu0
        %v3023 = vadd.f32 %v2883, %v3022
        %v3024 = vpop.f32.mrb[0].mxu0
        %3025 = vmatprep.mubr.f32.mxu0 %v2650
        %3026 = vmatmul.mubr.f32.gmra.mrb[0].mxu0 %v2649
        %v3027 = vpop.f32.mrb[0].mxu0
        %v3028 = vadd.f32 %v2888, %v3027
        %v3029 = vpop.f32.mrb[0].mxu0
        %3030 = vmatprep.mubr.f32.mxu0 %v2656
        %3031 = vmatmul.mubr.f32.gmra.mrb[0].mxu0 %v2655
        %v3032 = vpop.f32.mrb[0].mxu0
        %v3033 = vadd.f32 %v2893, %v3032
        %v3034 = vpop.f32.mrb[0].mxu0
        %3035 = vmatprep.mubr.f32.mxu0 %v2662
        %3036 = vmatmul.mubr.f32.gmra.mrb[0].mxu0 %v2661
        %v3037 = vpop.f32.mrb[0].mxu0
        %v3038 = vadd.f32 %v2898, %v3037
        %v3039 = vpop.f32.mrb[0].mxu0
        %3040 = vmatprep.mubr.f32.mxu0 %v2668
        %3041 = vmatmul.mubr.f32.gmra.mrb[0].mxu0 %v2667
        %v3042 = vpop.f32.mrb[0].mxu0
        %v3043 = vadd.f32 %v2903, %v3042
        %v3044 = vpop.f32.mrb[0].mxu0
        %3045 = vmatprep.mubr.f32.mxu0 %v2674
        %3046 = vmatmul.mubr.f32.gmra.mrb[0].mxu0 %v2673
        %v3047 = vpop.f32.mrb[0].mxu0
        %v3048 = vadd.f32 %v2908, %v3047
        %v3049 = vpop.f32.mrb[0].mxu0
        %3050 = vmatprep.mubr.f32.mxu0 %v2680
        %3051 = vmatmul.mubr.f32.gmra.mrb[0].mxu0 %v2679
        %v3052 = vpop.f32.mrb[0].mxu0
        %v3053 = vadd.f32 %v2913, %v3052
        %v3054 = vpop.f32.mrb[0].mxu0
        %3055 = vmatprep.mubr.f32.mxu0 %v2686
        %3056 = vmatmul.mubr.f32.gmra.mrb[0].mxu0 %v2685
        %v3057 = vpop.f32.mrb[0].mxu0
        %v3058 = vadd.f32 %v2918, %v3057
        %v3059 = vpop.f32.mrb[0].mxu0
        %3060 = vmatprep.mubr.f32.mxu0 %v2692
        %3061 = vmatmul.mubr.f32.gmra.mrb[0].mxu0 %v2691
        %v3062 = vpop.f32.mrb[0].mxu0
        %v3063 = vadd.f32 %v2923, %v3062
        %v3064 = vpop.f32.mrb[0].mxu0
        %3065 = vmatprep.mubr.f32.mxu0 %v2698
        %3066 = vmatmul.mubr.f32.gmra.mrb[0].mxu0 %v2697
        %v3067 = vpop.f32.mrb[0].mxu0
        %v3068 = vadd.f32 %v2928, %v3067
        %v3069 = vpop.f32.mrb[0].mxu0
        %3070 = vdwg.mxu0
        %3071 = vmatprep.subr.mxu0 0.0
        %3072 = vmatpush1.msra.mxu0 %v2579
        %3073 = vmatprep.subr.mxu0 0.0
        %3074 = vmatpush1.msra.mxu0 %v2580
        %3075 = vmatprep.subr.mxu0 0.0
        %3076 = vmatpush1.msra.mxu0 %v2581
        %3077 = vmatprep.subr.mxu0 0.0
        %3078 = vmatpush1.msra.mxu0 %v2582
        %3079 = vmatprep.subr.mxu0 0.0
        %3080 = vmatpush1.msra.mxu0 %v2583
        %3081 = vmatprep.subr.mxu0 0.0
        %3082 = vmatpush1.msra.mxu0 %v2584
        %3083 = vmatprep.subr.mxu0 0.0
        %3084 = vmatpush1.msra.mxu0 %v2585
        %3085 = vmatprep.subr.mxu0 0.0
        %3086 = vmatpush1.msra.mxu0 %v2586
        %3087 = vmatprep.subr.mxu0 0.0
        %3088 = vmatpush1.msra.mxu0 %v2587
        %3089 = vmatprep.subr.mxu0 0.0
        %3090 = vmatpush1.msra.mxu0 %v2588
        %3091 = vmatprep.subr.mxu0 0.0
        %3092 = vmatpush1.msra.mxu0 %v2589
        %3093 = vmatprep.subr.mxu0 0.0
        %3094 = vmatpush1.msra.mxu0 %v2590
        %3095 = vmatprep.subr.mxu0 0.0
        %3096 = vmatpush1.msra.mxu0 %v2591
        %3097 = vmatprep.subr.mxu0 0.0
        %3098 = vmatpush1.msra.mxu0 %v2592
        %3099 = vmatprep.subr.mxu0 0.0
        %3100 = vmatpush1.msra.mxu0 %v2593
        %3101 = vmatprep.subr.mxu0 0.0
        %3102 = vmatpush1.msra.mxu0 %v2594
        %3103 = vmatprep.subr.mxu0 0.0
        %3104 = vmatpush1.msra.mxu0 %v2595
        %3105 = vmatprep.subr.mxu0 0.0
        %3106 = vmatpush1.msra.mxu0 %v2596
        %3107 = vmatprep.subr.mxu0 0.0
        %3108 = vmatpush1.msra.mxu0 %v2597
        %3109 = vmatprep.subr.mxu0 0.0
        %3110 = vmatpush1.msra.mxu0 %v2598
        %3111 = vmatprep.subr.mxu0 0.0
        %3112 = vmatpush1.msra.mxu0 %v2599
        %3113 = vmatprep.subr.mxu0 0.0
        %3114 = vmatpush1.msra.mxu0 %v2600
        %3115 = vmatprep.subr.mxu0 0.0
        %3116 = vmatpush1.msra.mxu0 %v2601
        %3117 = vmatprep.subr.mxu0 0.0
        %3118 = vmatpush1.msra.mxu0 %v2602
        %3119 = vmatprep.subr.mxu0 0.0
        %3120 = vmatpush1.msra.mxu0 %v2603
        %3121 = vmatprep.subr.mxu0 0.0
        %3122 = vmatpush1.msra.mxu0 %v2604
        %3123 = vmatprep.subr.mxu0 0.0
        %3124 = vmatpush1.msra.mxu0 %v2605
        %3125 = vmatprep.subr.mxu0 0.0
        %3126 = vmatpush1.msra.mxu0 %v2606
        %3127 = vmatprep.subr.mxu0 0.0
        %3128 = vmatpush1.msra.mxu0 %v2607
        %3129 = vmatprep.subr.mxu0 0.0
        %3130 = vmatpush1.msra.mxu0 %v2608
        %3131 = vmatprep.subr.mxu0 0.0
        %3132 = vmatpush1.msra.mxu0 %v2609
        %3133 = vmatprep.subr.mxu0 0.0
        %3134 = vmatpush1.msra.mxu0 %v2610
        %3135 = vmatprep.mubr.f32.mxu0 %v2616
        %3136 = vmatmul.mubr.f32.gmra.mrb[0].mxu0 %v2615
        %v3137 = vpop.f32.mrb[0].mxu0
        %v3138 = vadd.f32 %v2998, %v3137
        %v3139 = vpop.f32.mrb[0].mxu0
        %3140 = vmatprep.mubr.f32.mxu0 %v2622
        %3141 = vmatmul.mubr.f32.gmra.mrb[0].mxu0 %v2621
        %v3142 = vpop.f32.mrb[0].mxu0
        %v3143 = vadd.f32 %v3003, %v3142
        %v3144 = vpop.f32.mrb[0].mxu0
        %3145 = vmatprep.mubr.f32.mxu0 %v2628
        %3146 = vmatmul.mubr.f32.gmra.mrb[0].mxu0 %v2627
        %v3147 = vpop.f32.mrb[0].mxu0
        %v3148 = vadd.f32 %v3008, %v3147
        %v3149 = vpop.f32.mrb[0].mxu0
        %3150 = vmatprep.mubr.f32.mxu0 %v2634
        %3151 = vmatmul.mubr.f32.gmra.mrb[0].mxu0 %v2633
        %v3152 = vpop.f32.mrb[0].mxu0
        %v3153 = vadd.f32 %v3013, %v3152
        %v3154 = vpop.f32.mrb[0].mxu0
        %3155 = vmatprep.mubr.f32.mxu0 %v2640
        %3156 = vmatmul.mubr.f32.gmra.mrb[0].mxu0 %v2639
        %v3157 = vpop.f32.mrb[0].mxu0
        %v3158 = vadd.f32 %v3018, %v3157
        %v3159 = vpop.f32.mrb[0].mxu0
        %3160 = vmatprep.mubr.f32.mxu0 %v2646
        %3161 = vmatmul.mubr.f32.gmra.mrb[0].mxu0 %v2645
        %v3162 = vpop.f32.mrb[0].mxu0
        %v3163 = vadd.f32 %v3023, %v3162
        %v3164 = vpop.f32.mrb[0].mxu0
        %3165 = vmatprep.mubr.f32.mxu0 %v2652
        %3166 = vmatmul.mubr.f32.gmra.mrb[0].mxu0 %v2651
        %v3167 = vpop.f32.mrb[0].mxu0
        %v3168 = vadd.f32 %v3028, %v3167
        %v3169 = vpop.f32.mrb[0].mxu0
        %3170 = vmatprep.mubr.f32.mxu0 %v2658
        %3171 = vmatmul.mubr.f32.gmra.mrb[0].mxu0 %v2657
        %v3172 = vpop.f32.mrb[0].mxu0
        %v3173 = vadd.f32 %v3033, %v3172
        %v3174 = vpop.f32.mrb[0].mxu0
        %3175 = vmatprep.mubr.f32.mxu0 %v2664
        %3176 = vmatmul.mubr.f32.gmra.mrb[0].mxu0 %v2663
        %v3177 = vpop.f32.mrb[0].mxu0
        %v3178 = vadd.f32 %v3038, %v3177
        %v3179 = vpop.f32.mrb[0].mxu0
        %3180 = vmatprep.mubr.f32.mxu0 %v2670
        %3181 = vmatmul.mubr.f32.gmra.mrb[0].mxu0 %v2669
        %v3182 = vpop.f32.mrb[0].mxu0
        %v3183 = vadd.f32 %v3043, %v3182
        %v3184 = vpop.f32.mrb[0].mxu0
        %3185 = vmatprep.mubr.f32.mxu0 %v2676
        %3186 = vmatmul.mubr.f32.gmra.mrb[0].mxu0 %v2675
        %v3187 = vpop.f32.mrb[0].mxu0
        %v3188 = vadd.f32 %v3048, %v3187
        %v3189 = vpop.f32.mrb[0].mxu0
        %3190 = vmatprep.mubr.f32.mxu0 %v2682
        %3191 = vmatmul.mubr.f32.gmra.mrb[0].mxu0 %v2681
        %v3192 = vpop.f32.mrb[0].mxu0
        %v3193 = vadd.f32 %v3053, %v3192
        %v3194 = vpop.f32.mrb[0].mxu0
        %3195 = vmatprep.mubr.f32.mxu0 %v2688
        %3196 = vmatmul.mubr.f32.gmra.mrb[0].mxu0 %v2687
        %v3197 = vpop.f32.mrb[0].mxu0
        %v3198 = vadd.f32 %v3058, %v3197
        %v3199 = vpop.f32.mrb[0].mxu0
        %3200 = vmatprep.mubr.f32.mxu0 %v2694
        %3201 = vmatmul.mubr.f32.gmra.mrb[0].mxu0 %v2693
        %v3202 = vpop.f32.mrb[0].mxu0
        %v3203 = vadd.f32 %v3063, %v3202
        %v3204 = vpop.f32.mrb[0].mxu0
        %3205 = vmatprep.mubr.f32.mxu0 %v2700
        %3206 = vmatmul.mubr.f32.gmra.mrb[0].mxu0 %v2699
        %v3207 = vpop.f32.mrb[0].mxu0
        %v3208 = vadd.f32 %v3068, %v3207
        %v3209 = vpop.f32.mrb[0].mxu0
        %3210 = vdwg.mxu0
        %v3211 = vmax.f32 %v3138, 0.0
        %v3212 = vmax.f32 %v3143, 0.0
        %v3213 = vmax.f32 %v3148, 0.0
        %v3214 = vmax.f32 %v3153, 0.0
        %v3215 = vmax.f32 %v3158, 0.0
        %v3216 = vmax.f32 %v3163, 0.0
        %v3217 = vmax.f32 %v3168, 0.0
        %v3218 = vmax.f32 %v3173, 0.0
        %v3219 = vmax.f32 %v3178, 0.0
        %v3220 = vmax.f32 %v3183, 0.0
        %v3221 = vmax.f32 %v3188, 0.0
        %v3222 = vmax.f32 %v3193, 0.0
        %v3223 = vmax.f32 %v3198, 0.0
        %v3224 = vmax.f32 %v3203, 0.0
        %v3225 = vmax.f32 %v3208, 0.0
        %v3226 = vld [vmem:[%s585] sm:$0xff]
        %v3227 = vld [vmem:[%s585 + $0x8] sm:$0xff]
        %v3228 = vld [vmem:[%s585 + $0x10] sm:$0xff]
        %v3229 = vld [vmem:[%s585 + $0x18] sm:$0xff]
        %v3230 = vld [vmem:[%s585 + $0x20] sm:$0xff]
        %v3231 = vld [vmem:[%s585 + $0x28] sm:$0xff]
        %v3232 = vld [vmem:[%s585 + $0x30] sm:$0xff]
        %v3233 = vld [vmem:[%s585 + $0x38] sm:$0xff]
        %v3234 = vld [vmem:[%s585 + $0x40] sm:$0xff]
        %v3235 = vld [vmem:[%s585 + $0x48] sm:$0xff]
        %v3236 = vld [vmem:[%s585 + $0x50] sm:$0xff]
        %v3237 = vld [vmem:[%s585 + $0x58] sm:$0xff]
        %v3238 = vld [vmem:[%s585 + $0x60] sm:$0xff]
        %v3239 = vld [vmem:[%s585 + $0x68] sm:$0xff]
        %v3240 = vld [vmem:[%s585 + $0x70] sm:$0xff]
        %v3241 = vmul.f32 %v3211, %v3226
        %v3242 = vmul.f32 %v3212, %v3227
        %v3243 = vmul.f32 %v3213, %v3228
        %v3244 = vmul.f32 %v3214, %v3229
        %v3245 = vmul.f32 %v3215, %v3230
        %v3246 = vmul.f32 %v3216, %v3231
        %v3247 = vmul.f32 %v3217, %v3232
        %v3248 = vmul.f32 %v3218, %v3233
        %v3249 = vmul.f32 %v3219, %v3234
        %v3250 = vmul.f32 %v3220, %v3235
        %v3251 = vmul.f32 %v3221, %v3236
        %v3252 = vmul.f32 %v3222, %v3237
        %v3253 = vmul.f32 %v3223, %v3238
        %v3254 = vmul.f32 %v3224, %v3239
        %v3255 = vmul.f32 %v3225, %v3240
        %v3256 = vld [vmem:[#allocation16] sm:$0xff]
        %v3257 = vld [vmem:[#allocation16 + $0x8] sm:$0xff]
        %v3258 = vld [vmem:[#allocation16 + $0x10] sm:$0xff]
        %v3259 = vld [vmem:[#allocation16 + $0x18] sm:$0xff]
        %v3260 = vld [vmem:[#allocation16 + $0x20] sm:$0xff]
        %v3261 = vld [vmem:[#allocation16 + $0x28] sm:$0xff]
        %v3262 = vld [vmem:[#allocation16 + $0x30] sm:$0xff]
        %v3263 = vld [vmem:[#allocation16 + $0x38] sm:$0xff]
        %v3264 = vld [vmem:[#allocation16 + $0x40] sm:$0xff]
        %v3265 = vld [vmem:[#allocation16 + $0x48] sm:$0xff]
        %v3266 = vld [vmem:[#allocation16 + $0x50] sm:$0xf]
        %v3267 = vld [vmem:[%s8] sm:$0xff]
        %v3268 = vld [vmem:[%s8 + $0x8] sm:$0xff]
        %v3269 = vld [vmem:[%s8 + $0x10] sm:$0xff]
        %v3270 = vld [vmem:[%s8 + $0x18] sm:$0xff]
        %v3271 = vld [vmem:[%s8 + $0x20] sm:$0xff]
        %v3272 = vld [vmem:[%s8 + $0x28] sm:$0xff]
        %v3273 = vld [vmem:[%s8 + $0x30] sm:$0xff]
        %v3274 = vld [vmem:[%s8 + $0x38] sm:$0xff]
        %v3275 = vld [vmem:[%s8 + $0x40] sm:$0xff]
        %v3276 = vld [vmem:[%s8 + $0x48] sm:$0xff]
        %v3277 = vld [vmem:[%s8 + $0x50] sm:$0xf]
        %3279 = vset.pattern.permute.xlu0 0
        %3280 = vperm.xlu0 %3279, %v3267
        %v3281 = vpop.permute.xlu0 %3280
        %3284 = vset.pattern.permute.xlu0 0
        %3285 = vperm.xlu0 %3284, %v3268
        %v3286 = vpop.permute.xlu0 %3285
        %3289 = vset.pattern.permute.xlu0 0
        %3290 = vperm.xlu0 %3289, %v3269
        %v3291 = vpop.permute.xlu0 %3290
        %3294 = vset.pattern.permute.xlu0 0
        %3295 = vperm.xlu0 %3294, %v3270
        %v3296 = vpop.permute.xlu0 %3295
        %3299 = vset.pattern.permute.xlu0 0
        %3300 = vperm.xlu0 %3299, %v3271
        %v3301 = vpop.permute.xlu0 %3300
        %3304 = vset.pattern.permute.xlu0 0
        %3305 = vperm.xlu0 %3304, %v3272
        %v3306 = vpop.permute.xlu0 %3305
        %3309 = vset.pattern.permute.xlu0 0
        %3310 = vperm.xlu0 %3309, %v3273
        %v3311 = vpop.permute.xlu0 %3310
        %3314 = vset.pattern.permute.xlu0 0
        %3315 = vperm.xlu0 %3314, %v3274
        %v3316 = vpop.permute.xlu0 %3315
        %3319 = vset.pattern.permute.xlu0 0
        %3320 = vperm.xlu0 %3319, %v3275
        %v3321 = vpop.permute.xlu0 %3320
        %3324 = vset.pattern.permute.xlu0 0
        %3325 = vperm.xlu0 %3324, %v3276
        %v3326 = vpop.permute.xlu0 %3325
        %3329 = vset.pattern.permute.xlu0 0
        %3330 = vperm.xlu0 %3329, %v3277
        %v3331 = vpop.permute.xlu0 %3330
        %vm3333 = vcmask 982016
        %v3335 = vsel %vm3333, %v3256, 0
        %v3338 = vsel %vm3333, %v3257, 0
        %v3341 = vsel %vm3333, %v3258, 0
        %v3344 = vsel %vm3333, %v3259, 0
        %v3347 = vsel %vm3333, %v3260, 0
        %v3350 = vsel %vm3333, %v3261, 0
        %v3353 = vsel %vm3333, %v3262, 0
        %v3356 = vsel %vm3333, %v3263, 0
        %v3359 = vsel %vm3333, %v3264, 0
        %v3362 = vsel %vm3333, %v3265, 0
        %v3365 = vsel %vm3333, %v3266, 0
        %3367 = vmatprep.subr.mxu0 0.0
        %3368 = vmatpush1.msra.mxu0 %v3241
        %3369 = vmatprep.subr.mxu0 0.0
        %3370 = vmatpush1.msra.mxu0 %v3242
        %3371 = vmatprep.subr.mxu0 0.0
        %3372 = vmatpush1.msra.mxu0 %v3243
        %3373 = vmatprep.subr.mxu0 0.0
        %3374 = vmatpush1.msra.mxu0 %v3244
        %3375 = vmatprep.subr.mxu0 0.0
        %3376 = vmatpush1.msra.mxu0 %v3245
        %3377 = vmatprep.subr.mxu0 0.0
        %3378 = vmatpush1.msra.mxu0 %v3246
        %3379 = vmatprep.subr.mxu0 0.0
        %3380 = vmatpush1.msra.mxu0 %v3247
        %3381 = vmatprep.subr.mxu0 0.0
        %3382 = vmatpush1.msra.mxu0 %v3248
        %3383 = vmatprep.subr.mxu0 0.0
        %3384 = vmatpush1.msra.mxu0 %v3249
        %3385 = vmatprep.subr.mxu0 0.0
        %3386 = vmatpush1.msra.mxu0 %v3250
        %3387 = vmatprep.subr.mxu0 0.0
        %3388 = vmatpush1.msra.mxu0 %v3251
        %3389 = vmatprep.subr.mxu0 0.0
        %3390 = vmatpush1.msra.mxu0 %v3252
        %3391 = vmatprep.subr.mxu0 0.0
        %3392 = vmatpush1.msra.mxu0 %v3253
        %3393 = vmatprep.subr.mxu0 0.0
        %3394 = vmatpush1.msra.mxu0 %v3254
        %3395 = vmatprep.subr.mxu0 0.0
        %3396 = vmatpush1.msra.mxu0 %v3255
        %3397 = vmatprep.subr.mxu0 0.0
        %3398 = vmatpush1.msra.mxu0 0.0
        %3399 = vmatprep.subr.mxu0 0.0
        %3400 = vmatpush1.msra.mxu0 0.0
        %3401 = vmatprep.subr.mxu0 0.0
        %3402 = vmatpush1.msra.mxu0 0.0
        %3403 = vmatprep.subr.mxu0 0.0
        %3404 = vmatpush1.msra.mxu0 0.0
        %3405 = vmatprep.subr.mxu0 0.0
        %3406 = vmatpush1.msra.mxu0 0.0
        %3407 = vmatprep.subr.mxu0 0.0
        %3408 = vmatpush1.msra.mxu0 0.0
        %3409 = vmatprep.subr.mxu0 0.0
        %3410 = vmatpush1.msra.mxu0 0.0
        %3411 = vmatprep.subr.mxu0 0.0
        %3412 = vmatpush1.msra.mxu0 0.0
        %3413 = vmatprep.subr.mxu0 0.0
        %3414 = vmatpush1.msra.mxu0 0.0
        %3415 = vmatprep.subr.mxu0 0.0
        %3416 = vmatpush1.msra.mxu0 0.0
        %3417 = vmatprep.subr.mxu0 0.0
        %3418 = vmatpush1.msra.mxu0 0.0
        %3419 = vmatprep.subr.mxu0 0.0
        %3420 = vmatpush1.msra.mxu0 0.0
        %3421 = vmatprep.subr.mxu0 0.0
        %3422 = vmatpush1.msra.mxu0 0.0
        %3423 = vmatprep.subr.mxu0 0.0
        %3424 = vmatpush1.msra.mxu0 0.0
        %3425 = vmatprep.subr.mxu0 0.0
        %3426 = vmatpush1.msra.mxu0 0.0
        %3427 = vmatprep.subr.mxu0 0.0
        %3428 = vmatpush1.msra.mxu0 0.0
        %3429 = vmatprep.subr.mxu0 0.0
        %3430 = vmatpush1.msra.mxu0 0.0
        %3431 = vmatprep.mubr.f32.mxu0 0.0
        %3432 = vmatmul.mubr.f32.gmra.mrb[0].mxu0 %v3335
        %v3433 = vpop.f32.mrb[0].mxu0
        %v3434 = vadd.f32 %v3281, %v3433
        %v3435 = vpop.f32.mrb[0].mxu0
        %3436 = vmatprep.mubr.f32.mxu0 0.0
        %3437 = vmatmul.mubr.f32.gmra.mrb[0].mxu0 %v3338
        %v3438 = vpop.f32.mrb[0].mxu0
        %v3439 = vadd.f32 %v3286, %v3438
        %v3440 = vpop.f32.mrb[0].mxu0
        %3441 = vmatprep.mubr.f32.mxu0 0.0
        %3442 = vmatmul.mubr.f32.gmra.mrb[0].mxu0 %v3341
        %v3443 = vpop.f32.mrb[0].mxu0
        %v3444 = vadd.f32 %v3291, %v3443
        %v3445 = vpop.f32.mrb[0].mxu0
        %3446 = vmatprep.mubr.f32.mxu0 0.0
        %3447 = vmatmul.mubr.f32.gmra.mrb[0].mxu0 %v3344
        %v3448 = vpop.f32.mrb[0].mxu0
        %v3449 = vadd.f32 %v3296, %v3448
        %v3450 = vpop.f32.mrb[0].mxu0
        %3451 = vmatprep.mubr.f32.mxu0 0.0
        %3452 = vmatmul.mubr.f32.gmra.mrb[0].mxu0 %v3347
        %v3453 = vpop.f32.mrb[0].mxu0
        %v3454 = vadd.f32 %v3301, %v3453
        %v3455 = vpop.f32.mrb[0].mxu0
        %3456 = vmatprep.mubr.f32.mxu0 0.0
        %3457 = vmatmul.mubr.f32.gmra.mrb[0].mxu0 %v3350
        %v3458 = vpop.f32.mrb[0].mxu0
        %v3459 = vadd.f32 %v3306, %v3458
        %v3460 = vpop.f32.mrb[0].mxu0
        %3461 = vmatprep.mubr.f32.mxu0 0.0
        %3462 = vmatmul.mubr.f32.gmra.mrb[0].mxu0 %v3353
        %v3463 = vpop.f32.mrb[0].mxu0
        %v3464 = vadd.f32 %v3311, %v3463
        %v3465 = vpop.f32.mrb[0].mxu0
        %3466 = vmatprep.mubr.f32.mxu0 0.0
        %3467 = vmatmul.mubr.f32.gmra.mrb[0].mxu0 %v3356
        %v3468 = vpop.f32.mrb[0].mxu0
        %v3469 = vadd.f32 %v3316, %v3468
        %v3470 = vpop.f32.mrb[0].mxu0
        %3471 = vmatprep.mubr.f32.mxu0 0.0
        %3472 = vmatmul.mubr.f32.gmra.mrb[0].mxu0 %v3359
        %v3473 = vpop.f32.mrb[0].mxu0
        %v3474 = vadd.f32 %v3321, %v3473
        %v3475 = vpop.f32.mrb[0].mxu0
        %3476 = vmatprep.mubr.f32.mxu0 0.0
        %3477 = vmatmul.mubr.f32.gmra.mrb[0].mxu0 %v3362
        %v3478 = vpop.f32.mrb[0].mxu0
        %v3479 = vadd.f32 %v3326, %v3478
        %v3480 = vpop.f32.mrb[0].mxu0
        %3481 = vmatprep.mubr.f32.mxu0 0.0
        %3482 = vmatmul.mubr.f32.gmra.mrb[0].mxu0 %v3365
        %v3483 = vpop.f32.mrb[0].mxu0
        %v3484 = vadd.f32 %v3331, %v3483
        %v3485 = vpop.f32.mrb[0].mxu0
        %3486 = vdwg.mxu0
        %v3487 = vmax.f32 %v3434, 0.0
        %v3488 = vmax.f32 %v3439, 0.0
        %v3489 = vmax.f32 %v3444, 0.0
        %v3490 = vmax.f32 %v3449, 0.0
        %v3491 = vmax.f32 %v3454, 0.0
        %v3492 = vmax.f32 %v3459, 0.0
        %v3493 = vmax.f32 %v3464, 0.0
        %v3494 = vmax.f32 %v3469, 0.0
        %v3495 = vmax.f32 %v3474, 0.0
        %v3496 = vmax.f32 %v3479, 0.0
        %v3497 = vmax.f32 %v3484, 0.0
        %v3498 = vld [vmem:[#allocation17] sm:$0xff]
        %v3499 = vld [vmem:[#allocation17 + $0x8] sm:$0x3]
        %v3500 = vld [vmem:[%s10] sm:$0xff]
        %v3501 = vld [vmem:[%s10 + $0x8] sm:$0x3]
        %3503 = vset.pattern.permute.xlu0 0
        %3504 = vperm.xlu0 %3503, %v3500
        %v3505 = vpop.permute.xlu0 %3504
        %3508 = vset.pattern.permute.xlu0 0
        %3509 = vperm.xlu0 %3508, %v3501
        %v3510 = vpop.permute.xlu0 %3509
        %vm3512 = vcmask 687104
        %v3514 = vsel %vm3512, %v3498, 0
        %v3517 = vsel %vm3512, %v3499, 0
        %vm3519 = vcmask 1043456
        %v3521 = vsel %vm3519, %v3497, 0
        %3523 = vmatprep.subr.mxu0 0.0
        %3524 = vmatpush1.msra.mxu0 %v3487
        %3525 = vmatprep.subr.mxu0 0.0
        %3526 = vmatpush1.msra.mxu0 %v3488
        %3527 = vmatprep.subr.mxu0 0.0
        %3528 = vmatpush1.msra.mxu0 %v3489
        %3529 = vmatprep.subr.mxu0 0.0
        %3530 = vmatpush1.msra.mxu0 %v3490
        %3531 = vmatprep.subr.mxu0 0.0
        %3532 = vmatpush1.msra.mxu0 %v3491
        %3533 = vmatprep.subr.mxu0 0.0
        %3534 = vmatpush1.msra.mxu0 %v3492
        %3535 = vmatprep.subr.mxu0 0.0
        %3536 = vmatpush1.msra.mxu0 %v3493
        %3537 = vmatprep.subr.mxu0 0.0
        %3538 = vmatpush1.msra.mxu0 %v3494
        %3539 = vmatprep.subr.mxu0 0.0
        %3540 = vmatpush1.msra.mxu0 %v3495
        %3541 = vmatprep.subr.mxu0 0.0
        %3542 = vmatpush1.msra.mxu0 %v3496
        %3543 = vmatprep.subr.mxu0 0.0
        %3544 = vmatpush1.msra.mxu0 %v3521
        %3545 = vmatprep.subr.mxu0 0.0
        %3546 = vmatpush1.msra.mxu0 0.0
        %3547 = vmatprep.subr.mxu0 0.0
        %3548 = vmatpush1.msra.mxu0 0.0
        %3549 = vmatprep.subr.mxu0 0.0
        %3550 = vmatpush1.msra.mxu0 0.0
        %3551 = vmatprep.subr.mxu0 0.0
        %3552 = vmatpush1.msra.mxu0 0.0
        %3553 = vmatprep.subr.mxu0 0.0
        %3554 = vmatpush1.msra.mxu0 0.0
        %3555 = vmatprep.subr.mxu0 0.0
        %3556 = vmatpush1.msra.mxu0 0.0
        %3557 = vmatprep.subr.mxu0 0.0
        %3558 = vmatpush1.msra.mxu0 0.0
        %3559 = vmatprep.subr.mxu0 0.0
        %3560 = vmatpush1.msra.mxu0 0.0
        %3561 = vmatprep.subr.mxu0 0.0
        %3562 = vmatpush1.msra.mxu0 0.0
        %3563 = vmatprep.subr.mxu0 0.0
        %3564 = vmatpush1.msra.mxu0 0.0
        %3565 = vmatprep.subr.mxu0 0.0
        %3566 = vmatpush1.msra.mxu0 0.0
        %3567 = vmatprep.subr.mxu0 0.0
        %3568 = vmatpush1.msra.mxu0 0.0
        %3569 = vmatprep.subr.mxu0 0.0
        %3570 = vmatpush1.msra.mxu0 0.0
        %3571 = vmatprep.subr.mxu0 0.0
        %3572 = vmatpush1.msra.mxu0 0.0
        %3573 = vmatprep.subr.mxu0 0.0
        %3574 = vmatpush1.msra.mxu0 0.0
        %3575 = vmatprep.subr.mxu0 0.0
        %3576 = vmatpush1.msra.mxu0 0.0
        %3577 = vmatprep.subr.mxu0 0.0
        %3578 = vmatpush1.msra.mxu0 0.0
        %3579 = vmatprep.subr.mxu0 0.0
        %3580 = vmatpush1.msra.mxu0 0.0
        %3581 = vmatprep.subr.mxu0 0.0
        %3582 = vmatpush1.msra.mxu0 0.0
        %3583 = vmatprep.subr.mxu0 0.0
        %3584 = vmatpush1.msra.mxu0 0.0
        %3585 = vmatprep.subr.mxu0 0.0
        %3586 = vmatpush1.msra.mxu0 0.0
        %3587 = vmatprep.mubr.f32.mxu0 0.0
        %3588 = vmatmul.mubr.f32.gmra.mrb[0].mxu0 %v3514
        %v3589 = vpop.f32.mrb[0].mxu0
        %v3590 = vadd.f32 %v3505, %v3589
        %v3591 = vpop.f32.mrb[0].mxu0
        %3592 = vmatprep.mubr.f32.mxu0 0.0
        %3593 = vmatmul.mubr.f32.gmra.mrb[0].mxu0 %v3517
        %v3594 = vpop.f32.mrb[0].mxu0
        %v3595 = vadd.f32 %v3510, %v3594
        %v3596 = vpop.f32.mrb[0].mxu0
        %3597 = vdwg.mxu0
        %3598 = vst [vmem:[%s635] sm:$0xff] %v3590
        %3599 = vst [vmem:[%s635 + $0x8] sm:$0x3] %v3595
        %s3600 = sand.u32 %s349, 1
        %s3601 = scalar_lea.sflag [#allocation6], %s3600
        %s3602 = sand.u32 %s349, 1
        %s3603 = smul.addr %s3602, 16
        %s3604 = scalar_lea.vmem [#allocation23], %s3603
        // Predicated region
        $region149: #{tpu_custom_call.1} parent=75 // pred_check
          %p3605 = pneg %p359
        $region150: #{tpu_custom_call.1} parent=75 // pred_check_branch
          %3607 = sbr.rel (%p3605) target = $region152
        $region151: #{tpu_custom_call.1} parent=75 // pred_region
          %s3609 = ssub.s32 256, 256
          %3610 = vsyncadd %s3601, %s3609
          %s3611 = smul.addr %s37, 128
          %s3612 = scalar_lea.hbm %s14, %s3611
          %s3613 = sshll.u32 %s3604, 4
          %s3614 = int_to_ptr.vmem [resolvable:$true] %s3613
          %3619 = dma.vmem_to_hbm [thread:$0]  %s3614, 256, %s3612, %s3601, 128, 256, 8
        $region152: #{tpu_custom_call.1} parent=75 // pred_fallthru
          _
      $region76: #{tpu_custom_call.1} parent=5 // pred_fallthru
        _
      %p3620 = scmp.le.s32.totalorder 2, %s32
      // Predicated region
      $region153: #{tpu_custom_call.1} parent=5 // pred_check
        %p3621 = pneg %p3620
      $region154: #{tpu_custom_call.1} parent=5 // pred_check_branch
        %3623 = sbr.rel (%p3621) target = $region156
      $region155: #{tpu_custom_call.1} parent=5 // pred_region
        %s3624 = ssub.s32 %s32, 2
        // Predicated region
        $region157: #{tpu_custom_call.1} parent=155 // pred_check
          %p3625 = pneg %p365
        $region158: #{tpu_custom_call.1} parent=155 // pred_check_branch
          %3627 = sbr.rel (%p3625) target = $region160
        $region159: #{tpu_custom_call.1} parent=155 // pred_region
          %s3628 = sand.u32 %s350, 1
          %s3629 = scalar_lea.sflag [#allocation6], %s3628
          %s3630 = sand.u32 %s350, 1
          %s3631 = smul.addr %s3630, 16
          %s3632 = scalar_lea.vmem [#allocation23], %s3631
          %3633 = dma.done %s3629, 256
        $region160: #{tpu_custom_call.1} parent=155 // pred_fallthru
          _
      $region156: #{tpu_custom_call.1} parent=5 // pred_fallthru
        _
    $region6: #{tpu_custom_call.1} parent=1 // loop_footer
      %s36 = sadd.s32 1, %s32
    $region7: #{tpu_custom_call.1} parent=1 // loop_footer_branch
      %31 = sbr.rel target = $region3
    $region8: #{tpu_custom_call.1} parent=1 // loop_exit
      _
    %3634 = vsyncpa [#allocation5], 1
    %s3635 = scalar_lea.sflag [#allocation5], 1
    %3636 = vsyncpa %s3635, 1
    %3637 = vsyncpa [#allocation15], 1
    %3638 = vsyncpa [#allocation18], 1
    %3639 = vsyncpa [#allocation21], 1
    %3640 = vsyncpa [#allocation6], 1
    %s3641 = scalar_lea.sflag [#allocation6], 1
    %3642 = vsyncpa %s3641, 1
    %3643 = vsyncpa [#allocation7], 1
    %s3644 = scalar_lea.sflag [#allocation7], 1
    %3645 = vsyncpa %s3644, 1
    %3646 = vsyncpa [#allocation10], 1
    %3647 = vsyncpa [#allocation13], 1

</llo_original>
